<compile_context>
chip_gen: v5e
topology: v5e:2x2
jax: 0.10.0
libtpu: 0.0.40
codegen_flags: <defaults>
</compile_context>

<pallas_src>
import jax
import jax.numpy as jnp
from jax.experimental import pallas as pl
from jax.experimental.pallas import tpu as pltpu


def _round_up(x, m):
    return (x + m - 1) // m * m


def _im2col(xp, kh, kw):
    """xp: (N, Hp, Wp, C) -> (N, Ho*Wo, kh*kw*C); features ordered (kh, kw, c)."""
    N, Hp, Wp, C = xp.shape
    Ho, Wo = Hp - kh + 1, Wp - kw + 1
    cols = []
    for i in range(kh):
        for j in range(kw):
            cols.append(xp[:, i:i + Ho, j:j + Wo, :])          # (N, Ho, Wo, C)
    p = jnp.stack(cols, axis=3)                                 # (N, Ho, Wo, kh*kw, C)
    return p.reshape(N, Ho * Wo, kh * kw * C)


def srcnn2_pallas(params, x_nchw):
    """Fused SRCNN2 forward: NCHW float32 input -> NCHW float32 output."""
    (w1, b1) = params["l1"]   # (9,9,3,128),  (128,)
    (w2, b2) = params["l2"]   # (3,3,128,64), (64,)
    (w3, b3) = params["l3"]   # (1,1,64,32),  (32,)
    (w4, b4) = params["l4"]   # (5,5,32,3),   (3,)

    x = jnp.transpose(x_nchw, (0, 2, 3, 1)).astype(jnp.float32)   # NHWC
    N, H, W, Cin = x.shape

    K1, P1, C1 = w1.shape[0], 2, w1.shape[3]
    K2, P2, C2 = w2.shape[0], 2, w2.shape[3]
    K3, P3, C3 = w3.shape[0], 2, w3.shape[3]
    K4, P4, C4 = w4.shape[0], 1, w4.shape[3]
    C4P = 128                                   # lane-dense final store

    # Spatial bookkeeping (stride 1 everywhere).
    Hp1, Wp1 = H + 2 * P1, W + 2 * P1
    Ho1, Wo1 = Hp1 - K1 + 1, Wp1 - K1 + 1
    Hp2, Wp2 = Ho1 + 2 * P2, Wo1 + 2 * P2
    Ho2, Wo2 = Hp2 - K2 + 1, Wp2 - K2 + 1
    Hp3, Wp3 = Ho2 + 2 * P3, Wo2 + 2 * P3
    Ho3, Wo3 = Hp3 - K3 + 1, Wp3 - K3 + 1       # 1x1 conv: Ho3 == Hp3
    Hp4, Wp4 = Ho3 + 2 * P4, Wo3 + 2 * P4
    Ho4, Wo4 = Hp4 - K4 + 1, Wp4 - K4 + 1

    # ---- layer-1 im2col in the wrapper (Cin=3 is tiny; done once) ----------
    xp = jnp.pad(x, ((0, 0), (P1, P1), (P1, P1), (0, 0)))
    patches = _im2col(xp, K1, K1)                               # (N, Ho1*Wo1, 243)
    Kraw = K1 * K1 * Cin
    Kp = _round_up(Kraw, 128)                                   # 243 -> 256 (lane aligned)
    patches = jnp.pad(patches, ((0, 0), (0, 0), (0, Kp - Kraw)))
    w1m = jnp.pad(w1.reshape(Kraw, C1), ((0, Kp - Kraw), (0, 0)))
    b1m = b1.reshape(1, C1)

    w2m = w2.reshape(K2 * K2, C1, C2)
    b2m = b2.reshape(1, C2)
    w3m = w3.reshape(C2, C3)
    b3m = b3.reshape(1, C3)
    w4m = jnp.pad(w4, ((0, 0), (0, 0), (0, 0), (0, C4P - C4))).reshape(K4 * K4, C3, C4P)
    b4m = jnp.pad(b4, (0, C4P - C4)).reshape(1, C4P)

    # Flattened (row-major over the *padded* width) VMEM activation buffers.
    M1 = Ho1 * Wo1                 # 144
    M2 = Ho2 * Wp2                 # 224
    M4 = Ho4 * Wp4                 # 320
    B2 = Hp2 * Wp2 + (K2 - 1)      # + tail rows so all shifted reads stay in-bounds
    B3 = Hp3 * Wp3
    B4 = Hp4 * Wp4 + (K4 - 1)

    def kernel(x1_ref, w1_ref, b1_ref, w2_ref, b2_ref, w3_ref, b3_ref,
               w4_ref, b4_ref, o_ref, buf2, buf3, buf4):
        f32 = jnp.float32
        # Zero the padded activation buffers (borders/tails must be zero).
        buf2[...] = jnp.zeros_like(buf2)
        buf3[...] = jnp.zeros_like(buf3)
        buf4[...] = jnp.zeros_like(buf4)

        # --- layer 1: Conv2d(3,128,k=9,p=2) as one im2col matmul + ReLU ------
        h1 = jnp.dot(x1_ref[0], w1_ref[...], preferred_element_type=f32)
        h1 = jnp.maximum(h1 + b1_ref[...], 0.0)                 # (M1, C1)
        for y in range(Ho1):                                    # scatter into padded L2 input
            dst = (y + P2) * Wp2 + P2
            buf2[dst:dst + Wo1, :] = h1[y * Wo1:(y + 1) * Wo1, :]

        # --- layer 2: Conv2d(128,64,k=3,p=2): shift-and-matmul + ReLU --------
        acc2 = jnp.zeros((M2, C2), f32)
        for kh in range(K2):
            for kw in range(K2):
                off = kh * Wp2 + kw
                acc2 = acc2 + jnp.dot(buf2[off:off + M2, :],
                                      w2_ref[kh * K2 + kw],
                                      preferred_element_type=f32)
        h2 = jnp.maximum(acc2 + b2_ref[...], 0.0)               # width Wp2 rows (tail cols are junk)
        for y in range(Ho2):
            dst = (y + P3) * Wp3 + P3
            buf3[dst:dst + Wo2, :] = h2[y * Wp2:y * Wp2 + Wo2, :]

        # --- layer 3: Conv2d(64,32,k=1,p=2) over the whole padded grid + ReLU
        # (padding positions read zeros -> relu(b3), exactly as the reference).
        h3 = jnp.dot(buf3[...], w3_ref[...], preferred_element_type=f32)
        h3 = jnp.maximum(h3 + b3_ref[...], 0.0)                 # (B3, C3), all rows valid
        for y in range(Ho3):
            dst = (y + P4) * Wp4 + P4
            buf4[dst:dst + Wo3, :] = h3[y * Wp3:y * Wp3 + Wo3, :]

        # --- layer 4: Conv2d(32,3,k=5,p=1): shift-and-matmul, Cout padded 3->128
        acc4 = jnp.zeros((M4, C4P), f32)
        for kh in range(K4):
            for kw in range(K4):
                off = kh * Wp4 + kw
                acc4 = acc4 + jnp.dot(buf4[off:off + M4, :],
                                      w4_ref[kh * K4 + kw],
                                      preferred_element_type=f32)
        out4 = acc4 + b4_ref[...]                               # no ReLU on the last layer
        for y in range(Ho4):                                    # lane-dense (128-wide) stores
            o_ref[0, y, :, :] = out4[y * Wp4:y * Wp4 + Wo4, :]

    out_nhwc = pl.pallas_call(
        kernel,
        out_shape=jax.ShapeDtypeStruct((N, Ho4, Wo4, C4P), jnp.float32),
        grid=(N,),
        in_specs=[
            pl.BlockSpec((1, M1, Kp), lambda n: (n, 0, 0)),
            pl.BlockSpec((Kp, C1), lambda n: (0, 0)),
            pl.BlockSpec((1, C1), lambda n: (0, 0)),
            pl.BlockSpec((K2 * K2, C1, C2), lambda n: (0, 0, 0)),
            pl.BlockSpec((1, C2), lambda n: (0, 0)),
            pl.BlockSpec((C2, C3), lambda n: (0, 0)),
            pl.BlockSpec((1, C3), lambda n: (0, 0)),
            pl.BlockSpec((K4 * K4, C3, C4P), lambda n: (0, 0, 0)),
            pl.BlockSpec((1, C4P), lambda n: (0, 0)),
        ],
        out_specs=pl.BlockSpec((1, Ho4, Wo4, C4P), lambda n: (n, 0, 0, 0)),
        scratch_shapes=[
            pltpu.VMEM((B2, C1), jnp.float32),   # padded layer-2 input (flattened)
            pltpu.VMEM((B3, C2), jnp.float32),   # padded layer-3 input (flattened)
            pltpu.VMEM((B4, C3), jnp.float32),   # padded layer-4 input (flattened)
        ],
        compiler_params=pltpu.CompilerParams(
            dimension_semantics=("parallel",)),
    )(patches, w1m, b1m, w2m, b2m, w3m, b3m, w4m, b4m)

    # Drop the output-channel padding and convert back to NCHW.
    return jnp.transpose(out_nhwc[..., :C4], (0, 3, 1, 2))


srcnn2_forward = jax.jit(srcnn2_pallas)


# --- parameter init (PyTorch Conv2d-default-like, HWIO layout) ---------------
def init_conv_params(key, kh, kw, cin, cout):
    wkey, bkey = jax.random.split(key)
    fan_in = cin * kh * kw
    bound = 1.0 / jnp.sqrt(jnp.float32(fan_in))
    w = jax.random.uniform(wkey, (kh, kw, cin, cout), jnp.float32, -bound, bound)
    b = jax.random.uniform(bkey, (cout,), jnp.float32, -bound, bound)
    return w, b


def make_srcnn2_params(key):
    k1, k2, k3, k4 = jax.random.split(key, 4)
    return {
        "l1": init_conv_params(k1, 9, 9, 3, 128),   # Conv2d(3, 128, k=9, pad=2)
        "l2": init_conv_params(k2, 3, 3, 128, 64),  # Conv2d(128, 64, k=3, pad=2)
        "l3": init_conv_params(k3, 1, 1, 64, 32),   # Conv2d(64, 32, k=1, pad=2)
        "l4": init_conv_params(k4, 5, 5, 32, 3),    # Conv2d(32, 3, k=5, pad=1)
    }


# --- pure-JAX reference (correctness check only) ------------------------------
def conv_ref(x_nhwc, w, b, padding, relu):
    out = jax.lax.conv_general_dilated(
        x_nhwc, w, window_strides=(1, 1),
        padding=((padding, padding), (padding, padding)),
        dimension_numbers=("NHWC", "HWIO", "NHWC"))
    out = out + b
    if relu:
        out = jnp.maximum(out, 0.0)
    return out


@jax.jit
def srcnn2_ref(params, x_nchw):
    h = jnp.transpose(x_nchw, (0, 2, 3, 1)).astype(jnp.float32)
    h = conv_ref(h, *params["l1"], padding=2, relu=True)
    h = conv_ref(h, *params["l2"], padding=2, relu=True)
    h = conv_ref(h, *params["l3"], padding=2, relu=True)
    h = conv_ref(h, *params["l4"], padding=1, relu=False)
    return jnp.transpose(h, (0, 3, 1, 2))


if __name__ == "__main__":
    key = jax.random.PRNGKey(0)
    pkey, xkey = jax.random.split(key)

    params = make_srcnn2_params(pkey)
    x = jax.random.normal(xkey, (2, 3, 16, 16), jnp.float32)   # NCHW like PyTorch

    out = jax.block_until_ready(srcnn2_forward(params, x))
    # Spatial: 16 -> 12 -> 14 -> 18 -> 16, channels 3 -> 3.
    assert out.shape == (2, 3, 16, 16), out.shape

    ref = jax.block_until_ready(srcnn2_ref(params, x))
    err = float(jnp.max(jnp.abs(out - ref)))
    # Tolerance accounts for TPU default-precision (bf16-pass) f32 matmuls in
    # both the kernel and the XLA reference; real indexing bugs give O(0.1+).
    assert err < 3e-2, err

    print("KERNEL_OK")
</pallas_src>

<mosaic_0001>
module attributes {stable_mosaic.version = 11 : i64} {
  func.func @kernel(%arg0: i32, %arg1: memref<1x144x256xf32, #tpu.memory_space<vmem>>, %arg2: memref<256x128xf32, #tpu.memory_space<vmem>>, %arg3: memref<1x128xf32, #tpu.memory_space<vmem>>, %arg4: memref<9x128x64xf32, #tpu.memory_space<vmem>>, %arg5: memref<1x64xf32, #tpu.memory_space<vmem>>, %arg6: memref<64x32xf32, #tpu.memory_space<vmem>>, %arg7: memref<1x32xf32, #tpu.memory_space<vmem>>, %arg8: memref<25x32x128xf32, #tpu.memory_space<vmem>>, %arg9: memref<1x128xf32, #tpu.memory_space<vmem>>, %arg10: memref<1x16x16x128xf32, #tpu.memory_space<vmem>>, %arg11: memref<258x128xf32, #tpu.memory_space<vmem>>, %arg12: memref<324x64xf32, #tpu.memory_space<vmem>>, %arg13: memref<404x32xf32, #tpu.memory_space<vmem>>) attributes {dimension_semantics = [#tpu.dimension_semantics<parallel>], iteration_bounds = array<i64: 2>, scalar_prefetch = 0 : i64, scratch_operands = 3 : i64, tpu.core_type = #tpu.core_type<tc>, window_params = [{transform_indices = @transform_0, window_bounds = array<i64: 1, 144, 256>}, {pipeline_mode = #tpu.pipeline_mode<synchronous>, transform_indices = @transform_1, window_bounds = array<i64: 256, 128>}, {pipeline_mode = #tpu.pipeline_mode<synchronous>, transform_indices = @transform_2, window_bounds = array<i64: 1, 128>}, {pipeline_mode = #tpu.pipeline_mode<synchronous>, transform_indices = @transform_3, window_bounds = array<i64: 9, 128, 64>}, {pipeline_mode = #tpu.pipeline_mode<synchronous>, transform_indices = @transform_4, window_bounds = array<i64: 1, 64>}, {pipeline_mode = #tpu.pipeline_mode<synchronous>, transform_indices = @transform_5, window_bounds = array<i64: 64, 32>}, {pipeline_mode = #tpu.pipeline_mode<synchronous>, transform_indices = @transform_6, window_bounds = array<i64: 1, 32>}, {pipeline_mode = #tpu.pipeline_mode<synchronous>, transform_indices = @transform_7, window_bounds = array<i64: 25, 32, 128>}, {pipeline_mode = #tpu.pipeline_mode<synchronous>, transform_indices = @transform_8, window_bounds = array<i64: 1, 128>}, {transform_indices = @transform_9, window_bounds = array<i64: 1, 16, 16, 128>}]} {
    %cst = arith.constant 0.000000e+00 : f32
    %0 = vector.broadcast %cst : f32 to vector<258x128xf32>
    %c0 = arith.constant 0 : index
    %c0_0 = arith.constant 0 : index
    %1 = vector.load %arg11[%c0, %c0_0] : memref<258x128xf32, #tpu.memory_space<vmem>>, vector<258x128xf32>
    tpu.vector_store %arg11[%c0, %c0_0], %0 {strides = array<i32>} : memref<258x128xf32, #tpu.memory_space<vmem>>, vector<258x128xf32>,
    %cst_1 = arith.constant 0.000000e+00 : f32
    %2 = vector.broadcast %cst_1 : f32 to vector<324x64xf32>
    %c0_2 = arith.constant 0 : index
    %c0_3 = arith.constant 0 : index
    %3 = vector.load %arg12[%c0_2, %c0_3] : memref<324x64xf32, #tpu.memory_space<vmem>>, vector<324x64xf32>
    tpu.vector_store %arg12[%c0_2, %c0_3], %2 {strides = array<i32>} : memref<324x64xf32, #tpu.memory_space<vmem>>, vector<324x64xf32>,
    %cst_4 = arith.constant 0.000000e+00 : f32
    %4 = vector.broadcast %cst_4 : f32 to vector<404x32xf32>
    %c0_5 = arith.constant 0 : index
    %c0_6 = arith.constant 0 : index
    %5 = vector.load %arg13[%c0_5, %c0_6] : memref<404x32xf32, #tpu.memory_space<vmem>>, vector<404x32xf32>
    tpu.vector_store %arg13[%c0_5, %c0_6], %4 {strides = array<i32>} : memref<404x32xf32, #tpu.memory_space<vmem>>, vector<404x32xf32>,
    %c0_7 = arith.constant 0 : index
    %c0_8 = arith.constant 0 : index
    %c0_9 = arith.constant 0 : index
    %6 = vector.load %arg1[%c0_7, %c0_8, %c0_9] : memref<1x144x256xf32, #tpu.memory_space<vmem>>, vector<1x144x256xf32>
    %7 = vector.shape_cast %6 : vector<1x144x256xf32> to vector<144x256xf32>
    %c0_10 = arith.constant 0 : index
    %c0_11 = arith.constant 0 : index
    %8 = vector.load %arg2[%c0_10, %c0_11] : memref<256x128xf32, #tpu.memory_space<vmem>>, vector<256x128xf32>
    %cst_12 = arith.constant dense<0.000000e+00> : vector<144x128xf32>
    %9 = tpu.matmul %7, %8, %cst_12 {dimension_numbers = #tpu.dot_dimension_numbers<[1], [0], [0], [1], [0, 0, 1, 1], [], []>} : vector<144x256xf32>, vector<256x128xf32>, vector<144x128xf32> -> vector<144x128xf32>
    %c0_13 = arith.constant 0 : index
    %c0_14 = arith.constant 0 : index
    %10 = vector.load %arg3[%c0_13, %c0_14] : memref<1x128xf32, #tpu.memory_space<vmem>>, vector<1x128xf32>
    %11 = vector.broadcast %10 : vector<1x128xf32> to vector<144x128xf32>
    %12 = arith.addf %9, %11 : vector<144x128xf32>
    %cst_15 = arith.constant 0.000000e+00 : f32
    %13 = vector.broadcast %cst_15 : f32 to vector<144x128xf32>
    %14 = arith.maximumf %12, %13 : vector<144x128xf32>
    %15 = vector.extract_strided_slice %14 {offsets = [0, 0], sizes = [12, 128], strides = [1, 1]} : vector<144x128xf32> to vector<12x128xf32>
    %c34 = arith.constant 34 : index
    %c0_16 = arith.constant 0 : index
    %16 = vector.load %arg11[%c34, %c0_16] : memref<258x128xf32, #tpu.memory_space<vmem>>, vector<12x128xf32>
    tpu.vector_store %arg11[%c34, %c0_16], %15 {strides = array<i32>} : memref<258x128xf32, #tpu.memory_space<vmem>>, vector<12x128xf32>,
    %17 = vector.extract_strided_slice %14 {offsets = [12, 0], sizes = [12, 128], strides = [1, 1]} : vector<144x128xf32> to vector<12x128xf32>
    %c50 = arith.constant 50 : index
    %c0_17 = arith.constant 0 : index
    %18 = vector.load %arg11[%c50, %c0_17] : memref<258x128xf32, #tpu.memory_space<vmem>>, vector<12x128xf32>
    tpu.vector_store %arg11[%c50, %c0_17], %17 {strides = array<i32>} : memref<258x128xf32, #tpu.memory_space<vmem>>, vector<12x128xf32>,
    %19 = vector.extract_strided_slice %14 {offsets = [24, 0], sizes = [12, 128], strides = [1, 1]} : vector<144x128xf32> to vector<12x128xf32>
    %c66 = arith.constant 66 : index
    %c0_18 = arith.constant 0 : index
    %20 = vector.load %arg11[%c66, %c0_18] : memref<258x128xf32, #tpu.memory_space<vmem>>, vector<12x128xf32>
    tpu.vector_store %arg11[%c66, %c0_18], %19 {strides = array<i32>} : memref<258x128xf32, #tpu.memory_space<vmem>>, vector<12x128xf32>,
    %21 = vector.extract_strided_slice %14 {offsets = [36, 0], sizes = [12, 128], strides = [1, 1]} : vector<144x128xf32> to vector<12x128xf32>
    %c82 = arith.constant 82 : index
    %c0_19 = arith.constant 0 : index
    %22 = vector.load %arg11[%c82, %c0_19] : memref<258x128xf32, #tpu.memory_space<vmem>>, vector<12x128xf32>
    tpu.vector_store %arg11[%c82, %c0_19], %21 {strides = array<i32>} : memref<258x128xf32, #tpu.memory_space<vmem>>, vector<12x128xf32>,
    %23 = vector.extract_strided_slice %14 {offsets = [48, 0], sizes = [12, 128], strides = [1, 1]} : vector<144x128xf32> to vector<12x128xf32>
    %c98 = arith.constant 98 : index
    %c0_20 = arith.constant 0 : index
    %24 = vector.load %arg11[%c98, %c0_20] : memref<258x128xf32, #tpu.memory_space<vmem>>, vector<12x128xf32>
    tpu.vector_store %arg11[%c98, %c0_20], %23 {strides = array<i32>} : memref<258x128xf32, #tpu.memory_space<vmem>>, vector<12x128xf32>,
    %25 = vector.extract_strided_slice %14 {offsets = [60, 0], sizes = [12, 128], strides = [1, 1]} : vector<144x128xf32> to vector<12x128xf32>
    %c114 = arith.constant 114 : index
    %c0_21 = arith.constant 0 : index
    %26 = vector.load %arg11[%c114, %c0_21] : memref<258x128xf32, #tpu.memory_space<vmem>>, vector<12x128xf32>
    tpu.vector_store %arg11[%c114, %c0_21], %25 {strides = array<i32>} : memref<258x128xf32, #tpu.memory_space<vmem>>, vector<12x128xf32>,
    %27 = vector.extract_strided_slice %14 {offsets = [72, 0], sizes = [12, 128], strides = [1, 1]} : vector<144x128xf32> to vector<12x128xf32>
    %c130 = arith.constant 130 : index
    %c0_22 = arith.constant 0 : index
    %28 = vector.load %arg11[%c130, %c0_22] : memref<258x128xf32, #tpu.memory_space<vmem>>, vector<12x128xf32>
    tpu.vector_store %arg11[%c130, %c0_22], %27 {strides = array<i32>} : memref<258x128xf32, #tpu.memory_space<vmem>>, vector<12x128xf32>,
    %29 = vector.extract_strided_slice %14 {offsets = [84, 0], sizes = [12, 128], strides = [1, 1]} : vector<144x128xf32> to vector<12x128xf32>
    %c146 = arith.constant 146 : index
    %c0_23 = arith.constant 0 : index
    %30 = vector.load %arg11[%c146, %c0_23] : memref<258x128xf32, #tpu.memory_space<vmem>>, vector<12x128xf32>
    tpu.vector_store %arg11[%c146, %c0_23], %29 {strides = array<i32>} : memref<258x128xf32, #tpu.memory_space<vmem>>, vector<12x128xf32>,
    %31 = vector.extract_strided_slice %14 {offsets = [96, 0], sizes = [12, 128], strides = [1, 1]} : vector<144x128xf32> to vector<12x128xf32>
    %c162 = arith.constant 162 : index
    %c0_24 = arith.constant 0 : index
    %32 = vector.load %arg11[%c162, %c0_24] : memref<258x128xf32, #tpu.memory_space<vmem>>, vector<12x128xf32>
    tpu.vector_store %arg11[%c162, %c0_24], %31 {strides = array<i32>} : memref<258x128xf32, #tpu.memory_space<vmem>>, vector<12x128xf32>,
    %33 = vector.extract_strided_slice %14 {offsets = [108, 0], sizes = [12, 128], strides = [1, 1]} : vector<144x128xf32> to vector<12x128xf32>
    %c178 = arith.constant 178 : index
    %c0_25 = arith.constant 0 : index
    %34 = vector.load %arg11[%c178, %c0_25] : memref<258x128xf32, #tpu.memory_space<vmem>>, vector<12x128xf32>
    tpu.vector_store %arg11[%c178, %c0_25], %33 {strides = array<i32>} : memref<258x128xf32, #tpu.memory_space<vmem>>, vector<12x128xf32>,
    %35 = vector.extract_strided_slice %14 {offsets = [120, 0], sizes = [12, 128], strides = [1, 1]} : vector<144x128xf32> to vector<12x128xf32>
    %c194 = arith.constant 194 : index
    %c0_26 = arith.constant 0 : index
    %36 = vector.load %arg11[%c194, %c0_26] : memref<258x128xf32, #tpu.memory_space<vmem>>, vector<12x128xf32>
    tpu.vector_store %arg11[%c194, %c0_26], %35 {strides = array<i32>} : memref<258x128xf32, #tpu.memory_space<vmem>>, vector<12x128xf32>,
    %37 = vector.extract_strided_slice %14 {offsets = [132, 0], sizes = [12, 128], strides = [1, 1]} : vector<144x128xf32> to vector<12x128xf32>
    %c210 = arith.constant 210 : index
    %c0_27 = arith.constant 0 : index
    %38 = vector.load %arg11[%c210, %c0_27] : memref<258x128xf32, #tpu.memory_space<vmem>>, vector<12x128xf32>
    tpu.vector_store %arg11[%c210, %c0_27], %37 {strides = array<i32>} : memref<258x128xf32, #tpu.memory_space<vmem>>, vector<12x128xf32>,
    %cst_28 = arith.constant 0.000000e+00 : f32
    %39 = vector.broadcast %cst_28 : f32 to vector<224x64xf32>
    %c0_29 = arith.constant 0 : index
    %c0_30 = arith.constant 0 : index
    %40 = vector.load %arg11[%c0_29, %c0_30] : memref<258x128xf32, #tpu.memory_space<vmem>>, vector<224x128xf32>
    %c0_31 = arith.constant 0 : index
    %c0_32 = arith.constant 0 : index
    %c0_33 = arith.constant 0 : index
    %41 = vector.load %arg4[%c0_31, %c0_32, %c0_33] : memref<9x128x64xf32, #tpu.memory_space<vmem>>, vector<1x128x64xf32>
    %42 = vector.shape_cast %41 : vector<1x128x64xf32> to vector<128x64xf32>
    %cst_34 = arith.constant dense<0.000000e+00> : vector<224x64xf32>
    %43 = tpu.matmul %40, %42, %cst_34 {dimension_numbers = #tpu.dot_dimension_numbers<[1], [0], [0], [1], [0, 0, 1, 1], [], []>} : vector<224x128xf32>, vector<128x64xf32>, vector<224x64xf32> -> vector<224x64xf32>
    %44 = arith.addf %39, %43 : vector<224x64xf32>
    %c1 = arith.constant 1 : index
    %c0_35 = arith.constant 0 : index
    %45 = vector.load %arg11[%c1, %c0_35] : memref<258x128xf32, #tpu.memory_space<vmem>>, vector<224x128xf32>
    %c1_36 = arith.constant 1 : index
    %c0_37 = arith.constant 0 : index
    %c0_38 = arith.constant 0 : index
    %46 = vector.load %arg4[%c1_36, %c0_37, %c0_38] : memref<9x128x64xf32, #tpu.memory_space<vmem>>, vector<1x128x64xf32>
    %47 = vector.shape_cast %46 : vector<1x128x64xf32> to vector<128x64xf32>
    %cst_39 = arith.constant dense<0.000000e+00> : vector<224x64xf32>
    %48 = tpu.matmul %45, %47, %cst_39 {dimension_numbers = #tpu.dot_dimension_numbers<[1], [0], [0], [1], [0, 0, 1, 1], [], []>} : vector<224x128xf32>, vector<128x64xf32>, vector<224x64xf32> -> vector<224x64xf32>
    %49 = arith.addf %44, %48 : vector<224x64xf32>
    %c2 = arith.constant 2 : index
    %c0_40 = arith.constant 0 : index
    %50 = vector.load %arg11[%c2, %c0_40] : memref<258x128xf32, #tpu.memory_space<vmem>>, vector<224x128xf32>
    %c2_41 = arith.constant 2 : index
    %c0_42 = arith.constant 0 : index
    %c0_43 = arith.constant 0 : index
    %51 = vector.load %arg4[%c2_41, %c0_42, %c0_43] : memref<9x128x64xf32, #tpu.memory_space<vmem>>, vector<1x128x64xf32>
    %52 = vector.shape_cast %51 : vector<1x128x64xf32> to vector<128x64xf32>
    %cst_44 = arith.constant dense<0.000000e+00> : vector<224x64xf32>
    %53 = tpu.matmul %50, %52, %cst_44 {dimension_numbers = #tpu.dot_dimension_numbers<[1], [0], [0], [1], [0, 0, 1, 1], [], []>} : vector<224x128xf32>, vector<128x64xf32>, vector<224x64xf32> -> vector<224x64xf32>
    %54 = arith.addf %49, %53 : vector<224x64xf32>
    %c16 = arith.constant 16 : index
    %c0_45 = arith.constant 0 : index
    %55 = vector.load %arg11[%c16, %c0_45] : memref<258x128xf32, #tpu.memory_space<vmem>>, vector<224x128xf32>
    %c3 = arith.constant 3 : index
    %c0_46 = arith.constant 0 : index
    %c0_47 = arith.constant 0 : index
    %56 = vector.load %arg4[%c3, %c0_46, %c0_47] : memref<9x128x64xf32, #tpu.memory_space<vmem>>, vector<1x128x64xf32>
    %57 = vector.shape_cast %56 : vector<1x128x64xf32> to vector<128x64xf32>
    %cst_48 = arith.constant dense<0.000000e+00> : vector<224x64xf32>
    %58 = tpu.matmul %55, %57, %cst_48 {dimension_numbers = #tpu.dot_dimension_numbers<[1], [0], [0], [1], [0, 0, 1, 1], [], []>} : vector<224x128xf32>, vector<128x64xf32>, vector<224x64xf32> -> vector<224x64xf32>
    %59 = arith.addf %54, %58 : vector<224x64xf32>
    %c17 = arith.constant 17 : index
    %c0_49 = arith.constant 0 : index
    %60 = vector.load %arg11[%c17, %c0_49] : memref<258x128xf32, #tpu.memory_space<vmem>>, vector<224x128xf32>
    %c4 = arith.constant 4 : index
    %c0_50 = arith.constant 0 : index
    %c0_51 = arith.constant 0 : index
    %61 = vector.load %arg4[%c4, %c0_50, %c0_51] : memref<9x128x64xf32, #tpu.memory_space<vmem>>, vector<1x128x64xf32>
    %62 = vector.shape_cast %61 : vector<1x128x64xf32> to vector<128x64xf32>
    %cst_52 = arith.constant dense<0.000000e+00> : vector<224x64xf32>
    %63 = tpu.matmul %60, %62, %cst_52 {dimension_numbers = #tpu.dot_dimension_numbers<[1], [0], [0], [1], [0, 0, 1, 1], [], []>} : vector<224x128xf32>, vector<128x64xf32>, vector<224x64xf32> -> vector<224x64xf32>
    %64 = arith.addf %59, %63 : vector<224x64xf32>
    %c18 = arith.constant 18 : index
    %c0_53 = arith.constant 0 : index
    %65 = vector.load %arg11[%c18, %c0_53] : memref<258x128xf32, #tpu.memory_space<vmem>>, vector<224x128xf32>
    %c5 = arith.constant 5 : index
    %c0_54 = arith.constant 0 : index
    %c0_55 = arith.constant 0 : index
    %66 = vector.load %arg4[%c5, %c0_54, %c0_55] : memref<9x128x64xf32, #tpu.memory_space<vmem>>, vector<1x128x64xf32>
    %67 = vector.shape_cast %66 : vector<1x128x64xf32> to vector<128x64xf32>
    %cst_56 = arith.constant dense<0.000000e+00> : vector<224x64xf32>
    %68 = tpu.matmul %65, %67, %cst_56 {dimension_numbers = #tpu.dot_dimension_numbers<[1], [0], [0], [1], [0, 0, 1, 1], [], []>} : vector<224x128xf32>, vector<128x64xf32>, vector<224x64xf32> -> vector<224x64xf32>
    %69 = arith.addf %64, %68 : vector<224x64xf32>
    %c32 = arith.constant 32 : index
    %c0_57 = arith.constant 0 : index
    %70 = vector.load %arg11[%c32, %c0_57] : memref<258x128xf32, #tpu.memory_space<vmem>>, vector<224x128xf32>
    %c6 = arith.constant 6 : index
    %c0_58 = arith.constant 0 : index
    %c0_59 = arith.constant 0 : index
    %71 = vector.load %arg4[%c6, %c0_58, %c0_59] : memref<9x128x64xf32, #tpu.memory_space<vmem>>, vector<1x128x64xf32>
    %72 = vector.shape_cast %71 : vector<1x128x64xf32> to vector<128x64xf32>
    %cst_60 = arith.constant dense<0.000000e+00> : vector<224x64xf32>
    %73 = tpu.matmul %70, %72, %cst_60 {dimension_numbers = #tpu.dot_dimension_numbers<[1], [0], [0], [1], [0, 0, 1, 1], [], []>} : vector<224x128xf32>, vector<128x64xf32>, vector<224x64xf32> -> vector<224x64xf32>
    %74 = arith.addf %69, %73 : vector<224x64xf32>
    %c33 = arith.constant 33 : index
    %c0_61 = arith.constant 0 : index
    %75 = vector.load %arg11[%c33, %c0_61] : memref<258x128xf32, #tpu.memory_space<vmem>>, vector<224x128xf32>
    %c7 = arith.constant 7 : index
    %c0_62 = arith.constant 0 : index
    %c0_63 = arith.constant 0 : index
    %76 = vector.load %arg4[%c7, %c0_62, %c0_63] : memref<9x128x64xf32, #tpu.memory_space<vmem>>, vector<1x128x64xf32>
    %77 = vector.shape_cast %76 : vector<1x128x64xf32> to vector<128x64xf32>
    %cst_64 = arith.constant dense<0.000000e+00> : vector<224x64xf32>
    %78 = tpu.matmul %75, %77, %cst_64 {dimension_numbers = #tpu.dot_dimension_numbers<[1], [0], [0], [1], [0, 0, 1, 1], [], []>} : vector<224x128xf32>, vector<128x64xf32>, vector<224x64xf32> -> vector<224x64xf32>
    %79 = arith.addf %74, %78 : vector<224x64xf32>
    %c34_65 = arith.constant 34 : index
    %c0_66 = arith.constant 0 : index
    %80 = vector.load %arg11[%c34_65, %c0_66] : memref<258x128xf32, #tpu.memory_space<vmem>>, vector<224x128xf32>
    %c8 = arith.constant 8 : index
    %c0_67 = arith.constant 0 : index
    %c0_68 = arith.constant 0 : index
    %81 = vector.load %arg4[%c8, %c0_67, %c0_68] : memref<9x128x64xf32, #tpu.memory_space<vmem>>, vector<1x128x64xf32>
    %82 = vector.shape_cast %81 : vector<1x128x64xf32> to vector<128x64xf32>
    %cst_69 = arith.constant dense<0.000000e+00> : vector<224x64xf32>
    %83 = tpu.matmul %80, %82, %cst_69 {dimension_numbers = #tpu.dot_dimension_numbers<[1], [0], [0], [1], [0, 0, 1, 1], [], []>} : vector<224x128xf32>, vector<128x64xf32>, vector<224x64xf32> -> vector<224x64xf32>
    %84 = arith.addf %79, %83 : vector<224x64xf32>
    %c0_70 = arith.constant 0 : index
    %c0_71 = arith.constant 0 : index
    %85 = vector.load %arg5[%c0_70, %c0_71] : memref<1x64xf32, #tpu.memory_space<vmem>>, vector<1x64xf32>
    %86 = vector.broadcast %85 : vector<1x64xf32> to vector<224x64xf32>
    %87 = arith.addf %84, %86 : vector<224x64xf32>
    %cst_72 = arith.constant 0.000000e+00 : f32
    %88 = vector.broadcast %cst_72 : f32 to vector<224x64xf32>
    %89 = arith.maximumf %87, %88 : vector<224x64xf32>
    %90 = vector.extract_strided_slice %89 {offsets = [0, 0], sizes = [14, 64], strides = [1, 1]} : vector<224x64xf32> to vector<14x64xf32>
    %c38 = arith.constant 38 : index
    %c0_73 = arith.constant 0 : index
    %91 = vector.load %arg12[%c38, %c0_73] : memref<324x64xf32, #tpu.memory_space<vmem>>, vector<14x64xf32>
    tpu.vector_store %arg12[%c38, %c0_73], %90 {strides = array<i32>} : memref<324x64xf32, #tpu.memory_space<vmem>>, vector<14x64xf32>,
    %92 = vector.extract_strided_slice %89 {offsets = [16, 0], sizes = [14, 64], strides = [1, 1]} : vector<224x64xf32> to vector<14x64xf32>
    %c56 = arith.constant 56 : index
    %c0_74 = arith.constant 0 : index
    %93 = vector.load %arg12[%c56, %c0_74] : memref<324x64xf32, #tpu.memory_space<vmem>>, vector<14x64xf32>
    tpu.vector_store %arg12[%c56, %c0_74], %92 {strides = array<i32>} : memref<324x64xf32, #tpu.memory_space<vmem>>, vector<14x64xf32>,
    %94 = vector.extract_strided_slice %89 {offsets = [32, 0], sizes = [14, 64], strides = [1, 1]} : vector<224x64xf32> to vector<14x64xf32>
    %c74 = arith.constant 74 : index
    %c0_75 = arith.constant 0 : index
    %95 = vector.load %arg12[%c74, %c0_75] : memref<324x64xf32, #tpu.memory_space<vmem>>, vector<14x64xf32>
    tpu.vector_store %arg12[%c74, %c0_75], %94 {strides = array<i32>} : memref<324x64xf32, #tpu.memory_space<vmem>>, vector<14x64xf32>,
    %96 = vector.extract_strided_slice %89 {offsets = [48, 0], sizes = [14, 64], strides = [1, 1]} : vector<224x64xf32> to vector<14x64xf32>
    %c92 = arith.constant 92 : index
    %c0_76 = arith.constant 0 : index
    %97 = vector.load %arg12[%c92, %c0_76] : memref<324x64xf32, #tpu.memory_space<vmem>>, vector<14x64xf32>
    tpu.vector_store %arg12[%c92, %c0_76], %96 {strides = array<i32>} : memref<324x64xf32, #tpu.memory_space<vmem>>, vector<14x64xf32>,
    %98 = vector.extract_strided_slice %89 {offsets = [64, 0], sizes = [14, 64], strides = [1, 1]} : vector<224x64xf32> to vector<14x64xf32>
    %c110 = arith.constant 110 : index
    %c0_77 = arith.constant 0 : index
    %99 = vector.load %arg12[%c110, %c0_77] : memref<324x64xf32, #tpu.memory_space<vmem>>, vector<14x64xf32>
    tpu.vector_store %arg12[%c110, %c0_77], %98 {strides = array<i32>} : memref<324x64xf32, #tpu.memory_space<vmem>>, vector<14x64xf32>,
    %100 = vector.extract_strided_slice %89 {offsets = [80, 0], sizes = [14, 64], strides = [1, 1]} : vector<224x64xf32> to vector<14x64xf32>
    %c128 = arith.constant 128 : index
    %c0_78 = arith.constant 0 : index
    %101 = vector.load %arg12[%c128, %c0_78] : memref<324x64xf32, #tpu.memory_space<vmem>>, vector<14x64xf32>
    tpu.vector_store %arg12[%c128, %c0_78], %100 {strides = array<i32>} : memref<324x64xf32, #tpu.memory_space<vmem>>, vector<14x64xf32>,
    %102 = vector.extract_strided_slice %89 {offsets = [96, 0], sizes = [14, 64], strides = [1, 1]} : vector<224x64xf32> to vector<14x64xf32>
    %c146_79 = arith.constant 146 : index
    %c0_80 = arith.constant 0 : index
    %103 = vector.load %arg12[%c146_79, %c0_80] : memref<324x64xf32, #tpu.memory_space<vmem>>, vector<14x64xf32>
    tpu.vector_store %arg12[%c146_79, %c0_80], %102 {strides = array<i32>} : memref<324x64xf32, #tpu.memory_space<vmem>>, vector<14x64xf32>,
    %104 = vector.extract_strided_slice %89 {offsets = [112, 0], sizes = [14, 64], strides = [1, 1]} : vector<224x64xf32> to vector<14x64xf32>
    %c164 = arith.constant 164 : index
    %c0_81 = arith.constant 0 : index
    %105 = vector.load %arg12[%c164, %c0_81] : memref<324x64xf32, #tpu.memory_space<vmem>>, vector<14x64xf32>
    tpu.vector_store %arg12[%c164, %c0_81], %104 {strides = array<i32>} : memref<324x64xf32, #tpu.memory_space<vmem>>, vector<14x64xf32>,
    %106 = vector.extract_strided_slice %89 {offsets = [128, 0], sizes = [14, 64], strides = [1, 1]} : vector<224x64xf32> to vector<14x64xf32>
    %c182 = arith.constant 182 : index
    %c0_82 = arith.constant 0 : index
    %107 = vector.load %arg12[%c182, %c0_82] : memref<324x64xf32, #tpu.memory_space<vmem>>, vector<14x64xf32>
    tpu.vector_store %arg12[%c182, %c0_82], %106 {strides = array<i32>} : memref<324x64xf32, #tpu.memory_space<vmem>>, vector<14x64xf32>,
    %108 = vector.extract_strided_slice %89 {offsets = [144, 0], sizes = [14, 64], strides = [1, 1]} : vector<224x64xf32> to vector<14x64xf32>
    %c200 = arith.constant 200 : index
    %c0_83 = arith.constant 0 : index
    %109 = vector.load %arg12[%c200, %c0_83] : memref<324x64xf32, #tpu.memory_space<vmem>>, vector<14x64xf32>
    tpu.vector_store %arg12[%c200, %c0_83], %108 {strides = array<i32>} : memref<324x64xf32, #tpu.memory_space<vmem>>, vector<14x64xf32>,
    %110 = vector.extract_strided_slice %89 {offsets = [160, 0], sizes = [14, 64], strides = [1, 1]} : vector<224x64xf32> to vector<14x64xf32>
    %c218 = arith.constant 218 : index
    %c0_84 = arith.constant 0 : index
    %111 = vector.load %arg12[%c218, %c0_84] : memref<324x64xf32, #tpu.memory_space<vmem>>, vector<14x64xf32>
    tpu.vector_store %arg12[%c218, %c0_84], %110 {strides = array<i32>} : memref<324x64xf32, #tpu.memory_space<vmem>>, vector<14x64xf32>,
    %112 = vector.extract_strided_slice %89 {offsets = [176, 0], sizes = [14, 64], strides = [1, 1]} : vector<224x64xf32> to vector<14x64xf32>
    %c236 = arith.constant 236 : index
    %c0_85 = arith.constant 0 : index
    %113 = vector.load %arg12[%c236, %c0_85] : memref<324x64xf32, #tpu.memory_space<vmem>>, vector<14x64xf32>
    tpu.vector_store %arg12[%c236, %c0_85], %112 {strides = array<i32>} : memref<324x64xf32, #tpu.memory_space<vmem>>, vector<14x64xf32>,
    %114 = vector.extract_strided_slice %89 {offsets = [192, 0], sizes = [14, 64], strides = [1, 1]} : vector<224x64xf32> to vector<14x64xf32>
    %c254 = arith.constant 254 : index
    %c0_86 = arith.constant 0 : index
    %115 = vector.load %arg12[%c254, %c0_86] : memref<324x64xf32, #tpu.memory_space<vmem>>, vector<14x64xf32>
    tpu.vector_store %arg12[%c254, %c0_86], %114 {strides = array<i32>} : memref<324x64xf32, #tpu.memory_space<vmem>>, vector<14x64xf32>,
    %116 = vector.extract_strided_slice %89 {offsets = [208, 0], sizes = [14, 64], strides = [1, 1]} : vector<224x64xf32> to vector<14x64xf32>
    %c272 = arith.constant 272 : index
    %c0_87 = arith.constant 0 : index
    %117 = vector.load %arg12[%c272, %c0_87] : memref<324x64xf32, #tpu.memory_space<vmem>>, vector<14x64xf32>
    tpu.vector_store %arg12[%c272, %c0_87], %116 {strides = array<i32>} : memref<324x64xf32, #tpu.memory_space<vmem>>, vector<14x64xf32>,
    %c0_88 = arith.constant 0 : index
    %c0_89 = arith.constant 0 : index
    %118 = vector.load %arg12[%c0_88, %c0_89] : memref<324x64xf32, #tpu.memory_space<vmem>>, vector<324x64xf32>
    %c0_90 = arith.constant 0 : index
    %c0_91 = arith.constant 0 : index
    %119 = vector.load %arg6[%c0_90, %c0_91] : memref<64x32xf32, #tpu.memory_space<vmem>>, vector<64x32xf32>
    %cst_92 = arith.constant dense<0.000000e+00> : vector<324x32xf32>
    %120 = tpu.matmul %118, %119, %cst_92 {dimension_numbers = #tpu.dot_dimension_numbers<[1], [0], [0], [1], [0, 0, 1, 1], [], []>} : vector<324x64xf32>, vector<64x32xf32>, vector<324x32xf32> -> vector<324x32xf32>
    %c0_93 = arith.constant 0 : index
    %c0_94 = arith.constant 0 : index
    %121 = vector.load %arg7[%c0_93, %c0_94] : memref<1x32xf32, #tpu.memory_space<vmem>>, vector<1x32xf32>
    %122 = vector.broadcast %121 : vector<1x32xf32> to vector<324x32xf32>
    %123 = arith.addf %120, %122 : vector<324x32xf32>
    %cst_95 = arith.constant 0.000000e+00 : f32
    %124 = vector.broadcast %cst_95 : f32 to vector<324x32xf32>
    %125 = arith.maximumf %123, %124 : vector<324x32xf32>
    %126 = vector.extract_strided_slice %125 {offsets = [0, 0], sizes = [18, 32], strides = [1, 1]} : vector<324x32xf32> to vector<18x32xf32>
    %c21 = arith.constant 21 : index
    %c0_96 = arith.constant 0 : index
    %127 = vector.load %arg13[%c21, %c0_96] : memref<404x32xf32, #tpu.memory_space<vmem>>, vector<18x32xf32>
    tpu.vector_store %arg13[%c21, %c0_96], %126 {strides = array<i32>} : memref<404x32xf32, #tpu.memory_space<vmem>>, vector<18x32xf32>,
    %128 = vector.extract_strided_slice %125 {offsets = [18, 0], sizes = [18, 32], strides = [1, 1]} : vector<324x32xf32> to vector<18x32xf32>
    %c41 = arith.constant 41 : index
    %c0_97 = arith.constant 0 : index
    %129 = vector.load %arg13[%c41, %c0_97] : memref<404x32xf32, #tpu.memory_space<vmem>>, vector<18x32xf32>
    tpu.vector_store %arg13[%c41, %c0_97], %128 {strides = array<i32>} : memref<404x32xf32, #tpu.memory_space<vmem>>, vector<18x32xf32>,
    %130 = vector.extract_strided_slice %125 {offsets = [36, 0], sizes = [18, 32], strides = [1, 1]} : vector<324x32xf32> to vector<18x32xf32>
    %c61 = arith.constant 61 : index
    %c0_98 = arith.constant 0 : index
    %131 = vector.load %arg13[%c61, %c0_98] : memref<404x32xf32, #tpu.memory_space<vmem>>, vector<18x32xf32>
    tpu.vector_store %arg13[%c61, %c0_98], %130 {strides = array<i32>} : memref<404x32xf32, #tpu.memory_space<vmem>>, vector<18x32xf32>,
    %132 = vector.extract_strided_slice %125 {offsets = [54, 0], sizes = [18, 32], strides = [1, 1]} : vector<324x32xf32> to vector<18x32xf32>
    %c81 = arith.constant 81 : index
    %c0_99 = arith.constant 0 : index
    %133 = vector.load %arg13[%c81, %c0_99] : memref<404x32xf32, #tpu.memory_space<vmem>>, vector<18x32xf32>
    tpu.vector_store %arg13[%c81, %c0_99], %132 {strides = array<i32>} : memref<404x32xf32, #tpu.memory_space<vmem>>, vector<18x32xf32>,
    %134 = vector.extract_strided_slice %125 {offsets = [72, 0], sizes = [18, 32], strides = [1, 1]} : vector<324x32xf32> to vector<18x32xf32>
    %c101 = arith.constant 101 : index
    %c0_100 = arith.constant 0 : index
    %135 = vector.load %arg13[%c101, %c0_100] : memref<404x32xf32, #tpu.memory_space<vmem>>, vector<18x32xf32>
    tpu.vector_store %arg13[%c101, %c0_100], %134 {strides = array<i32>} : memref<404x32xf32, #tpu.memory_space<vmem>>, vector<18x32xf32>,
    %136 = vector.extract_strided_slice %125 {offsets = [90, 0], sizes = [18, 32], strides = [1, 1]} : vector<324x32xf32> to vector<18x32xf32>
    %c121 = arith.constant 121 : index
    %c0_101 = arith.constant 0 : index
    %137 = vector.load %arg13[%c121, %c0_101] : memref<404x32xf32, #tpu.memory_space<vmem>>, vector<18x32xf32>
    tpu.vector_store %arg13[%c121, %c0_101], %136 {strides = array<i32>} : memref<404x32xf32, #tpu.memory_space<vmem>>, vector<18x32xf32>,
    %138 = vector.extract_strided_slice %125 {offsets = [108, 0], sizes = [18, 32], strides = [1, 1]} : vector<324x32xf32> to vector<18x32xf32>
    %c141 = arith.constant 141 : index
    %c0_102 = arith.constant 0 : index
    %139 = vector.load %arg13[%c141, %c0_102] : memref<404x32xf32, #tpu.memory_space<vmem>>, vector<18x32xf32>
    tpu.vector_store %arg13[%c141, %c0_102], %138 {strides = array<i32>} : memref<404x32xf32, #tpu.memory_space<vmem>>, vector<18x32xf32>,
    %140 = vector.extract_strided_slice %125 {offsets = [126, 0], sizes = [18, 32], strides = [1, 1]} : vector<324x32xf32> to vector<18x32xf32>
    %c161 = arith.constant 161 : index
    %c0_103 = arith.constant 0 : index
    %141 = vector.load %arg13[%c161, %c0_103] : memref<404x32xf32, #tpu.memory_space<vmem>>, vector<18x32xf32>
    tpu.vector_store %arg13[%c161, %c0_103], %140 {strides = array<i32>} : memref<404x32xf32, #tpu.memory_space<vmem>>, vector<18x32xf32>,
    %142 = vector.extract_strided_slice %125 {offsets = [144, 0], sizes = [18, 32], strides = [1, 1]} : vector<324x32xf32> to vector<18x32xf32>
    %c181 = arith.constant 181 : index
    %c0_104 = arith.constant 0 : index
    %143 = vector.load %arg13[%c181, %c0_104] : memref<404x32xf32, #tpu.memory_space<vmem>>, vector<18x32xf32>
    tpu.vector_store %arg13[%c181, %c0_104], %142 {strides = array<i32>} : memref<404x32xf32, #tpu.memory_space<vmem>>, vector<18x32xf32>,
    %144 = vector.extract_strided_slice %125 {offsets = [162, 0], sizes = [18, 32], strides = [1, 1]} : vector<324x32xf32> to vector<18x32xf32>
    %c201 = arith.constant 201 : index
    %c0_105 = arith.constant 0 : index
    %145 = vector.load %arg13[%c201, %c0_105] : memref<404x32xf32, #tpu.memory_space<vmem>>, vector<18x32xf32>
    tpu.vector_store %arg13[%c201, %c0_105], %144 {strides = array<i32>} : memref<404x32xf32, #tpu.memory_space<vmem>>, vector<18x32xf32>,
    %146 = vector.extract_strided_slice %125 {offsets = [180, 0], sizes = [18, 32], strides = [1, 1]} : vector<324x32xf32> to vector<18x32xf32>
    %c221 = arith.constant 221 : index
    %c0_106 = arith.constant 0 : index
    %147 = vector.load %arg13[%c221, %c0_106] : memref<404x32xf32, #tpu.memory_space<vmem>>, vector<18x32xf32>
    tpu.vector_store %arg13[%c221, %c0_106], %146 {strides = array<i32>} : memref<404x32xf32, #tpu.memory_space<vmem>>, vector<18x32xf32>,
    %148 = vector.extract_strided_slice %125 {offsets = [198, 0], sizes = [18, 32], strides = [1, 1]} : vector<324x32xf32> to vector<18x32xf32>
    %c241 = arith.constant 241 : index
    %c0_107 = arith.constant 0 : index
    %149 = vector.load %arg13[%c241, %c0_107] : memref<404x32xf32, #tpu.memory_space<vmem>>, vector<18x32xf32>
    tpu.vector_store %arg13[%c241, %c0_107], %148 {strides = array<i32>} : memref<404x32xf32, #tpu.memory_space<vmem>>, vector<18x32xf32>,
    %150 = vector.extract_strided_slice %125 {offsets = [216, 0], sizes = [18, 32], strides = [1, 1]} : vector<324x32xf32> to vector<18x32xf32>
    %c261 = arith.constant 261 : index
    %c0_108 = arith.constant 0 : index
    %151 = vector.load %arg13[%c261, %c0_108] : memref<404x32xf32, #tpu.memory_space<vmem>>, vector<18x32xf32>
    tpu.vector_store %arg13[%c261, %c0_108], %150 {strides = array<i32>} : memref<404x32xf32, #tpu.memory_space<vmem>>, vector<18x32xf32>,
    %152 = vector.extract_strided_slice %125 {offsets = [234, 0], sizes = [18, 32], strides = [1, 1]} : vector<324x32xf32> to vector<18x32xf32>
    %c281 = arith.constant 281 : index
    %c0_109 = arith.constant 0 : index
    %153 = vector.load %arg13[%c281, %c0_109] : memref<404x32xf32, #tpu.memory_space<vmem>>, vector<18x32xf32>
    tpu.vector_store %arg13[%c281, %c0_109], %152 {strides = array<i32>} : memref<404x32xf32, #tpu.memory_space<vmem>>, vector<18x32xf32>,
    %154 = vector.extract_strided_slice %125 {offsets = [252, 0], sizes = [18, 32], strides = [1, 1]} : vector<324x32xf32> to vector<18x32xf32>
    %c301 = arith.constant 301 : index
    %c0_110 = arith.constant 0 : index
    %155 = vector.load %arg13[%c301, %c0_110] : memref<404x32xf32, #tpu.memory_space<vmem>>, vector<18x32xf32>
    tpu.vector_store %arg13[%c301, %c0_110], %154 {strides = array<i32>} : memref<404x32xf32, #tpu.memory_space<vmem>>, vector<18x32xf32>,
    %156 = vector.extract_strided_slice %125 {offsets = [270, 0], sizes = [18, 32], strides = [1, 1]} : vector<324x32xf32> to vector<18x32xf32>
    %c321 = arith.constant 321 : index
    %c0_111 = arith.constant 0 : index
    %157 = vector.load %arg13[%c321, %c0_111] : memref<404x32xf32, #tpu.memory_space<vmem>>, vector<18x32xf32>
    tpu.vector_store %arg13[%c321, %c0_111], %156 {strides = array<i32>} : memref<404x32xf32, #tpu.memory_space<vmem>>, vector<18x32xf32>,
    %158 = vector.extract_strided_slice %125 {offsets = [288, 0], sizes = [18, 32], strides = [1, 1]} : vector<324x32xf32> to vector<18x32xf32>
    %c341 = arith.constant 341 : index
    %c0_112 = arith.constant 0 : index
    %159 = vector.load %arg13[%c341, %c0_112] : memref<404x32xf32, #tpu.memory_space<vmem>>, vector<18x32xf32>
    tpu.vector_store %arg13[%c341, %c0_112], %158 {strides = array<i32>} : memref<404x32xf32, #tpu.memory_space<vmem>>, vector<18x32xf32>,
    %160 = vector.extract_strided_slice %125 {offsets = [306, 0], sizes = [18, 32], strides = [1, 1]} : vector<324x32xf32> to vector<18x32xf32>
    %c361 = arith.constant 361 : index
    %c0_113 = arith.constant 0 : index
    %161 = vector.load %arg13[%c361, %c0_113] : memref<404x32xf32, #tpu.memory_space<vmem>>, vector<18x32xf32>
    tpu.vector_store %arg13[%c361, %c0_113], %160 {strides = array<i32>} : memref<404x32xf32, #tpu.memory_space<vmem>>, vector<18x32xf32>,
    %cst_114 = arith.constant 0.000000e+00 : f32
    %162 = vector.broadcast %cst_114 : f32 to vector<320x128xf32>
    %c0_115 = arith.constant 0 : index
    %c0_116 = arith.constant 0 : index
    %163 = vector.load %arg13[%c0_115, %c0_116] : memref<404x32xf32, #tpu.memory_space<vmem>>, vector<320x32xf32>
    %c0_117 = arith.constant 0 : index
    %c0_118 = arith.constant 0 : index
    %c0_119 = arith.constant 0 : index
    %164 = vector.load %arg8[%c0_117, %c0_118, %c0_119] : memref<25x32x128xf32, #tpu.memory_space<vmem>>, vector<1x32x128xf32>
    %165 = vector.shape_cast %164 : vector<1x32x128xf32> to vector<32x128xf32>
    %cst_120 = arith.constant dense<0.000000e+00> : vector<320x128xf32>
    %166 = tpu.matmul %163, %165, %cst_120 {dimension_numbers = #tpu.dot_dimension_numbers<[1], [0], [0], [1], [0, 0, 1, 1], [], []>} : vector<320x32xf32>, vector<32x128xf32>, vector<320x128xf32> -> vector<320x128xf32>
    %167 = arith.addf %162, %166 : vector<320x128xf32>
    %c1_121 = arith.constant 1 : index
    %c0_122 = arith.constant 0 : index
    %168 = vector.load %arg13[%c1_121, %c0_122] : memref<404x32xf32, #tpu.memory_space<vmem>>, vector<320x32xf32>
    %c1_123 = arith.constant 1 : index
    %c0_124 = arith.constant 0 : index
    %c0_125 = arith.constant 0 : index
    %169 = vector.load %arg8[%c1_123, %c0_124, %c0_125] : memref<25x32x128xf32, #tpu.memory_space<vmem>>, vector<1x32x128xf32>
    %170 = vector.shape_cast %169 : vector<1x32x128xf32> to vector<32x128xf32>
    %cst_126 = arith.constant dense<0.000000e+00> : vector<320x128xf32>
    %171 = tpu.matmul %168, %170, %cst_126 {dimension_numbers = #tpu.dot_dimension_numbers<[1], [0], [0], [1], [0, 0, 1, 1], [], []>} : vector<320x32xf32>, vector<32x128xf32>, vector<320x128xf32> -> vector<320x128xf32>
    %172 = arith.addf %167, %171 : vector<320x128xf32>
    %c2_127 = arith.constant 2 : index
    %c0_128 = arith.constant 0 : index
    %173 = vector.load %arg13[%c2_127, %c0_128] : memref<404x32xf32, #tpu.memory_space<vmem>>, vector<320x32xf32>
    %c2_129 = arith.constant 2 : index
    %c0_130 = arith.constant 0 : index
    %c0_131 = arith.constant 0 : index
    %174 = vector.load %arg8[%c2_129, %c0_130, %c0_131] : memref<25x32x128xf32, #tpu.memory_space<vmem>>, vector<1x32x128xf32>
    %175 = vector.shape_cast %174 : vector<1x32x128xf32> to vector<32x128xf32>
    %cst_132 = arith.constant dense<0.000000e+00> : vector<320x128xf32>
    %176 = tpu.matmul %173, %175, %cst_132 {dimension_numbers = #tpu.dot_dimension_numbers<[1], [0], [0], [1], [0, 0, 1, 1], [], []>} : vector<320x32xf32>, vector<32x128xf32>, vector<320x128xf32> -> vector<320x128xf32>
    %177 = arith.addf %172, %176 : vector<320x128xf32>
    %c3_133 = arith.constant 3 : index
    %c0_134 = arith.constant 0 : index
    %178 = vector.load %arg13[%c3_133, %c0_134] : memref<404x32xf32, #tpu.memory_space<vmem>>, vector<320x32xf32>
    %c3_135 = arith.constant 3 : index
    %c0_136 = arith.constant 0 : index
    %c0_137 = arith.constant 0 : index
    %179 = vector.load %arg8[%c3_135, %c0_136, %c0_137] : memref<25x32x128xf32, #tpu.memory_space<vmem>>, vector<1x32x128xf32>
    %180 = vector.shape_cast %179 : vector<1x32x128xf32> to vector<32x128xf32>
    %cst_138 = arith.constant dense<0.000000e+00> : vector<320x128xf32>
    %181 = tpu.matmul %178, %180, %cst_138 {dimension_numbers = #tpu.dot_dimension_numbers<[1], [0], [0], [1], [0, 0, 1, 1], [], []>} : vector<320x32xf32>, vector<32x128xf32>, vector<320x128xf32> -> vector<320x128xf32>
    %182 = arith.addf %177, %181 : vector<320x128xf32>
    %c4_139 = arith.constant 4 : index
    %c0_140 = arith.constant 0 : index
    %183 = vector.load %arg13[%c4_139, %c0_140] : memref<404x32xf32, #tpu.memory_space<vmem>>, vector<320x32xf32>
    %c4_141 = arith.constant 4 : index
    %c0_142 = arith.constant 0 : index
    %c0_143 = arith.constant 0 : index
    %184 = vector.load %arg8[%c4_141, %c0_142, %c0_143] : memref<25x32x128xf32, #tpu.memory_space<vmem>>, vector<1x32x128xf32>
    %185 = vector.shape_cast %184 : vector<1x32x128xf32> to vector<32x128xf32>
    %cst_144 = arith.constant dense<0.000000e+00> : vector<320x128xf32>
    %186 = tpu.matmul %183, %185, %cst_144 {dimension_numbers = #tpu.dot_dimension_numbers<[1], [0], [0], [1], [0, 0, 1, 1], [], []>} : vector<320x32xf32>, vector<32x128xf32>, vector<320x128xf32> -> vector<320x128xf32>
    %187 = arith.addf %182, %186 : vector<320x128xf32>
    %c20 = arith.constant 20 : index
    %c0_145 = arith.constant 0 : index
    %188 = vector.load %arg13[%c20, %c0_145] : memref<404x32xf32, #tpu.memory_space<vmem>>, vector<320x32xf32>
    %c5_146 = arith.constant 5 : index
    %c0_147 = arith.constant 0 : index
    %c0_148 = arith.constant 0 : index
    %189 = vector.load %arg8[%c5_146, %c0_147, %c0_148] : memref<25x32x128xf32, #tpu.memory_space<vmem>>, vector<1x32x128xf32>
    %190 = vector.shape_cast %189 : vector<1x32x128xf32> to vector<32x128xf32>
    %cst_149 = arith.constant dense<0.000000e+00> : vector<320x128xf32>
    %191 = tpu.matmul %188, %190, %cst_149 {dimension_numbers = #tpu.dot_dimension_numbers<[1], [0], [0], [1], [0, 0, 1, 1], [], []>} : vector<320x32xf32>, vector<32x128xf32>, vector<320x128xf32> -> vector<320x128xf32>
    %192 = arith.addf %187, %191 : vector<320x128xf32>
    %c21_150 = arith.constant 21 : index
    %c0_151 = arith.constant 0 : index
    %193 = vector.load %arg13[%c21_150, %c0_151] : memref<404x32xf32, #tpu.memory_space<vmem>>, vector<320x32xf32>
    %c6_152 = arith.constant 6 : index
    %c0_153 = arith.constant 0 : index
    %c0_154 = arith.constant 0 : index
    %194 = vector.load %arg8[%c6_152, %c0_153, %c0_154] : memref<25x32x128xf32, #tpu.memory_space<vmem>>, vector<1x32x128xf32>
    %195 = vector.shape_cast %194 : vector<1x32x128xf32> to vector<32x128xf32>
    %cst_155 = arith.constant dense<0.000000e+00> : vector<320x128xf32>
    %196 = tpu.matmul %193, %195, %cst_155 {dimension_numbers = #tpu.dot_dimension_numbers<[1], [0], [0], [1], [0, 0, 1, 1], [], []>} : vector<320x32xf32>, vector<32x128xf32>, vector<320x128xf32> -> vector<320x128xf32>
    %197 = arith.addf %192, %196 : vector<320x128xf32>
    %c22 = arith.constant 22 : index
    %c0_156 = arith.constant 0 : index
    %198 = vector.load %arg13[%c22, %c0_156] : memref<404x32xf32, #tpu.memory_space<vmem>>, vector<320x32xf32>
    %c7_157 = arith.constant 7 : index
    %c0_158 = arith.constant 0 : index
    %c0_159 = arith.constant 0 : index
    %199 = vector.load %arg8[%c7_157, %c0_158, %c0_159] : memref<25x32x128xf32, #tpu.memory_space<vmem>>, vector<1x32x128xf32>
    %200 = vector.shape_cast %199 : vector<1x32x128xf32> to vector<32x128xf32>
    %cst_160 = arith.constant dense<0.000000e+00> : vector<320x128xf32>
    %201 = tpu.matmul %198, %200, %cst_160 {dimension_numbers = #tpu.dot_dimension_numbers<[1], [0], [0], [1], [0, 0, 1, 1], [], []>} : vector<320x32xf32>, vector<32x128xf32>, vector<320x128xf32> -> vector<320x128xf32>
    %202 = arith.addf %197, %201 : vector<320x128xf32>
    %c23 = arith.constant 23 : index
    %c0_161 = arith.constant 0 : index
    %203 = vector.load %arg13[%c23, %c0_161] : memref<404x32xf32, #tpu.memory_space<vmem>>, vector<320x32xf32>
    %c8_162 = arith.constant 8 : index
    %c0_163 = arith.constant 0 : index
    %c0_164 = arith.constant 0 : index
    %204 = vector.load %arg8[%c8_162, %c0_163, %c0_164] : memref<25x32x128xf32, #tpu.memory_space<vmem>>, vector<1x32x128xf32>
    %205 = vector.shape_cast %204 : vector<1x32x128xf32> to vector<32x128xf32>
    %cst_165 = arith.constant dense<0.000000e+00> : vector<320x128xf32>
    %206 = tpu.matmul %203, %205, %cst_165 {dimension_numbers = #tpu.dot_dimension_numbers<[1], [0], [0], [1], [0, 0, 1, 1], [], []>} : vector<320x32xf32>, vector<32x128xf32>, vector<320x128xf32> -> vector<320x128xf32>
    %207 = arith.addf %202, %206 : vector<320x128xf32>
    %c24 = arith.constant 24 : index
    %c0_166 = arith.constant 0 : index
    %208 = vector.load %arg13[%c24, %c0_166] : memref<404x32xf32, #tpu.memory_space<vmem>>, vector<320x32xf32>
    %c9 = arith.constant 9 : index
    %c0_167 = arith.constant 0 : index
    %c0_168 = arith.constant 0 : index
    %209 = vector.load %arg8[%c9, %c0_167, %c0_168] : memref<25x32x128xf32, #tpu.memory_space<vmem>>, vector<1x32x128xf32>
    %210 = vector.shape_cast %209 : vector<1x32x128xf32> to vector<32x128xf32>
    %cst_169 = arith.constant dense<0.000000e+00> : vector<320x128xf32>
    %211 = tpu.matmul %208, %210, %cst_169 {dimension_numbers = #tpu.dot_dimension_numbers<[1], [0], [0], [1], [0, 0, 1, 1], [], []>} : vector<320x32xf32>, vector<32x128xf32>, vector<320x128xf32> -> vector<320x128xf32>
    %212 = arith.addf %207, %211 : vector<320x128xf32>
    %c40 = arith.constant 40 : index
    %c0_170 = arith.constant 0 : index
    %213 = vector.load %arg13[%c40, %c0_170] : memref<404x32xf32, #tpu.memory_space<vmem>>, vector<320x32xf32>
    %c10 = arith.constant 10 : index
    %c0_171 = arith.constant 0 : index
    %c0_172 = arith.constant 0 : index
    %214 = vector.load %arg8[%c10, %c0_171, %c0_172] : memref<25x32x128xf32, #tpu.memory_space<vmem>>, vector<1x32x128xf32>
    %215 = vector.shape_cast %214 : vector<1x32x128xf32> to vector<32x128xf32>
    %cst_173 = arith.constant dense<0.000000e+00> : vector<320x128xf32>
    %216 = tpu.matmul %213, %215, %cst_173 {dimension_numbers = #tpu.dot_dimension_numbers<[1], [0], [0], [1], [0, 0, 1, 1], [], []>} : vector<320x32xf32>, vector<32x128xf32>, vector<320x128xf32> -> vector<320x128xf32>
    %217 = arith.addf %212, %216 : vector<320x128xf32>
    %c41_174 = arith.constant 41 : index
    %c0_175 = arith.constant 0 : index
    %218 = vector.load %arg13[%c41_174, %c0_175] : memref<404x32xf32, #tpu.memory_space<vmem>>, vector<320x32xf32>
    %c11 = arith.constant 11 : index
    %c0_176 = arith.constant 0 : index
    %c0_177 = arith.constant 0 : index
    %219 = vector.load %arg8[%c11, %c0_176, %c0_177] : memref<25x32x128xf32, #tpu.memory_space<vmem>>, vector<1x32x128xf32>
    %220 = vector.shape_cast %219 : vector<1x32x128xf32> to vector<32x128xf32>
    %cst_178 = arith.constant dense<0.000000e+00> : vector<320x128xf32>
    %221 = tpu.matmul %218, %220, %cst_178 {dimension_numbers = #tpu.dot_dimension_numbers<[1], [0], [0], [1], [0, 0, 1, 1], [], []>} : vector<320x32xf32>, vector<32x128xf32>, vector<320x128xf32> -> vector<320x128xf32>
    %222 = arith.addf %217, %221 : vector<320x128xf32>
    %c42 = arith.constant 42 : index
    %c0_179 = arith.constant 0 : index
    %223 = vector.load %arg13[%c42, %c0_179] : memref<404x32xf32, #tpu.memory_space<vmem>>, vector<320x32xf32>
    %c12 = arith.constant 12 : index
    %c0_180 = arith.constant 0 : index
    %c0_181 = arith.constant 0 : index
    %224 = vector.load %arg8[%c12, %c0_180, %c0_181] : memref<25x32x128xf32, #tpu.memory_space<vmem>>, vector<1x32x128xf32>
    %225 = vector.shape_cast %224 : vector<1x32x128xf32> to vector<32x128xf32>
    %cst_182 = arith.constant dense<0.000000e+00> : vector<320x128xf32>
    %226 = tpu.matmul %223, %225, %cst_182 {dimension_numbers = #tpu.dot_dimension_numbers<[1], [0], [0], [1], [0, 0, 1, 1], [], []>} : vector<320x32xf32>, vector<32x128xf32>, vector<320x128xf32> -> vector<320x128xf32>
    %227 = arith.addf %222, %226 : vector<320x128xf32>
    %c43 = arith.constant 43 : index
    %c0_183 = arith.constant 0 : index
    %228 = vector.load %arg13[%c43, %c0_183] : memref<404x32xf32, #tpu.memory_space<vmem>>, vector<320x32xf32>
    %c13 = arith.constant 13 : index
    %c0_184 = arith.constant 0 : index
    %c0_185 = arith.constant 0 : index
    %229 = vector.load %arg8[%c13, %c0_184, %c0_185] : memref<25x32x128xf32, #tpu.memory_space<vmem>>, vector<1x32x128xf32>
    %230 = vector.shape_cast %229 : vector<1x32x128xf32> to vector<32x128xf32>
    %cst_186 = arith.constant dense<0.000000e+00> : vector<320x128xf32>
    %231 = tpu.matmul %228, %230, %cst_186 {dimension_numbers = #tpu.dot_dimension_numbers<[1], [0], [0], [1], [0, 0, 1, 1], [], []>} : vector<320x32xf32>, vector<32x128xf32>, vector<320x128xf32> -> vector<320x128xf32>
    %232 = arith.addf %227, %231 : vector<320x128xf32>
    %c44 = arith.constant 44 : index
    %c0_187 = arith.constant 0 : index
    %233 = vector.load %arg13[%c44, %c0_187] : memref<404x32xf32, #tpu.memory_space<vmem>>, vector<320x32xf32>
    %c14 = arith.constant 14 : index
    %c0_188 = arith.constant 0 : index
    %c0_189 = arith.constant 0 : index
    %234 = vector.load %arg8[%c14, %c0_188, %c0_189] : memref<25x32x128xf32, #tpu.memory_space<vmem>>, vector<1x32x128xf32>
    %235 = vector.shape_cast %234 : vector<1x32x128xf32> to vector<32x128xf32>
    %cst_190 = arith.constant dense<0.000000e+00> : vector<320x128xf32>
    %236 = tpu.matmul %233, %235, %cst_190 {dimension_numbers = #tpu.dot_dimension_numbers<[1], [0], [0], [1], [0, 0, 1, 1], [], []>} : vector<320x32xf32>, vector<32x128xf32>, vector<320x128xf32> -> vector<320x128xf32>
    %237 = arith.addf %232, %236 : vector<320x128xf32>
    %c60 = arith.constant 60 : index
    %c0_191 = arith.constant 0 : index
    %238 = vector.load %arg13[%c60, %c0_191] : memref<404x32xf32, #tpu.memory_space<vmem>>, vector<320x32xf32>
    %c15 = arith.constant 15 : index
    %c0_192 = arith.constant 0 : index
    %c0_193 = arith.constant 0 : index
    %239 = vector.load %arg8[%c15, %c0_192, %c0_193] : memref<25x32x128xf32, #tpu.memory_space<vmem>>, vector<1x32x128xf32>
    %240 = vector.shape_cast %239 : vector<1x32x128xf32> to vector<32x128xf32>
    %cst_194 = arith.constant dense<0.000000e+00> : vector<320x128xf32>
    %241 = tpu.matmul %238, %240, %cst_194 {dimension_numbers = #tpu.dot_dimension_numbers<[1], [0], [0], [1], [0, 0, 1, 1], [], []>} : vector<320x32xf32>, vector<32x128xf32>, vector<320x128xf32> -> vector<320x128xf32>
    %242 = arith.addf %237, %241 : vector<320x128xf32>
    %c61_195 = arith.constant 61 : index
    %c0_196 = arith.constant 0 : index
    %243 = vector.load %arg13[%c61_195, %c0_196] : memref<404x32xf32, #tpu.memory_space<vmem>>, vector<320x32xf32>
    %c16_197 = arith.constant 16 : index
    %c0_198 = arith.constant 0 : index
    %c0_199 = arith.constant 0 : index
    %244 = vector.load %arg8[%c16_197, %c0_198, %c0_199] : memref<25x32x128xf32, #tpu.memory_space<vmem>>, vector<1x32x128xf32>
    %245 = vector.shape_cast %244 : vector<1x32x128xf32> to vector<32x128xf32>
    %cst_200 = arith.constant dense<0.000000e+00> : vector<320x128xf32>
    %246 = tpu.matmul %243, %245, %cst_200 {dimension_numbers = #tpu.dot_dimension_numbers<[1], [0], [0], [1], [0, 0, 1, 1], [], []>} : vector<320x32xf32>, vector<32x128xf32>, vector<320x128xf32> -> vector<320x128xf32>
    %247 = arith.addf %242, %246 : vector<320x128xf32>
    %c62 = arith.constant 62 : index
    %c0_201 = arith.constant 0 : index
    %248 = vector.load %arg13[%c62, %c0_201] : memref<404x32xf32, #tpu.memory_space<vmem>>, vector<320x32xf32>
    %c17_202 = arith.constant 17 : index
    %c0_203 = arith.constant 0 : index
    %c0_204 = arith.constant 0 : index
    %249 = vector.load %arg8[%c17_202, %c0_203, %c0_204] : memref<25x32x128xf32, #tpu.memory_space<vmem>>, vector<1x32x128xf32>
    %250 = vector.shape_cast %249 : vector<1x32x128xf32> to vector<32x128xf32>
    %cst_205 = arith.constant dense<0.000000e+00> : vector<320x128xf32>
    %251 = tpu.matmul %248, %250, %cst_205 {dimension_numbers = #tpu.dot_dimension_numbers<[1], [0], [0], [1], [0, 0, 1, 1], [], []>} : vector<320x32xf32>, vector<32x128xf32>, vector<320x128xf32> -> vector<320x128xf32>
    %252 = arith.addf %247, %251 : vector<320x128xf32>
    %c63 = arith.constant 63 : index
    %c0_206 = arith.constant 0 : index
    %253 = vector.load %arg13[%c63, %c0_206] : memref<404x32xf32, #tpu.memory_space<vmem>>, vector<320x32xf32>
    %c18_207 = arith.constant 18 : index
    %c0_208 = arith.constant 0 : index
    %c0_209 = arith.constant 0 : index
    %254 = vector.load %arg8[%c18_207, %c0_208, %c0_209] : memref<25x32x128xf32, #tpu.memory_space<vmem>>, vector<1x32x128xf32>
    %255 = vector.shape_cast %254 : vector<1x32x128xf32> to vector<32x128xf32>
    %cst_210 = arith.constant dense<0.000000e+00> : vector<320x128xf32>
    %256 = tpu.matmul %253, %255, %cst_210 {dimension_numbers = #tpu.dot_dimension_numbers<[1], [0], [0], [1], [0, 0, 1, 1], [], []>} : vector<320x32xf32>, vector<32x128xf32>, vector<320x128xf32> -> vector<320x128xf32>
    %257 = arith.addf %252, %256 : vector<320x128xf32>
    %c64 = arith.constant 64 : index
    %c0_211 = arith.constant 0 : index
    %258 = vector.load %arg13[%c64, %c0_211] : memref<404x32xf32, #tpu.memory_space<vmem>>, vector<320x32xf32>
    %c19 = arith.constant 19 : index
    %c0_212 = arith.constant 0 : index
    %c0_213 = arith.constant 0 : index
    %259 = vector.load %arg8[%c19, %c0_212, %c0_213] : memref<25x32x128xf32, #tpu.memory_space<vmem>>, vector<1x32x128xf32>
    %260 = vector.shape_cast %259 : vector<1x32x128xf32> to vector<32x128xf32>
    %cst_214 = arith.constant dense<0.000000e+00> : vector<320x128xf32>
    %261 = tpu.matmul %258, %260, %cst_214 {dimension_numbers = #tpu.dot_dimension_numbers<[1], [0], [0], [1], [0, 0, 1, 1], [], []>} : vector<320x32xf32>, vector<32x128xf32>, vector<320x128xf32> -> vector<320x128xf32>
    %262 = arith.addf %257, %261 : vector<320x128xf32>
    %c80 = arith.constant 80 : index
    %c0_215 = arith.constant 0 : index
    %263 = vector.load %arg13[%c80, %c0_215] : memref<404x32xf32, #tpu.memory_space<vmem>>, vector<320x32xf32>
    %c20_216 = arith.constant 20 : index
    %c0_217 = arith.constant 0 : index
    %c0_218 = arith.constant 0 : index
    %264 = vector.load %arg8[%c20_216, %c0_217, %c0_218] : memref<25x32x128xf32, #tpu.memory_space<vmem>>, vector<1x32x128xf32>
    %265 = vector.shape_cast %264 : vector<1x32x128xf32> to vector<32x128xf32>
    %cst_219 = arith.constant dense<0.000000e+00> : vector<320x128xf32>
    %266 = tpu.matmul %263, %265, %cst_219 {dimension_numbers = #tpu.dot_dimension_numbers<[1], [0], [0], [1], [0, 0, 1, 1], [], []>} : vector<320x32xf32>, vector<32x128xf32>, vector<320x128xf32> -> vector<320x128xf32>
    %267 = arith.addf %262, %266 : vector<320x128xf32>
    %c81_220 = arith.constant 81 : index
    %c0_221 = arith.constant 0 : index
    %268 = vector.load %arg13[%c81_220, %c0_221] : memref<404x32xf32, #tpu.memory_space<vmem>>, vector<320x32xf32>
    %c21_222 = arith.constant 21 : index
    %c0_223 = arith.constant 0 : index
    %c0_224 = arith.constant 0 : index
    %269 = vector.load %arg8[%c21_222, %c0_223, %c0_224] : memref<25x32x128xf32, #tpu.memory_space<vmem>>, vector<1x32x128xf32>
    %270 = vector.shape_cast %269 : vector<1x32x128xf32> to vector<32x128xf32>
    %cst_225 = arith.constant dense<0.000000e+00> : vector<320x128xf32>
    %271 = tpu.matmul %268, %270, %cst_225 {dimension_numbers = #tpu.dot_dimension_numbers<[1], [0], [0], [1], [0, 0, 1, 1], [], []>} : vector<320x32xf32>, vector<32x128xf32>, vector<320x128xf32> -> vector<320x128xf32>
    %272 = arith.addf %267, %271 : vector<320x128xf32>
    %c82_226 = arith.constant 82 : index
    %c0_227 = arith.constant 0 : index
    %273 = vector.load %arg13[%c82_226, %c0_227] : memref<404x32xf32, #tpu.memory_space<vmem>>, vector<320x32xf32>
    %c22_228 = arith.constant 22 : index
    %c0_229 = arith.constant 0 : index
    %c0_230 = arith.constant 0 : index
    %274 = vector.load %arg8[%c22_228, %c0_229, %c0_230] : memref<25x32x128xf32, #tpu.memory_space<vmem>>, vector<1x32x128xf32>
    %275 = vector.shape_cast %274 : vector<1x32x128xf32> to vector<32x128xf32>
    %cst_231 = arith.constant dense<0.000000e+00> : vector<320x128xf32>
    %276 = tpu.matmul %273, %275, %cst_231 {dimension_numbers = #tpu.dot_dimension_numbers<[1], [0], [0], [1], [0, 0, 1, 1], [], []>} : vector<320x32xf32>, vector<32x128xf32>, vector<320x128xf32> -> vector<320x128xf32>
    %277 = arith.addf %272, %276 : vector<320x128xf32>
    %c83 = arith.constant 83 : index
    %c0_232 = arith.constant 0 : index
    %278 = vector.load %arg13[%c83, %c0_232] : memref<404x32xf32, #tpu.memory_space<vmem>>, vector<320x32xf32>
    %c23_233 = arith.constant 23 : index
    %c0_234 = arith.constant 0 : index
    %c0_235 = arith.constant 0 : index
    %279 = vector.load %arg8[%c23_233, %c0_234, %c0_235] : memref<25x32x128xf32, #tpu.memory_space<vmem>>, vector<1x32x128xf32>
    %280 = vector.shape_cast %279 : vector<1x32x128xf32> to vector<32x128xf32>
    %cst_236 = arith.constant dense<0.000000e+00> : vector<320x128xf32>
    %281 = tpu.matmul %278, %280, %cst_236 {dimension_numbers = #tpu.dot_dimension_numbers<[1], [0], [0], [1], [0, 0, 1, 1], [], []>} : vector<320x32xf32>, vector<32x128xf32>, vector<320x128xf32> -> vector<320x128xf32>
    %282 = arith.addf %277, %281 : vector<320x128xf32>
    %c84 = arith.constant 84 : index
    %c0_237 = arith.constant 0 : index
    %283 = vector.load %arg13[%c84, %c0_237] : memref<404x32xf32, #tpu.memory_space<vmem>>, vector<320x32xf32>
    %c24_238 = arith.constant 24 : index
    %c0_239 = arith.constant 0 : index
    %c0_240 = arith.constant 0 : index
    %284 = vector.load %arg8[%c24_238, %c0_239, %c0_240] : memref<25x32x128xf32, #tpu.memory_space<vmem>>, vector<1x32x128xf32>
    %285 = vector.shape_cast %284 : vector<1x32x128xf32> to vector<32x128xf32>
    %cst_241 = arith.constant dense<0.000000e+00> : vector<320x128xf32>
    %286 = tpu.matmul %283, %285, %cst_241 {dimension_numbers = #tpu.dot_dimension_numbers<[1], [0], [0], [1], [0, 0, 1, 1], [], []>} : vector<320x32xf32>, vector<32x128xf32>, vector<320x128xf32> -> vector<320x128xf32>
    %287 = arith.addf %282, %286 : vector<320x128xf32>
    %c0_242 = arith.constant 0 : index
    %c0_243 = arith.constant 0 : index
    %288 = vector.load %arg9[%c0_242, %c0_243] : memref<1x128xf32, #tpu.memory_space<vmem>>, vector<1x128xf32>
    %289 = vector.broadcast %288 : vector<1x128xf32> to vector<320x128xf32>
    %290 = arith.addf %287, %289 : vector<320x128xf32>
    %291 = vector.extract_strided_slice %290 {offsets = [0, 0], sizes = [16, 128], strides = [1, 1]} : vector<320x128xf32> to vector<16x128xf32>
    %c0_244 = arith.constant 0 : index
    %c0_245 = arith.constant 0 : index
    %c0_246 = arith.constant 0 : index
    %c0_247 = arith.constant 0 : index
    %292 = vector.load %arg10[%c0_244, %c0_245, %c0_246, %c0_247] : memref<1x16x16x128xf32, #tpu.memory_space<vmem>>, vector<1x1x16x128xf32>
    %293 = vector.shape_cast %292 : vector<1x1x16x128xf32> to vector<16x128xf32>
    %294 = vector.shape_cast %291 : vector<16x128xf32> to vector<1x1x16x128xf32>
    tpu.vector_store %arg10[%c0_244, %c0_245, %c0_246, %c0_247], %294 {strides = array<i32>} : memref<1x16x16x128xf32, #tpu.memory_space<vmem>>, vector<1x1x16x128xf32>,
    %295 = vector.extract_strided_slice %290 {offsets = [20, 0], sizes = [16, 128], strides = [1, 1]} : vector<320x128xf32> to vector<16x128xf32>
    %c0_248 = arith.constant 0 : index
    %c1_249 = arith.constant 1 : index
    %c0_250 = arith.constant 0 : index
    %c0_251 = arith.constant 0 : index
    %296 = vector.load %arg10[%c0_248, %c1_249, %c0_250, %c0_251] : memref<1x16x16x128xf32, #tpu.memory_space<vmem>>, vector<1x1x16x128xf32>
    %297 = vector.shape_cast %296 : vector<1x1x16x128xf32> to vector<16x128xf32>
    %298 = vector.shape_cast %295 : vector<16x128xf32> to vector<1x1x16x128xf32>
    tpu.vector_store %arg10[%c0_248, %c1_249, %c0_250, %c0_251], %298 {strides = array<i32>} : memref<1x16x16x128xf32, #tpu.memory_space<vmem>>, vector<1x1x16x128xf32>,
    %299 = vector.extract_strided_slice %290 {offsets = [40, 0], sizes = [16, 128], strides = [1, 1]} : vector<320x128xf32> to vector<16x128xf32>
    %c0_252 = arith.constant 0 : index
    %c2_253 = arith.constant 2 : index
    %c0_254 = arith.constant 0 : index
    %c0_255 = arith.constant 0 : index
    %300 = vector.load %arg10[%c0_252, %c2_253, %c0_254, %c0_255] : memref<1x16x16x128xf32, #tpu.memory_space<vmem>>, vector<1x1x16x128xf32>
    %301 = vector.shape_cast %300 : vector<1x1x16x128xf32> to vector<16x128xf32>
    %302 = vector.shape_cast %299 : vector<16x128xf32> to vector<1x1x16x128xf32>
    tpu.vector_store %arg10[%c0_252, %c2_253, %c0_254, %c0_255], %302 {strides = array<i32>} : memref<1x16x16x128xf32, #tpu.memory_space<vmem>>, vector<1x1x16x128xf32>,
    %303 = vector.extract_strided_slice %290 {offsets = [60, 0], sizes = [16, 128], strides = [1, 1]} : vector<320x128xf32> to vector<16x128xf32>
    %c0_256 = arith.constant 0 : index
    %c3_257 = arith.constant 3 : index
    %c0_258 = arith.constant 0 : index
    %c0_259 = arith.constant 0 : index
    %304 = vector.load %arg10[%c0_256, %c3_257, %c0_258, %c0_259] : memref<1x16x16x128xf32, #tpu.memory_space<vmem>>, vector<1x1x16x128xf32>
    %305 = vector.shape_cast %304 : vector<1x1x16x128xf32> to vector<16x128xf32>
    %306 = vector.shape_cast %303 : vector<16x128xf32> to vector<1x1x16x128xf32>
    tpu.vector_store %arg10[%c0_256, %c3_257, %c0_258, %c0_259], %306 {strides = array<i32>} : memref<1x16x16x128xf32, #tpu.memory_space<vmem>>, vector<1x1x16x128xf32>,
    %307 = vector.extract_strided_slice %290 {offsets = [80, 0], sizes = [16, 128], strides = [1, 1]} : vector<320x128xf32> to vector<16x128xf32>
    %c0_260 = arith.constant 0 : index
    %c4_261 = arith.constant 4 : index
    %c0_262 = arith.constant 0 : index
    %c0_263 = arith.constant 0 : index
    %308 = vector.load %arg10[%c0_260, %c4_261, %c0_262, %c0_263] : memref<1x16x16x128xf32, #tpu.memory_space<vmem>>, vector<1x1x16x128xf32>
    %309 = vector.shape_cast %308 : vector<1x1x16x128xf32> to vector<16x128xf32>
    %310 = vector.shape_cast %307 : vector<16x128xf32> to vector<1x1x16x128xf32>
    tpu.vector_store %arg10[%c0_260, %c4_261, %c0_262, %c0_263], %310 {strides = array<i32>} : memref<1x16x16x128xf32, #tpu.memory_space<vmem>>, vector<1x1x16x128xf32>,
    %311 = vector.extract_strided_slice %290 {offsets = [100, 0], sizes = [16, 128], strides = [1, 1]} : vector<320x128xf32> to vector<16x128xf32>
    %c0_264 = arith.constant 0 : index
    %c5_265 = arith.constant 5 : index
    %c0_266 = arith.constant 0 : index
    %c0_267 = arith.constant 0 : index
    %312 = vector.load %arg10[%c0_264, %c5_265, %c0_266, %c0_267] : memref<1x16x16x128xf32, #tpu.memory_space<vmem>>, vector<1x1x16x128xf32>
    %313 = vector.shape_cast %312 : vector<1x1x16x128xf32> to vector<16x128xf32>
    %314 = vector.shape_cast %311 : vector<16x128xf32> to vector<1x1x16x128xf32>
    tpu.vector_store %arg10[%c0_264, %c5_265, %c0_266, %c0_267], %314 {strides = array<i32>} : memref<1x16x16x128xf32, #tpu.memory_space<vmem>>, vector<1x1x16x128xf32>,
    %315 = vector.extract_strided_slice %290 {offsets = [120, 0], sizes = [16, 128], strides = [1, 1]} : vector<320x128xf32> to vector<16x128xf32>
    %c0_268 = arith.constant 0 : index
    %c6_269 = arith.constant 6 : index
    %c0_270 = arith.constant 0 : index
    %c0_271 = arith.constant 0 : index
    %316 = vector.load %arg10[%c0_268, %c6_269, %c0_270, %c0_271] : memref<1x16x16x128xf32, #tpu.memory_space<vmem>>, vector<1x1x16x128xf32>
    %317 = vector.shape_cast %316 : vector<1x1x16x128xf32> to vector<16x128xf32>
    %318 = vector.shape_cast %315 : vector<16x128xf32> to vector<1x1x16x128xf32>
    tpu.vector_store %arg10[%c0_268, %c6_269, %c0_270, %c0_271], %318 {strides = array<i32>} : memref<1x16x16x128xf32, #tpu.memory_space<vmem>>, vector<1x1x16x128xf32>,
    %319 = vector.extract_strided_slice %290 {offsets = [140, 0], sizes = [16, 128], strides = [1, 1]} : vector<320x128xf32> to vector<16x128xf32>
    %c0_272 = arith.constant 0 : index
    %c7_273 = arith.constant 7 : index
    %c0_274 = arith.constant 0 : index
    %c0_275 = arith.constant 0 : index
    %320 = vector.load %arg10[%c0_272, %c7_273, %c0_274, %c0_275] : memref<1x16x16x128xf32, #tpu.memory_space<vmem>>, vector<1x1x16x128xf32>
    %321 = vector.shape_cast %320 : vector<1x1x16x128xf32> to vector<16x128xf32>
    %322 = vector.shape_cast %319 : vector<16x128xf32> to vector<1x1x16x128xf32>
    tpu.vector_store %arg10[%c0_272, %c7_273, %c0_274, %c0_275], %322 {strides = array<i32>} : memref<1x16x16x128xf32, #tpu.memory_space<vmem>>, vector<1x1x16x128xf32>,
    %323 = vector.extract_strided_slice %290 {offsets = [160, 0], sizes = [16, 128], strides = [1, 1]} : vector<320x128xf32> to vector<16x128xf32>
    %c0_276 = arith.constant 0 : index
    %c8_277 = arith.constant 8 : index
    %c0_278 = arith.constant 0 : index
    %c0_279 = arith.constant 0 : index
    %324 = vector.load %arg10[%c0_276, %c8_277, %c0_278, %c0_279] : memref<1x16x16x128xf32, #tpu.memory_space<vmem>>, vector<1x1x16x128xf32>
    %325 = vector.shape_cast %324 : vector<1x1x16x128xf32> to vector<16x128xf32>
    %326 = vector.shape_cast %323 : vector<16x128xf32> to vector<1x1x16x128xf32>
    tpu.vector_store %arg10[%c0_276, %c8_277, %c0_278, %c0_279], %326 {strides = array<i32>} : memref<1x16x16x128xf32, #tpu.memory_space<vmem>>, vector<1x1x16x128xf32>,
    %327 = vector.extract_strided_slice %290 {offsets = [180, 0], sizes = [16, 128], strides = [1, 1]} : vector<320x128xf32> to vector<16x128xf32>
    %c0_280 = arith.constant 0 : index
    %c9_281 = arith.constant 9 : index
    %c0_282 = arith.constant 0 : index
    %c0_283 = arith.constant 0 : index
    %328 = vector.load %arg10[%c0_280, %c9_281, %c0_282, %c0_283] : memref<1x16x16x128xf32, #tpu.memory_space<vmem>>, vector<1x1x16x128xf32>
    %329 = vector.shape_cast %328 : vector<1x1x16x128xf32> to vector<16x128xf32>
    %330 = vector.shape_cast %327 : vector<16x128xf32> to vector<1x1x16x128xf32>
    tpu.vector_store %arg10[%c0_280, %c9_281, %c0_282, %c0_283], %330 {strides = array<i32>} : memref<1x16x16x128xf32, #tpu.memory_space<vmem>>, vector<1x1x16x128xf32>,
    %331 = vector.extract_strided_slice %290 {offsets = [200, 0], sizes = [16, 128], strides = [1, 1]} : vector<320x128xf32> to vector<16x128xf32>
    %c0_284 = arith.constant 0 : index
    %c10_285 = arith.constant 10 : index
    %c0_286 = arith.constant 0 : index
    %c0_287 = arith.constant 0 : index
    %332 = vector.load %arg10[%c0_284, %c10_285, %c0_286, %c0_287] : memref<1x16x16x128xf32, #tpu.memory_space<vmem>>, vector<1x1x16x128xf32>
    %333 = vector.shape_cast %332 : vector<1x1x16x128xf32> to vector<16x128xf32>
    %334 = vector.shape_cast %331 : vector<16x128xf32> to vector<1x1x16x128xf32>
    tpu.vector_store %arg10[%c0_284, %c10_285, %c0_286, %c0_287], %334 {strides = array<i32>} : memref<1x16x16x128xf32, #tpu.memory_space<vmem>>, vector<1x1x16x128xf32>,
    %335 = vector.extract_strided_slice %290 {offsets = [220, 0], sizes = [16, 128], strides = [1, 1]} : vector<320x128xf32> to vector<16x128xf32>
    %c0_288 = arith.constant 0 : index
    %c11_289 = arith.constant 11 : index
    %c0_290 = arith.constant 0 : index
    %c0_291 = arith.constant 0 : index
    %336 = vector.load %arg10[%c0_288, %c11_289, %c0_290, %c0_291] : memref<1x16x16x128xf32, #tpu.memory_space<vmem>>, vector<1x1x16x128xf32>
    %337 = vector.shape_cast %336 : vector<1x1x16x128xf32> to vector<16x128xf32>
    %338 = vector.shape_cast %335 : vector<16x128xf32> to vector<1x1x16x128xf32>
    tpu.vector_store %arg10[%c0_288, %c11_289, %c0_290, %c0_291], %338 {strides = array<i32>} : memref<1x16x16x128xf32, #tpu.memory_space<vmem>>, vector<1x1x16x128xf32>,
    %339 = vector.extract_strided_slice %290 {offsets = [240, 0], sizes = [16, 128], strides = [1, 1]} : vector<320x128xf32> to vector<16x128xf32>
    %c0_292 = arith.constant 0 : index
    %c12_293 = arith.constant 12 : index
    %c0_294 = arith.constant 0 : index
    %c0_295 = arith.constant 0 : index
    %340 = vector.load %arg10[%c0_292, %c12_293, %c0_294, %c0_295] : memref<1x16x16x128xf32, #tpu.memory_space<vmem>>, vector<1x1x16x128xf32>
    %341 = vector.shape_cast %340 : vector<1x1x16x128xf32> to vector<16x128xf32>
    %342 = vector.shape_cast %339 : vector<16x128xf32> to vector<1x1x16x128xf32>
    tpu.vector_store %arg10[%c0_292, %c12_293, %c0_294, %c0_295], %342 {strides = array<i32>} : memref<1x16x16x128xf32, #tpu.memory_space<vmem>>, vector<1x1x16x128xf32>,
    %343 = vector.extract_strided_slice %290 {offsets = [260, 0], sizes = [16, 128], strides = [1, 1]} : vector<320x128xf32> to vector<16x128xf32>
    %c0_296 = arith.constant 0 : index
    %c13_297 = arith.constant 13 : index
    %c0_298 = arith.constant 0 : index
    %c0_299 = arith.constant 0 : index
    %344 = vector.load %arg10[%c0_296, %c13_297, %c0_298, %c0_299] : memref<1x16x16x128xf32, #tpu.memory_space<vmem>>, vector<1x1x16x128xf32>
    %345 = vector.shape_cast %344 : vector<1x1x16x128xf32> to vector<16x128xf32>
    %346 = vector.shape_cast %343 : vector<16x128xf32> to vector<1x1x16x128xf32>
    tpu.vector_store %arg10[%c0_296, %c13_297, %c0_298, %c0_299], %346 {strides = array<i32>} : memref<1x16x16x128xf32, #tpu.memory_space<vmem>>, vector<1x1x16x128xf32>,
    %347 = vector.extract_strided_slice %290 {offsets = [280, 0], sizes = [16, 128], strides = [1, 1]} : vector<320x128xf32> to vector<16x128xf32>
    %c0_300 = arith.constant 0 : index
    %c14_301 = arith.constant 14 : index
    %c0_302 = arith.constant 0 : index
    %c0_303 = arith.constant 0 : index
    %348 = vector.load %arg10[%c0_300, %c14_301, %c0_302, %c0_303] : memref<1x16x16x128xf32, #tpu.memory_space<vmem>>, vector<1x1x16x128xf32>
    %349 = vector.shape_cast %348 : vector<1x1x16x128xf32> to vector<16x128xf32>
    %350 = vector.shape_cast %347 : vector<16x128xf32> to vector<1x1x16x128xf32>
    tpu.vector_store %arg10[%c0_300, %c14_301, %c0_302, %c0_303], %350 {strides = array<i32>} : memref<1x16x16x128xf32, #tpu.memory_space<vmem>>, vector<1x1x16x128xf32>,
    %351 = vector.extract_strided_slice %290 {offsets = [300, 0], sizes = [16, 128], strides = [1, 1]} : vector<320x128xf32> to vector<16x128xf32>
    %c0_304 = arith.constant 0 : index
    %c15_305 = arith.constant 15 : index
    %c0_306 = arith.constant 0 : index
    %c0_307 = arith.constant 0 : index
    %352 = vector.load %arg10[%c0_304, %c15_305, %c0_306, %c0_307] : memref<1x16x16x128xf32, #tpu.memory_space<vmem>>, vector<1x1x16x128xf32>
    %353 = vector.shape_cast %352 : vector<1x1x16x128xf32> to vector<16x128xf32>
    %354 = vector.shape_cast %351 : vector<16x128xf32> to vector<1x1x16x128xf32>
    tpu.vector_store %arg10[%c0_304, %c15_305, %c0_306, %c0_307], %354 {strides = array<i32>} : memref<1x16x16x128xf32, #tpu.memory_space<vmem>>, vector<1x1x16x128xf32>,
    return
  }
  func.func @transform_0(%arg0: i32) -> (i32, i32, i32) {
    %c0_i32 = arith.constant 0 : i32
    %c0_i32_0 = arith.constant 0 : i32
    %c0_i32_1 = arith.constant 0 : i32
    return %arg0, %c0_i32, %c0_i32_0 : i32, i32, i32
  }
  func.func @transform_1(%arg0: i32) -> (i32, i32) {
    %c0_i32 = arith.constant 0 : i32
    %c0_i32_0 = arith.constant 0 : i32
    %c0_i32_1 = arith.constant 0 : i32
    return %c0_i32, %c0_i32_0 : i32, i32
  }
  func.func @transform_2(%arg0: i32) -> (i32, i32) {
    %c0_i32 = arith.constant 0 : i32
    %c0_i32_0 = arith.constant 0 : i32
    %c0_i32_1 = arith.constant 0 : i32
    return %c0_i32, %c0_i32_0 : i32, i32
  }
  func.func @transform_3(%arg0: i32) -> (i32, i32, i32) {
    %c0_i32 = arith.constant 0 : i32
    %c0_i32_0 = arith.constant 0 : i32
    %c0_i32_1 = arith.constant 0 : i32
    %c0_i32_2 = arith.constant 0 : i32
    return %c0_i32, %c0_i32_0, %c0_i32_1 : i32, i32, i32
  }
  func.func @transform_4(%arg0: i32) -> (i32, i32) {
    %c0_i32 = arith.constant 0 : i32
    %c0_i32_0 = arith.constant 0 : i32
    %c0_i32_1 = arith.constant 0 : i32
    return %c0_i32, %c0_i32_0 : i32, i32
  }
  func.func @transform_5(%arg0: i32) -> (i32, i32) {
    %c0_i32 = arith.constant 0 : i32
    %c0_i32_0 = arith.constant 0 : i32
    %c0_i32_1 = arith.constant 0 : i32
    return %c0_i32, %c0_i32_0 : i32, i32
  }
  func.func @transform_6(%arg0: i32) -> (i32, i32) {
    %c0_i32 = arith.constant 0 : i32
    %c0_i32_0 = arith.constant 0 : i32
    %c0_i32_1 = arith.constant 0 : i32
    return %c0_i32, %c0_i32_0 : i32, i32
  }
  func.func @transform_7(%arg0: i32) -> (i32, i32, i32) {
    %c0_i32 = arith.constant 0 : i32
    %c0_i32_0 = arith.constant 0 : i32
    %c0_i32_1 = arith.constant 0 : i32
    %c0_i32_2 = arith.constant 0 : i32
    return %c0_i32, %c0_i32_0, %c0_i32_1 : i32, i32, i32
  }
  func.func @transform_8(%arg0: i32) -> (i32, i32) {
    %c0_i32 = arith.constant 0 : i32
    %c0_i32_0 = arith.constant 0 : i32
    %c0_i32_1 = arith.constant 0 : i32
    return %c0_i32, %c0_i32_0 : i32, i32
  }
  func.func @transform_9(%arg0: i32) -> (i32, i32, i32, i32) {
    %c0_i32 = arith.constant 0 : i32
    %c0_i32_0 = arith.constant 0 : i32
    %c0_i32_1 = arith.constant 0 : i32
    %c0_i32_2 = arith.constant 0 : i32
    return %arg0, %c0_i32, %c0_i32_0, %c0_i32_1 : i32, i32, i32, i32
  }
}

</mosaic_0001>

<llo_original>
// kernel: srcnn2_pallas.1
$region0: #{srcnn2_pallas.1}
  #allocation0 [shape = 'u32[]', space=smem, size = 0x4, offset = 0x4, fixed_abs, tag = 'smem constant byte address 0x4 - core index']
  #allocation1 [shape = 'u32[72,128]{1,0:T(1,128)}', space=vmem, size = 0x9000, scoped, tag = 'internal scratch']
  #allocation2 [shape = 'f32[258,128]{1,0:T(8,128)}', space=vmem, size = 0x21000, scoped, tag = 'scratch operand']
  #allocation3 [shape = 'f32[324,64]{1,0:T(8,128)}', space=vmem, size = 0x29000, scoped, tag = 'scratch operand']
  #allocation4 [shape = 'f32[404,32]{1,0:T(8,128)}', space=vmem, size = 0x33000, scoped, tag = 'scratch operand']
  %s0 = inlined_call_operand.vmem [shape: f32[2,144,256], index: 0, kind: input, shape index: {}]
  %s1 = inlined_call_operand.vmem [shape: f32[256,128], index: 1, kind: input, shape index: {}]
  %s2 = inlined_call_operand.vmem [shape: f32[1,128], index: 2, kind: input, shape index: {}]
  %s3 = inlined_call_operand.vmem [shape: f32[9,128,64], index: 3, kind: input, shape index: {}]
  %s4 = inlined_call_operand.vmem [shape: f32[1,64], index: 4, kind: input, shape index: {}]
  %s5 = inlined_call_operand.vmem [shape: f32[64,32], index: 5, kind: input, shape index: {}]
  %s6 = inlined_call_operand.vmem [shape: f32[1,32], index: 6, kind: input, shape index: {}]
  %s7 = inlined_call_operand.vmem [shape: f32[25,32,128], index: 7, kind: input, shape index: {}]
  %s8 = inlined_call_operand.vmem [shape: f32[1,128], index: 8, kind: input, shape index: {}]
  %s9 = inlined_call_operand.vmem [shape: f32[2,16,16,128], index: 9, kind: output, shape index: {}]
  %s10 = sld [smem:[#allocation0]]
  $region69: #{srcnn2_pallas.1} parent=0
    _
  %s12 = ssub.s32 1, %s10
  %s13 = scalar_select 0, %s12, %s10
  loop: start=0, step=1, limit=4
  $region2: #{srcnn2_pallas.1} parent=0 // loop_pre_header
    _
  $region3: #{srcnn2_pallas.1} parent=0 // loop_header
    %s15 = sphi 0, %s19
    %p16 = scmp.ge.s32.totalorder %s15, 4
    %s25 = sphi 0, %s27
    %s28 = sphi 0, %s25
    %s29 = sphi 0, %s28
    %s45 = sphi 0, %s29
    %s49 = sphi 0, %s49
    %s51 = sphi 0, %s49
    %s52 = sphi 0, %s51
    %s66 = sphi 0, %s52
    %s70 = sphi 0, %s70
    %s72 = sphi 0, %s70
    %s73 = sphi 0, %s72
    %s87 = sphi 0, %s73
    %s91 = sphi 0, %s91
    %s93 = sphi 0, %s91
    %s94 = sphi 0, %s93
    %s108 = sphi 0, %s94
    %s112 = sphi 0, %s112
    %s114 = sphi 0, %s112
    %s115 = sphi 0, %s114
    %s129 = sphi 0, %s115
    %s133 = sphi 0, %s133
    %s135 = sphi 0, %s133
    %s136 = sphi 0, %s135
    %s150 = sphi 0, %s136
    %s154 = sphi 0, %s154
    %s156 = sphi 0, %s154
    %s157 = sphi 0, %s156
    %s171 = sphi 0, %s157
    %s175 = sphi 0, %s175
    %s177 = sphi 0, %s175
    %s178 = sphi 0, %s177
    %s192 = sphi 0, %s178
    %s196 = sphi 0, %s196
    %s198 = sphi 0, %s196
    %s199 = sphi 0, %s198
    %s213 = sphi 0, %s199
    %s219 = sphi 0, %s221
    %s222 = sphi 0, %s219
    %s223 = sphi 0, %s222
    %s239 = sphi 0, %s223
  $region4: #{srcnn2_pallas.1} parent=0 // loop_header_branch
    %18 = sbr.rel (%p16) target = $region8
  $region5: #{srcnn2_pallas.1} parent=0 // loop_body
    %s20 = ssub.s32 %s15, 1
    %s21 = ssub.s32 %s15, 2
    %s22 = sadd.s32 %s15, 1
    %s23 = ssub.s32 %s15, %s22
    %p24 = scmp.eq.s32.totalorder %s23, 0
    %s26 = sadd.s32 %s25, 1
    %s27 = scalar_select %p24, %s25, %s26
    %p30 = pneg %p24
    %p31 = scmp.eq.s32.totalorder %s15, 1
    %p32 = por %p30, %p31
    %p33 = scmp.ne.s32.totalorder %s25, %s28
    %p34 = scmp.eq.s32.totalorder %s15, 0
    %p35 = por %p33, %p34
    %p36 = scmp.ne.s32.totalorder %s25, %s28
    %p37 = scmp.eq.s32.totalorder %s20, 1
    %p38 = por %p36, %p37
    %p39 = scmp.ne.s32.totalorder %s28, %s29
    %p40 = scmp.eq.s32.totalorder %s20, 0
    %p41 = por %p39, %p40
    %p42 = scmp.ne.s32.totalorder %s28, %s29
    %p43 = scmp.eq.s32.totalorder %s21, 1
    %p44 = por %p42, %p43
    %p46 = scmp.ne.s32.totalorder %s29, %s45
    %p47 = scmp.eq.s32.totalorder %s21, 0
    %p48 = por %p46, %p47
    %s50 = sadd.s32 %s49, 1
    %p53 = scmp.eq.s32.totalorder %s15, 1
    %p54 = scmp.ne.s32.totalorder %s49, %s51
    %p55 = scmp.eq.s32.totalorder %s15, 0
    %p56 = por %p54, %p55
    %p57 = scmp.ne.s32.totalorder %s49, %s51
    %p58 = scmp.eq.s32.totalorder %s20, 1
    %p59 = por %p57, %p58
    %p60 = scmp.ne.s32.totalorder %s51, %s52
    %p61 = scmp.eq.s32.totalorder %s20, 0
    %p62 = por %p60, %p61
    %p63 = scmp.ne.s32.totalorder %s51, %s52
    %p64 = scmp.eq.s32.totalorder %s21, 1
    %p65 = por %p63, %p64
    %p67 = scmp.ne.s32.totalorder %s52, %s66
    %p68 = scmp.eq.s32.totalorder %s21, 0
    %p69 = por %p67, %p68
    %s71 = sadd.s32 %s70, 1
    %p74 = scmp.eq.s32.totalorder %s15, 1
    %p75 = scmp.ne.s32.totalorder %s70, %s72
    %p76 = scmp.eq.s32.totalorder %s15, 0
    %p77 = por %p75, %p76
    %p78 = scmp.ne.s32.totalorder %s70, %s72
    %p79 = scmp.eq.s32.totalorder %s20, 1
    %p80 = por %p78, %p79
    %p81 = scmp.ne.s32.totalorder %s72, %s73
    %p82 = scmp.eq.s32.totalorder %s20, 0
    %p83 = por %p81, %p82
    %p84 = scmp.ne.s32.totalorder %s72, %s73
    %p85 = scmp.eq.s32.totalorder %s21, 1
    %p86 = por %p84, %p85
    %p88 = scmp.ne.s32.totalorder %s73, %s87
    %p89 = scmp.eq.s32.totalorder %s21, 0
    %p90 = por %p88, %p89
    %s92 = sadd.s32 %s91, 1
    %p95 = scmp.eq.s32.totalorder %s15, 1
    %p96 = scmp.ne.s32.totalorder %s91, %s93
    %p97 = scmp.eq.s32.totalorder %s15, 0
    %p98 = por %p96, %p97
    %p99 = scmp.ne.s32.totalorder %s91, %s93
    %p100 = scmp.eq.s32.totalorder %s20, 1
    %p101 = por %p99, %p100
    %p102 = scmp.ne.s32.totalorder %s93, %s94
    %p103 = scmp.eq.s32.totalorder %s20, 0
    %p104 = por %p102, %p103
    %p105 = scmp.ne.s32.totalorder %s93, %s94
    %p106 = scmp.eq.s32.totalorder %s21, 1
    %p107 = por %p105, %p106
    %p109 = scmp.ne.s32.totalorder %s94, %s108
    %p110 = scmp.eq.s32.totalorder %s21, 0
    %p111 = por %p109, %p110
    %s113 = sadd.s32 %s112, 1
    %p116 = scmp.eq.s32.totalorder %s15, 1
    %p117 = scmp.ne.s32.totalorder %s112, %s114
    %p118 = scmp.eq.s32.totalorder %s15, 0
    %p119 = por %p117, %p118
    %p120 = scmp.ne.s32.totalorder %s112, %s114
    %p121 = scmp.eq.s32.totalorder %s20, 1
    %p122 = por %p120, %p121
    %p123 = scmp.ne.s32.totalorder %s114, %s115
    %p124 = scmp.eq.s32.totalorder %s20, 0
    %p125 = por %p123, %p124
    %p126 = scmp.ne.s32.totalorder %s114, %s115
    %p127 = scmp.eq.s32.totalorder %s21, 1
    %p128 = por %p126, %p127
    %p130 = scmp.ne.s32.totalorder %s115, %s129
    %p131 = scmp.eq.s32.totalorder %s21, 0
    %p132 = por %p130, %p131
    %s134 = sadd.s32 %s133, 1
    %p137 = scmp.eq.s32.totalorder %s15, 1
    %p138 = scmp.ne.s32.totalorder %s133, %s135
    %p139 = scmp.eq.s32.totalorder %s15, 0
    %p140 = por %p138, %p139
    %p141 = scmp.ne.s32.totalorder %s133, %s135
    %p142 = scmp.eq.s32.totalorder %s20, 1
    %p143 = por %p141, %p142
    %p144 = scmp.ne.s32.totalorder %s135, %s136
    %p145 = scmp.eq.s32.totalorder %s20, 0
    %p146 = por %p144, %p145
    %p147 = scmp.ne.s32.totalorder %s135, %s136
    %p148 = scmp.eq.s32.totalorder %s21, 1
    %p149 = por %p147, %p148
    %p151 = scmp.ne.s32.totalorder %s136, %s150
    %p152 = scmp.eq.s32.totalorder %s21, 0
    %p153 = por %p151, %p152
    %s155 = sadd.s32 %s154, 1
    %p158 = scmp.eq.s32.totalorder %s15, 1
    %p159 = scmp.ne.s32.totalorder %s154, %s156
    %p160 = scmp.eq.s32.totalorder %s15, 0
    %p161 = por %p159, %p160
    %p162 = scmp.ne.s32.totalorder %s154, %s156
    %p163 = scmp.eq.s32.totalorder %s20, 1
    %p164 = por %p162, %p163
    %p165 = scmp.ne.s32.totalorder %s156, %s157
    %p166 = scmp.eq.s32.totalorder %s20, 0
    %p167 = por %p165, %p166
    %p168 = scmp.ne.s32.totalorder %s156, %s157
    %p169 = scmp.eq.s32.totalorder %s21, 1
    %p170 = por %p168, %p169
    %p172 = scmp.ne.s32.totalorder %s157, %s171
    %p173 = scmp.eq.s32.totalorder %s21, 0
    %p174 = por %p172, %p173
    %s176 = sadd.s32 %s175, 1
    %p179 = scmp.eq.s32.totalorder %s15, 1
    %p180 = scmp.ne.s32.totalorder %s175, %s177
    %p181 = scmp.eq.s32.totalorder %s15, 0
    %p182 = por %p180, %p181
    %p183 = scmp.ne.s32.totalorder %s175, %s177
    %p184 = scmp.eq.s32.totalorder %s20, 1
    %p185 = por %p183, %p184
    %p186 = scmp.ne.s32.totalorder %s177, %s178
    %p187 = scmp.eq.s32.totalorder %s20, 0
    %p188 = por %p186, %p187
    %p189 = scmp.ne.s32.totalorder %s177, %s178
    %p190 = scmp.eq.s32.totalorder %s21, 1
    %p191 = por %p189, %p190
    %p193 = scmp.ne.s32.totalorder %s178, %s192
    %p194 = scmp.eq.s32.totalorder %s21, 0
    %p195 = por %p193, %p194
    %s197 = sadd.s32 %s196, 1
    %p200 = scmp.eq.s32.totalorder %s15, 1
    %p201 = scmp.ne.s32.totalorder %s196, %s198
    %p202 = scmp.eq.s32.totalorder %s15, 0
    %p203 = por %p201, %p202
    %p204 = scmp.ne.s32.totalorder %s196, %s198
    %p205 = scmp.eq.s32.totalorder %s20, 1
    %p206 = por %p204, %p205
    %p207 = scmp.ne.s32.totalorder %s198, %s199
    %p208 = scmp.eq.s32.totalorder %s20, 0
    %p209 = por %p207, %p208
    %p210 = scmp.ne.s32.totalorder %s198, %s199
    %p211 = scmp.eq.s32.totalorder %s21, 1
    %p212 = por %p210, %p211
    %p214 = scmp.ne.s32.totalorder %s199, %s213
    %p215 = scmp.eq.s32.totalorder %s21, 0
    %p216 = por %p214, %p215
    %s217 = ssub.s32 %s15, %s22
    %p218 = scmp.eq.s32.totalorder %s217, 0
    %s220 = sadd.s32 %s219, 1
    %s221 = scalar_select %p218, %s219, %s220
    %p224 = pneg %p218
    %p225 = scmp.eq.s32.totalorder %s15, 1
    %p226 = por %p224, %p225
    %p227 = scmp.ne.s32.totalorder %s219, %s222
    %p228 = scmp.eq.s32.totalorder %s15, 0
    %p229 = por %p227, %p228
    %p230 = scmp.ne.s32.totalorder %s219, %s222
    %p231 = scmp.eq.s32.totalorder %s20, 1
    %p232 = por %p230, %p231
    %p233 = scmp.ne.s32.totalorder %s222, %s223
    %p234 = scmp.eq.s32.totalorder %s20, 0
    %p235 = por %p233, %p234
    %p236 = scmp.ne.s32.totalorder %s222, %s223
    %p237 = scmp.eq.s32.totalorder %s21, 1
    %p238 = por %p236, %p237
    %p240 = scmp.ne.s32.totalorder %s223, %s239
    %p241 = scmp.eq.s32.totalorder %s21, 0
    %p242 = por %p240, %p241
    %p243 = scmp.le.s32.totalorder 1, %s15
    %p244 = scmp.lt.s32.totalorder %s15, 3
    %p245 = pnand %p243, %p244
    %p246 = pneg %p245
    // Predicated region
    $region9: #{srcnn2_pallas.1} parent=5 // pred_check
      _
    $region10: #{srcnn2_pallas.1} parent=5 // pred_check_branch
      %248 = sbr.rel (%p245) target = $region12
    $region11: #{srcnn2_pallas.1} parent=5 // pred_region
      %s249 = ssub.s32 %s15, 1
      // Predicated region
      $region13: #{srcnn2_pallas.1} parent=11 // pred_check
        %p250 = pneg %p62
      $region14: #{srcnn2_pallas.1} parent=11 // pred_check_branch
        %252 = sbr.rel (%p250) target = $region16
      $region15: #{srcnn2_pallas.1} parent=11 // pred_region
        _
      $region16: #{srcnn2_pallas.1} parent=11 // pred_fallthru
        _
      // Predicated region
      $region17: #{srcnn2_pallas.1} parent=11 // pred_check
        %p253 = pneg %p83
      $region18: #{srcnn2_pallas.1} parent=11 // pred_check_branch
        %255 = sbr.rel (%p253) target = $region20
      $region19: #{srcnn2_pallas.1} parent=11 // pred_region
        _
      $region20: #{srcnn2_pallas.1} parent=11 // pred_fallthru
        _
      // Predicated region
      $region21: #{srcnn2_pallas.1} parent=11 // pred_check
        %p256 = pneg %p104
      $region22: #{srcnn2_pallas.1} parent=11 // pred_check_branch
        %258 = sbr.rel (%p256) target = $region24
      $region23: #{srcnn2_pallas.1} parent=11 // pred_region
        _
      $region24: #{srcnn2_pallas.1} parent=11 // pred_fallthru
        _
      // Predicated region
      $region25: #{srcnn2_pallas.1} parent=11 // pred_check
        %p259 = pneg %p125
      $region26: #{srcnn2_pallas.1} parent=11 // pred_check_branch
        %261 = sbr.rel (%p259) target = $region28
      $region27: #{srcnn2_pallas.1} parent=11 // pred_region
        _
      $region28: #{srcnn2_pallas.1} parent=11 // pred_fallthru
        _
      // Predicated region
      $region29: #{srcnn2_pallas.1} parent=11 // pred_check
        %p262 = pneg %p146
      $region30: #{srcnn2_pallas.1} parent=11 // pred_check_branch
        %264 = sbr.rel (%p262) target = $region32
      $region31: #{srcnn2_pallas.1} parent=11 // pred_region
        _
      $region32: #{srcnn2_pallas.1} parent=11 // pred_fallthru
        _
      // Predicated region
      $region33: #{srcnn2_pallas.1} parent=11 // pred_check
        %p265 = pneg %p167
      $region34: #{srcnn2_pallas.1} parent=11 // pred_check_branch
        %267 = sbr.rel (%p265) target = $region36
      $region35: #{srcnn2_pallas.1} parent=11 // pred_region
        _
      $region36: #{srcnn2_pallas.1} parent=11 // pred_fallthru
        _
      // Predicated region
      $region37: #{srcnn2_pallas.1} parent=11 // pred_check
        %p268 = pneg %p188
      $region38: #{srcnn2_pallas.1} parent=11 // pred_check_branch
        %270 = sbr.rel (%p268) target = $region40
      $region39: #{srcnn2_pallas.1} parent=11 // pred_region
        _
      $region40: #{srcnn2_pallas.1} parent=11 // pred_fallthru
        _
      // Predicated region
      $region41: #{srcnn2_pallas.1} parent=11 // pred_check
        %p271 = pneg %p209
      $region42: #{srcnn2_pallas.1} parent=11 // pred_check_branch
        %273 = sbr.rel (%p271) target = $region44
      $region43: #{srcnn2_pallas.1} parent=11 // pred_region
        _
      $region44: #{srcnn2_pallas.1} parent=11 // pred_fallthru
        _
    $region12: #{srcnn2_pallas.1} parent=5 // pred_fallthru
      _
    %p274 = scmp.lt.s32.totalorder %s15, 2
    // Predicated region
    $region45: #{srcnn2_pallas.1} parent=5 // pred_check
      %p275 = pneg %p274
    $region46: #{srcnn2_pallas.1} parent=5 // pred_check_branch
      %277 = sbr.rel (%p275) target = $region48
    $region47: #{srcnn2_pallas.1} parent=5 // pred_region
      // Predicated region
      $region49: #{srcnn2_pallas.1} parent=47 // pred_check
        %p278 = pneg %p35
      $region50: #{srcnn2_pallas.1} parent=47 // pred_check_branch
        %280 = sbr.rel (%p278) target = $region52
      $region51: #{srcnn2_pallas.1} parent=47 // pred_region
        %p281 = scmp.lt.s32.totalorder %s15, 1
        %s282 = scalar_select %p281, %s15, 1
        %s283 = smul.addr %s282, 36
        %s284 = smul.addr %s283, 8
        %s285 = scalar_lea.vmem %s0, %s284
      $region52: #{srcnn2_pallas.1} parent=47 // pred_fallthru
        _
    $region48: #{srcnn2_pallas.1} parent=5 // pred_fallthru
      _
    %p286 = scmp.le.s32.totalorder 1, %s15
    %p287 = scmp.lt.s32.totalorder %s15, 3
    %p288 = pnand %p286, %p287
    %p289 = pneg %p288
    // Predicated region
    $region53: #{srcnn2_pallas.1} parent=5 // pred_check
      _
    $region54: #{srcnn2_pallas.1} parent=5 // pred_check_branch
      %291 = sbr.rel (%p288) target = $region56
    $region55: #{srcnn2_pallas.1} parent=5 // pred_region
      %s292 = ssub.s32 %s15, 1
      %p293 = scmp.lt.s32.totalorder %s20, 1
      %s294 = scalar_select %p293, %s20, 1
      %s295 = smul.addr %s294, 36
      %s296 = smul.addr %s295, 8
      %s297 = scalar_lea.vmem %s0, %s296
      %p298 = pneg %p41
      %p299 = pneg %p38
      %p300 = pneg %p62
      %p301 = pneg %p59
      %p302 = pneg %p83
      %p303 = pneg %p80
      %p304 = pneg %p104
      %p305 = pneg %p101
      %p306 = pneg %p125
      %p307 = pneg %p122
      %p308 = pneg %p146
      %p309 = pneg %p143
      %p310 = pneg %p167
      %p311 = pneg %p164
      %p312 = pneg %p188
      %p313 = pneg %p185
      %p314 = pneg %p209
      %p315 = pneg %p206
      %p316 = pneg %p235
      %p317 = pneg %p232
      %p318 = scmp.lt.s32.totalorder %s20, 1
      %s319 = scalar_select %p318, %s20, 1
      %s320 = smul.addr %s319, 32
      %s321 = smul.addr %s320, 8
      %s322 = scalar_lea.vmem %s9, %s321
      %p323 = scmp.lt.s32.totalorder %s20, 1
      %s324 = scalar_select %p323, %s20, 1
      %s325 = smul.addr %s324, 36
      %s326 = smul.addr %s325, 8
      %s327 = scalar_lea.vmem %s0, %s326
      %p328 = scmp.lt.s32.totalorder %s20, 1
      %s329 = scalar_select %p328, %s20, 1
      %s330 = smul.addr %s329, 32
      %s331 = smul.addr %s330, 8
      %s332 = scalar_lea.vmem %s9, %s331
      %333 = vst [vmem:[#allocation2] sm:$0xff] 0.0
      %334 = vst [vmem:[#allocation2 + $0x8] sm:$0xff] 0.0
      %335 = vst [vmem:[#allocation2 + $0x10] sm:$0xff] 0.0
      %336 = vst [vmem:[#allocation2 + $0x18] sm:$0xff] 0.0
      %337 = vst [vmem:[#allocation2 + $0x20] sm:$0xff] 0.0
      %338 = vst [vmem:[#allocation2 + $0x28] sm:$0xff] 0.0
      %339 = vst [vmem:[#allocation2 + $0x30] sm:$0xff] 0.0
      %340 = vst [vmem:[#allocation2 + $0x38] sm:$0xff] 0.0
      %341 = vst [vmem:[#allocation2 + $0x40] sm:$0xff] 0.0
      %342 = vst [vmem:[#allocation2 + $0x48] sm:$0xff] 0.0
      %343 = vst [vmem:[#allocation2 + $0x50] sm:$0xff] 0.0
      %344 = vst [vmem:[#allocation2 + $0x58] sm:$0xff] 0.0
      %345 = vst [vmem:[#allocation2 + $0x60] sm:$0xff] 0.0
      %346 = vst [vmem:[#allocation2 + $0x68] sm:$0xff] 0.0
      %347 = vst [vmem:[#allocation2 + $0x70] sm:$0xff] 0.0
      %348 = vst [vmem:[#allocation2 + $0x78] sm:$0xff] 0.0
      %349 = vst [vmem:[#allocation2 + $0x80] sm:$0xff] 0.0
      %350 = vst [vmem:[#allocation2 + $0x88] sm:$0xff] 0.0
      %351 = vst [vmem:[#allocation2 + $0x90] sm:$0xff] 0.0
      %352 = vst [vmem:[#allocation2 + $0x98] sm:$0xff] 0.0
      %353 = vst [vmem:[#allocation2 + $0xa0] sm:$0xff] 0.0
      %354 = vst [vmem:[#allocation2 + $0xa8] sm:$0xff] 0.0
      %355 = vst [vmem:[#allocation2 + $0xb0] sm:$0xff] 0.0
      %356 = vst [vmem:[#allocation2 + $0xb8] sm:$0xff] 0.0
      %357 = vst [vmem:[#allocation2 + $0xc0] sm:$0xff] 0.0
      %358 = vst [vmem:[#allocation2 + $0xc8] sm:$0xff] 0.0
      %359 = vst [vmem:[#allocation2 + $0xd0] sm:$0xff] 0.0
      %360 = vst [vmem:[#allocation2 + $0xd8] sm:$0xff] 0.0
      %361 = vst [vmem:[#allocation2 + $0xe0] sm:$0xff] 0.0
      %362 = vst [vmem:[#allocation2 + $0xe8] sm:$0xff] 0.0
      %363 = vst [vmem:[#allocation2 + $0xf0] sm:$0xff] 0.0
      %364 = vst [vmem:[#allocation2 + $0xf8] sm:$0xff] 0.0
      %365 = vst [vmem:[#allocation2 + $0x100] sm:$0x3] 0.0
      %vm366 = vcmask 523264
      %367 = vst.msk [vmem:[#allocation3] sm:$0xff] %vm366, 0.0
      %368 = vst.msk [vmem:[#allocation3 + $0x8] sm:$0xff] %vm366, 0.0
      %369 = vst.msk [vmem:[#allocation3 + $0x10] sm:$0xff] %vm366, 0.0
      %370 = vst.msk [vmem:[#allocation3 + $0x18] sm:$0xff] %vm366, 0.0
      %371 = vst.msk [vmem:[#allocation3 + $0x20] sm:$0xff] %vm366, 0.0
      %372 = vst.msk [vmem:[#allocation3 + $0x28] sm:$0xff] %vm366, 0.0
      %373 = vst.msk [vmem:[#allocation3 + $0x30] sm:$0xff] %vm366, 0.0
      %374 = vst.msk [vmem:[#allocation3 + $0x38] sm:$0xff] %vm366, 0.0
      %375 = vst.msk [vmem:[#allocation3 + $0x40] sm:$0xff] %vm366, 0.0
      %376 = vst.msk [vmem:[#allocation3 + $0x48] sm:$0xff] %vm366, 0.0
      %377 = vst.msk [vmem:[#allocation3 + $0x50] sm:$0xff] %vm366, 0.0
      %378 = vst.msk [vmem:[#allocation3 + $0x58] sm:$0xff] %vm366, 0.0
      %379 = vst.msk [vmem:[#allocation3 + $0x60] sm:$0xff] %vm366, 0.0
      %380 = vst.msk [vmem:[#allocation3 + $0x68] sm:$0xff] %vm366, 0.0
      %381 = vst.msk [vmem:[#allocation3 + $0x70] sm:$0xff] %vm366, 0.0
      %382 = vst.msk [vmem:[#allocation3 + $0x78] sm:$0xff] %vm366, 0.0
      %383 = vst.msk [vmem:[#allocation3 + $0x80] sm:$0xff] %vm366, 0.0
      %384 = vst.msk [vmem:[#allocation3 + $0x88] sm:$0xff] %vm366, 0.0
      %385 = vst.msk [vmem:[#allocation3 + $0x90] sm:$0xff] %vm366, 0.0
      %386 = vst.msk [vmem:[#allocation3 + $0x98] sm:$0xff] %vm366, 0.0
      %387 = vst.msk [vmem:[#allocation3 + $0xa0] sm:$0xff] %vm366, 0.0
      %388 = vst.msk [vmem:[#allocation3 + $0xa8] sm:$0xff] %vm366, 0.0
      %389 = vst.msk [vmem:[#allocation3 + $0xb0] sm:$0xff] %vm366, 0.0
      %390 = vst.msk [vmem:[#allocation3 + $0xb8] sm:$0xff] %vm366, 0.0
      %391 = vst.msk [vmem:[#allocation3 + $0xc0] sm:$0xff] %vm366, 0.0
      %392 = vst.msk [vmem:[#allocation3 + $0xc8] sm:$0xff] %vm366, 0.0
      %393 = vst.msk [vmem:[#allocation3 + $0xd0] sm:$0xff] %vm366, 0.0
      %394 = vst.msk [vmem:[#allocation3 + $0xd8] sm:$0xff] %vm366, 0.0
      %395 = vst.msk [vmem:[#allocation3 + $0xe0] sm:$0xff] %vm366, 0.0
      %396 = vst.msk [vmem:[#allocation3 + $0xe8] sm:$0xff] %vm366, 0.0
      %397 = vst.msk [vmem:[#allocation3 + $0xf0] sm:$0xff] %vm366, 0.0
      %398 = vst.msk [vmem:[#allocation3 + $0xf8] sm:$0xff] %vm366, 0.0
      %399 = vst.msk [vmem:[#allocation3 + $0x100] sm:$0xff] %vm366, 0.0
      %400 = vst.msk [vmem:[#allocation3 + $0x108] sm:$0xff] %vm366, 0.0
      %401 = vst.msk [vmem:[#allocation3 + $0x110] sm:$0xff] %vm366, 0.0
      %402 = vst.msk [vmem:[#allocation3 + $0x118] sm:$0xff] %vm366, 0.0
      %403 = vst.msk [vmem:[#allocation3 + $0x120] sm:$0xff] %vm366, 0.0
      %404 = vst.msk [vmem:[#allocation3 + $0x128] sm:$0xff] %vm366, 0.0
      %405 = vst.msk [vmem:[#allocation3 + $0x130] sm:$0xff] %vm366, 0.0
      %406 = vst.msk [vmem:[#allocation3 + $0x138] sm:$0xff] %vm366, 0.0
      %vm407 = vcmask 519168
      %408 = vst.msk [vmem:[#allocation3 + $0x140] sm:$0xf] %vm407, 0.0
      %vm409 = vcmask 261120
      %410 = vst.msk [vmem:[#allocation4] sm:$0xff] %vm409, 0.0
      %411 = vst.msk [vmem:[#allocation4 + $0x8] sm:$0xff] %vm409, 0.0
      %412 = vst.msk [vmem:[#allocation4 + $0x10] sm:$0xff] %vm409, 0.0
      %413 = vst.msk [vmem:[#allocation4 + $0x18] sm:$0xff] %vm409, 0.0
      %414 = vst.msk [vmem:[#allocation4 + $0x20] sm:$0xff] %vm409, 0.0
      %415 = vst.msk [vmem:[#allocation4 + $0x28] sm:$0xff] %vm409, 0.0
      %416 = vst.msk [vmem:[#allocation4 + $0x30] sm:$0xff] %vm409, 0.0
      %417 = vst.msk [vmem:[#allocation4 + $0x38] sm:$0xff] %vm409, 0.0
      %418 = vst.msk [vmem:[#allocation4 + $0x40] sm:$0xff] %vm409, 0.0
      %419 = vst.msk [vmem:[#allocation4 + $0x48] sm:$0xff] %vm409, 0.0
      %420 = vst.msk [vmem:[#allocation4 + $0x50] sm:$0xff] %vm409, 0.0
      %421 = vst.msk [vmem:[#allocation4 + $0x58] sm:$0xff] %vm409, 0.0
      %422 = vst.msk [vmem:[#allocation4 + $0x60] sm:$0xff] %vm409, 0.0
      %423 = vst.msk [vmem:[#allocation4 + $0x68] sm:$0xff] %vm409, 0.0
      %424 = vst.msk [vmem:[#allocation4 + $0x70] sm:$0xff] %vm409, 0.0
      %425 = vst.msk [vmem:[#allocation4 + $0x78] sm:$0xff] %vm409, 0.0
      %426 = vst.msk [vmem:[#allocation4 + $0x80] sm:$0xff] %vm409, 0.0
      %427 = vst.msk [vmem:[#allocation4 + $0x88] sm:$0xff] %vm409, 0.0
      %428 = vst.msk [vmem:[#allocation4 + $0x90] sm:$0xff] %vm409, 0.0
      %429 = vst.msk [vmem:[#allocation4 + $0x98] sm:$0xff] %vm409, 0.0
      %430 = vst.msk [vmem:[#allocation4 + $0xa0] sm:$0xff] %vm409, 0.0
      %431 = vst.msk [vmem:[#allocation4 + $0xa8] sm:$0xff] %vm409, 0.0
      %432 = vst.msk [vmem:[#allocation4 + $0xb0] sm:$0xff] %vm409, 0.0
      %433 = vst.msk [vmem:[#allocation4 + $0xb8] sm:$0xff] %vm409, 0.0
      %434 = vst.msk [vmem:[#allocation4 + $0xc0] sm:$0xff] %vm409, 0.0
      %435 = vst.msk [vmem:[#allocation4 + $0xc8] sm:$0xff] %vm409, 0.0
      %436 = vst.msk [vmem:[#allocation4 + $0xd0] sm:$0xff] %vm409, 0.0
      %437 = vst.msk [vmem:[#allocation4 + $0xd8] sm:$0xff] %vm409, 0.0
      %438 = vst.msk [vmem:[#allocation4 + $0xe0] sm:$0xff] %vm409, 0.0
      %439 = vst.msk [vmem:[#allocation4 + $0xe8] sm:$0xff] %vm409, 0.0
      %440 = vst.msk [vmem:[#allocation4 + $0xf0] sm:$0xff] %vm409, 0.0
      %441 = vst.msk [vmem:[#allocation4 + $0xf8] sm:$0xff] %vm409, 0.0
      %442 = vst.msk [vmem:[#allocation4 + $0x100] sm:$0xff] %vm409, 0.0
      %443 = vst.msk [vmem:[#allocation4 + $0x108] sm:$0xff] %vm409, 0.0
      %444 = vst.msk [vmem:[#allocation4 + $0x110] sm:$0xff] %vm409, 0.0
      %445 = vst.msk [vmem:[#allocation4 + $0x118] sm:$0xff] %vm409, 0.0
      %446 = vst.msk [vmem:[#allocation4 + $0x120] sm:$0xff] %vm409, 0.0
      %447 = vst.msk [vmem:[#allocation4 + $0x128] sm:$0xff] %vm409, 0.0
      %448 = vst.msk [vmem:[#allocation4 + $0x130] sm:$0xff] %vm409, 0.0
      %449 = vst.msk [vmem:[#allocation4 + $0x138] sm:$0xff] %vm409, 0.0
      %450 = vst.msk [vmem:[#allocation4 + $0x140] sm:$0xff] %vm409, 0.0
      %451 = vst.msk [vmem:[#allocation4 + $0x148] sm:$0xff] %vm409, 0.0
      %452 = vst.msk [vmem:[#allocation4 + $0x150] sm:$0xff] %vm409, 0.0
      %453 = vst.msk [vmem:[#allocation4 + $0x158] sm:$0xff] %vm409, 0.0
      %454 = vst.msk [vmem:[#allocation4 + $0x160] sm:$0xff] %vm409, 0.0
      %455 = vst.msk [vmem:[#allocation4 + $0x168] sm:$0xff] %vm409, 0.0
      %456 = vst.msk [vmem:[#allocation4 + $0x170] sm:$0xff] %vm409, 0.0
      %457 = vst.msk [vmem:[#allocation4 + $0x178] sm:$0xff] %vm409, 0.0
      %458 = vst.msk [vmem:[#allocation4 + $0x180] sm:$0xff] %vm409, 0.0
      %459 = vst.msk [vmem:[#allocation4 + $0x188] sm:$0xff] %vm409, 0.0
      %vm460 = vcmask 257024
      %461 = vst.msk [vmem:[#allocation4 + $0x190] sm:$0xf] %vm460, 0.0
      %v462 = vld [vmem:[%s327] sm:$0xff]
      %v463 = vld [vmem:[%s327 + $0x8] sm:$0xff]
      %v464 = vld [vmem:[%s327 + $0x10] sm:$0xff]
      %v465 = vld [vmem:[%s327 + $0x18] sm:$0xff]
      %v466 = vld [vmem:[%s327 + $0x20] sm:$0xff]
      %v467 = vld [vmem:[%s327 + $0x28] sm:$0xff]
      %v468 = vld [vmem:[%s327 + $0x30] sm:$0xff]
      %v469 = vld [vmem:[%s327 + $0x38] sm:$0xff]
      %v470 = vld [vmem:[%s327 + $0x40] sm:$0xff]
      %v471 = vld [vmem:[%s327 + $0x48] sm:$0xff]
      %v472 = vld [vmem:[%s327 + $0x50] sm:$0xff]
      %v473 = vld [vmem:[%s327 + $0x58] sm:$0xff]
      %v474 = vld [vmem:[%s327 + $0x60] sm:$0xff]
      %v475 = vld [vmem:[%s327 + $0x68] sm:$0xff]
      %v476 = vld [vmem:[%s327 + $0x70] sm:$0xff]
      %v477 = vld [vmem:[%s327 + $0x78] sm:$0xff]
      %v478 = vld [vmem:[%s327 + $0x80] sm:$0xff]
      %v479 = vld [vmem:[%s327 + $0x88] sm:$0xff]
      %v480 = vld [vmem:[%s327 + $0x90] sm:$0xff]
      %v481 = vld [vmem:[%s327 + $0x98] sm:$0xff]
      %v482 = vld [vmem:[%s327 + $0xa0] sm:$0xff]
      %v483 = vld [vmem:[%s327 + $0xa8] sm:$0xff]
      %v484 = vld [vmem:[%s327 + $0xb0] sm:$0xff]
      %v485 = vld [vmem:[%s327 + $0xb8] sm:$0xff]
      %v486 = vld [vmem:[%s327 + $0xc0] sm:$0xff]
      %v487 = vld [vmem:[%s327 + $0xc8] sm:$0xff]
      %v488 = vld [vmem:[%s327 + $0xd0] sm:$0xff]
      %v489 = vld [vmem:[%s327 + $0xd8] sm:$0xff]
      %v490 = vld [vmem:[%s327 + $0xe0] sm:$0xff]
      %v491 = vld [vmem:[%s327 + $0xe8] sm:$0xff]
      %v492 = vld [vmem:[%s327 + $0xf0] sm:$0xff]
      %v493 = vld [vmem:[%s327 + $0xf8] sm:$0xff]
      %v494 = vld [vmem:[%s327 + $0x100] sm:$0xff]
      %v495 = vld [vmem:[%s327 + $0x108] sm:$0xff]
      %v496 = vld [vmem:[%s327 + $0x110] sm:$0xff]
      %v497 = vld [vmem:[%s327 + $0x118] sm:$0xff]
      %v498 = vld [vmem:[%s1] sm:$0xff]
      %v499 = vld [vmem:[%s1 + $0x8] sm:$0xff]
      %v500 = vld [vmem:[%s1 + $0x10] sm:$0xff]
      %v501 = vld [vmem:[%s1 + $0x18] sm:$0xff]
      %v502 = vld [vmem:[%s1 + $0x20] sm:$0xff]
      %v503 = vld [vmem:[%s1 + $0x28] sm:$0xff]
      %v504 = vld [vmem:[%s1 + $0x30] sm:$0xff]
      %v505 = vld [vmem:[%s1 + $0x38] sm:$0xff]
      %v506 = vld [vmem:[%s1 + $0x40] sm:$0xff]
      %v507 = vld [vmem:[%s1 + $0x48] sm:$0xff]
      %v508 = vld [vmem:[%s1 + $0x50] sm:$0xff]
      %v509 = vld [vmem:[%s1 + $0x58] sm:$0xff]
      %v510 = vld [vmem:[%s1 + $0x60] sm:$0xff]
      %v511 = vld [vmem:[%s1 + $0x68] sm:$0xff]
      %v512 = vld [vmem:[%s1 + $0x70] sm:$0xff]
      %v513 = vld [vmem:[%s1 + $0x78] sm:$0xff]
      %v514 = vld [vmem:[%s1 + $0x80] sm:$0xff]
      %v515 = vld [vmem:[%s1 + $0x88] sm:$0xff]
      %v516 = vld [vmem:[%s1 + $0x90] sm:$0xff]
      %v517 = vld [vmem:[%s1 + $0x98] sm:$0xff]
      %v518 = vld [vmem:[%s1 + $0xa0] sm:$0xff]
      %v519 = vld [vmem:[%s1 + $0xa8] sm:$0xff]
      %v520 = vld [vmem:[%s1 + $0xb0] sm:$0xff]
      %v521 = vld [vmem:[%s1 + $0xb8] sm:$0xff]
      %v522 = vld [vmem:[%s1 + $0xc0] sm:$0xff]
      %v523 = vld [vmem:[%s1 + $0xc8] sm:$0xff]
      %v524 = vld [vmem:[%s1 + $0xd0] sm:$0xff]
      %v525 = vld [vmem:[%s1 + $0xd8] sm:$0xff]
      %v526 = vld [vmem:[%s1 + $0xe0] sm:$0xff]
      %v527 = vld [vmem:[%s1 + $0xe8] sm:$0xff]
      %v528 = vld [vmem:[%s1 + $0xf0] sm:$0xff]
      %v529 = vld [vmem:[%s1 + $0xf8] sm:$0xff]
      %v530 = vld [vmem:[%s2] sm:$0x1]
      %v532 = vperm.slane %v530, 0
      %534 = vmatpush.msra.mxu0 %v513
      %535 = vmatpush.msra.mxu0 %v512
      %536 = vmatpush.msra.mxu0 %v511
      %537 = vmatpush.msra.mxu0 %v510
      %538 = vmatpush.msra.mxu0 %v509
      %539 = vmatpush.msra.mxu0 %v508
      %540 = vmatpush.msra.mxu0 %v507
      %541 = vmatpush.msra.mxu0 %v506
      %542 = vmatpush.msra.mxu0 %v505
      %543 = vmatpush.msra.mxu0 %v504
      %544 = vmatpush.msra.mxu0 %v503
      %545 = vmatpush.msra.mxu0 %v502
      %546 = vmatpush.msra.mxu0 %v501
      %547 = vmatpush.msra.mxu0 %v500
      %548 = vmatpush.msra.mxu0 %v499
      %549 = vmatpush.msra.mxu0 %v498
      %550 = vmatmul.f32.gmra.mxu0 %v462
      %v551 = vpop.f32.mrf.mxu0
      %v552 = vadd.f32 %v532, %v551
      %553 = vmatmul.f32.gmra.mxu0 %v464
      %v554 = vpop.f32.mrf.mxu0
      %v555 = vadd.f32 %v532, %v554
      %556 = vmatmul.f32.gmra.mxu0 %v466
      %v557 = vpop.f32.mrf.mxu0
      %v558 = vadd.f32 %v532, %v557
      %559 = vmatmul.f32.gmra.mxu0 %v468
      %v560 = vpop.f32.mrf.mxu0
      %v561 = vadd.f32 %v532, %v560
      %562 = vmatmul.f32.gmra.mxu0 %v470
      %v563 = vpop.f32.mrf.mxu0
      %v564 = vadd.f32 %v532, %v563
      %565 = vmatmul.f32.gmra.mxu0 %v472
      %v566 = vpop.f32.mrf.mxu0
      %v567 = vadd.f32 %v532, %v566
      %568 = vmatmul.f32.gmra.mxu0 %v474
      %v569 = vpop.f32.mrf.mxu0
      %v570 = vadd.f32 %v532, %v569
      %571 = vmatmul.f32.gmra.mxu0 %v476
      %v572 = vpop.f32.mrf.mxu0
      %v573 = vadd.f32 %v532, %v572
      %574 = vmatmul.f32.gmra.mxu0 %v478
      %v575 = vpop.f32.mrf.mxu0
      %v576 = vadd.f32 %v532, %v575
      %577 = vmatmul.f32.gmra.mxu0 %v480
      %v578 = vpop.f32.mrf.mxu0
      %v579 = vadd.f32 %v532, %v578
      %580 = vmatmul.f32.gmra.mxu0 %v482
      %v581 = vpop.f32.mrf.mxu0
      %v582 = vadd.f32 %v532, %v581
      %583 = vmatmul.f32.gmra.mxu0 %v484
      %v584 = vpop.f32.mrf.mxu0
      %v585 = vadd.f32 %v532, %v584
      %586 = vmatmul.f32.gmra.mxu0 %v486
      %v587 = vpop.f32.mrf.mxu0
      %v588 = vadd.f32 %v532, %v587
      %589 = vmatmul.f32.gmra.mxu0 %v488
      %v590 = vpop.f32.mrf.mxu0
      %v591 = vadd.f32 %v532, %v590
      %592 = vmatmul.f32.gmra.mxu0 %v490
      %v593 = vpop.f32.mrf.mxu0
      %v594 = vadd.f32 %v532, %v593
      %595 = vmatmul.f32.gmra.mxu0 %v492
      %v596 = vpop.f32.mrf.mxu0
      %v597 = vadd.f32 %v532, %v596
      %598 = vmatmul.f32.gmra.mxu0 %v494
      %v599 = vpop.f32.mrf.mxu0
      %v600 = vadd.f32 %v532, %v599
      %601 = vmatmul.f32.gmra.mxu0 %v496
      %v602 = vpop.f32.mrf.mxu0
      %v603 = vadd.f32 %v532, %v602
      %604 = vdwg.mxu0
      %605 = vmatpush.msra.mxu0 %v529
      %606 = vmatpush.msra.mxu0 %v528
      %607 = vmatpush.msra.mxu0 %v527
      %608 = vmatpush.msra.mxu0 %v526
      %609 = vmatpush.msra.mxu0 %v525
      %610 = vmatpush.msra.mxu0 %v524
      %611 = vmatpush.msra.mxu0 %v523
      %612 = vmatpush.msra.mxu0 %v522
      %613 = vmatpush.msra.mxu0 %v521
      %614 = vmatpush.msra.mxu0 %v520
      %615 = vmatpush.msra.mxu0 %v519
      %616 = vmatpush.msra.mxu0 %v518
      %617 = vmatpush.msra.mxu0 %v517
      %618 = vmatpush.msra.mxu0 %v516
      %619 = vmatpush.msra.mxu0 %v515
      %620 = vmatpush.msra.mxu0 %v514
      %621 = vmatmul.f32.gmra.mxu0 %v463
      %v622 = vpop.f32.mrf.mxu0
      %v623 = vadd.f32 %v552, %v622
      %624 = vmatmul.f32.gmra.mxu0 %v465
      %v625 = vpop.f32.mrf.mxu0
      %v626 = vadd.f32 %v555, %v625
      %627 = vmatmul.f32.gmra.mxu0 %v467
      %v628 = vpop.f32.mrf.mxu0
      %v629 = vadd.f32 %v558, %v628
      %630 = vmatmul.f32.gmra.mxu0 %v469
      %v631 = vpop.f32.mrf.mxu0
      %v632 = vadd.f32 %v561, %v631
      %633 = vmatmul.f32.gmra.mxu0 %v471
      %v634 = vpop.f32.mrf.mxu0
      %v635 = vadd.f32 %v564, %v634
      %636 = vmatmul.f32.gmra.mxu0 %v473
      %v637 = vpop.f32.mrf.mxu0
      %v638 = vadd.f32 %v567, %v637
      %639 = vmatmul.f32.gmra.mxu0 %v475
      %v640 = vpop.f32.mrf.mxu0
      %v641 = vadd.f32 %v570, %v640
      %642 = vmatmul.f32.gmra.mxu0 %v477
      %v643 = vpop.f32.mrf.mxu0
      %v644 = vadd.f32 %v573, %v643
      %645 = vmatmul.f32.gmra.mxu0 %v479
      %v646 = vpop.f32.mrf.mxu0
      %v647 = vadd.f32 %v576, %v646
      %648 = vmatmul.f32.gmra.mxu0 %v481
      %v649 = vpop.f32.mrf.mxu0
      %v650 = vadd.f32 %v579, %v649
      %651 = vmatmul.f32.gmra.mxu0 %v483
      %v652 = vpop.f32.mrf.mxu0
      %v653 = vadd.f32 %v582, %v652
      %654 = vmatmul.f32.gmra.mxu0 %v485
      %v655 = vpop.f32.mrf.mxu0
      %v656 = vadd.f32 %v585, %v655
      %657 = vmatmul.f32.gmra.mxu0 %v487
      %v658 = vpop.f32.mrf.mxu0
      %v659 = vadd.f32 %v588, %v658
      %660 = vmatmul.f32.gmra.mxu0 %v489
      %v661 = vpop.f32.mrf.mxu0
      %v662 = vadd.f32 %v591, %v661
      %663 = vmatmul.f32.gmra.mxu0 %v491
      %v664 = vpop.f32.mrf.mxu0
      %v665 = vadd.f32 %v594, %v664
      %666 = vmatmul.f32.gmra.mxu0 %v493
      %v667 = vpop.f32.mrf.mxu0
      %v668 = vadd.f32 %v597, %v667
      %669 = vmatmul.f32.gmra.mxu0 %v495
      %v670 = vpop.f32.mrf.mxu0
      %v671 = vadd.f32 %v600, %v670
      %672 = vmatmul.f32.gmra.mxu0 %v497
      %v673 = vpop.f32.mrf.mxu0
      %v674 = vadd.f32 %v603, %v673
      %675 = vdwg.mxu0
      %v676 = vmax.f32 %v623, 0.0
      %v677 = vmax.f32 %v626, 0.0
      %v678 = vmax.f32 %v629, 0.0
      %v679 = vmax.f32 %v632, 0.0
      %v680 = vmax.f32 %v635, 0.0
      %v681 = vmax.f32 %v638, 0.0
      %v682 = vmax.f32 %v641, 0.0
      %v683 = vmax.f32 %v644, 0.0
      %v684 = vmax.f32 %v647, 0.0
      %v685 = vmax.f32 %v650, 0.0
      %v686 = vmax.f32 %v653, 0.0
      %v687 = vmax.f32 %v656, 0.0
      %v688 = vmax.f32 %v659, 0.0
      %v689 = vmax.f32 %v662, 0.0
      %v690 = vmax.f32 %v665, 0.0
      %v691 = vmax.f32 %v668, 0.0
      %v692 = vmax.f32 %v671, 0.0
      %v693 = vmax.f32 %v674, 0.0
      %694 = vst [vmem:[#allocation2 + $0x22] sm:$0xff] %v676
      %695 = vst [vmem:[#allocation2 + $0x2a] sm:$0xf] %v677
      %696 = vst [vmem:[#allocation2 + $0x2e] sm:$0xf0] %v677
      %697 = vst [vmem:[#allocation2 + $0x36] sm:$0xff] %v678
      %698 = vst [vmem:[#allocation2 + $0x42] sm:$0xff] %v679
      %699 = vst [vmem:[#allocation2 + $0x4a] sm:$0xf] %v680
      %700 = vst [vmem:[#allocation2 + $0x4e] sm:$0xf0] %v680
      %701 = vst [vmem:[#allocation2 + $0x56] sm:$0xff] %v681
      %702 = vst [vmem:[#allocation2 + $0x62] sm:$0xff] %v682
      %703 = vst [vmem:[#allocation2 + $0x6a] sm:$0xf] %v683
      %704 = vst [vmem:[#allocation2 + $0x6e] sm:$0xf0] %v683
      %705 = vst [vmem:[#allocation2 + $0x76] sm:$0xff] %v684
      %706 = vst [vmem:[#allocation2 + $0x82] sm:$0xff] %v685
      %707 = vst [vmem:[#allocation2 + $0x8a] sm:$0xf] %v686
      %708 = vst [vmem:[#allocation2 + $0x8e] sm:$0xf0] %v686
      %709 = vst [vmem:[#allocation2 + $0x96] sm:$0xff] %v687
      %710 = vst [vmem:[#allocation2 + $0xa2] sm:$0xff] %v688
      %711 = vst [vmem:[#allocation2 + $0xaa] sm:$0xf] %v689
      %712 = vst [vmem:[#allocation2 + $0xae] sm:$0xf0] %v689
      %713 = vst [vmem:[#allocation2 + $0xb6] sm:$0xff] %v690
      %714 = vst [vmem:[#allocation2 + $0xc2] sm:$0xff] %v691
      %715 = vst [vmem:[#allocation2 + $0xca] sm:$0xf] %v692
      %716 = vst [vmem:[#allocation2 + $0xce] sm:$0xf0] %v692
      %717 = vst [vmem:[#allocation2 + $0xd6] sm:$0xff] %v693
      %v718 = vld [vmem:[#allocation2] sm:$0xff]
      %v719 = vld [vmem:[#allocation2 + $0x8] sm:$0xff]
      %v720 = vld [vmem:[#allocation2 + $0x10] sm:$0xff]
      %v721 = vld [vmem:[#allocation2 + $0x18] sm:$0xff]
      %v722 = vld [vmem:[#allocation2 + $0x20] sm:$0xff]
      %v723 = vld [vmem:[#allocation2 + $0x28] sm:$0xff]
      %v724 = vld [vmem:[#allocation2 + $0x30] sm:$0xff]
      %v725 = vld [vmem:[#allocation2 + $0x38] sm:$0xff]
      %v726 = vld [vmem:[#allocation2 + $0x40] sm:$0xff]
      %v727 = vld [vmem:[#allocation2 + $0x48] sm:$0xff]
      %v728 = vld [vmem:[#allocation2 + $0x50] sm:$0xff]
      %v729 = vld [vmem:[#allocation2 + $0x58] sm:$0xff]
      %v730 = vld [vmem:[#allocation2 + $0x60] sm:$0xff]
      %v731 = vld [vmem:[#allocation2 + $0x68] sm:$0xff]
      %v732 = vld [vmem:[#allocation2 + $0x70] sm:$0xff]
      %v733 = vld [vmem:[#allocation2 + $0x78] sm:$0xff]
      %v734 = vld [vmem:[#allocation2 + $0x80] sm:$0xff]
      %v735 = vld [vmem:[#allocation2 + $0x88] sm:$0xff]
      %v736 = vld [vmem:[#allocation2 + $0x90] sm:$0xff]
      %v737 = vld [vmem:[#allocation2 + $0x98] sm:$0xff]
      %v738 = vld [vmem:[#allocation2 + $0xa0] sm:$0xff]
      %v739 = vld [vmem:[#allocation2 + $0xa8] sm:$0xff]
      %v740 = vld [vmem:[#allocation2 + $0xb0] sm:$0xff]
      %v741 = vld [vmem:[#allocation2 + $0xb8] sm:$0xff]
      %v742 = vld [vmem:[#allocation2 + $0xc0] sm:$0xff]
      %v743 = vld [vmem:[#allocation2 + $0xc8] sm:$0xff]
      %v744 = vld [vmem:[#allocation2 + $0xd0] sm:$0xff]
      %v745 = vld [vmem:[#allocation2 + $0xd8] sm:$0xff]
      %v746 = vld [vmem:[%s3] sm:$0xff]
      %v747 = vld [vmem:[%s3 + $0x8] sm:$0xff]
      %v748 = vld [vmem:[%s3 + $0x10] sm:$0xff]
      %v749 = vld [vmem:[%s3 + $0x18] sm:$0xff]
      %v750 = vld [vmem:[%s3 + $0x20] sm:$0xff]
      %v751 = vld [vmem:[%s3 + $0x28] sm:$0xff]
      %v752 = vld [vmem:[%s3 + $0x30] sm:$0xff]
      %v753 = vld [vmem:[%s3 + $0x38] sm:$0xff]
      %v754 = vld [vmem:[%s3 + $0x40] sm:$0xff]
      %v755 = vld [vmem:[%s3 + $0x48] sm:$0xff]
      %v756 = vld [vmem:[%s3 + $0x50] sm:$0xff]
      %v757 = vld [vmem:[%s3 + $0x58] sm:$0xff]
      %v758 = vld [vmem:[%s3 + $0x60] sm:$0xff]
      %v759 = vld [vmem:[%s3 + $0x68] sm:$0xff]
      %v760 = vld [vmem:[%s3 + $0x70] sm:$0xff]
      %v761 = vld [vmem:[%s3 + $0x78] sm:$0xff]
      %v762 = vld [vmem:[#allocation2 + $0x1] sm:$0xff]
      %v763 = vld [vmem:[#allocation2 + $0x9] sm:$0xff]
      %v764 = vld [vmem:[#allocation2 + $0x11] sm:$0xff]
      %v765 = vld [vmem:[#allocation2 + $0x19] sm:$0xff]
      %v766 = vld [vmem:[#allocation2 + $0x21] sm:$0xff]
      %v767 = vld [vmem:[#allocation2 + $0x29] sm:$0xff]
      %v768 = vld [vmem:[#allocation2 + $0x31] sm:$0xff]
      %v769 = vld [vmem:[#allocation2 + $0x39] sm:$0xff]
      %v770 = vld [vmem:[#allocation2 + $0x41] sm:$0xff]
      %v771 = vld [vmem:[#allocation2 + $0x49] sm:$0xff]
      %v772 = vld [vmem:[#allocation2 + $0x51] sm:$0xff]
      %v773 = vld [vmem:[#allocation2 + $0x59] sm:$0xff]
      %v774 = vld [vmem:[#allocation2 + $0x61] sm:$0xff]
      %v775 = vld [vmem:[#allocation2 + $0x69] sm:$0xff]
      %v776 = vld [vmem:[#allocation2 + $0x71] sm:$0xff]
      %v777 = vld [vmem:[#allocation2 + $0x79] sm:$0xff]
      %v778 = vld [vmem:[#allocation2 + $0x81] sm:$0xff]
      %v779 = vld [vmem:[#allocation2 + $0x89] sm:$0xff]
      %v780 = vld [vmem:[#allocation2 + $0x91] sm:$0xff]
      %v781 = vld [vmem:[#allocation2 + $0x99] sm:$0xff]
      %v782 = vld [vmem:[#allocation2 + $0xa1] sm:$0xff]
      %v783 = vld [vmem:[#allocation2 + $0xa9] sm:$0xff]
      %v784 = vld [vmem:[#allocation2 + $0xb1] sm:$0xff]
      %v785 = vld [vmem:[#allocation2 + $0xb9] sm:$0xff]
      %v786 = vld [vmem:[#allocation2 + $0xc1] sm:$0xff]
      %v787 = vld [vmem:[#allocation2 + $0xc9] sm:$0xff]
      %v788 = vld [vmem:[#allocation2 + $0xd1] sm:$0xff]
      %v789 = vld [vmem:[#allocation2 + $0xd9] sm:$0xff]
      %s790 = scalar_lea.vmem %s3, 128
      %v791 = vld [vmem:[%s790] sm:$0xff]
      %v792 = vld [vmem:[%s790 + $0x8] sm:$0xff]
      %v793 = vld [vmem:[%s790 + $0x10] sm:$0xff]
      %v794 = vld [vmem:[%s790 + $0x18] sm:$0xff]
      %v795 = vld [vmem:[%s790 + $0x20] sm:$0xff]
      %v796 = vld [vmem:[%s790 + $0x28] sm:$0xff]
      %v797 = vld [vmem:[%s790 + $0x30] sm:$0xff]
      %v798 = vld [vmem:[%s790 + $0x38] sm:$0xff]
      %v799 = vld [vmem:[%s790 + $0x40] sm:$0xff]
      %v800 = vld [vmem:[%s790 + $0x48] sm:$0xff]
      %v801 = vld [vmem:[%s790 + $0x50] sm:$0xff]
      %v802 = vld [vmem:[%s790 + $0x58] sm:$0xff]
      %v803 = vld [vmem:[%s790 + $0x60] sm:$0xff]
      %v804 = vld [vmem:[%s790 + $0x68] sm:$0xff]
      %v805 = vld [vmem:[%s790 + $0x70] sm:$0xff]
      %v806 = vld [vmem:[%s790 + $0x78] sm:$0xff]
      %807 = vmatpush.msra.mxu0 %v806
      %808 = vmatpush.msra.mxu0 %v805
      %809 = vmatpush.msra.mxu0 %v804
      %810 = vmatpush.msra.mxu0 %v803
      %811 = vmatpush.msra.mxu0 %v802
      %812 = vmatpush.msra.mxu0 %v801
      %813 = vmatpush.msra.mxu0 %v800
      %814 = vmatpush.msra.mxu0 %v799
      %815 = vmatpush.msra.mxu0 %v798
      %816 = vmatpush.msra.mxu0 %v797
      %817 = vmatpush.msra.mxu0 %v796
      %818 = vmatpush.msra.mxu0 %v795
      %819 = vmatpush.msra.mxu0 %v794
      %820 = vmatpush.msra.mxu0 %v793
      %821 = vmatpush.msra.mxu0 %v792
      %822 = vmatpush.msra.mxu0 %v791
      %823 = vmatmul.f32.gmra.mxu0 %v762
      %v824 = vpop.f32.mrf.mxu0
      %v825 = vadd.f32 0.0, %v824
      %826 = vmatmul.f32.gmra.mxu0 %v763
      %v827 = vpop.f32.mrf.mxu0
      %v828 = vadd.f32 0.0, %v827
      %829 = vmatmul.f32.gmra.mxu0 %v764
      %v830 = vpop.f32.mrf.mxu0
      %v831 = vadd.f32 0.0, %v830
      %832 = vmatmul.f32.gmra.mxu0 %v765
      %v833 = vpop.f32.mrf.mxu0
      %v834 = vadd.f32 0.0, %v833
      %835 = vmatmul.f32.gmra.mxu0 %v766
      %v836 = vpop.f32.mrf.mxu0
      %v837 = vadd.f32 0.0, %v836
      %838 = vmatmul.f32.gmra.mxu0 %v767
      %v839 = vpop.f32.mrf.mxu0
      %v840 = vadd.f32 0.0, %v839
      %841 = vmatmul.f32.gmra.mxu0 %v768
      %v842 = vpop.f32.mrf.mxu0
      %v843 = vadd.f32 0.0, %v842
      %844 = vmatmul.f32.gmra.mxu0 %v769
      %v845 = vpop.f32.mrf.mxu0
      %v846 = vadd.f32 0.0, %v845
      %847 = vmatmul.f32.gmra.mxu0 %v770
      %v848 = vpop.f32.mrf.mxu0
      %v849 = vadd.f32 0.0, %v848
      %850 = vmatmul.f32.gmra.mxu0 %v771
      %v851 = vpop.f32.mrf.mxu0
      %v852 = vadd.f32 0.0, %v851
      %853 = vmatmul.f32.gmra.mxu0 %v772
      %v854 = vpop.f32.mrf.mxu0
      %v855 = vadd.f32 0.0, %v854
      %856 = vmatmul.f32.gmra.mxu0 %v773
      %v857 = vpop.f32.mrf.mxu0
      %v858 = vadd.f32 0.0, %v857
      %859 = vmatmul.f32.gmra.mxu0 %v774
      %v860 = vpop.f32.mrf.mxu0
      %v861 = vadd.f32 0.0, %v860
      %862 = vmatmul.f32.gmra.mxu0 %v775
      %v863 = vpop.f32.mrf.mxu0
      %v864 = vadd.f32 0.0, %v863
      %865 = vmatmul.f32.gmra.mxu0 %v776
      %v866 = vpop.f32.mrf.mxu0
      %v867 = vadd.f32 0.0, %v866
      %868 = vmatmul.f32.gmra.mxu0 %v777
      %v869 = vpop.f32.mrf.mxu0
      %v870 = vadd.f32 0.0, %v869
      %871 = vmatmul.f32.gmra.mxu0 %v778
      %v872 = vpop.f32.mrf.mxu0
      %v873 = vadd.f32 0.0, %v872
      %874 = vmatmul.f32.gmra.mxu0 %v779
      %v875 = vpop.f32.mrf.mxu0
      %v876 = vadd.f32 0.0, %v875
      %877 = vmatmul.f32.gmra.mxu0 %v780
      %v878 = vpop.f32.mrf.mxu0
      %v879 = vadd.f32 0.0, %v878
      %880 = vmatmul.f32.gmra.mxu0 %v781
      %v881 = vpop.f32.mrf.mxu0
      %v882 = vadd.f32 0.0, %v881
      %883 = vmatmul.f32.gmra.mxu0 %v782
      %v884 = vpop.f32.mrf.mxu0
      %v885 = vadd.f32 0.0, %v884
      %886 = vmatmul.f32.gmra.mxu0 %v783
      %v887 = vpop.f32.mrf.mxu0
      %v888 = vadd.f32 0.0, %v887
      %889 = vmatmul.f32.gmra.mxu0 %v784
      %v890 = vpop.f32.mrf.mxu0
      %v891 = vadd.f32 0.0, %v890
      %892 = vmatmul.f32.gmra.mxu0 %v785
      %v893 = vpop.f32.mrf.mxu0
      %v894 = vadd.f32 0.0, %v893
      %895 = vmatmul.f32.gmra.mxu0 %v786
      %v896 = vpop.f32.mrf.mxu0
      %v897 = vadd.f32 0.0, %v896
      %898 = vmatmul.f32.gmra.mxu0 %v787
      %v899 = vpop.f32.mrf.mxu0
      %v900 = vadd.f32 0.0, %v899
      %901 = vmatmul.f32.gmra.mxu0 %v788
      %v902 = vpop.f32.mrf.mxu0
      %v903 = vadd.f32 0.0, %v902
      %904 = vmatmul.f32.gmra.mxu0 %v789
      %v905 = vpop.f32.mrf.mxu0
      %v906 = vadd.f32 0.0, %v905
      %907 = vdwg.mxu0
      %908 = vmatpush.msra.mxu0 %v761
      %909 = vmatpush.msra.mxu0 %v760
      %910 = vmatpush.msra.mxu0 %v759
      %911 = vmatpush.msra.mxu0 %v758
      %912 = vmatpush.msra.mxu0 %v757
      %913 = vmatpush.msra.mxu0 %v756
      %914 = vmatpush.msra.mxu0 %v755
      %915 = vmatpush.msra.mxu0 %v754
      %916 = vmatpush.msra.mxu0 %v753
      %917 = vmatpush.msra.mxu0 %v752
      %918 = vmatpush.msra.mxu0 %v751
      %919 = vmatpush.msra.mxu0 %v750
      %920 = vmatpush.msra.mxu0 %v749
      %921 = vmatpush.msra.mxu0 %v748
      %922 = vmatpush.msra.mxu0 %v747
      %923 = vmatpush.msra.mxu0 %v746
      %924 = vmatmul.f32.gmra.mxu0 %v718
      %v925 = vpop.f32.mrf.mxu0
      %v926 = vadd.f32 %v825, %v925
      %927 = vmatmul.f32.gmra.mxu0 %v719
      %v928 = vpop.f32.mrf.mxu0
      %v929 = vadd.f32 %v828, %v928
      %930 = vmatmul.f32.gmra.mxu0 %v720
      %v931 = vpop.f32.mrf.mxu0
      %v932 = vadd.f32 %v831, %v931
      %933 = vmatmul.f32.gmra.mxu0 %v721
      %v934 = vpop.f32.mrf.mxu0
      %v935 = vadd.f32 %v834, %v934
      %936 = vmatmul.f32.gmra.mxu0 %v722
      %v937 = vpop.f32.mrf.mxu0
      %v938 = vadd.f32 %v837, %v937
      %939 = vmatmul.f32.gmra.mxu0 %v723
      %v940 = vpop.f32.mrf.mxu0
      %v941 = vadd.f32 %v840, %v940
      %942 = vmatmul.f32.gmra.mxu0 %v724
      %v943 = vpop.f32.mrf.mxu0
      %v944 = vadd.f32 %v843, %v943
      %945 = vmatmul.f32.gmra.mxu0 %v725
      %v946 = vpop.f32.mrf.mxu0
      %v947 = vadd.f32 %v846, %v946
      %948 = vmatmul.f32.gmra.mxu0 %v726
      %v949 = vpop.f32.mrf.mxu0
      %v950 = vadd.f32 %v849, %v949
      %951 = vmatmul.f32.gmra.mxu0 %v727
      %v952 = vpop.f32.mrf.mxu0
      %v953 = vadd.f32 %v852, %v952
      %954 = vmatmul.f32.gmra.mxu0 %v728
      %v955 = vpop.f32.mrf.mxu0
      %v956 = vadd.f32 %v855, %v955
      %957 = vmatmul.f32.gmra.mxu0 %v729
      %v958 = vpop.f32.mrf.mxu0
      %v959 = vadd.f32 %v858, %v958
      %960 = vmatmul.f32.gmra.mxu0 %v730
      %v961 = vpop.f32.mrf.mxu0
      %v962 = vadd.f32 %v861, %v961
      %963 = vmatmul.f32.gmra.mxu0 %v731
      %v964 = vpop.f32.mrf.mxu0
      %v965 = vadd.f32 %v864, %v964
      %966 = vmatmul.f32.gmra.mxu0 %v732
      %v967 = vpop.f32.mrf.mxu0
      %v968 = vadd.f32 %v867, %v967
      %969 = vmatmul.f32.gmra.mxu0 %v733
      %v970 = vpop.f32.mrf.mxu0
      %v971 = vadd.f32 %v870, %v970
      %972 = vmatmul.f32.gmra.mxu0 %v734
      %v973 = vpop.f32.mrf.mxu0
      %v974 = vadd.f32 %v873, %v973
      %975 = vmatmul.f32.gmra.mxu0 %v735
      %v976 = vpop.f32.mrf.mxu0
      %v977 = vadd.f32 %v876, %v976
      %978 = vmatmul.f32.gmra.mxu0 %v736
      %v979 = vpop.f32.mrf.mxu0
      %v980 = vadd.f32 %v879, %v979
      %981 = vmatmul.f32.gmra.mxu0 %v737
      %v982 = vpop.f32.mrf.mxu0
      %v983 = vadd.f32 %v882, %v982
      %984 = vmatmul.f32.gmra.mxu0 %v738
      %v985 = vpop.f32.mrf.mxu0
      %v986 = vadd.f32 %v885, %v985
      %987 = vmatmul.f32.gmra.mxu0 %v739
      %v988 = vpop.f32.mrf.mxu0
      %v989 = vadd.f32 %v888, %v988
      %990 = vmatmul.f32.gmra.mxu0 %v740
      %v991 = vpop.f32.mrf.mxu0
      %v992 = vadd.f32 %v891, %v991
      %993 = vmatmul.f32.gmra.mxu0 %v741
      %v994 = vpop.f32.mrf.mxu0
      %v995 = vadd.f32 %v894, %v994
      %996 = vmatmul.f32.gmra.mxu0 %v742
      %v997 = vpop.f32.mrf.mxu0
      %v998 = vadd.f32 %v897, %v997
      %999 = vmatmul.f32.gmra.mxu0 %v743
      %v1000 = vpop.f32.mrf.mxu0
      %v1001 = vadd.f32 %v900, %v1000
      %1002 = vmatmul.f32.gmra.mxu0 %v744
      %v1003 = vpop.f32.mrf.mxu0
      %v1004 = vadd.f32 %v903, %v1003
      %1005 = vmatmul.f32.gmra.mxu0 %v745
      %v1006 = vpop.f32.mrf.mxu0
      %v1007 = vadd.f32 %v906, %v1006
      %1008 = vdwg.mxu0
      %v1009 = vld [vmem:[#allocation2 + $0x2] sm:$0xff]
      %v1010 = vld [vmem:[#allocation2 + $0xa] sm:$0xff]
      %v1011 = vld [vmem:[#allocation2 + $0x12] sm:$0xff]
      %v1012 = vld [vmem:[#allocation2 + $0x1a] sm:$0xff]
      %v1013 = vld [vmem:[#allocation2 + $0x22] sm:$0xff]
      %v1014 = vld [vmem:[#allocation2 + $0x2a] sm:$0xff]
      %v1015 = vld [vmem:[#allocation2 + $0x32] sm:$0xff]
      %v1016 = vld [vmem:[#allocation2 + $0x3a] sm:$0xff]
      %v1017 = vld [vmem:[#allocation2 + $0x42] sm:$0xff]
      %v1018 = vld [vmem:[#allocation2 + $0x4a] sm:$0xff]
      %v1019 = vld [vmem:[#allocation2 + $0x52] sm:$0xff]
      %v1020 = vld [vmem:[#allocation2 + $0x5a] sm:$0xff]
      %v1021 = vld [vmem:[#allocation2 + $0x62] sm:$0xff]
      %v1022 = vld [vmem:[#allocation2 + $0x6a] sm:$0xff]
      %v1023 = vld [vmem:[#allocation2 + $0x72] sm:$0xff]
      %v1024 = vld [vmem:[#allocation2 + $0x7a] sm:$0xff]
      %v1025 = vld [vmem:[#allocation2 + $0x82] sm:$0xff]
      %v1026 = vld [vmem:[#allocation2 + $0x8a] sm:$0xff]
      %v1027 = vld [vmem:[#allocation2 + $0x92] sm:$0xff]
      %v1028 = vld [vmem:[#allocation2 + $0x9a] sm:$0xff]
      %v1029 = vld [vmem:[#allocation2 + $0xa2] sm:$0xff]
      %v1030 = vld [vmem:[#allocation2 + $0xaa] sm:$0xff]
      %v1031 = vld [vmem:[#allocation2 + $0xb2] sm:$0xff]
      %v1032 = vld [vmem:[#allocation2 + $0xba] sm:$0xff]
      %v1033 = vld [vmem:[#allocation2 + $0xc2] sm:$0xff]
      %v1034 = vld [vmem:[#allocation2 + $0xca] sm:$0xff]
      %v1035 = vld [vmem:[#allocation2 + $0xd2] sm:$0xff]
      %v1036 = vld [vmem:[#allocation2 + $0xda] sm:$0xff]
      %s1037 = scalar_lea.vmem %s3, 256
      %v1038 = vld [vmem:[%s1037] sm:$0xff]
      %v1039 = vld [vmem:[%s1037 + $0x8] sm:$0xff]
      %v1040 = vld [vmem:[%s1037 + $0x10] sm:$0xff]
      %v1041 = vld [vmem:[%s1037 + $0x18] sm:$0xff]
      %v1042 = vld [vmem:[%s1037 + $0x20] sm:$0xff]
      %v1043 = vld [vmem:[%s1037 + $0x28] sm:$0xff]
      %v1044 = vld [vmem:[%s1037 + $0x30] sm:$0xff]
      %v1045 = vld [vmem:[%s1037 + $0x38] sm:$0xff]
      %v1046 = vld [vmem:[%s1037 + $0x40] sm:$0xff]
      %v1047 = vld [vmem:[%s1037 + $0x48] sm:$0xff]
      %v1048 = vld [vmem:[%s1037 + $0x50] sm:$0xff]
      %v1049 = vld [vmem:[%s1037 + $0x58] sm:$0xff]
      %v1050 = vld [vmem:[%s1037 + $0x60] sm:$0xff]
      %v1051 = vld [vmem:[%s1037 + $0x68] sm:$0xff]
      %v1052 = vld [vmem:[%s1037 + $0x70] sm:$0xff]
      %v1053 = vld [vmem:[%s1037 + $0x78] sm:$0xff]
      %1054 = vmatpush.msra.mxu0 %v1053
      %1055 = vmatpush.msra.mxu0 %v1052
      %1056 = vmatpush.msra.mxu0 %v1051
      %1057 = vmatpush.msra.mxu0 %v1050
      %1058 = vmatpush.msra.mxu0 %v1049
      %1059 = vmatpush.msra.mxu0 %v1048
      %1060 = vmatpush.msra.mxu0 %v1047
      %1061 = vmatpush.msra.mxu0 %v1046
      %1062 = vmatpush.msra.mxu0 %v1045
      %1063 = vmatpush.msra.mxu0 %v1044
      %1064 = vmatpush.msra.mxu0 %v1043
      %1065 = vmatpush.msra.mxu0 %v1042
      %1066 = vmatpush.msra.mxu0 %v1041
      %1067 = vmatpush.msra.mxu0 %v1040
      %1068 = vmatpush.msra.mxu0 %v1039
      %1069 = vmatpush.msra.mxu0 %v1038
      %1070 = vmatmul.f32.gmra.mxu0 %v1009
      %v1071 = vpop.f32.mrf.mxu0
      %v1072 = vadd.f32 0.0, %v1071
      %1073 = vmatmul.f32.gmra.mxu0 %v1010
      %v1074 = vpop.f32.mrf.mxu0
      %v1075 = vadd.f32 0.0, %v1074
      %1076 = vmatmul.f32.gmra.mxu0 %v1011
      %v1077 = vpop.f32.mrf.mxu0
      %v1078 = vadd.f32 0.0, %v1077
      %1079 = vmatmul.f32.gmra.mxu0 %v1012
      %v1080 = vpop.f32.mrf.mxu0
      %v1081 = vadd.f32 0.0, %v1080
      %1082 = vmatmul.f32.gmra.mxu0 %v1013
      %v1083 = vpop.f32.mrf.mxu0
      %v1084 = vadd.f32 0.0, %v1083
      %1085 = vmatmul.f32.gmra.mxu0 %v1014
      %v1086 = vpop.f32.mrf.mxu0
      %v1087 = vadd.f32 0.0, %v1086
      %1088 = vmatmul.f32.gmra.mxu0 %v1015
      %v1089 = vpop.f32.mrf.mxu0
      %v1090 = vadd.f32 0.0, %v1089
      %1091 = vmatmul.f32.gmra.mxu0 %v1016
      %v1092 = vpop.f32.mrf.mxu0
      %v1093 = vadd.f32 0.0, %v1092
      %1094 = vmatmul.f32.gmra.mxu0 %v1017
      %v1095 = vpop.f32.mrf.mxu0
      %v1096 = vadd.f32 0.0, %v1095
      %1097 = vmatmul.f32.gmra.mxu0 %v1018
      %v1098 = vpop.f32.mrf.mxu0
      %v1099 = vadd.f32 0.0, %v1098
      %1100 = vmatmul.f32.gmra.mxu0 %v1019
      %v1101 = vpop.f32.mrf.mxu0
      %v1102 = vadd.f32 0.0, %v1101
      %1103 = vmatmul.f32.gmra.mxu0 %v1020
      %v1104 = vpop.f32.mrf.mxu0
      %v1105 = vadd.f32 0.0, %v1104
      %1106 = vmatmul.f32.gmra.mxu0 %v1021
      %v1107 = vpop.f32.mrf.mxu0
      %v1108 = vadd.f32 0.0, %v1107
      %1109 = vmatmul.f32.gmra.mxu0 %v1022
      %v1110 = vpop.f32.mrf.mxu0
      %v1111 = vadd.f32 0.0, %v1110
      %1112 = vmatmul.f32.gmra.mxu0 %v1023
      %v1113 = vpop.f32.mrf.mxu0
      %v1114 = vadd.f32 0.0, %v1113
      %1115 = vmatmul.f32.gmra.mxu0 %v1024
      %v1116 = vpop.f32.mrf.mxu0
      %v1117 = vadd.f32 0.0, %v1116
      %1118 = vmatmul.f32.gmra.mxu0 %v1025
      %v1119 = vpop.f32.mrf.mxu0
      %v1120 = vadd.f32 0.0, %v1119
      %1121 = vmatmul.f32.gmra.mxu0 %v1026
      %v1122 = vpop.f32.mrf.mxu0
      %v1123 = vadd.f32 0.0, %v1122
      %1124 = vmatmul.f32.gmra.mxu0 %v1027
      %v1125 = vpop.f32.mrf.mxu0
      %v1126 = vadd.f32 0.0, %v1125
      %1127 = vmatmul.f32.gmra.mxu0 %v1028
      %v1128 = vpop.f32.mrf.mxu0
      %v1129 = vadd.f32 0.0, %v1128
      %1130 = vmatmul.f32.gmra.mxu0 %v1029
      %v1131 = vpop.f32.mrf.mxu0
      %v1132 = vadd.f32 0.0, %v1131
      %1133 = vmatmul.f32.gmra.mxu0 %v1030
      %v1134 = vpop.f32.mrf.mxu0
      %v1135 = vadd.f32 0.0, %v1134
      %1136 = vmatmul.f32.gmra.mxu0 %v1031
      %v1137 = vpop.f32.mrf.mxu0
      %v1138 = vadd.f32 0.0, %v1137
      %1139 = vmatmul.f32.gmra.mxu0 %v1032
      %v1140 = vpop.f32.mrf.mxu0
      %v1141 = vadd.f32 0.0, %v1140
      %1142 = vmatmul.f32.gmra.mxu0 %v1033
      %v1143 = vpop.f32.mrf.mxu0
      %v1144 = vadd.f32 0.0, %v1143
      %1145 = vmatmul.f32.gmra.mxu0 %v1034
      %v1146 = vpop.f32.mrf.mxu0
      %v1147 = vadd.f32 0.0, %v1146
      %1148 = vmatmul.f32.gmra.mxu0 %v1035
      %v1149 = vpop.f32.mrf.mxu0
      %v1150 = vadd.f32 0.0, %v1149
      %1151 = vmatmul.f32.gmra.mxu0 %v1036
      %v1152 = vpop.f32.mrf.mxu0
      %v1153 = vadd.f32 0.0, %v1152
      %1154 = vdwg.mxu0
      %v1155 = vadd.f32 %v926, %v1072
      %v1156 = vadd.f32 %v929, %v1075
      %v1157 = vadd.f32 %v932, %v1078
      %v1158 = vadd.f32 %v935, %v1081
      %v1159 = vadd.f32 %v938, %v1084
      %v1160 = vadd.f32 %v941, %v1087
      %v1161 = vadd.f32 %v944, %v1090
      %v1162 = vadd.f32 %v947, %v1093
      %v1163 = vadd.f32 %v950, %v1096
      %v1164 = vadd.f32 %v953, %v1099
      %v1165 = vadd.f32 %v956, %v1102
      %v1166 = vadd.f32 %v959, %v1105
      %v1167 = vadd.f32 %v962, %v1108
      %v1168 = vadd.f32 %v965, %v1111
      %v1169 = vadd.f32 %v968, %v1114
      %v1170 = vadd.f32 %v971, %v1117
      %v1171 = vadd.f32 %v974, %v1120
      %v1172 = vadd.f32 %v977, %v1123
      %v1173 = vadd.f32 %v980, %v1126
      %v1174 = vadd.f32 %v983, %v1129
      %v1175 = vadd.f32 %v986, %v1132
      %v1176 = vadd.f32 %v989, %v1135
      %v1177 = vadd.f32 %v992, %v1138
      %v1178 = vadd.f32 %v995, %v1141
      %v1179 = vadd.f32 %v998, %v1144
      %v1180 = vadd.f32 %v1001, %v1147
      %v1181 = vadd.f32 %v1004, %v1150
      %v1182 = vadd.f32 %v1007, %v1153
      %v1183 = vld [vmem:[#allocation2 + $0x10] sm:$0xff]
      %v1184 = vld [vmem:[#allocation2 + $0x18] sm:$0xff]
      %v1185 = vld [vmem:[#allocation2 + $0x20] sm:$0xff]
      %v1186 = vld [vmem:[#allocation2 + $0x28] sm:$0xff]
      %v1187 = vld [vmem:[#allocation2 + $0x30] sm:$0xff]
      %v1188 = vld [vmem:[#allocation2 + $0x38] sm:$0xff]
      %v1189 = vld [vmem:[#allocation2 + $0x40] sm:$0xff]
      %v1190 = vld [vmem:[#allocation2 + $0x48] sm:$0xff]
      %v1191 = vld [vmem:[#allocation2 + $0x50] sm:$0xff]
      %v1192 = vld [vmem:[#allocation2 + $0x58] sm:$0xff]
      %v1193 = vld [vmem:[#allocation2 + $0x60] sm:$0xff]
      %v1194 = vld [vmem:[#allocation2 + $0x68] sm:$0xff]
      %v1195 = vld [vmem:[#allocation2 + $0x70] sm:$0xff]
      %v1196 = vld [vmem:[#allocation2 + $0x78] sm:$0xff]
      %v1197 = vld [vmem:[#allocation2 + $0x80] sm:$0xff]
      %v1198 = vld [vmem:[#allocation2 + $0x88] sm:$0xff]
      %v1199 = vld [vmem:[#allocation2 + $0x90] sm:$0xff]
      %v1200 = vld [vmem:[#allocation2 + $0x98] sm:$0xff]
      %v1201 = vld [vmem:[#allocation2 + $0xa0] sm:$0xff]
      %v1202 = vld [vmem:[#allocation2 + $0xa8] sm:$0xff]
      %v1203 = vld [vmem:[#allocation2 + $0xb0] sm:$0xff]
      %v1204 = vld [vmem:[#allocation2 + $0xb8] sm:$0xff]
      %v1205 = vld [vmem:[#allocation2 + $0xc0] sm:$0xff]
      %v1206 = vld [vmem:[#allocation2 + $0xc8] sm:$0xff]
      %v1207 = vld [vmem:[#allocation2 + $0xd0] sm:$0xff]
      %v1208 = vld [vmem:[#allocation2 + $0xd8] sm:$0xff]
      %v1209 = vld [vmem:[#allocation2 + $0xe0] sm:$0xff]
      %v1210 = vld [vmem:[#allocation2 + $0xe8] sm:$0xff]
      %s1211 = scalar_lea.vmem %s3, 384
      %v1212 = vld [vmem:[%s1211] sm:$0xff]
      %v1213 = vld [vmem:[%s1211 + $0x8] sm:$0xff]
      %v1214 = vld [vmem:[%s1211 + $0x10] sm:$0xff]
      %v1215 = vld [vmem:[%s1211 + $0x18] sm:$0xff]
      %v1216 = vld [vmem:[%s1211 + $0x20] sm:$0xff]
      %v1217 = vld [vmem:[%s1211 + $0x28] sm:$0xff]
      %v1218 = vld [vmem:[%s1211 + $0x30] sm:$0xff]
      %v1219 = vld [vmem:[%s1211 + $0x38] sm:$0xff]
      %v1220 = vld [vmem:[%s1211 + $0x40] sm:$0xff]
      %v1221 = vld [vmem:[%s1211 + $0x48] sm:$0xff]
      %v1222 = vld [vmem:[%s1211 + $0x50] sm:$0xff]
      %v1223 = vld [vmem:[%s1211 + $0x58] sm:$0xff]
      %v1224 = vld [vmem:[%s1211 + $0x60] sm:$0xff]
      %v1225 = vld [vmem:[%s1211 + $0x68] sm:$0xff]
      %v1226 = vld [vmem:[%s1211 + $0x70] sm:$0xff]
      %v1227 = vld [vmem:[%s1211 + $0x78] sm:$0xff]
      %1228 = vmatpush.msra.mxu0 %v1227
      %1229 = vmatpush.msra.mxu0 %v1226
      %1230 = vmatpush.msra.mxu0 %v1225
      %1231 = vmatpush.msra.mxu0 %v1224
      %1232 = vmatpush.msra.mxu0 %v1223
      %1233 = vmatpush.msra.mxu0 %v1222
      %1234 = vmatpush.msra.mxu0 %v1221
      %1235 = vmatpush.msra.mxu0 %v1220
      %1236 = vmatpush.msra.mxu0 %v1219
      %1237 = vmatpush.msra.mxu0 %v1218
      %1238 = vmatpush.msra.mxu0 %v1217
      %1239 = vmatpush.msra.mxu0 %v1216
      %1240 = vmatpush.msra.mxu0 %v1215
      %1241 = vmatpush.msra.mxu0 %v1214
      %1242 = vmatpush.msra.mxu0 %v1213
      %1243 = vmatpush.msra.mxu0 %v1212
      %1244 = vmatmul.f32.gmra.mxu0 %v1183
      %v1245 = vpop.f32.mrf.mxu0
      %v1246 = vadd.f32 0.0, %v1245
      %1247 = vmatmul.f32.gmra.mxu0 %v1184
      %v1248 = vpop.f32.mrf.mxu0
      %v1249 = vadd.f32 0.0, %v1248
      %1250 = vmatmul.f32.gmra.mxu0 %v1185
      %v1251 = vpop.f32.mrf.mxu0
      %v1252 = vadd.f32 0.0, %v1251
      %1253 = vmatmul.f32.gmra.mxu0 %v1186
      %v1254 = vpop.f32.mrf.mxu0
      %v1255 = vadd.f32 0.0, %v1254
      %1256 = vmatmul.f32.gmra.mxu0 %v1187
      %v1257 = vpop.f32.mrf.mxu0
      %v1258 = vadd.f32 0.0, %v1257
      %1259 = vmatmul.f32.gmra.mxu0 %v1188
      %v1260 = vpop.f32.mrf.mxu0
      %v1261 = vadd.f32 0.0, %v1260
      %1262 = vmatmul.f32.gmra.mxu0 %v1189
      %v1263 = vpop.f32.mrf.mxu0
      %v1264 = vadd.f32 0.0, %v1263
      %1265 = vmatmul.f32.gmra.mxu0 %v1190
      %v1266 = vpop.f32.mrf.mxu0
      %v1267 = vadd.f32 0.0, %v1266
      %1268 = vmatmul.f32.gmra.mxu0 %v1191
      %v1269 = vpop.f32.mrf.mxu0
      %v1270 = vadd.f32 0.0, %v1269
      %1271 = vmatmul.f32.gmra.mxu0 %v1192
      %v1272 = vpop.f32.mrf.mxu0
      %v1273 = vadd.f32 0.0, %v1272
      %1274 = vmatmul.f32.gmra.mxu0 %v1193
      %v1275 = vpop.f32.mrf.mxu0
      %v1276 = vadd.f32 0.0, %v1275
      %1277 = vmatmul.f32.gmra.mxu0 %v1194
      %v1278 = vpop.f32.mrf.mxu0
      %v1279 = vadd.f32 0.0, %v1278
      %1280 = vmatmul.f32.gmra.mxu0 %v1195
      %v1281 = vpop.f32.mrf.mxu0
      %v1282 = vadd.f32 0.0, %v1281
      %1283 = vmatmul.f32.gmra.mxu0 %v1196
      %v1284 = vpop.f32.mrf.mxu0
      %v1285 = vadd.f32 0.0, %v1284
      %1286 = vmatmul.f32.gmra.mxu0 %v1197
      %v1287 = vpop.f32.mrf.mxu0
      %v1288 = vadd.f32 0.0, %v1287
      %1289 = vmatmul.f32.gmra.mxu0 %v1198
      %v1290 = vpop.f32.mrf.mxu0
      %v1291 = vadd.f32 0.0, %v1290
      %1292 = vmatmul.f32.gmra.mxu0 %v1199
      %v1293 = vpop.f32.mrf.mxu0
      %v1294 = vadd.f32 0.0, %v1293
      %1295 = vmatmul.f32.gmra.mxu0 %v1200
      %v1296 = vpop.f32.mrf.mxu0
      %v1297 = vadd.f32 0.0, %v1296
      %1298 = vmatmul.f32.gmra.mxu0 %v1201
      %v1299 = vpop.f32.mrf.mxu0
      %v1300 = vadd.f32 0.0, %v1299
      %1301 = vmatmul.f32.gmra.mxu0 %v1202
      %v1302 = vpop.f32.mrf.mxu0
      %v1303 = vadd.f32 0.0, %v1302
      %1304 = vmatmul.f32.gmra.mxu0 %v1203
      %v1305 = vpop.f32.mrf.mxu0
      %v1306 = vadd.f32 0.0, %v1305
      %1307 = vmatmul.f32.gmra.mxu0 %v1204
      %v1308 = vpop.f32.mrf.mxu0
      %v1309 = vadd.f32 0.0, %v1308
      %1310 = vmatmul.f32.gmra.mxu0 %v1205
      %v1311 = vpop.f32.mrf.mxu0
      %v1312 = vadd.f32 0.0, %v1311
      %1313 = vmatmul.f32.gmra.mxu0 %v1206
      %v1314 = vpop.f32.mrf.mxu0
      %v1315 = vadd.f32 0.0, %v1314
      %1316 = vmatmul.f32.gmra.mxu0 %v1207
      %v1317 = vpop.f32.mrf.mxu0
      %v1318 = vadd.f32 0.0, %v1317
      %1319 = vmatmul.f32.gmra.mxu0 %v1208
      %v1320 = vpop.f32.mrf.mxu0
      %v1321 = vadd.f32 0.0, %v1320
      %1322 = vmatmul.f32.gmra.mxu0 %v1209
      %v1323 = vpop.f32.mrf.mxu0
      %v1324 = vadd.f32 0.0, %v1323
      %1325 = vmatmul.f32.gmra.mxu0 %v1210
      %v1326 = vpop.f32.mrf.mxu0
      %v1327 = vadd.f32 0.0, %v1326
      %1328 = vdwg.mxu0
      %v1329 = vadd.f32 %v1155, %v1246
      %v1330 = vadd.f32 %v1156, %v1249
      %v1331 = vadd.f32 %v1157, %v1252
      %v1332 = vadd.f32 %v1158, %v1255
      %v1333 = vadd.f32 %v1159, %v1258
      %v1334 = vadd.f32 %v1160, %v1261
      %v1335 = vadd.f32 %v1161, %v1264
      %v1336 = vadd.f32 %v1162, %v1267
      %v1337 = vadd.f32 %v1163, %v1270
      %v1338 = vadd.f32 %v1164, %v1273
      %v1339 = vadd.f32 %v1165, %v1276
      %v1340 = vadd.f32 %v1166, %v1279
      %v1341 = vadd.f32 %v1167, %v1282
      %v1342 = vadd.f32 %v1168, %v1285
      %v1343 = vadd.f32 %v1169, %v1288
      %v1344 = vadd.f32 %v1170, %v1291
      %v1345 = vadd.f32 %v1171, %v1294
      %v1346 = vadd.f32 %v1172, %v1297
      %v1347 = vadd.f32 %v1173, %v1300
      %v1348 = vadd.f32 %v1174, %v1303
      %v1349 = vadd.f32 %v1175, %v1306
      %v1350 = vadd.f32 %v1176, %v1309
      %v1351 = vadd.f32 %v1177, %v1312
      %v1352 = vadd.f32 %v1178, %v1315
      %v1353 = vadd.f32 %v1179, %v1318
      %v1354 = vadd.f32 %v1180, %v1321
      %v1355 = vadd.f32 %v1181, %v1324
      %v1356 = vadd.f32 %v1182, %v1327
      %v1357 = vld [vmem:[#allocation2 + $0x11] sm:$0xff]
      %v1358 = vld [vmem:[#allocation2 + $0x19] sm:$0xff]
      %v1359 = vld [vmem:[#allocation2 + $0x21] sm:$0xff]
      %v1360 = vld [vmem:[#allocation2 + $0x29] sm:$0xff]
      %v1361 = vld [vmem:[#allocation2 + $0x31] sm:$0xff]
      %v1362 = vld [vmem:[#allocation2 + $0x39] sm:$0xff]
      %v1363 = vld [vmem:[#allocation2 + $0x41] sm:$0xff]
      %v1364 = vld [vmem:[#allocation2 + $0x49] sm:$0xff]
      %v1365 = vld [vmem:[#allocation2 + $0x51] sm:$0xff]
      %v1366 = vld [vmem:[#allocation2 + $0x59] sm:$0xff]
      %v1367 = vld [vmem:[#allocation2 + $0x61] sm:$0xff]
      %v1368 = vld [vmem:[#allocation2 + $0x69] sm:$0xff]
      %v1369 = vld [vmem:[#allocation2 + $0x71] sm:$0xff]
      %v1370 = vld [vmem:[#allocation2 + $0x79] sm:$0xff]
      %v1371 = vld [vmem:[#allocation2 + $0x81] sm:$0xff]
      %v1372 = vld [vmem:[#allocation2 + $0x89] sm:$0xff]
      %v1373 = vld [vmem:[#allocation2 + $0x91] sm:$0xff]
      %v1374 = vld [vmem:[#allocation2 + $0x99] sm:$0xff]
      %v1375 = vld [vmem:[#allocation2 + $0xa1] sm:$0xff]
      %v1376 = vld [vmem:[#allocation2 + $0xa9] sm:$0xff]
      %v1377 = vld [vmem:[#allocation2 + $0xb1] sm:$0xff]
      %v1378 = vld [vmem:[#allocation2 + $0xb9] sm:$0xff]
      %v1379 = vld [vmem:[#allocation2 + $0xc1] sm:$0xff]
      %v1380 = vld [vmem:[#allocation2 + $0xc9] sm:$0xff]
      %v1381 = vld [vmem:[#allocation2 + $0xd1] sm:$0xff]
      %v1382 = vld [vmem:[#allocation2 + $0xd9] sm:$0xff]
      %v1383 = vld [vmem:[#allocation2 + $0xe1] sm:$0xff]
      %v1384 = vld [vmem:[#allocation2 + $0xe9] sm:$0xff]
      %s1385 = scalar_lea.vmem %s3, 512
      %v1386 = vld [vmem:[%s1385] sm:$0xff]
      %v1387 = vld [vmem:[%s1385 + $0x8] sm:$0xff]
      %v1388 = vld [vmem:[%s1385 + $0x10] sm:$0xff]
      %v1389 = vld [vmem:[%s1385 + $0x18] sm:$0xff]
      %v1390 = vld [vmem:[%s1385 + $0x20] sm:$0xff]
      %v1391 = vld [vmem:[%s1385 + $0x28] sm:$0xff]
      %v1392 = vld [vmem:[%s1385 + $0x30] sm:$0xff]
      %v1393 = vld [vmem:[%s1385 + $0x38] sm:$0xff]
      %v1394 = vld [vmem:[%s1385 + $0x40] sm:$0xff]
      %v1395 = vld [vmem:[%s1385 + $0x48] sm:$0xff]
      %v1396 = vld [vmem:[%s1385 + $0x50] sm:$0xff]
      %v1397 = vld [vmem:[%s1385 + $0x58] sm:$0xff]
      %v1398 = vld [vmem:[%s1385 + $0x60] sm:$0xff]
      %v1399 = vld [vmem:[%s1385 + $0x68] sm:$0xff]
      %v1400 = vld [vmem:[%s1385 + $0x70] sm:$0xff]
      %v1401 = vld [vmem:[%s1385 + $0x78] sm:$0xff]
      %1402 = vmatpush.msra.mxu0 %v1401
      %1403 = vmatpush.msra.mxu0 %v1400
      %1404 = vmatpush.msra.mxu0 %v1399
      %1405 = vmatpush.msra.mxu0 %v1398
      %1406 = vmatpush.msra.mxu0 %v1397
      %1407 = vmatpush.msra.mxu0 %v1396
      %1408 = vmatpush.msra.mxu0 %v1395
      %1409 = vmatpush.msra.mxu0 %v1394
      %1410 = vmatpush.msra.mxu0 %v1393
      %1411 = vmatpush.msra.mxu0 %v1392
      %1412 = vmatpush.msra.mxu0 %v1391
      %1413 = vmatpush.msra.mxu0 %v1390
      %1414 = vmatpush.msra.mxu0 %v1389
      %1415 = vmatpush.msra.mxu0 %v1388
      %1416 = vmatpush.msra.mxu0 %v1387
      %1417 = vmatpush.msra.mxu0 %v1386
      %1418 = vmatmul.f32.gmra.mxu0 %v1357
      %v1419 = vpop.f32.mrf.mxu0
      %v1420 = vadd.f32 0.0, %v1419
      %1421 = vmatmul.f32.gmra.mxu0 %v1358
      %v1422 = vpop.f32.mrf.mxu0
      %v1423 = vadd.f32 0.0, %v1422
      %1424 = vmatmul.f32.gmra.mxu0 %v1359
      %v1425 = vpop.f32.mrf.mxu0
      %v1426 = vadd.f32 0.0, %v1425
      %1427 = vmatmul.f32.gmra.mxu0 %v1360
      %v1428 = vpop.f32.mrf.mxu0
      %v1429 = vadd.f32 0.0, %v1428
      %1430 = vmatmul.f32.gmra.mxu0 %v1361
      %v1431 = vpop.f32.mrf.mxu0
      %v1432 = vadd.f32 0.0, %v1431
      %1433 = vmatmul.f32.gmra.mxu0 %v1362
      %v1434 = vpop.f32.mrf.mxu0
      %v1435 = vadd.f32 0.0, %v1434
      %1436 = vmatmul.f32.gmra.mxu0 %v1363
      %v1437 = vpop.f32.mrf.mxu0
      %v1438 = vadd.f32 0.0, %v1437
      %1439 = vmatmul.f32.gmra.mxu0 %v1364
      %v1440 = vpop.f32.mrf.mxu0
      %v1441 = vadd.f32 0.0, %v1440
      %1442 = vmatmul.f32.gmra.mxu0 %v1365
      %v1443 = vpop.f32.mrf.mxu0
      %v1444 = vadd.f32 0.0, %v1443
      %1445 = vmatmul.f32.gmra.mxu0 %v1366
      %v1446 = vpop.f32.mrf.mxu0
      %v1447 = vadd.f32 0.0, %v1446
      %1448 = vmatmul.f32.gmra.mxu0 %v1367
      %v1449 = vpop.f32.mrf.mxu0
      %v1450 = vadd.f32 0.0, %v1449
      %1451 = vmatmul.f32.gmra.mxu0 %v1368
      %v1452 = vpop.f32.mrf.mxu0
      %v1453 = vadd.f32 0.0, %v1452
      %1454 = vmatmul.f32.gmra.mxu0 %v1369
      %v1455 = vpop.f32.mrf.mxu0
      %v1456 = vadd.f32 0.0, %v1455
      %1457 = vmatmul.f32.gmra.mxu0 %v1370
      %v1458 = vpop.f32.mrf.mxu0
      %v1459 = vadd.f32 0.0, %v1458
      %1460 = vmatmul.f32.gmra.mxu0 %v1371
      %v1461 = vpop.f32.mrf.mxu0
      %v1462 = vadd.f32 0.0, %v1461
      %1463 = vmatmul.f32.gmra.mxu0 %v1372
      %v1464 = vpop.f32.mrf.mxu0
      %v1465 = vadd.f32 0.0, %v1464
      %1466 = vmatmul.f32.gmra.mxu0 %v1373
      %v1467 = vpop.f32.mrf.mxu0
      %v1468 = vadd.f32 0.0, %v1467
      %1469 = vmatmul.f32.gmra.mxu0 %v1374
      %v1470 = vpop.f32.mrf.mxu0
      %v1471 = vadd.f32 0.0, %v1470
      %1472 = vmatmul.f32.gmra.mxu0 %v1375
      %v1473 = vpop.f32.mrf.mxu0
      %v1474 = vadd.f32 0.0, %v1473
      %1475 = vmatmul.f32.gmra.mxu0 %v1376
      %v1476 = vpop.f32.mrf.mxu0
      %v1477 = vadd.f32 0.0, %v1476
      %1478 = vmatmul.f32.gmra.mxu0 %v1377
      %v1479 = vpop.f32.mrf.mxu0
      %v1480 = vadd.f32 0.0, %v1479
      %1481 = vmatmul.f32.gmra.mxu0 %v1378
      %v1482 = vpop.f32.mrf.mxu0
      %v1483 = vadd.f32 0.0, %v1482
      %1484 = vmatmul.f32.gmra.mxu0 %v1379
      %v1485 = vpop.f32.mrf.mxu0
      %v1486 = vadd.f32 0.0, %v1485
      %1487 = vmatmul.f32.gmra.mxu0 %v1380
      %v1488 = vpop.f32.mrf.mxu0
      %v1489 = vadd.f32 0.0, %v1488
      %1490 = vmatmul.f32.gmra.mxu0 %v1381
      %v1491 = vpop.f32.mrf.mxu0
      %v1492 = vadd.f32 0.0, %v1491
      %1493 = vmatmul.f32.gmra.mxu0 %v1382
      %v1494 = vpop.f32.mrf.mxu0
      %v1495 = vadd.f32 0.0, %v1494
      %1496 = vmatmul.f32.gmra.mxu0 %v1383
      %v1497 = vpop.f32.mrf.mxu0
      %v1498 = vadd.f32 0.0, %v1497
      %1499 = vmatmul.f32.gmra.mxu0 %v1384
      %v1500 = vpop.f32.mrf.mxu0
      %v1501 = vadd.f32 0.0, %v1500
      %1502 = vdwg.mxu0
      %v1503 = vadd.f32 %v1329, %v1420
      %v1504 = vadd.f32 %v1330, %v1423
      %v1505 = vadd.f32 %v1331, %v1426
      %v1506 = vadd.f32 %v1332, %v1429
      %v1507 = vadd.f32 %v1333, %v1432
      %v1508 = vadd.f32 %v1334, %v1435
      %v1509 = vadd.f32 %v1335, %v1438
      %v1510 = vadd.f32 %v1336, %v1441
      %v1511 = vadd.f32 %v1337, %v1444
      %v1512 = vadd.f32 %v1338, %v1447
      %v1513 = vadd.f32 %v1339, %v1450
      %v1514 = vadd.f32 %v1340, %v1453
      %v1515 = vadd.f32 %v1341, %v1456
      %v1516 = vadd.f32 %v1342, %v1459
      %v1517 = vadd.f32 %v1343, %v1462
      %v1518 = vadd.f32 %v1344, %v1465
      %v1519 = vadd.f32 %v1345, %v1468
      %v1520 = vadd.f32 %v1346, %v1471
      %v1521 = vadd.f32 %v1347, %v1474
      %v1522 = vadd.f32 %v1348, %v1477
      %v1523 = vadd.f32 %v1349, %v1480
      %v1524 = vadd.f32 %v1350, %v1483
      %v1525 = vadd.f32 %v1351, %v1486
      %v1526 = vadd.f32 %v1352, %v1489
      %v1527 = vadd.f32 %v1353, %v1492
      %v1528 = vadd.f32 %v1354, %v1495
      %v1529 = vadd.f32 %v1355, %v1498
      %v1530 = vadd.f32 %v1356, %v1501
      %v1531 = vld [vmem:[#allocation2 + $0x12] sm:$0xff]
      %v1532 = vld [vmem:[#allocation2 + $0x1a] sm:$0xff]
      %v1533 = vld [vmem:[#allocation2 + $0x22] sm:$0xff]
      %v1534 = vld [vmem:[#allocation2 + $0x2a] sm:$0xff]
      %v1535 = vld [vmem:[#allocation2 + $0x32] sm:$0xff]
      %v1536 = vld [vmem:[#allocation2 + $0x3a] sm:$0xff]
      %v1537 = vld [vmem:[#allocation2 + $0x42] sm:$0xff]
      %v1538 = vld [vmem:[#allocation2 + $0x4a] sm:$0xff]
      %v1539 = vld [vmem:[#allocation2 + $0x52] sm:$0xff]
      %v1540 = vld [vmem:[#allocation2 + $0x5a] sm:$0xff]
      %v1541 = vld [vmem:[#allocation2 + $0x62] sm:$0xff]
      %v1542 = vld [vmem:[#allocation2 + $0x6a] sm:$0xff]
      %v1543 = vld [vmem:[#allocation2 + $0x72] sm:$0xff]
      %v1544 = vld [vmem:[#allocation2 + $0x7a] sm:$0xff]
      %v1545 = vld [vmem:[#allocation2 + $0x82] sm:$0xff]
      %v1546 = vld [vmem:[#allocation2 + $0x8a] sm:$0xff]
      %v1547 = vld [vmem:[#allocation2 + $0x92] sm:$0xff]
      %v1548 = vld [vmem:[#allocation2 + $0x9a] sm:$0xff]
      %v1549 = vld [vmem:[#allocation2 + $0xa2] sm:$0xff]
      %v1550 = vld [vmem:[#allocation2 + $0xaa] sm:$0xff]
      %v1551 = vld [vmem:[#allocation2 + $0xb2] sm:$0xff]
      %v1552 = vld [vmem:[#allocation2 + $0xba] sm:$0xff]
      %v1553 = vld [vmem:[#allocation2 + $0xc2] sm:$0xff]
      %v1554 = vld [vmem:[#allocation2 + $0xca] sm:$0xff]
      %v1555 = vld [vmem:[#allocation2 + $0xd2] sm:$0xff]
      %v1556 = vld [vmem:[#allocation2 + $0xda] sm:$0xff]
      %v1557 = vld [vmem:[#allocation2 + $0xe2] sm:$0xff]
      %v1558 = vld [vmem:[#allocation2 + $0xea] sm:$0xff]
      %s1559 = scalar_lea.vmem %s3, 640
      %v1560 = vld [vmem:[%s1559] sm:$0xff]
      %v1561 = vld [vmem:[%s1559 + $0x8] sm:$0xff]
      %v1562 = vld [vmem:[%s1559 + $0x10] sm:$0xff]
      %v1563 = vld [vmem:[%s1559 + $0x18] sm:$0xff]
      %v1564 = vld [vmem:[%s1559 + $0x20] sm:$0xff]
      %v1565 = vld [vmem:[%s1559 + $0x28] sm:$0xff]
      %v1566 = vld [vmem:[%s1559 + $0x30] sm:$0xff]
      %v1567 = vld [vmem:[%s1559 + $0x38] sm:$0xff]
      %v1568 = vld [vmem:[%s1559 + $0x40] sm:$0xff]
      %v1569 = vld [vmem:[%s1559 + $0x48] sm:$0xff]
      %v1570 = vld [vmem:[%s1559 + $0x50] sm:$0xff]
      %v1571 = vld [vmem:[%s1559 + $0x58] sm:$0xff]
      %v1572 = vld [vmem:[%s1559 + $0x60] sm:$0xff]
      %v1573 = vld [vmem:[%s1559 + $0x68] sm:$0xff]
      %v1574 = vld [vmem:[%s1559 + $0x70] sm:$0xff]
      %v1575 = vld [vmem:[%s1559 + $0x78] sm:$0xff]
      %1576 = vmatpush.msra.mxu0 %v1575
      %1577 = vmatpush.msra.mxu0 %v1574
      %1578 = vmatpush.msra.mxu0 %v1573
      %1579 = vmatpush.msra.mxu0 %v1572
      %1580 = vmatpush.msra.mxu0 %v1571
      %1581 = vmatpush.msra.mxu0 %v1570
      %1582 = vmatpush.msra.mxu0 %v1569
      %1583 = vmatpush.msra.mxu0 %v1568
      %1584 = vmatpush.msra.mxu0 %v1567
      %1585 = vmatpush.msra.mxu0 %v1566
      %1586 = vmatpush.msra.mxu0 %v1565
      %1587 = vmatpush.msra.mxu0 %v1564
      %1588 = vmatpush.msra.mxu0 %v1563
      %1589 = vmatpush.msra.mxu0 %v1562
      %1590 = vmatpush.msra.mxu0 %v1561
      %1591 = vmatpush.msra.mxu0 %v1560
      %1592 = vmatmul.f32.gmra.mxu0 %v1531
      %v1593 = vpop.f32.mrf.mxu0
      %v1594 = vadd.f32 0.0, %v1593
      %1595 = vmatmul.f32.gmra.mxu0 %v1532
      %v1596 = vpop.f32.mrf.mxu0
      %v1597 = vadd.f32 0.0, %v1596
      %1598 = vmatmul.f32.gmra.mxu0 %v1533
      %v1599 = vpop.f32.mrf.mxu0
      %v1600 = vadd.f32 0.0, %v1599
      %1601 = vmatmul.f32.gmra.mxu0 %v1534
      %v1602 = vpop.f32.mrf.mxu0
      %v1603 = vadd.f32 0.0, %v1602
      %1604 = vmatmul.f32.gmra.mxu0 %v1535
      %v1605 = vpop.f32.mrf.mxu0
      %v1606 = vadd.f32 0.0, %v1605
      %1607 = vmatmul.f32.gmra.mxu0 %v1536
      %v1608 = vpop.f32.mrf.mxu0
      %v1609 = vadd.f32 0.0, %v1608
      %1610 = vmatmul.f32.gmra.mxu0 %v1537
      %v1611 = vpop.f32.mrf.mxu0
      %v1612 = vadd.f32 0.0, %v1611
      %1613 = vmatmul.f32.gmra.mxu0 %v1538
      %v1614 = vpop.f32.mrf.mxu0
      %v1615 = vadd.f32 0.0, %v1614
      %1616 = vmatmul.f32.gmra.mxu0 %v1539
      %v1617 = vpop.f32.mrf.mxu0
      %v1618 = vadd.f32 0.0, %v1617
      %1619 = vmatmul.f32.gmra.mxu0 %v1540
      %v1620 = vpop.f32.mrf.mxu0
      %v1621 = vadd.f32 0.0, %v1620
      %1622 = vmatmul.f32.gmra.mxu0 %v1541
      %v1623 = vpop.f32.mrf.mxu0
      %v1624 = vadd.f32 0.0, %v1623
      %1625 = vmatmul.f32.gmra.mxu0 %v1542
      %v1626 = vpop.f32.mrf.mxu0
      %v1627 = vadd.f32 0.0, %v1626
      %1628 = vmatmul.f32.gmra.mxu0 %v1543
      %v1629 = vpop.f32.mrf.mxu0
      %v1630 = vadd.f32 0.0, %v1629
      %1631 = vmatmul.f32.gmra.mxu0 %v1544
      %v1632 = vpop.f32.mrf.mxu0
      %v1633 = vadd.f32 0.0, %v1632
      %1634 = vmatmul.f32.gmra.mxu0 %v1545
      %v1635 = vpop.f32.mrf.mxu0
      %v1636 = vadd.f32 0.0, %v1635
      %1637 = vmatmul.f32.gmra.mxu0 %v1546
      %v1638 = vpop.f32.mrf.mxu0
      %v1639 = vadd.f32 0.0, %v1638
      %1640 = vmatmul.f32.gmra.mxu0 %v1547
      %v1641 = vpop.f32.mrf.mxu0
      %v1642 = vadd.f32 0.0, %v1641
      %1643 = vmatmul.f32.gmra.mxu0 %v1548
      %v1644 = vpop.f32.mrf.mxu0
      %v1645 = vadd.f32 0.0, %v1644
      %1646 = vmatmul.f32.gmra.mxu0 %v1549
      %v1647 = vpop.f32.mrf.mxu0
      %v1648 = vadd.f32 0.0, %v1647
      %1649 = vmatmul.f32.gmra.mxu0 %v1550
      %v1650 = vpop.f32.mrf.mxu0
      %v1651 = vadd.f32 0.0, %v1650
      %1652 = vmatmul.f32.gmra.mxu0 %v1551
      %v1653 = vpop.f32.mrf.mxu0
      %v1654 = vadd.f32 0.0, %v1653
      %1655 = vmatmul.f32.gmra.mxu0 %v1552
      %v1656 = vpop.f32.mrf.mxu0
      %v1657 = vadd.f32 0.0, %v1656
      %1658 = vmatmul.f32.gmra.mxu0 %v1553
      %v1659 = vpop.f32.mrf.mxu0
      %v1660 = vadd.f32 0.0, %v1659
      %1661 = vmatmul.f32.gmra.mxu0 %v1554
      %v1662 = vpop.f32.mrf.mxu0
      %v1663 = vadd.f32 0.0, %v1662
      %1664 = vmatmul.f32.gmra.mxu0 %v1555
      %v1665 = vpop.f32.mrf.mxu0
      %v1666 = vadd.f32 0.0, %v1665
      %1667 = vmatmul.f32.gmra.mxu0 %v1556
      %v1668 = vpop.f32.mrf.mxu0
      %v1669 = vadd.f32 0.0, %v1668
      %1670 = vmatmul.f32.gmra.mxu0 %v1557
      %v1671 = vpop.f32.mrf.mxu0
      %v1672 = vadd.f32 0.0, %v1671
      %1673 = vmatmul.f32.gmra.mxu0 %v1558
      %v1674 = vpop.f32.mrf.mxu0
      %v1675 = vadd.f32 0.0, %v1674
      %1676 = vdwg.mxu0
      %v1677 = vadd.f32 %v1503, %v1594
      %v1678 = vadd.f32 %v1504, %v1597
      %v1679 = vadd.f32 %v1505, %v1600
      %v1680 = vadd.f32 %v1506, %v1603
      %v1681 = vadd.f32 %v1507, %v1606
      %v1682 = vadd.f32 %v1508, %v1609
      %v1683 = vadd.f32 %v1509, %v1612
      %v1684 = vadd.f32 %v1510, %v1615
      %v1685 = vadd.f32 %v1511, %v1618
      %v1686 = vadd.f32 %v1512, %v1621
      %v1687 = vadd.f32 %v1513, %v1624
      %v1688 = vadd.f32 %v1514, %v1627
      %v1689 = vadd.f32 %v1515, %v1630
      %v1690 = vadd.f32 %v1516, %v1633
      %v1691 = vadd.f32 %v1517, %v1636
      %v1692 = vadd.f32 %v1518, %v1639
      %v1693 = vadd.f32 %v1519, %v1642
      %v1694 = vadd.f32 %v1520, %v1645
      %v1695 = vadd.f32 %v1521, %v1648
      %v1696 = vadd.f32 %v1522, %v1651
      %v1697 = vadd.f32 %v1523, %v1654
      %v1698 = vadd.f32 %v1524, %v1657
      %v1699 = vadd.f32 %v1525, %v1660
      %v1700 = vadd.f32 %v1526, %v1663
      %v1701 = vadd.f32 %v1527, %v1666
      %v1702 = vadd.f32 %v1528, %v1669
      %v1703 = vadd.f32 %v1529, %v1672
      %v1704 = vadd.f32 %v1530, %v1675
      %v1705 = vld [vmem:[#allocation2 + $0x20] sm:$0xff]
      %v1706 = vld [vmem:[#allocation2 + $0x28] sm:$0xff]
      %v1707 = vld [vmem:[#allocation2 + $0x30] sm:$0xff]
      %v1708 = vld [vmem:[#allocation2 + $0x38] sm:$0xff]
      %v1709 = vld [vmem:[#allocation2 + $0x40] sm:$0xff]
      %v1710 = vld [vmem:[#allocation2 + $0x48] sm:$0xff]
      %v1711 = vld [vmem:[#allocation2 + $0x50] sm:$0xff]
      %v1712 = vld [vmem:[#allocation2 + $0x58] sm:$0xff]
      %v1713 = vld [vmem:[#allocation2 + $0x60] sm:$0xff]
      %v1714 = vld [vmem:[#allocation2 + $0x68] sm:$0xff]
      %v1715 = vld [vmem:[#allocation2 + $0x70] sm:$0xff]
      %v1716 = vld [vmem:[#allocation2 + $0x78] sm:$0xff]
      %v1717 = vld [vmem:[#allocation2 + $0x80] sm:$0xff]
      %v1718 = vld [vmem:[#allocation2 + $0x88] sm:$0xff]
      %v1719 = vld [vmem:[#allocation2 + $0x90] sm:$0xff]
      %v1720 = vld [vmem:[#allocation2 + $0x98] sm:$0xff]
      %v1721 = vld [vmem:[#allocation2 + $0xa0] sm:$0xff]
      %v1722 = vld [vmem:[#allocation2 + $0xa8] sm:$0xff]
      %v1723 = vld [vmem:[#allocation2 + $0xb0] sm:$0xff]
      %v1724 = vld [vmem:[#allocation2 + $0xb8] sm:$0xff]
      %v1725 = vld [vmem:[#allocation2 + $0xc0] sm:$0xff]
      %v1726 = vld [vmem:[#allocation2 + $0xc8] sm:$0xff]
      %v1727 = vld [vmem:[#allocation2 + $0xd0] sm:$0xff]
      %v1728 = vld [vmem:[#allocation2 + $0xd8] sm:$0xff]
      %v1729 = vld [vmem:[#allocation2 + $0xe0] sm:$0xff]
      %v1730 = vld [vmem:[#allocation2 + $0xe8] sm:$0xff]
      %v1731 = vld [vmem:[#allocation2 + $0xf0] sm:$0xff]
      %v1732 = vld [vmem:[#allocation2 + $0xf8] sm:$0xff]
      %s1733 = scalar_lea.vmem %s3, 768
      %v1734 = vld [vmem:[%s1733] sm:$0xff]
      %v1735 = vld [vmem:[%s1733 + $0x8] sm:$0xff]
      %v1736 = vld [vmem:[%s1733 + $0x10] sm:$0xff]
      %v1737 = vld [vmem:[%s1733 + $0x18] sm:$0xff]
      %v1738 = vld [vmem:[%s1733 + $0x20] sm:$0xff]
      %v1739 = vld [vmem:[%s1733 + $0x28] sm:$0xff]
      %v1740 = vld [vmem:[%s1733 + $0x30] sm:$0xff]
      %v1741 = vld [vmem:[%s1733 + $0x38] sm:$0xff]
      %v1742 = vld [vmem:[%s1733 + $0x40] sm:$0xff]
      %v1743 = vld [vmem:[%s1733 + $0x48] sm:$0xff]
      %v1744 = vld [vmem:[%s1733 + $0x50] sm:$0xff]
      %v1745 = vld [vmem:[%s1733 + $0x58] sm:$0xff]
      %v1746 = vld [vmem:[%s1733 + $0x60] sm:$0xff]
      %v1747 = vld [vmem:[%s1733 + $0x68] sm:$0xff]
      %v1748 = vld [vmem:[%s1733 + $0x70] sm:$0xff]
      %v1749 = vld [vmem:[%s1733 + $0x78] sm:$0xff]
      %1750 = vmatpush.msra.mxu0 %v1749
      %1751 = vmatpush.msra.mxu0 %v1748
      %1752 = vmatpush.msra.mxu0 %v1747
      %1753 = vmatpush.msra.mxu0 %v1746
      %1754 = vmatpush.msra.mxu0 %v1745
      %1755 = vmatpush.msra.mxu0 %v1744
      %1756 = vmatpush.msra.mxu0 %v1743
      %1757 = vmatpush.msra.mxu0 %v1742
      %1758 = vmatpush.msra.mxu0 %v1741
      %1759 = vmatpush.msra.mxu0 %v1740
      %1760 = vmatpush.msra.mxu0 %v1739
      %1761 = vmatpush.msra.mxu0 %v1738
      %1762 = vmatpush.msra.mxu0 %v1737
      %1763 = vmatpush.msra.mxu0 %v1736
      %1764 = vmatpush.msra.mxu0 %v1735
      %1765 = vmatpush.msra.mxu0 %v1734
      %1766 = vmatmul.f32.gmra.mxu0 %v1705
      %v1767 = vpop.f32.mrf.mxu0
      %v1768 = vadd.f32 0.0, %v1767
      %1769 = vmatmul.f32.gmra.mxu0 %v1706
      %v1770 = vpop.f32.mrf.mxu0
      %v1771 = vadd.f32 0.0, %v1770
      %1772 = vmatmul.f32.gmra.mxu0 %v1707
      %v1773 = vpop.f32.mrf.mxu0
      %v1774 = vadd.f32 0.0, %v1773
      %1775 = vmatmul.f32.gmra.mxu0 %v1708
      %v1776 = vpop.f32.mrf.mxu0
      %v1777 = vadd.f32 0.0, %v1776
      %1778 = vmatmul.f32.gmra.mxu0 %v1709
      %v1779 = vpop.f32.mrf.mxu0
      %v1780 = vadd.f32 0.0, %v1779
      %1781 = vmatmul.f32.gmra.mxu0 %v1710
      %v1782 = vpop.f32.mrf.mxu0
      %v1783 = vadd.f32 0.0, %v1782
      %1784 = vmatmul.f32.gmra.mxu0 %v1711
      %v1785 = vpop.f32.mrf.mxu0
      %v1786 = vadd.f32 0.0, %v1785
      %1787 = vmatmul.f32.gmra.mxu0 %v1712
      %v1788 = vpop.f32.mrf.mxu0
      %v1789 = vadd.f32 0.0, %v1788
      %1790 = vmatmul.f32.gmra.mxu0 %v1713
      %v1791 = vpop.f32.mrf.mxu0
      %v1792 = vadd.f32 0.0, %v1791
      %1793 = vmatmul.f32.gmra.mxu0 %v1714
      %v1794 = vpop.f32.mrf.mxu0
      %v1795 = vadd.f32 0.0, %v1794
      %1796 = vmatmul.f32.gmra.mxu0 %v1715
      %v1797 = vpop.f32.mrf.mxu0
      %v1798 = vadd.f32 0.0, %v1797
      %1799 = vmatmul.f32.gmra.mxu0 %v1716
      %v1800 = vpop.f32.mrf.mxu0
      %v1801 = vadd.f32 0.0, %v1800
      %1802 = vmatmul.f32.gmra.mxu0 %v1717
      %v1803 = vpop.f32.mrf.mxu0
      %v1804 = vadd.f32 0.0, %v1803
      %1805 = vmatmul.f32.gmra.mxu0 %v1718
      %v1806 = vpop.f32.mrf.mxu0
      %v1807 = vadd.f32 0.0, %v1806
      %1808 = vmatmul.f32.gmra.mxu0 %v1719
      %v1809 = vpop.f32.mrf.mxu0
      %v1810 = vadd.f32 0.0, %v1809
      %1811 = vmatmul.f32.gmra.mxu0 %v1720
      %v1812 = vpop.f32.mrf.mxu0
      %v1813 = vadd.f32 0.0, %v1812
      %1814 = vmatmul.f32.gmra.mxu0 %v1721
      %v1815 = vpop.f32.mrf.mxu0
      %v1816 = vadd.f32 0.0, %v1815
      %1817 = vmatmul.f32.gmra.mxu0 %v1722
      %v1818 = vpop.f32.mrf.mxu0
      %v1819 = vadd.f32 0.0, %v1818
      %1820 = vmatmul.f32.gmra.mxu0 %v1723
      %v1821 = vpop.f32.mrf.mxu0
      %v1822 = vadd.f32 0.0, %v1821
      %1823 = vmatmul.f32.gmra.mxu0 %v1724
      %v1824 = vpop.f32.mrf.mxu0
      %v1825 = vadd.f32 0.0, %v1824
      %1826 = vmatmul.f32.gmra.mxu0 %v1725
      %v1827 = vpop.f32.mrf.mxu0
      %v1828 = vadd.f32 0.0, %v1827
      %1829 = vmatmul.f32.gmra.mxu0 %v1726
      %v1830 = vpop.f32.mrf.mxu0
      %v1831 = vadd.f32 0.0, %v1830
      %1832 = vmatmul.f32.gmra.mxu0 %v1727
      %v1833 = vpop.f32.mrf.mxu0
      %v1834 = vadd.f32 0.0, %v1833
      %1835 = vmatmul.f32.gmra.mxu0 %v1728
      %v1836 = vpop.f32.mrf.mxu0
      %v1837 = vadd.f32 0.0, %v1836
      %1838 = vmatmul.f32.gmra.mxu0 %v1729
      %v1839 = vpop.f32.mrf.mxu0
      %v1840 = vadd.f32 0.0, %v1839
      %1841 = vmatmul.f32.gmra.mxu0 %v1730
      %v1842 = vpop.f32.mrf.mxu0
      %v1843 = vadd.f32 0.0, %v1842
      %1844 = vmatmul.f32.gmra.mxu0 %v1731
      %v1845 = vpop.f32.mrf.mxu0
      %v1846 = vadd.f32 0.0, %v1845
      %1847 = vmatmul.f32.gmra.mxu0 %v1732
      %v1848 = vpop.f32.mrf.mxu0
      %v1849 = vadd.f32 0.0, %v1848
      %1850 = vdwg.mxu0
      %v1851 = vadd.f32 %v1677, %v1768
      %v1852 = vadd.f32 %v1678, %v1771
      %v1853 = vadd.f32 %v1679, %v1774
      %v1854 = vadd.f32 %v1680, %v1777
      %v1855 = vadd.f32 %v1681, %v1780
      %v1856 = vadd.f32 %v1682, %v1783
      %v1857 = vadd.f32 %v1683, %v1786
      %v1858 = vadd.f32 %v1684, %v1789
      %v1859 = vadd.f32 %v1685, %v1792
      %v1860 = vadd.f32 %v1686, %v1795
      %v1861 = vadd.f32 %v1687, %v1798
      %v1862 = vadd.f32 %v1688, %v1801
      %v1863 = vadd.f32 %v1689, %v1804
      %v1864 = vadd.f32 %v1690, %v1807
      %v1865 = vadd.f32 %v1691, %v1810
      %v1866 = vadd.f32 %v1692, %v1813
      %v1867 = vadd.f32 %v1693, %v1816
      %v1868 = vadd.f32 %v1694, %v1819
      %v1869 = vadd.f32 %v1695, %v1822
      %v1870 = vadd.f32 %v1696, %v1825
      %v1871 = vadd.f32 %v1697, %v1828
      %v1872 = vadd.f32 %v1698, %v1831
      %v1873 = vadd.f32 %v1699, %v1834
      %v1874 = vadd.f32 %v1700, %v1837
      %v1875 = vadd.f32 %v1701, %v1840
      %v1876 = vadd.f32 %v1702, %v1843
      %v1877 = vadd.f32 %v1703, %v1846
      %v1878 = vadd.f32 %v1704, %v1849
      %v1879 = vld [vmem:[#allocation2 + $0x21] sm:$0xff]
      %v1880 = vld [vmem:[#allocation2 + $0x29] sm:$0xff]
      %v1881 = vld [vmem:[#allocation2 + $0x31] sm:$0xff]
      %v1882 = vld [vmem:[#allocation2 + $0x39] sm:$0xff]
      %v1883 = vld [vmem:[#allocation2 + $0x41] sm:$0xff]
      %v1884 = vld [vmem:[#allocation2 + $0x49] sm:$0xff]
      %v1885 = vld [vmem:[#allocation2 + $0x51] sm:$0xff]
      %v1886 = vld [vmem:[#allocation2 + $0x59] sm:$0xff]
      %v1887 = vld [vmem:[#allocation2 + $0x61] sm:$0xff]
      %v1888 = vld [vmem:[#allocation2 + $0x69] sm:$0xff]
      %v1889 = vld [vmem:[#allocation2 + $0x71] sm:$0xff]
      %v1890 = vld [vmem:[#allocation2 + $0x79] sm:$0xff]
      %v1891 = vld [vmem:[#allocation2 + $0x81] sm:$0xff]
      %v1892 = vld [vmem:[#allocation2 + $0x89] sm:$0xff]
      %v1893 = vld [vmem:[#allocation2 + $0x91] sm:$0xff]
      %v1894 = vld [vmem:[#allocation2 + $0x99] sm:$0xff]
      %v1895 = vld [vmem:[#allocation2 + $0xa1] sm:$0xff]
      %v1896 = vld [vmem:[#allocation2 + $0xa9] sm:$0xff]
      %v1897 = vld [vmem:[#allocation2 + $0xb1] sm:$0xff]
      %v1898 = vld [vmem:[#allocation2 + $0xb9] sm:$0xff]
      %v1899 = vld [vmem:[#allocation2 + $0xc1] sm:$0xff]
      %v1900 = vld [vmem:[#allocation2 + $0xc9] sm:$0xff]
      %v1901 = vld [vmem:[#allocation2 + $0xd1] sm:$0xff]
      %v1902 = vld [vmem:[#allocation2 + $0xd9] sm:$0xff]
      %v1903 = vld [vmem:[#allocation2 + $0xe1] sm:$0xff]
      %v1904 = vld [vmem:[#allocation2 + $0xe9] sm:$0xff]
      %v1905 = vld [vmem:[#allocation2 + $0xf1] sm:$0xff]
      %v1906 = vld [vmem:[#allocation2 + $0xf9] sm:$0xff]
      %s1907 = scalar_lea.vmem %s3, 896
      %v1908 = vld [vmem:[%s1907] sm:$0xff]
      %v1909 = vld [vmem:[%s1907 + $0x8] sm:$0xff]
      %v1910 = vld [vmem:[%s1907 + $0x10] sm:$0xff]
      %v1911 = vld [vmem:[%s1907 + $0x18] sm:$0xff]
      %v1912 = vld [vmem:[%s1907 + $0x20] sm:$0xff]
      %v1913 = vld [vmem:[%s1907 + $0x28] sm:$0xff]
      %v1914 = vld [vmem:[%s1907 + $0x30] sm:$0xff]
      %v1915 = vld [vmem:[%s1907 + $0x38] sm:$0xff]
      %v1916 = vld [vmem:[%s1907 + $0x40] sm:$0xff]
      %v1917 = vld [vmem:[%s1907 + $0x48] sm:$0xff]
      %v1918 = vld [vmem:[%s1907 + $0x50] sm:$0xff]
      %v1919 = vld [vmem:[%s1907 + $0x58] sm:$0xff]
      %v1920 = vld [vmem:[%s1907 + $0x60] sm:$0xff]
      %v1921 = vld [vmem:[%s1907 + $0x68] sm:$0xff]
      %v1922 = vld [vmem:[%s1907 + $0x70] sm:$0xff]
      %v1923 = vld [vmem:[%s1907 + $0x78] sm:$0xff]
      %1924 = vmatpush.msra.mxu0 %v1923
      %1925 = vmatpush.msra.mxu0 %v1922
      %1926 = vmatpush.msra.mxu0 %v1921
      %1927 = vmatpush.msra.mxu0 %v1920
      %1928 = vmatpush.msra.mxu0 %v1919
      %1929 = vmatpush.msra.mxu0 %v1918
      %1930 = vmatpush.msra.mxu0 %v1917
      %1931 = vmatpush.msra.mxu0 %v1916
      %1932 = vmatpush.msra.mxu0 %v1915
      %1933 = vmatpush.msra.mxu0 %v1914
      %1934 = vmatpush.msra.mxu0 %v1913
      %1935 = vmatpush.msra.mxu0 %v1912
      %1936 = vmatpush.msra.mxu0 %v1911
      %1937 = vmatpush.msra.mxu0 %v1910
      %1938 = vmatpush.msra.mxu0 %v1909
      %1939 = vmatpush.msra.mxu0 %v1908
      %1940 = vmatmul.f32.gmra.mxu0 %v1879
      %v1941 = vpop.f32.mrf.mxu0
      %v1942 = vadd.f32 0.0, %v1941
      %1943 = vmatmul.f32.gmra.mxu0 %v1880
      %v1944 = vpop.f32.mrf.mxu0
      %v1945 = vadd.f32 0.0, %v1944
      %1946 = vmatmul.f32.gmra.mxu0 %v1881
      %v1947 = vpop.f32.mrf.mxu0
      %v1948 = vadd.f32 0.0, %v1947
      %1949 = vmatmul.f32.gmra.mxu0 %v1882
      %v1950 = vpop.f32.mrf.mxu0
      %v1951 = vadd.f32 0.0, %v1950
      %1952 = vmatmul.f32.gmra.mxu0 %v1883
      %v1953 = vpop.f32.mrf.mxu0
      %v1954 = vadd.f32 0.0, %v1953
      %1955 = vmatmul.f32.gmra.mxu0 %v1884
      %v1956 = vpop.f32.mrf.mxu0
      %v1957 = vadd.f32 0.0, %v1956
      %1958 = vmatmul.f32.gmra.mxu0 %v1885
      %v1959 = vpop.f32.mrf.mxu0
      %v1960 = vadd.f32 0.0, %v1959
      %1961 = vmatmul.f32.gmra.mxu0 %v1886
      %v1962 = vpop.f32.mrf.mxu0
      %v1963 = vadd.f32 0.0, %v1962
      %1964 = vmatmul.f32.gmra.mxu0 %v1887
      %v1965 = vpop.f32.mrf.mxu0
      %v1966 = vadd.f32 0.0, %v1965
      %1967 = vmatmul.f32.gmra.mxu0 %v1888
      %v1968 = vpop.f32.mrf.mxu0
      %v1969 = vadd.f32 0.0, %v1968
      %1970 = vmatmul.f32.gmra.mxu0 %v1889
      %v1971 = vpop.f32.mrf.mxu0
      %v1972 = vadd.f32 0.0, %v1971
      %1973 = vmatmul.f32.gmra.mxu0 %v1890
      %v1974 = vpop.f32.mrf.mxu0
      %v1975 = vadd.f32 0.0, %v1974
      %1976 = vmatmul.f32.gmra.mxu0 %v1891
      %v1977 = vpop.f32.mrf.mxu0
      %v1978 = vadd.f32 0.0, %v1977
      %1979 = vmatmul.f32.gmra.mxu0 %v1892
      %v1980 = vpop.f32.mrf.mxu0
      %v1981 = vadd.f32 0.0, %v1980
      %1982 = vmatmul.f32.gmra.mxu0 %v1893
      %v1983 = vpop.f32.mrf.mxu0
      %v1984 = vadd.f32 0.0, %v1983
      %1985 = vmatmul.f32.gmra.mxu0 %v1894
      %v1986 = vpop.f32.mrf.mxu0
      %v1987 = vadd.f32 0.0, %v1986
      %1988 = vmatmul.f32.gmra.mxu0 %v1895
      %v1989 = vpop.f32.mrf.mxu0
      %v1990 = vadd.f32 0.0, %v1989
      %1991 = vmatmul.f32.gmra.mxu0 %v1896
      %v1992 = vpop.f32.mrf.mxu0
      %v1993 = vadd.f32 0.0, %v1992
      %1994 = vmatmul.f32.gmra.mxu0 %v1897
      %v1995 = vpop.f32.mrf.mxu0
      %v1996 = vadd.f32 0.0, %v1995
      %1997 = vmatmul.f32.gmra.mxu0 %v1898
      %v1998 = vpop.f32.mrf.mxu0
      %v1999 = vadd.f32 0.0, %v1998
      %2000 = vmatmul.f32.gmra.mxu0 %v1899
      %v2001 = vpop.f32.mrf.mxu0
      %v2002 = vadd.f32 0.0, %v2001
      %2003 = vmatmul.f32.gmra.mxu0 %v1900
      %v2004 = vpop.f32.mrf.mxu0
      %v2005 = vadd.f32 0.0, %v2004
      %2006 = vmatmul.f32.gmra.mxu0 %v1901
      %v2007 = vpop.f32.mrf.mxu0
      %v2008 = vadd.f32 0.0, %v2007
      %2009 = vmatmul.f32.gmra.mxu0 %v1902
      %v2010 = vpop.f32.mrf.mxu0
      %v2011 = vadd.f32 0.0, %v2010
      %2012 = vmatmul.f32.gmra.mxu0 %v1903
      %v2013 = vpop.f32.mrf.mxu0
      %v2014 = vadd.f32 0.0, %v2013
      %2015 = vmatmul.f32.gmra.mxu0 %v1904
      %v2016 = vpop.f32.mrf.mxu0
      %v2017 = vadd.f32 0.0, %v2016
      %2018 = vmatmul.f32.gmra.mxu0 %v1905
      %v2019 = vpop.f32.mrf.mxu0
      %v2020 = vadd.f32 0.0, %v2019
      %2021 = vmatmul.f32.gmra.mxu0 %v1906
      %v2022 = vpop.f32.mrf.mxu0
      %v2023 = vadd.f32 0.0, %v2022
      %2024 = vdwg.mxu0
      %v2025 = vadd.f32 %v1851, %v1942
      %v2026 = vadd.f32 %v1852, %v1945
      %v2027 = vadd.f32 %v1853, %v1948
      %v2028 = vadd.f32 %v1854, %v1951
      %v2029 = vadd.f32 %v1855, %v1954
      %v2030 = vadd.f32 %v1856, %v1957
      %v2031 = vadd.f32 %v1857, %v1960
      %v2032 = vadd.f32 %v1858, %v1963
      %v2033 = vadd.f32 %v1859, %v1966
      %v2034 = vadd.f32 %v1860, %v1969
      %v2035 = vadd.f32 %v1861, %v1972
      %v2036 = vadd.f32 %v1862, %v1975
      %v2037 = vadd.f32 %v1863, %v1978
      %v2038 = vadd.f32 %v1864, %v1981
      %v2039 = vadd.f32 %v1865, %v1984
      %v2040 = vadd.f32 %v1866, %v1987
      %v2041 = vadd.f32 %v1867, %v1990
      %v2042 = vadd.f32 %v1868, %v1993
      %v2043 = vadd.f32 %v1869, %v1996
      %v2044 = vadd.f32 %v1870, %v1999
      %v2045 = vadd.f32 %v1871, %v2002
      %v2046 = vadd.f32 %v1872, %v2005
      %v2047 = vadd.f32 %v1873, %v2008
      %v2048 = vadd.f32 %v1874, %v2011
      %v2049 = vadd.f32 %v1875, %v2014
      %v2050 = vadd.f32 %v1876, %v2017
      %v2051 = vadd.f32 %v1877, %v2020
      %v2052 = vadd.f32 %v1878, %v2023
      %v2053 = vld [vmem:[#allocation2 + $0x22] sm:$0xff]
      %v2054 = vld [vmem:[#allocation2 + $0x2a] sm:$0xff]
      %v2055 = vld [vmem:[#allocation2 + $0x32] sm:$0xff]
      %v2056 = vld [vmem:[#allocation2 + $0x3a] sm:$0xff]
      %v2057 = vld [vmem:[#allocation2 + $0x42] sm:$0xff]
      %v2058 = vld [vmem:[#allocation2 + $0x4a] sm:$0xff]
      %v2059 = vld [vmem:[#allocation2 + $0x52] sm:$0xff]
      %v2060 = vld [vmem:[#allocation2 + $0x5a] sm:$0xff]
      %v2061 = vld [vmem:[#allocation2 + $0x62] sm:$0xff]
      %v2062 = vld [vmem:[#allocation2 + $0x6a] sm:$0xff]
      %v2063 = vld [vmem:[#allocation2 + $0x72] sm:$0xff]
      %v2064 = vld [vmem:[#allocation2 + $0x7a] sm:$0xff]
      %v2065 = vld [vmem:[#allocation2 + $0x82] sm:$0xff]
      %v2066 = vld [vmem:[#allocation2 + $0x8a] sm:$0xff]
      %v2067 = vld [vmem:[#allocation2 + $0x92] sm:$0xff]
      %v2068 = vld [vmem:[#allocation2 + $0x9a] sm:$0xff]
      %v2069 = vld [vmem:[#allocation2 + $0xa2] sm:$0xff]
      %v2070 = vld [vmem:[#allocation2 + $0xaa] sm:$0xff]
      %v2071 = vld [vmem:[#allocation2 + $0xb2] sm:$0xff]
      %v2072 = vld [vmem:[#allocation2 + $0xba] sm:$0xff]
      %v2073 = vld [vmem:[#allocation2 + $0xc2] sm:$0xff]
      %v2074 = vld [vmem:[#allocation2 + $0xca] sm:$0xff]
      %v2075 = vld [vmem:[#allocation2 + $0xd2] sm:$0xff]
      %v2076 = vld [vmem:[#allocation2 + $0xda] sm:$0xff]
      %v2077 = vld [vmem:[#allocation2 + $0xe2] sm:$0xff]
      %v2078 = vld [vmem:[#allocation2 + $0xea] sm:$0xff]
      %v2079 = vld [vmem:[#allocation2 + $0xf2] sm:$0xff]
      %v2080 = vld [vmem:[#allocation2 + $0xfa] sm:$0xff]
      %s2081 = scalar_lea.vmem %s3, 1024
      %v2082 = vld [vmem:[%s2081] sm:$0xff]
      %v2083 = vld [vmem:[%s2081 + $0x8] sm:$0xff]
      %v2084 = vld [vmem:[%s2081 + $0x10] sm:$0xff]
      %v2085 = vld [vmem:[%s2081 + $0x18] sm:$0xff]
      %v2086 = vld [vmem:[%s2081 + $0x20] sm:$0xff]
      %v2087 = vld [vmem:[%s2081 + $0x28] sm:$0xff]
      %v2088 = vld [vmem:[%s2081 + $0x30] sm:$0xff]
      %v2089 = vld [vmem:[%s2081 + $0x38] sm:$0xff]
      %v2090 = vld [vmem:[%s2081 + $0x40] sm:$0xff]
      %v2091 = vld [vmem:[%s2081 + $0x48] sm:$0xff]
      %v2092 = vld [vmem:[%s2081 + $0x50] sm:$0xff]
      %v2093 = vld [vmem:[%s2081 + $0x58] sm:$0xff]
      %v2094 = vld [vmem:[%s2081 + $0x60] sm:$0xff]
      %v2095 = vld [vmem:[%s2081 + $0x68] sm:$0xff]
      %v2096 = vld [vmem:[%s2081 + $0x70] sm:$0xff]
      %v2097 = vld [vmem:[%s2081 + $0x78] sm:$0xff]
      %2098 = vmatpush.msra.mxu0 %v2097
      %2099 = vmatpush.msra.mxu0 %v2096
      %2100 = vmatpush.msra.mxu0 %v2095
      %2101 = vmatpush.msra.mxu0 %v2094
      %2102 = vmatpush.msra.mxu0 %v2093
      %2103 = vmatpush.msra.mxu0 %v2092
      %2104 = vmatpush.msra.mxu0 %v2091
      %2105 = vmatpush.msra.mxu0 %v2090
      %2106 = vmatpush.msra.mxu0 %v2089
      %2107 = vmatpush.msra.mxu0 %v2088
      %2108 = vmatpush.msra.mxu0 %v2087
      %2109 = vmatpush.msra.mxu0 %v2086
      %2110 = vmatpush.msra.mxu0 %v2085
      %2111 = vmatpush.msra.mxu0 %v2084
      %2112 = vmatpush.msra.mxu0 %v2083
      %2113 = vmatpush.msra.mxu0 %v2082
      %2114 = vmatmul.f32.gmra.mxu0 %v2053
      %v2115 = vpop.f32.mrf.mxu0
      %v2116 = vadd.f32 0.0, %v2115
      %2117 = vmatmul.f32.gmra.mxu0 %v2054
      %v2118 = vpop.f32.mrf.mxu0
      %v2119 = vadd.f32 0.0, %v2118
      %2120 = vmatmul.f32.gmra.mxu0 %v2055
      %v2121 = vpop.f32.mrf.mxu0
      %v2122 = vadd.f32 0.0, %v2121
      %2123 = vmatmul.f32.gmra.mxu0 %v2056
      %v2124 = vpop.f32.mrf.mxu0
      %v2125 = vadd.f32 0.0, %v2124
      %2126 = vmatmul.f32.gmra.mxu0 %v2057
      %v2127 = vpop.f32.mrf.mxu0
      %v2128 = vadd.f32 0.0, %v2127
      %2129 = vmatmul.f32.gmra.mxu0 %v2058
      %v2130 = vpop.f32.mrf.mxu0
      %v2131 = vadd.f32 0.0, %v2130
      %2132 = vmatmul.f32.gmra.mxu0 %v2059
      %v2133 = vpop.f32.mrf.mxu0
      %v2134 = vadd.f32 0.0, %v2133
      %2135 = vmatmul.f32.gmra.mxu0 %v2060
      %v2136 = vpop.f32.mrf.mxu0
      %v2137 = vadd.f32 0.0, %v2136
      %2138 = vmatmul.f32.gmra.mxu0 %v2061
      %v2139 = vpop.f32.mrf.mxu0
      %v2140 = vadd.f32 0.0, %v2139
      %2141 = vmatmul.f32.gmra.mxu0 %v2062
      %v2142 = vpop.f32.mrf.mxu0
      %v2143 = vadd.f32 0.0, %v2142
      %2144 = vmatmul.f32.gmra.mxu0 %v2063
      %v2145 = vpop.f32.mrf.mxu0
      %v2146 = vadd.f32 0.0, %v2145
      %2147 = vmatmul.f32.gmra.mxu0 %v2064
      %v2148 = vpop.f32.mrf.mxu0
      %v2149 = vadd.f32 0.0, %v2148
      %2150 = vmatmul.f32.gmra.mxu0 %v2065
      %v2151 = vpop.f32.mrf.mxu0
      %v2152 = vadd.f32 0.0, %v2151
      %2153 = vmatmul.f32.gmra.mxu0 %v2066
      %v2154 = vpop.f32.mrf.mxu0
      %v2155 = vadd.f32 0.0, %v2154
      %2156 = vmatmul.f32.gmra.mxu0 %v2067
      %v2157 = vpop.f32.mrf.mxu0
      %v2158 = vadd.f32 0.0, %v2157
      %2159 = vmatmul.f32.gmra.mxu0 %v2068
      %v2160 = vpop.f32.mrf.mxu0
      %v2161 = vadd.f32 0.0, %v2160
      %2162 = vmatmul.f32.gmra.mxu0 %v2069
      %v2163 = vpop.f32.mrf.mxu0
      %v2164 = vadd.f32 0.0, %v2163
      %2165 = vmatmul.f32.gmra.mxu0 %v2070
      %v2166 = vpop.f32.mrf.mxu0
      %v2167 = vadd.f32 0.0, %v2166
      %2168 = vmatmul.f32.gmra.mxu0 %v2071
      %v2169 = vpop.f32.mrf.mxu0
      %v2170 = vadd.f32 0.0, %v2169
      %2171 = vmatmul.f32.gmra.mxu0 %v2072
      %v2172 = vpop.f32.mrf.mxu0
      %v2173 = vadd.f32 0.0, %v2172
      %2174 = vmatmul.f32.gmra.mxu0 %v2073
      %v2175 = vpop.f32.mrf.mxu0
      %v2176 = vadd.f32 0.0, %v2175
      %2177 = vmatmul.f32.gmra.mxu0 %v2074
      %v2178 = vpop.f32.mrf.mxu0
      %v2179 = vadd.f32 0.0, %v2178
      %2180 = vmatmul.f32.gmra.mxu0 %v2075
      %v2181 = vpop.f32.mrf.mxu0
      %v2182 = vadd.f32 0.0, %v2181
      %2183 = vmatmul.f32.gmra.mxu0 %v2076
      %v2184 = vpop.f32.mrf.mxu0
      %v2185 = vadd.f32 0.0, %v2184
      %2186 = vmatmul.f32.gmra.mxu0 %v2077
      %v2187 = vpop.f32.mrf.mxu0
      %v2188 = vadd.f32 0.0, %v2187
      %2189 = vmatmul.f32.gmra.mxu0 %v2078
      %v2190 = vpop.f32.mrf.mxu0
      %v2191 = vadd.f32 0.0, %v2190
      %2192 = vmatmul.f32.gmra.mxu0 %v2079
      %v2193 = vpop.f32.mrf.mxu0
      %v2194 = vadd.f32 0.0, %v2193
      %2195 = vmatmul.f32.gmra.mxu0 %v2080
      %v2196 = vpop.f32.mrf.mxu0
      %v2197 = vadd.f32 0.0, %v2196
      %2198 = vdwg.mxu0
      %v2199 = vadd.f32 %v2025, %v2116
      %v2200 = vadd.f32 %v2026, %v2119
      %v2201 = vadd.f32 %v2027, %v2122
      %v2202 = vadd.f32 %v2028, %v2125
      %v2203 = vadd.f32 %v2029, %v2128
      %v2204 = vadd.f32 %v2030, %v2131
      %v2205 = vadd.f32 %v2031, %v2134
      %v2206 = vadd.f32 %v2032, %v2137
      %v2207 = vadd.f32 %v2033, %v2140
      %v2208 = vadd.f32 %v2034, %v2143
      %v2209 = vadd.f32 %v2035, %v2146
      %v2210 = vadd.f32 %v2036, %v2149
      %v2211 = vadd.f32 %v2037, %v2152
      %v2212 = vadd.f32 %v2038, %v2155
      %v2213 = vadd.f32 %v2039, %v2158
      %v2214 = vadd.f32 %v2040, %v2161
      %v2215 = vadd.f32 %v2041, %v2164
      %v2216 = vadd.f32 %v2042, %v2167
      %v2217 = vadd.f32 %v2043, %v2170
      %v2218 = vadd.f32 %v2044, %v2173
      %v2219 = vadd.f32 %v2045, %v2176
      %v2220 = vadd.f32 %v2046, %v2179
      %v2221 = vadd.f32 %v2047, %v2182
      %v2222 = vadd.f32 %v2048, %v2185
      %v2223 = vadd.f32 %v2049, %v2188
      %v2224 = vadd.f32 %v2050, %v2191
      %v2225 = vadd.f32 %v2051, %v2194
      %v2226 = vadd.f32 %v2052, %v2197
      %v2227 = vld [vmem:[%s4] sm:$0x1]
      %v2229 = vperm.slane %v2227, 0
      %v2231 = vadd.f32 %v2199, %v2229
      %v2232 = vadd.f32 %v2200, %v2229
      %v2233 = vadd.f32 %v2201, %v2229
      %v2234 = vadd.f32 %v2202, %v2229
      %v2235 = vadd.f32 %v2203, %v2229
      %v2236 = vadd.f32 %v2204, %v2229
      %v2237 = vadd.f32 %v2205, %v2229
      %v2238 = vadd.f32 %v2206, %v2229
      %v2239 = vadd.f32 %v2207, %v2229
      %v2240 = vadd.f32 %v2208, %v2229
      %v2241 = vadd.f32 %v2209, %v2229
      %v2242 = vadd.f32 %v2210, %v2229
      %v2243 = vadd.f32 %v2211, %v2229
      %v2244 = vadd.f32 %v2212, %v2229
      %v2245 = vadd.f32 %v2213, %v2229
      %v2246 = vadd.f32 %v2214, %v2229
      %v2247 = vadd.f32 %v2215, %v2229
      %v2248 = vadd.f32 %v2216, %v2229
      %v2249 = vadd.f32 %v2217, %v2229
      %v2250 = vadd.f32 %v2218, %v2229
      %v2251 = vadd.f32 %v2219, %v2229
      %v2252 = vadd.f32 %v2220, %v2229
      %v2253 = vadd.f32 %v2221, %v2229
      %v2254 = vadd.f32 %v2222, %v2229
      %v2255 = vadd.f32 %v2223, %v2229
      %v2256 = vadd.f32 %v2224, %v2229
      %v2257 = vadd.f32 %v2225, %v2229
      %v2258 = vadd.f32 %v2226, %v2229
      %v2259 = vmax.f32 %v2231, 0.0
      %v2260 = vmax.f32 %v2232, 0.0
      %v2261 = vmax.f32 %v2233, 0.0
      %v2262 = vmax.f32 %v2234, 0.0
      %v2263 = vmax.f32 %v2235, 0.0
      %v2264 = vmax.f32 %v2236, 0.0
      %v2265 = vmax.f32 %v2237, 0.0
      %v2266 = vmax.f32 %v2238, 0.0
      %v2267 = vmax.f32 %v2239, 0.0
      %v2268 = vmax.f32 %v2240, 0.0
      %v2269 = vmax.f32 %v2241, 0.0
      %v2270 = vmax.f32 %v2242, 0.0
      %v2271 = vmax.f32 %v2243, 0.0
      %v2272 = vmax.f32 %v2244, 0.0
      %v2273 = vmax.f32 %v2245, 0.0
      %v2274 = vmax.f32 %v2246, 0.0
      %v2275 = vmax.f32 %v2247, 0.0
      %v2276 = vmax.f32 %v2248, 0.0
      %v2277 = vmax.f32 %v2249, 0.0
      %v2278 = vmax.f32 %v2250, 0.0
      %v2279 = vmax.f32 %v2251, 0.0
      %v2280 = vmax.f32 %v2252, 0.0
      %v2281 = vmax.f32 %v2253, 0.0
      %v2282 = vmax.f32 %v2254, 0.0
      %v2283 = vmax.f32 %v2255, 0.0
      %v2284 = vmax.f32 %v2256, 0.0
      %v2285 = vmax.f32 %v2257, 0.0
      %v2286 = vmax.f32 %v2258, 0.0
      %2287 = vst.msk [vmem:[#allocation3 + $0x26] sm:$0xff] %vm366, %v2259
      %vm2288 = vcmask 521216
      %2289 = vst.msk [vmem:[#allocation3 + $0x2e] sm:$0x3f] %vm2288, %v2260
      %2290 = vst.msk [vmem:[#allocation3 + $0x38] sm:$0xff] %vm366, %v2261
      %2291 = vst.msk [vmem:[#allocation3 + $0x40] sm:$0x3f] %vm2288, %v2262
      %2292 = vst.msk [vmem:[#allocation3 + $0x4a] sm:$0xff] %vm366, %v2263
      %2293 = vst.msk [vmem:[#allocation3 + $0x52] sm:$0x3f] %vm2288, %v2264
      %2294 = vst.msk [vmem:[#allocation3 + $0x5c] sm:$0xff] %vm366, %v2265
      %2295 = vst.msk [vmem:[#allocation3 + $0x64] sm:$0x3f] %vm2288, %v2266
      %2296 = vst.msk [vmem:[#allocation3 + $0x6e] sm:$0xff] %vm366, %v2267
      %2297 = vst.msk [vmem:[#allocation3 + $0x76] sm:$0x3f] %vm2288, %v2268
      %2298 = vst.msk [vmem:[#allocation3 + $0x80] sm:$0xff] %vm366, %v2269
      %2299 = vst.msk [vmem:[#allocation3 + $0x88] sm:$0x3f] %vm2288, %v2270
      %2300 = vst.msk [vmem:[#allocation3 + $0x92] sm:$0xff] %vm366, %v2271
      %2301 = vst.msk [vmem:[#allocation3 + $0x9a] sm:$0x3f] %vm2288, %v2272
      %2302 = vst.msk [vmem:[#allocation3 + $0xa4] sm:$0xff] %vm366, %v2273
      %2303 = vst.msk [vmem:[#allocation3 + $0xac] sm:$0x3f] %vm2288, %v2274
      %2304 = vst.msk [vmem:[#allocation3 + $0xb6] sm:$0xff] %vm366, %v2275
      %2305 = vst.msk [vmem:[#allocation3 + $0xbe] sm:$0x3f] %vm2288, %v2276
      %2306 = vst.msk [vmem:[#allocation3 + $0xc8] sm:$0xff] %vm366, %v2277
      %2307 = vst.msk [vmem:[#allocation3 + $0xd0] sm:$0x3f] %vm2288, %v2278
      %2308 = vst.msk [vmem:[#allocation3 + $0xda] sm:$0xff] %vm366, %v2279
      %2309 = vst.msk [vmem:[#allocation3 + $0xe2] sm:$0x3f] %vm2288, %v2280
      %2310 = vst.msk [vmem:[#allocation3 + $0xec] sm:$0xff] %vm366, %v2281
      %2311 = vst.msk [vmem:[#allocation3 + $0xf4] sm:$0x3f] %vm2288, %v2282
      %2312 = vst.msk [vmem:[#allocation3 + $0xfe] sm:$0xff] %vm366, %v2283
      %2313 = vst.msk [vmem:[#allocation3 + $0x106] sm:$0x3f] %vm2288, %v2284
      %2314 = vst.msk [vmem:[#allocation3 + $0x110] sm:$0xff] %vm366, %v2285
      %2315 = vst.msk [vmem:[#allocation3 + $0x118] sm:$0x3f] %vm2288, %v2286
      %v2316 = vld [vmem:[#allocation3] sm:$0xff]
      %v2317 = vld [vmem:[#allocation3 + $0x8] sm:$0xff]
      %v2318 = vld [vmem:[#allocation3 + $0x10] sm:$0xff]
      %v2319 = vld [vmem:[#allocation3 + $0x18] sm:$0xff]
      %v2320 = vld [vmem:[#allocation3 + $0x20] sm:$0xff]
      %v2321 = vld [vmem:[#allocation3 + $0x28] sm:$0xff]
      %v2322 = vld [vmem:[#allocation3 + $0x30] sm:$0xff]
      %v2323 = vld [vmem:[#allocation3 + $0x38] sm:$0xff]
      %v2324 = vld [vmem:[#allocation3 + $0x40] sm:$0xff]
      %v2325 = vld [vmem:[#allocation3 + $0x48] sm:$0xff]
      %v2326 = vld [vmem:[#allocation3 + $0x50] sm:$0xff]
      %v2327 = vld [vmem:[#allocation3 + $0x58] sm:$0xff]
      %v2328 = vld [vmem:[#allocation3 + $0x60] sm:$0xff]
      %v2329 = vld [vmem:[#allocation3 + $0x68] sm:$0xff]
      %v2330 = vld [vmem:[#allocation3 + $0x70] sm:$0xff]
      %v2331 = vld [vmem:[#allocation3 + $0x78] sm:$0xff]
      %v2332 = vld [vmem:[#allocation3 + $0x80] sm:$0xff]
      %v2333 = vld [vmem:[#allocation3 + $0x88] sm:$0xff]
      %v2334 = vld [vmem:[#allocation3 + $0x90] sm:$0xff]
      %v2335 = vld [vmem:[#allocation3 + $0x98] sm:$0xff]
      %v2336 = vld [vmem:[#allocation3 + $0xa0] sm:$0xff]
      %v2337 = vld [vmem:[#allocation3 + $0xa8] sm:$0xff]
      %v2338 = vld [vmem:[#allocation3 + $0xb0] sm:$0xff]
      %v2339 = vld [vmem:[#allocation3 + $0xb8] sm:$0xff]
      %v2340 = vld [vmem:[#allocation3 + $0xc0] sm:$0xff]
      %v2341 = vld [vmem:[#allocation3 + $0xc8] sm:$0xff]
      %v2342 = vld [vmem:[#allocation3 + $0xd0] sm:$0xff]
      %v2343 = vld [vmem:[#allocation3 + $0xd8] sm:$0xff]
      %v2344 = vld [vmem:[#allocation3 + $0xe0] sm:$0xff]
      %v2345 = vld [vmem:[#allocation3 + $0xe8] sm:$0xff]
      %v2346 = vld [vmem:[#allocation3 + $0xf0] sm:$0xff]
      %v2347 = vld [vmem:[#allocation3 + $0xf8] sm:$0xff]
      %v2348 = vld [vmem:[#allocation3 + $0x100] sm:$0xff]
      %v2349 = vld [vmem:[#allocation3 + $0x108] sm:$0xff]
      %v2350 = vld [vmem:[#allocation3 + $0x110] sm:$0xff]
      %v2351 = vld [vmem:[#allocation3 + $0x118] sm:$0xff]
      %v2352 = vld [vmem:[#allocation3 + $0x120] sm:$0xff]
      %v2353 = vld [vmem:[#allocation3 + $0x128] sm:$0xff]
      %v2354 = vld [vmem:[#allocation3 + $0x130] sm:$0xff]
      %v2355 = vld [vmem:[#allocation3 + $0x138] sm:$0xff]
      %v2356 = vld [vmem:[#allocation3 + $0x140] sm:$0xf]
      %v2357 = vld [vmem:[%s5] sm:$0xff]
      %v2358 = vld [vmem:[%s5 + $0x8] sm:$0xff]
      %v2359 = vld [vmem:[%s5 + $0x10] sm:$0xff]
      %v2360 = vld [vmem:[%s5 + $0x18] sm:$0xff]
      %v2361 = vld [vmem:[%s5 + $0x20] sm:$0xff]
      %v2362 = vld [vmem:[%s5 + $0x28] sm:$0xff]
      %v2363 = vld [vmem:[%s5 + $0x30] sm:$0xff]
      %v2364 = vld [vmem:[%s5 + $0x38] sm:$0xff]
      %v2365 = vld [vmem:[%s6] sm:$0x1]
      %v2367 = vperm.slane %v2365, 0
      %v2370 = vsel %vm366, %v2316, 0
      %v2373 = vsel %vm366, %v2317, 0
      %v2376 = vsel %vm366, %v2318, 0
      %v2379 = vsel %vm366, %v2319, 0
      %v2382 = vsel %vm366, %v2320, 0
      %v2385 = vsel %vm366, %v2321, 0
      %v2388 = vsel %vm366, %v2322, 0
      %v2391 = vsel %vm366, %v2323, 0
      %v2394 = vsel %vm366, %v2324, 0
      %v2397 = vsel %vm366, %v2325, 0
      %v2400 = vsel %vm366, %v2326, 0
      %v2403 = vsel %vm366, %v2327, 0
      %v2406 = vsel %vm366, %v2328, 0
      %v2409 = vsel %vm366, %v2329, 0
      %v2412 = vsel %vm366, %v2330, 0
      %v2415 = vsel %vm366, %v2331, 0
      %v2418 = vsel %vm366, %v2332, 0
      %v2421 = vsel %vm366, %v2333, 0
      %v2424 = vsel %vm366, %v2334, 0
      %v2427 = vsel %vm366, %v2335, 0
      %v2430 = vsel %vm366, %v2336, 0
      %v2433 = vsel %vm366, %v2337, 0
      %v2436 = vsel %vm366, %v2338, 0
      %v2439 = vsel %vm366, %v2339, 0
      %v2442 = vsel %vm366, %v2340, 0
      %v2445 = vsel %vm366, %v2341, 0
      %v2448 = vsel %vm366, %v2342, 0
      %v2451 = vsel %vm366, %v2343, 0
      %v2454 = vsel %vm366, %v2344, 0
      %v2457 = vsel %vm366, %v2345, 0
      %v2460 = vsel %vm366, %v2346, 0
      %v2463 = vsel %vm366, %v2347, 0
      %v2466 = vsel %vm366, %v2348, 0
      %v2469 = vsel %vm366, %v2349, 0
      %v2472 = vsel %vm366, %v2350, 0
      %v2475 = vsel %vm366, %v2351, 0
      %v2478 = vsel %vm366, %v2352, 0
      %v2481 = vsel %vm366, %v2353, 0
      %v2484 = vsel %vm366, %v2354, 0
      %v2487 = vsel %vm366, %v2355, 0
      %v2490 = vsel %vm366, %v2356, 0
      %2492 = vmatpush.msra.mxu0 0.0
      %2493 = vmatpush.msra.mxu0 0.0
      %2494 = vmatpush.msra.mxu0 0.0
      %2495 = vmatpush.msra.mxu0 0.0
      %2496 = vmatpush.msra.mxu0 0.0
      %2497 = vmatpush.msra.mxu0 0.0
      %2498 = vmatpush.msra.mxu0 0.0
      %2499 = vmatpush.msra.mxu0 0.0
      %2500 = vmatpush.msra.mxu0 %v2364
      %2501 = vmatpush.msra.mxu0 %v2363
      %2502 = vmatpush.msra.mxu0 %v2362
      %2503 = vmatpush.msra.mxu0 %v2361
      %2504 = vmatpush.msra.mxu0 %v2360
      %2505 = vmatpush.msra.mxu0 %v2359
      %2506 = vmatpush.msra.mxu0 %v2358
      %2507 = vmatpush.msra.mxu0 %v2357
      %2508 = vmatmul.f32.gmra.mxu0 %v2370
      %v2509 = vpop.f32.mrf.mxu0
      %v2510 = vadd.f32 %v2367, %v2509
      %2511 = vmatmul.f32.gmra.mxu0 %v2373
      %v2512 = vpop.f32.mrf.mxu0
      %v2513 = vadd.f32 %v2367, %v2512
      %2514 = vmatmul.f32.gmra.mxu0 %v2376
      %v2515 = vpop.f32.mrf.mxu0
      %v2516 = vadd.f32 %v2367, %v2515
      %2517 = vmatmul.f32.gmra.mxu0 %v2379
      %v2518 = vpop.f32.mrf.mxu0
      %v2519 = vadd.f32 %v2367, %v2518
      %2520 = vmatmul.f32.gmra.mxu0 %v2382
      %v2521 = vpop.f32.mrf.mxu0
      %v2522 = vadd.f32 %v2367, %v2521
      %2523 = vmatmul.f32.gmra.mxu0 %v2385
      %v2524 = vpop.f32.mrf.mxu0
      %v2525 = vadd.f32 %v2367, %v2524
      %2526 = vmatmul.f32.gmra.mxu0 %v2388
      %v2527 = vpop.f32.mrf.mxu0
      %v2528 = vadd.f32 %v2367, %v2527
      %2529 = vmatmul.f32.gmra.mxu0 %v2391
      %v2530 = vpop.f32.mrf.mxu0
      %v2531 = vadd.f32 %v2367, %v2530
      %2532 = vmatmul.f32.gmra.mxu0 %v2394
      %v2533 = vpop.f32.mrf.mxu0
      %v2534 = vadd.f32 %v2367, %v2533
      %2535 = vmatmul.f32.gmra.mxu0 %v2397
      %v2536 = vpop.f32.mrf.mxu0
      %v2537 = vadd.f32 %v2367, %v2536
      %2538 = vmatmul.f32.gmra.mxu0 %v2400
      %v2539 = vpop.f32.mrf.mxu0
      %v2540 = vadd.f32 %v2367, %v2539
      %2541 = vmatmul.f32.gmra.mxu0 %v2403
      %v2542 = vpop.f32.mrf.mxu0
      %v2543 = vadd.f32 %v2367, %v2542
      %2544 = vmatmul.f32.gmra.mxu0 %v2406
      %v2545 = vpop.f32.mrf.mxu0
      %v2546 = vadd.f32 %v2367, %v2545
      %2547 = vmatmul.f32.gmra.mxu0 %v2409
      %v2548 = vpop.f32.mrf.mxu0
      %v2549 = vadd.f32 %v2367, %v2548
      %2550 = vmatmul.f32.gmra.mxu0 %v2412
      %v2551 = vpop.f32.mrf.mxu0
      %v2552 = vadd.f32 %v2367, %v2551
      %2553 = vmatmul.f32.gmra.mxu0 %v2415
      %v2554 = vpop.f32.mrf.mxu0
      %v2555 = vadd.f32 %v2367, %v2554
      %2556 = vmatmul.f32.gmra.mxu0 %v2418
      %v2557 = vpop.f32.mrf.mxu0
      %v2558 = vadd.f32 %v2367, %v2557
      %2559 = vmatmul.f32.gmra.mxu0 %v2421
      %v2560 = vpop.f32.mrf.mxu0
      %v2561 = vadd.f32 %v2367, %v2560
      %2562 = vmatmul.f32.gmra.mxu0 %v2424
      %v2563 = vpop.f32.mrf.mxu0
      %v2564 = vadd.f32 %v2367, %v2563
      %2565 = vmatmul.f32.gmra.mxu0 %v2427
      %v2566 = vpop.f32.mrf.mxu0
      %v2567 = vadd.f32 %v2367, %v2566
      %2568 = vmatmul.f32.gmra.mxu0 %v2430
      %v2569 = vpop.f32.mrf.mxu0
      %v2570 = vadd.f32 %v2367, %v2569
      %2571 = vmatmul.f32.gmra.mxu0 %v2433
      %v2572 = vpop.f32.mrf.mxu0
      %v2573 = vadd.f32 %v2367, %v2572
      %2574 = vmatmul.f32.gmra.mxu0 %v2436
      %v2575 = vpop.f32.mrf.mxu0
      %v2576 = vadd.f32 %v2367, %v2575
      %2577 = vmatmul.f32.gmra.mxu0 %v2439
      %v2578 = vpop.f32.mrf.mxu0
      %v2579 = vadd.f32 %v2367, %v2578
      %2580 = vmatmul.f32.gmra.mxu0 %v2442
      %v2581 = vpop.f32.mrf.mxu0
      %v2582 = vadd.f32 %v2367, %v2581
      %2583 = vmatmul.f32.gmra.mxu0 %v2445
      %v2584 = vpop.f32.mrf.mxu0
      %v2585 = vadd.f32 %v2367, %v2584
      %2586 = vmatmul.f32.gmra.mxu0 %v2448
      %v2587 = vpop.f32.mrf.mxu0
      %v2588 = vadd.f32 %v2367, %v2587
      %2589 = vmatmul.f32.gmra.mxu0 %v2451
      %v2590 = vpop.f32.mrf.mxu0
      %v2591 = vadd.f32 %v2367, %v2590
      %2592 = vmatmul.f32.gmra.mxu0 %v2454
      %v2593 = vpop.f32.mrf.mxu0
      %v2594 = vadd.f32 %v2367, %v2593
      %2595 = vmatmul.f32.gmra.mxu0 %v2457
      %v2596 = vpop.f32.mrf.mxu0
      %v2597 = vadd.f32 %v2367, %v2596
      %2598 = vmatmul.f32.gmra.mxu0 %v2460
      %v2599 = vpop.f32.mrf.mxu0
      %v2600 = vadd.f32 %v2367, %v2599
      %2601 = vmatmul.f32.gmra.mxu0 %v2463
      %v2602 = vpop.f32.mrf.mxu0
      %v2603 = vadd.f32 %v2367, %v2602
      %2604 = vmatmul.f32.gmra.mxu0 %v2466
      %v2605 = vpop.f32.mrf.mxu0
      %v2606 = vadd.f32 %v2367, %v2605
      %2607 = vmatmul.f32.gmra.mxu0 %v2469
      %v2608 = vpop.f32.mrf.mxu0
      %v2609 = vadd.f32 %v2367, %v2608
      %2610 = vmatmul.f32.gmra.mxu0 %v2472
      %v2611 = vpop.f32.mrf.mxu0
      %v2612 = vadd.f32 %v2367, %v2611
      %2613 = vmatmul.f32.gmra.mxu0 %v2475
      %v2614 = vpop.f32.mrf.mxu0
      %v2615 = vadd.f32 %v2367, %v2614
      %2616 = vmatmul.f32.gmra.mxu0 %v2478
      %v2617 = vpop.f32.mrf.mxu0
      %v2618 = vadd.f32 %v2367, %v2617
      %2619 = vmatmul.f32.gmra.mxu0 %v2481
      %v2620 = vpop.f32.mrf.mxu0
      %v2621 = vadd.f32 %v2367, %v2620
      %2622 = vmatmul.f32.gmra.mxu0 %v2484
      %v2623 = vpop.f32.mrf.mxu0
      %v2624 = vadd.f32 %v2367, %v2623
      %2625 = vmatmul.f32.gmra.mxu0 %v2487
      %v2626 = vpop.f32.mrf.mxu0
      %v2627 = vadd.f32 %v2367, %v2626
      %2628 = vmatmul.f32.gmra.mxu0 %v2490
      %v2629 = vpop.f32.mrf.mxu0
      %v2630 = vadd.f32 %v2367, %v2629
      %2631 = vdwg.mxu0
      %v2632 = vmax.f32 %v2510, 0.0
      %v2633 = vmax.f32 %v2513, 0.0
      %v2634 = vmax.f32 %v2516, 0.0
      %v2635 = vmax.f32 %v2519, 0.0
      %v2636 = vmax.f32 %v2522, 0.0
      %v2637 = vmax.f32 %v2525, 0.0
      %v2638 = vmax.f32 %v2528, 0.0
      %v2639 = vmax.f32 %v2531, 0.0
      %v2640 = vmax.f32 %v2534, 0.0
      %v2641 = vmax.f32 %v2537, 0.0
      %v2642 = vmax.f32 %v2540, 0.0
      %v2643 = vmax.f32 %v2543, 0.0
      %v2644 = vmax.f32 %v2546, 0.0
      %v2645 = vmax.f32 %v2549, 0.0
      %v2646 = vmax.f32 %v2552, 0.0
      %v2647 = vmax.f32 %v2555, 0.0
      %v2648 = vmax.f32 %v2558, 0.0
      %v2649 = vmax.f32 %v2561, 0.0
      %v2650 = vmax.f32 %v2564, 0.0
      %v2651 = vmax.f32 %v2567, 0.0
      %v2652 = vmax.f32 %v2570, 0.0
      %v2653 = vmax.f32 %v2573, 0.0
      %v2654 = vmax.f32 %v2576, 0.0
      %v2655 = vmax.f32 %v2579, 0.0
      %v2656 = vmax.f32 %v2582, 0.0
      %v2657 = vmax.f32 %v2585, 0.0
      %v2658 = vmax.f32 %v2588, 0.0
      %v2659 = vmax.f32 %v2591, 0.0
      %v2660 = vmax.f32 %v2594, 0.0
      %v2661 = vmax.f32 %v2597, 0.0
      %v2662 = vmax.f32 %v2600, 0.0
      %v2663 = vmax.f32 %v2603, 0.0
      %v2664 = vmax.f32 %v2606, 0.0
      %v2665 = vmax.f32 %v2609, 0.0
      %v2666 = vmax.f32 %v2612, 0.0
      %v2667 = vmax.f32 %v2615, 0.0
      %v2668 = vmax.f32 %v2618, 0.0
      %v2669 = vmax.f32 %v2621, 0.0
      %v2670 = vmax.f32 %v2624, 0.0
      %v2671 = vmax.f32 %v2627, 0.0
      %v2672 = vmax.f32 %v2630, 0.0
      %2673 = vst.msk [vmem:[#allocation4 + $0x15] sm:$0xff] %vm409, %v2632
      %2674 = vst.msk [vmem:[#allocation4 + $0x1d] sm:$0xff] %vm409, %v2633
      %vm2675 = vcmask 254976
      %2676 = vst.msk [vmem:[#allocation4 + $0x25] sm:$0x3] %vm2675, %v2634
      %vm2677 = vcmask 261122
      %2678 = vst.msk [vmem:[#allocation4 + $0x27] sm:$0xfc] %vm2677, %v2634
      %2679 = vst.msk [vmem:[#allocation4 + $0x2f] sm:$0xff] %vm409, %v2635
      %2680 = vst.msk [vmem:[#allocation4 + $0x37] sm:$0xf] %vm460, %v2636
      %vm2681 = vcmask 261124
      %2682 = vst.msk [vmem:[#allocation4 + $0x39] sm:$0xf0] %vm2681, %v2636
      %2683 = vst.msk [vmem:[#allocation4 + $0x41] sm:$0xff] %vm409, %v2637
      %vm2684 = vcmask 259072
      %2685 = vst.msk [vmem:[#allocation4 + $0x49] sm:$0x3f] %vm2684, %v2638
      %vm2686 = vcmask 261126
      %2687 = vst.msk [vmem:[#allocation4 + $0x4b] sm:$0xc0] %vm2686, %v2638
      %2688 = vst.msk [vmem:[#allocation4 + $0x53] sm:$0xff] %vm409, %v2639
      %2689 = vst.msk [vmem:[#allocation4 + $0x5b] sm:$0xff] %vm409, %v2640
      %2690 = vst.msk [vmem:[#allocation4 + $0x65] sm:$0xff] %vm409, %v2641
      %2691 = vst.msk [vmem:[#allocation4 + $0x6d] sm:$0xff] %vm409, %v2642
      %2692 = vst.msk [vmem:[#allocation4 + $0x75] sm:$0x3] %vm2675, %v2643
      %2693 = vst.msk [vmem:[#allocation4 + $0x77] sm:$0xfc] %vm2677, %v2643
      %2694 = vst.msk [vmem:[#allocation4 + $0x7f] sm:$0xff] %vm409, %v2644
      %2695 = vst.msk [vmem:[#allocation4 + $0x87] sm:$0xf] %vm460, %v2645
      %2696 = vst.msk [vmem:[#allocation4 + $0x89] sm:$0xf0] %vm2681, %v2645
      %2697 = vst.msk [vmem:[#allocation4 + $0x91] sm:$0xff] %vm409, %v2646
      %2698 = vst.msk [vmem:[#allocation4 + $0x99] sm:$0x3f] %vm2684, %v2647
      %2699 = vst.msk [vmem:[#allocation4 + $0x9b] sm:$0xc0] %vm2686, %v2647
      %2700 = vst.msk [vmem:[#allocation4 + $0xa3] sm:$0xff] %vm409, %v2648
      %2701 = vst.msk [vmem:[#allocation4 + $0xab] sm:$0xff] %vm409, %v2649
      %2702 = vst.msk [vmem:[#allocation4 + $0xb5] sm:$0xff] %vm409, %v2650
      %2703 = vst.msk [vmem:[#allocation4 + $0xbd] sm:$0xff] %vm409, %v2651
      %2704 = vst.msk [vmem:[#allocation4 + $0xc5] sm:$0x3] %vm2675, %v2652
      %2705 = vst.msk [vmem:[#allocation4 + $0xc7] sm:$0xfc] %vm2677, %v2652
      %2706 = vst.msk [vmem:[#allocation4 + $0xcf] sm:$0xff] %vm409, %v2653
      %2707 = vst.msk [vmem:[#allocation4 + $0xd7] sm:$0xf] %vm460, %v2654
      %2708 = vst.msk [vmem:[#allocation4 + $0xd9] sm:$0xf0] %vm2681, %v2654
      %2709 = vst.msk [vmem:[#allocation4 + $0xe1] sm:$0xff] %vm409, %v2655
      %2710 = vst.msk [vmem:[#allocation4 + $0xe9] sm:$0x3f] %vm2684, %v2656
      %2711 = vst.msk [vmem:[#allocation4 + $0xeb] sm:$0xc0] %vm2686, %v2656
      %2712 = vst.msk [vmem:[#allocation4 + $0xf3] sm:$0xff] %vm409, %v2657
      %2713 = vst.msk [vmem:[#allocation4 + $0xfb] sm:$0xff] %vm409, %v2658
      %2714 = vst.msk [vmem:[#allocation4 + $0x105] sm:$0xff] %vm409, %v2659
      %2715 = vst.msk [vmem:[#allocation4 + $0x10d] sm:$0xff] %vm409, %v2660
      %2716 = vst.msk [vmem:[#allocation4 + $0x115] sm:$0x3] %vm2675, %v2661
      %2717 = vst.msk [vmem:[#allocation4 + $0x117] sm:$0xfc] %vm2677, %v2661
      %2718 = vst.msk [vmem:[#allocation4 + $0x11f] sm:$0xff] %vm409, %v2662
      %2719 = vst.msk [vmem:[#allocation4 + $0x127] sm:$0xf] %vm460, %v2663
      %2720 = vst.msk [vmem:[#allocation4 + $0x129] sm:$0xf0] %vm2681, %v2663
      %2721 = vst.msk [vmem:[#allocation4 + $0x131] sm:$0xff] %vm409, %v2664
      %2722 = vst.msk [vmem:[#allocation4 + $0x139] sm:$0x3f] %vm2684, %v2665
      %2723 = vst.msk [vmem:[#allocation4 + $0x13b] sm:$0xc0] %vm2686, %v2665
      %2724 = vst.msk [vmem:[#allocation4 + $0x143] sm:$0xff] %vm409, %v2666
      %2725 = vst.msk [vmem:[#allocation4 + $0x14b] sm:$0xff] %vm409, %v2667
      %2726 = vst.msk [vmem:[#allocation4 + $0x155] sm:$0xff] %vm409, %v2668
      %2727 = vst.msk [vmem:[#allocation4 + $0x15d] sm:$0xff] %vm409, %v2669
      %2728 = vst.msk [vmem:[#allocation4 + $0x165] sm:$0x3] %vm2675, %v2670
      %2729 = vst.msk [vmem:[#allocation4 + $0x167] sm:$0xfc] %vm2677, %v2670
      %2730 = vst.msk [vmem:[#allocation4 + $0x16f] sm:$0xff] %vm409, %v2671
      %2731 = vst.msk [vmem:[#allocation4 + $0x177] sm:$0xf] %vm460, %v2672
      %v2732 = vld [vmem:[#allocation4] sm:$0xff]
      %v2733 = vld [vmem:[#allocation4 + $0x8] sm:$0xff]
      %v2734 = vld [vmem:[#allocation4 + $0x10] sm:$0xff]
      %v2735 = vld [vmem:[#allocation4 + $0x18] sm:$0xff]
      %v2736 = vld [vmem:[#allocation4 + $0x20] sm:$0xff]
      %v2737 = vld [vmem:[#allocation4 + $0x28] sm:$0xff]
      %v2738 = vld [vmem:[#allocation4 + $0x30] sm:$0xff]
      %v2739 = vld [vmem:[#allocation4 + $0x38] sm:$0xff]
      %v2740 = vld [vmem:[#allocation4 + $0x40] sm:$0xff]
      %v2741 = vld [vmem:[#allocation4 + $0x48] sm:$0xff]
      %v2742 = vld [vmem:[#allocation4 + $0x50] sm:$0xff]
      %v2743 = vld [vmem:[#allocation4 + $0x58] sm:$0xff]
      %v2744 = vld [vmem:[#allocation4 + $0x60] sm:$0xff]
      %v2745 = vld [vmem:[#allocation4 + $0x68] sm:$0xff]
      %v2746 = vld [vmem:[#allocation4 + $0x70] sm:$0xff]
      %v2747 = vld [vmem:[#allocation4 + $0x78] sm:$0xff]
      %v2748 = vld [vmem:[#allocation4 + $0x80] sm:$0xff]
      %v2749 = vld [vmem:[#allocation4 + $0x88] sm:$0xff]
      %v2750 = vld [vmem:[#allocation4 + $0x90] sm:$0xff]
      %v2751 = vld [vmem:[#allocation4 + $0x98] sm:$0xff]
      %v2752 = vld [vmem:[#allocation4 + $0xa0] sm:$0xff]
      %v2753 = vld [vmem:[#allocation4 + $0xa8] sm:$0xff]
      %v2754 = vld [vmem:[#allocation4 + $0xb0] sm:$0xff]
      %v2755 = vld [vmem:[#allocation4 + $0xb8] sm:$0xff]
      %v2756 = vld [vmem:[#allocation4 + $0xc0] sm:$0xff]
      %v2757 = vld [vmem:[#allocation4 + $0xc8] sm:$0xff]
      %v2758 = vld [vmem:[#allocation4 + $0xd0] sm:$0xff]
      %v2759 = vld [vmem:[#allocation4 + $0xd8] sm:$0xff]
      %v2760 = vld [vmem:[#allocation4 + $0xe0] sm:$0xff]
      %v2761 = vld [vmem:[#allocation4 + $0xe8] sm:$0xff]
      %v2762 = vld [vmem:[#allocation4 + $0xf0] sm:$0xff]
      %v2763 = vld [vmem:[#allocation4 + $0xf8] sm:$0xff]
      %v2764 = vld [vmem:[#allocation4 + $0x100] sm:$0xff]
      %v2765 = vld [vmem:[#allocation4 + $0x108] sm:$0xff]
      %v2766 = vld [vmem:[#allocation4 + $0x110] sm:$0xff]
      %v2767 = vld [vmem:[#allocation4 + $0x118] sm:$0xff]
      %v2768 = vld [vmem:[#allocation4 + $0x120] sm:$0xff]
      %v2769 = vld [vmem:[#allocation4 + $0x128] sm:$0xff]
      %v2770 = vld [vmem:[#allocation4 + $0x130] sm:$0xff]
      %v2771 = vld [vmem:[#allocation4 + $0x138] sm:$0xff]
      %v2772 = vld [vmem:[%s7] sm:$0xff]
      %v2773 = vld [vmem:[%s7 + $0x8] sm:$0xff]
      %v2774 = vld [vmem:[%s7 + $0x10] sm:$0xff]
      %v2775 = vld [vmem:[%s7 + $0x18] sm:$0xff]
      %v2776 = vld [vmem:[#allocation4 + $0x1] sm:$0xff]
      %v2777 = vld [vmem:[#allocation4 + $0x9] sm:$0xff]
      %v2778 = vld [vmem:[#allocation4 + $0x11] sm:$0xff]
      %v2779 = vld [vmem:[#allocation4 + $0x19] sm:$0xff]
      %v2780 = vld [vmem:[#allocation4 + $0x21] sm:$0xff]
      %v2781 = vld [vmem:[#allocation4 + $0x29] sm:$0xff]
      %v2782 = vld [vmem:[#allocation4 + $0x31] sm:$0xff]
      %v2783 = vld [vmem:[#allocation4 + $0x39] sm:$0xff]
      %v2784 = vld [vmem:[#allocation4 + $0x41] sm:$0xff]
      %v2785 = vld [vmem:[#allocation4 + $0x49] sm:$0xff]
      %v2786 = vld [vmem:[#allocation4 + $0x51] sm:$0xff]
      %v2787 = vld [vmem:[#allocation4 + $0x59] sm:$0xff]
      %v2788 = vld [vmem:[#allocation4 + $0x61] sm:$0xff]
      %v2789 = vld [vmem:[#allocation4 + $0x69] sm:$0xff]
      %v2790 = vld [vmem:[#allocation4 + $0x71] sm:$0xff]
      %v2791 = vld [vmem:[#allocation4 + $0x79] sm:$0xff]
      %v2792 = vld [vmem:[#allocation4 + $0x81] sm:$0xff]
      %v2793 = vld [vmem:[#allocation4 + $0x89] sm:$0xff]
      %v2794 = vld [vmem:[#allocation4 + $0x91] sm:$0xff]
      %v2795 = vld [vmem:[#allocation4 + $0x99] sm:$0xff]
      %v2796 = vld [vmem:[#allocation4 + $0xa1] sm:$0xff]
      %v2797 = vld [vmem:[#allocation4 + $0xa9] sm:$0xff]
      %v2798 = vld [vmem:[#allocation4 + $0xb1] sm:$0xff]
      %v2799 = vld [vmem:[#allocation4 + $0xb9] sm:$0xff]
      %v2800 = vld [vmem:[#allocation4 + $0xc1] sm:$0xff]
      %v2801 = vld [vmem:[#allocation4 + $0xc9] sm:$0xff]
      %v2802 = vld [vmem:[#allocation4 + $0xd1] sm:$0xff]
      %v2803 = vld [vmem:[#allocation4 + $0xd9] sm:$0xff]
      %v2804 = vld [vmem:[#allocation4 + $0xe1] sm:$0xff]
      %v2805 = vld [vmem:[#allocation4 + $0xe9] sm:$0xff]
      %v2806 = vld [vmem:[#allocation4 + $0xf1] sm:$0xff]
      %v2807 = vld [vmem:[#allocation4 + $0xf9] sm:$0xff]
      %v2808 = vld [vmem:[#allocation4 + $0x101] sm:$0xff]
      %v2809 = vld [vmem:[#allocation4 + $0x109] sm:$0xff]
      %v2810 = vld [vmem:[#allocation4 + $0x111] sm:$0xff]
      %v2811 = vld [vmem:[#allocation4 + $0x119] sm:$0xff]
      %v2812 = vld [vmem:[#allocation4 + $0x121] sm:$0xff]
      %v2813 = vld [vmem:[#allocation4 + $0x129] sm:$0xff]
      %v2814 = vld [vmem:[#allocation4 + $0x131] sm:$0xff]
      %v2815 = vld [vmem:[#allocation4 + $0x139] sm:$0xff]
      %s2816 = scalar_lea.vmem %s7, 32
      %v2817 = vld [vmem:[%s2816] sm:$0xff]
      %v2818 = vld [vmem:[%s2816 + $0x8] sm:$0xff]
      %v2819 = vld [vmem:[%s2816 + $0x10] sm:$0xff]
      %v2820 = vld [vmem:[%s2816 + $0x18] sm:$0xff]
      %v2822 = vsel %vm409, %v2776, 0
      %v2825 = vsel %vm409, %v2777, 0
      %v2828 = vsel %vm409, %v2778, 0
      %v2831 = vsel %vm409, %v2779, 0
      %v2834 = vsel %vm409, %v2780, 0
      %v2837 = vsel %vm409, %v2781, 0
      %v2840 = vsel %vm409, %v2782, 0
      %v2843 = vsel %vm409, %v2783, 0
      %v2846 = vsel %vm409, %v2784, 0
      %v2849 = vsel %vm409, %v2785, 0
      %v2852 = vsel %vm409, %v2786, 0
      %v2855 = vsel %vm409, %v2787, 0
      %v2858 = vsel %vm409, %v2788, 0
      %v2861 = vsel %vm409, %v2789, 0
      %v2864 = vsel %vm409, %v2790, 0
      %v2867 = vsel %vm409, %v2791, 0
      %v2870 = vsel %vm409, %v2792, 0
      %v2873 = vsel %vm409, %v2793, 0
      %v2876 = vsel %vm409, %v2794, 0
      %v2879 = vsel %vm409, %v2795, 0
      %v2882 = vsel %vm409, %v2796, 0
      %v2885 = vsel %vm409, %v2797, 0
      %v2888 = vsel %vm409, %v2798, 0
      %v2891 = vsel %vm409, %v2799, 0
      %v2894 = vsel %vm409, %v2800, 0
      %v2897 = vsel %vm409, %v2801, 0
      %v2900 = vsel %vm409, %v2802, 0
      %v2903 = vsel %vm409, %v2803, 0
      %v2906 = vsel %vm409, %v2804, 0
      %v2909 = vsel %vm409, %v2805, 0
      %v2912 = vsel %vm409, %v2806, 0
      %v2915 = vsel %vm409, %v2807, 0
      %v2918 = vsel %vm409, %v2808, 0
      %v2921 = vsel %vm409, %v2809, 0
      %v2924 = vsel %vm409, %v2810, 0
      %v2927 = vsel %vm409, %v2811, 0
      %v2930 = vsel %vm409, %v2812, 0
      %v2933 = vsel %vm409, %v2813, 0
      %v2936 = vsel %vm409, %v2814, 0
      %v2939 = vsel %vm409, %v2815, 0
      %2941 = vmatpush.msra.mxu0 0.0
      %2942 = vmatpush.msra.mxu0 0.0
      %2943 = vmatpush.msra.mxu0 0.0
      %2944 = vmatpush.msra.mxu0 0.0
      %2945 = vmatpush.msra.mxu0 0.0
      %2946 = vmatpush.msra.mxu0 0.0
      %2947 = vmatpush.msra.mxu0 0.0
      %2948 = vmatpush.msra.mxu0 0.0
      %2949 = vmatpush.msra.mxu0 0.0
      %2950 = vmatpush.msra.mxu0 0.0
      %2951 = vmatpush.msra.mxu0 0.0
      %2952 = vmatpush.msra.mxu0 0.0
      %2953 = vmatpush.msra.mxu0 %v2820
      %2954 = vmatpush.msra.mxu0 %v2819
      %2955 = vmatpush.msra.mxu0 %v2818
      %2956 = vmatpush.msra.mxu0 %v2817
      %2957 = vmatmul.f32.gmra.mxu0 %v2822
      %v2958 = vpop.f32.mrf.mxu0
      %v2959 = vadd.f32 0.0, %v2958
      %2960 = vmatmul.f32.gmra.mxu0 %v2825
      %v2961 = vpop.f32.mrf.mxu0
      %v2962 = vadd.f32 0.0, %v2961
      %2963 = vmatmul.f32.gmra.mxu0 %v2828
      %v2964 = vpop.f32.mrf.mxu0
      %v2965 = vadd.f32 0.0, %v2964
      %2966 = vmatmul.f32.gmra.mxu0 %v2831
      %v2967 = vpop.f32.mrf.mxu0
      %v2968 = vadd.f32 0.0, %v2967
      %2969 = vmatmul.f32.gmra.mxu0 %v2834
      %v2970 = vpop.f32.mrf.mxu0
      %v2971 = vadd.f32 0.0, %v2970
      %2972 = vmatmul.f32.gmra.mxu0 %v2837
      %v2973 = vpop.f32.mrf.mxu0
      %v2974 = vadd.f32 0.0, %v2973
      %2975 = vmatmul.f32.gmra.mxu0 %v2840
      %v2976 = vpop.f32.mrf.mxu0
      %v2977 = vadd.f32 0.0, %v2976
      %2978 = vmatmul.f32.gmra.mxu0 %v2843
      %v2979 = vpop.f32.mrf.mxu0
      %v2980 = vadd.f32 0.0, %v2979
      %2981 = vmatmul.f32.gmra.mxu0 %v2846
      %v2982 = vpop.f32.mrf.mxu0
      %v2983 = vadd.f32 0.0, %v2982
      %2984 = vmatmul.f32.gmra.mxu0 %v2849
      %v2985 = vpop.f32.mrf.mxu0
      %v2986 = vadd.f32 0.0, %v2985
      %2987 = vmatmul.f32.gmra.mxu0 %v2852
      %v2988 = vpop.f32.mrf.mxu0
      %v2989 = vadd.f32 0.0, %v2988
      %2990 = vmatmul.f32.gmra.mxu0 %v2855
      %v2991 = vpop.f32.mrf.mxu0
      %v2992 = vadd.f32 0.0, %v2991
      %2993 = vmatmul.f32.gmra.mxu0 %v2858
      %v2994 = vpop.f32.mrf.mxu0
      %v2995 = vadd.f32 0.0, %v2994
      %2996 = vmatmul.f32.gmra.mxu0 %v2861
      %v2997 = vpop.f32.mrf.mxu0
      %v2998 = vadd.f32 0.0, %v2997
      %2999 = vmatmul.f32.gmra.mxu0 %v2864
      %v3000 = vpop.f32.mrf.mxu0
      %v3001 = vadd.f32 0.0, %v3000
      %3002 = vmatmul.f32.gmra.mxu0 %v2867
      %v3003 = vpop.f32.mrf.mxu0
      %v3004 = vadd.f32 0.0, %v3003
      %3005 = vmatmul.f32.gmra.mxu0 %v2870
      %v3006 = vpop.f32.mrf.mxu0
      %v3007 = vadd.f32 0.0, %v3006
      %3008 = vmatmul.f32.gmra.mxu0 %v2873
      %v3009 = vpop.f32.mrf.mxu0
      %v3010 = vadd.f32 0.0, %v3009
      %3011 = vmatmul.f32.gmra.mxu0 %v2876
      %v3012 = vpop.f32.mrf.mxu0
      %v3013 = vadd.f32 0.0, %v3012
      %3014 = vmatmul.f32.gmra.mxu0 %v2879
      %v3015 = vpop.f32.mrf.mxu0
      %v3016 = vadd.f32 0.0, %v3015
      %3017 = vmatmul.f32.gmra.mxu0 %v2882
      %v3018 = vpop.f32.mrf.mxu0
      %v3019 = vadd.f32 0.0, %v3018
      %3020 = vmatmul.f32.gmra.mxu0 %v2885
      %v3021 = vpop.f32.mrf.mxu0
      %v3022 = vadd.f32 0.0, %v3021
      %3023 = vmatmul.f32.gmra.mxu0 %v2888
      %v3024 = vpop.f32.mrf.mxu0
      %v3025 = vadd.f32 0.0, %v3024
      %3026 = vmatmul.f32.gmra.mxu0 %v2891
      %v3027 = vpop.f32.mrf.mxu0
      %v3028 = vadd.f32 0.0, %v3027
      %3029 = vmatmul.f32.gmra.mxu0 %v2894
      %v3030 = vpop.f32.mrf.mxu0
      %v3031 = vadd.f32 0.0, %v3030
      %3032 = vmatmul.f32.gmra.mxu0 %v2897
      %v3033 = vpop.f32.mrf.mxu0
      %v3034 = vadd.f32 0.0, %v3033
      %3035 = vmatmul.f32.gmra.mxu0 %v2900
      %v3036 = vpop.f32.mrf.mxu0
      %v3037 = vadd.f32 0.0, %v3036
      %3038 = vmatmul.f32.gmra.mxu0 %v2903
      %v3039 = vpop.f32.mrf.mxu0
      %v3040 = vadd.f32 0.0, %v3039
      %3041 = vmatmul.f32.gmra.mxu0 %v2906
      %v3042 = vpop.f32.mrf.mxu0
      %v3043 = vadd.f32 0.0, %v3042
      %3044 = vmatmul.f32.gmra.mxu0 %v2909
      %v3045 = vpop.f32.mrf.mxu0
      %v3046 = vadd.f32 0.0, %v3045
      %3047 = vmatmul.f32.gmra.mxu0 %v2912
      %v3048 = vpop.f32.mrf.mxu0
      %v3049 = vadd.f32 0.0, %v3048
      %3050 = vmatmul.f32.gmra.mxu0 %v2915
      %v3051 = vpop.f32.mrf.mxu0
      %v3052 = vadd.f32 0.0, %v3051
      %3053 = vmatmul.f32.gmra.mxu0 %v2918
      %v3054 = vpop.f32.mrf.mxu0
      %v3055 = vadd.f32 0.0, %v3054
      %3056 = vmatmul.f32.gmra.mxu0 %v2921
      %v3057 = vpop.f32.mrf.mxu0
      %v3058 = vadd.f32 0.0, %v3057
      %3059 = vmatmul.f32.gmra.mxu0 %v2924
      %v3060 = vpop.f32.mrf.mxu0
      %v3061 = vadd.f32 0.0, %v3060
      %3062 = vmatmul.f32.gmra.mxu0 %v2927
      %v3063 = vpop.f32.mrf.mxu0
      %v3064 = vadd.f32 0.0, %v3063
      %3065 = vmatmul.f32.gmra.mxu0 %v2930
      %v3066 = vpop.f32.mrf.mxu0
      %v3067 = vadd.f32 0.0, %v3066
      %3068 = vmatmul.f32.gmra.mxu0 %v2933
      %v3069 = vpop.f32.mrf.mxu0
      %v3070 = vadd.f32 0.0, %v3069
      %3071 = vmatmul.f32.gmra.mxu0 %v2936
      %v3072 = vpop.f32.mrf.mxu0
      %v3073 = vadd.f32 0.0, %v3072
      %3074 = vmatmul.f32.gmra.mxu0 %v2939
      %v3075 = vpop.f32.mrf.mxu0
      %v3076 = vadd.f32 0.0, %v3075
      %3077 = vdwg.mxu0
      %v3079 = vsel %vm409, %v2732, 0
      %v3082 = vsel %vm409, %v2733, 0
      %v3085 = vsel %vm409, %v2734, 0
      %v3088 = vsel %vm409, %v2735, 0
      %v3091 = vsel %vm409, %v2736, 0
      %v3094 = vsel %vm409, %v2737, 0
      %v3097 = vsel %vm409, %v2738, 0
      %v3100 = vsel %vm409, %v2739, 0
      %v3103 = vsel %vm409, %v2740, 0
      %v3106 = vsel %vm409, %v2741, 0
      %v3109 = vsel %vm409, %v2742, 0
      %v3112 = vsel %vm409, %v2743, 0
      %v3115 = vsel %vm409, %v2744, 0
      %v3118 = vsel %vm409, %v2745, 0
      %v3121 = vsel %vm409, %v2746, 0
      %v3124 = vsel %vm409, %v2747, 0
      %v3127 = vsel %vm409, %v2748, 0
      %v3130 = vsel %vm409, %v2749, 0
      %v3133 = vsel %vm409, %v2750, 0
      %v3136 = vsel %vm409, %v2751, 0
      %v3139 = vsel %vm409, %v2752, 0
      %v3142 = vsel %vm409, %v2753, 0
      %v3145 = vsel %vm409, %v2754, 0
      %v3148 = vsel %vm409, %v2755, 0
      %v3151 = vsel %vm409, %v2756, 0
      %v3154 = vsel %vm409, %v2757, 0
      %v3157 = vsel %vm409, %v2758, 0
      %v3160 = vsel %vm409, %v2759, 0
      %v3163 = vsel %vm409, %v2760, 0
      %v3166 = vsel %vm409, %v2761, 0
      %v3169 = vsel %vm409, %v2762, 0
      %v3172 = vsel %vm409, %v2763, 0
      %v3175 = vsel %vm409, %v2764, 0
      %v3178 = vsel %vm409, %v2765, 0
      %v3181 = vsel %vm409, %v2766, 0
      %v3184 = vsel %vm409, %v2767, 0
      %v3187 = vsel %vm409, %v2768, 0
      %v3190 = vsel %vm409, %v2769, 0
      %v3193 = vsel %vm409, %v2770, 0
      %v3196 = vsel %vm409, %v2771, 0
      %3198 = vmatpush.msra.mxu0 0.0
      %3199 = vmatpush.msra.mxu0 0.0
      %3200 = vmatpush.msra.mxu0 0.0
      %3201 = vmatpush.msra.mxu0 0.0
      %3202 = vmatpush.msra.mxu0 0.0
      %3203 = vmatpush.msra.mxu0 0.0
      %3204 = vmatpush.msra.mxu0 0.0
      %3205 = vmatpush.msra.mxu0 0.0
      %3206 = vmatpush.msra.mxu0 0.0
      %3207 = vmatpush.msra.mxu0 0.0
      %3208 = vmatpush.msra.mxu0 0.0
      %3209 = vmatpush.msra.mxu0 0.0
      %3210 = vmatpush.msra.mxu0 %v2775
      %3211 = vmatpush.msra.mxu0 %v2774
      %3212 = vmatpush.msra.mxu0 %v2773
      %3213 = vmatpush.msra.mxu0 %v2772
      %3214 = vmatmul.f32.gmra.mxu0 %v3079
      %v3215 = vpop.f32.mrf.mxu0
      %v3216 = vadd.f32 %v2959, %v3215
      %3217 = vmatmul.f32.gmra.mxu0 %v3082
      %v3218 = vpop.f32.mrf.mxu0
      %v3219 = vadd.f32 %v2962, %v3218
      %3220 = vmatmul.f32.gmra.mxu0 %v3085
      %v3221 = vpop.f32.mrf.mxu0
      %v3222 = vadd.f32 %v2965, %v3221
      %3223 = vmatmul.f32.gmra.mxu0 %v3088
      %v3224 = vpop.f32.mrf.mxu0
      %v3225 = vadd.f32 %v2968, %v3224
      %3226 = vmatmul.f32.gmra.mxu0 %v3091
      %v3227 = vpop.f32.mrf.mxu0
      %v3228 = vadd.f32 %v2971, %v3227
      %3229 = vmatmul.f32.gmra.mxu0 %v3094
      %v3230 = vpop.f32.mrf.mxu0
      %v3231 = vadd.f32 %v2974, %v3230
      %3232 = vmatmul.f32.gmra.mxu0 %v3097
      %v3233 = vpop.f32.mrf.mxu0
      %v3234 = vadd.f32 %v2977, %v3233
      %3235 = vmatmul.f32.gmra.mxu0 %v3100
      %v3236 = vpop.f32.mrf.mxu0
      %v3237 = vadd.f32 %v2980, %v3236
      %3238 = vmatmul.f32.gmra.mxu0 %v3103
      %v3239 = vpop.f32.mrf.mxu0
      %v3240 = vadd.f32 %v2983, %v3239
      %3241 = vmatmul.f32.gmra.mxu0 %v3106
      %v3242 = vpop.f32.mrf.mxu0
      %v3243 = vadd.f32 %v2986, %v3242
      %3244 = vmatmul.f32.gmra.mxu0 %v3109
      %v3245 = vpop.f32.mrf.mxu0
      %v3246 = vadd.f32 %v2989, %v3245
      %3247 = vmatmul.f32.gmra.mxu0 %v3112
      %v3248 = vpop.f32.mrf.mxu0
      %v3249 = vadd.f32 %v2992, %v3248
      %3250 = vmatmul.f32.gmra.mxu0 %v3115
      %v3251 = vpop.f32.mrf.mxu0
      %v3252 = vadd.f32 %v2995, %v3251
      %3253 = vmatmul.f32.gmra.mxu0 %v3118
      %v3254 = vpop.f32.mrf.mxu0
      %v3255 = vadd.f32 %v2998, %v3254
      %3256 = vmatmul.f32.gmra.mxu0 %v3121
      %v3257 = vpop.f32.mrf.mxu0
      %v3258 = vadd.f32 %v3001, %v3257
      %3259 = vmatmul.f32.gmra.mxu0 %v3124
      %v3260 = vpop.f32.mrf.mxu0
      %v3261 = vadd.f32 %v3004, %v3260
      %3262 = vmatmul.f32.gmra.mxu0 %v3127
      %v3263 = vpop.f32.mrf.mxu0
      %v3264 = vadd.f32 %v3007, %v3263
      %3265 = vmatmul.f32.gmra.mxu0 %v3130
      %v3266 = vpop.f32.mrf.mxu0
      %v3267 = vadd.f32 %v3010, %v3266
      %3268 = vmatmul.f32.gmra.mxu0 %v3133
      %v3269 = vpop.f32.mrf.mxu0
      %v3270 = vadd.f32 %v3013, %v3269
      %3271 = vmatmul.f32.gmra.mxu0 %v3136
      %v3272 = vpop.f32.mrf.mxu0
      %v3273 = vadd.f32 %v3016, %v3272
      %3274 = vmatmul.f32.gmra.mxu0 %v3139
      %v3275 = vpop.f32.mrf.mxu0
      %v3276 = vadd.f32 %v3019, %v3275
      %3277 = vmatmul.f32.gmra.mxu0 %v3142
      %v3278 = vpop.f32.mrf.mxu0
      %v3279 = vadd.f32 %v3022, %v3278
      %3280 = vmatmul.f32.gmra.mxu0 %v3145
      %v3281 = vpop.f32.mrf.mxu0
      %v3282 = vadd.f32 %v3025, %v3281
      %3283 = vmatmul.f32.gmra.mxu0 %v3148
      %v3284 = vpop.f32.mrf.mxu0
      %v3285 = vadd.f32 %v3028, %v3284
      %3286 = vmatmul.f32.gmra.mxu0 %v3151
      %v3287 = vpop.f32.mrf.mxu0
      %v3288 = vadd.f32 %v3031, %v3287
      %3289 = vmatmul.f32.gmra.mxu0 %v3154
      %v3290 = vpop.f32.mrf.mxu0
      %v3291 = vadd.f32 %v3034, %v3290
      %3292 = vmatmul.f32.gmra.mxu0 %v3157
      %v3293 = vpop.f32.mrf.mxu0
      %v3294 = vadd.f32 %v3037, %v3293
      %3295 = vmatmul.f32.gmra.mxu0 %v3160
      %v3296 = vpop.f32.mrf.mxu0
      %v3297 = vadd.f32 %v3040, %v3296
      %3298 = vmatmul.f32.gmra.mxu0 %v3163
      %v3299 = vpop.f32.mrf.mxu0
      %v3300 = vadd.f32 %v3043, %v3299
      %3301 = vmatmul.f32.gmra.mxu0 %v3166
      %v3302 = vpop.f32.mrf.mxu0
      %v3303 = vadd.f32 %v3046, %v3302
      %3304 = vmatmul.f32.gmra.mxu0 %v3169
      %v3305 = vpop.f32.mrf.mxu0
      %v3306 = vadd.f32 %v3049, %v3305
      %3307 = vmatmul.f32.gmra.mxu0 %v3172
      %v3308 = vpop.f32.mrf.mxu0
      %v3309 = vadd.f32 %v3052, %v3308
      %3310 = vmatmul.f32.gmra.mxu0 %v3175
      %v3311 = vpop.f32.mrf.mxu0
      %v3312 = vadd.f32 %v3055, %v3311
      %3313 = vmatmul.f32.gmra.mxu0 %v3178
      %v3314 = vpop.f32.mrf.mxu0
      %v3315 = vadd.f32 %v3058, %v3314
      %3316 = vmatmul.f32.gmra.mxu0 %v3181
      %v3317 = vpop.f32.mrf.mxu0
      %v3318 = vadd.f32 %v3061, %v3317
      %3319 = vmatmul.f32.gmra.mxu0 %v3184
      %v3320 = vpop.f32.mrf.mxu0
      %v3321 = vadd.f32 %v3064, %v3320
      %3322 = vmatmul.f32.gmra.mxu0 %v3187
      %v3323 = vpop.f32.mrf.mxu0
      %v3324 = vadd.f32 %v3067, %v3323
      %3325 = vmatmul.f32.gmra.mxu0 %v3190
      %v3326 = vpop.f32.mrf.mxu0
      %v3327 = vadd.f32 %v3070, %v3326
      %3328 = vmatmul.f32.gmra.mxu0 %v3193
      %v3329 = vpop.f32.mrf.mxu0
      %v3330 = vadd.f32 %v3073, %v3329
      %3331 = vmatmul.f32.gmra.mxu0 %v3196
      %v3332 = vpop.f32.mrf.mxu0
      %v3333 = vadd.f32 %v3076, %v3332
      %3334 = vdwg.mxu0
      %v3335 = vld [vmem:[#allocation4 + $0x2] sm:$0xff]
      %v3336 = vld [vmem:[#allocation4 + $0xa] sm:$0xff]
      %v3337 = vld [vmem:[#allocation4 + $0x12] sm:$0xff]
      %v3338 = vld [vmem:[#allocation4 + $0x1a] sm:$0xff]
      %v3339 = vld [vmem:[#allocation4 + $0x22] sm:$0xff]
      %v3340 = vld [vmem:[#allocation4 + $0x2a] sm:$0xff]
      %v3341 = vld [vmem:[#allocation4 + $0x32] sm:$0xff]
      %v3342 = vld [vmem:[#allocation4 + $0x3a] sm:$0xff]
      %v3343 = vld [vmem:[#allocation4 + $0x42] sm:$0xff]
      %v3344 = vld [vmem:[#allocation4 + $0x4a] sm:$0xff]
      %v3345 = vld [vmem:[#allocation4 + $0x52] sm:$0xff]
      %v3346 = vld [vmem:[#allocation4 + $0x5a] sm:$0xff]
      %v3347 = vld [vmem:[#allocation4 + $0x62] sm:$0xff]
      %v3348 = vld [vmem:[#allocation4 + $0x6a] sm:$0xff]
      %v3349 = vld [vmem:[#allocation4 + $0x72] sm:$0xff]
      %v3350 = vld [vmem:[#allocation4 + $0x7a] sm:$0xff]
      %v3351 = vld [vmem:[#allocation4 + $0x82] sm:$0xff]
      %v3352 = vld [vmem:[#allocation4 + $0x8a] sm:$0xff]
      %v3353 = vld [vmem:[#allocation4 + $0x92] sm:$0xff]
      %v3354 = vld [vmem:[#allocation4 + $0x9a] sm:$0xff]
      %v3355 = vld [vmem:[#allocation4 + $0xa2] sm:$0xff]
      %v3356 = vld [vmem:[#allocation4 + $0xaa] sm:$0xff]
      %v3357 = vld [vmem:[#allocation4 + $0xb2] sm:$0xff]
      %v3358 = vld [vmem:[#allocation4 + $0xba] sm:$0xff]
      %v3359 = vld [vmem:[#allocation4 + $0xc2] sm:$0xff]
      %v3360 = vld [vmem:[#allocation4 + $0xca] sm:$0xff]
      %v3361 = vld [vmem:[#allocation4 + $0xd2] sm:$0xff]
      %v3362 = vld [vmem:[#allocation4 + $0xda] sm:$0xff]
      %v3363 = vld [vmem:[#allocation4 + $0xe2] sm:$0xff]
      %v3364 = vld [vmem:[#allocation4 + $0xea] sm:$0xff]
      %v3365 = vld [vmem:[#allocation4 + $0xf2] sm:$0xff]
      %v3366 = vld [vmem:[#allocation4 + $0xfa] sm:$0xff]
      %v3367 = vld [vmem:[#allocation4 + $0x102] sm:$0xff]
      %v3368 = vld [vmem:[#allocation4 + $0x10a] sm:$0xff]
      %v3369 = vld [vmem:[#allocation4 + $0x112] sm:$0xff]
      %v3370 = vld [vmem:[#allocation4 + $0x11a] sm:$0xff]
      %v3371 = vld [vmem:[#allocation4 + $0x122] sm:$0xff]
      %v3372 = vld [vmem:[#allocation4 + $0x12a] sm:$0xff]
      %v3373 = vld [vmem:[#allocation4 + $0x132] sm:$0xff]
      %v3374 = vld [vmem:[#allocation4 + $0x13a] sm:$0xff]
      %s3375 = scalar_lea.vmem %s7, 64
      %v3376 = vld [vmem:[%s3375] sm:$0xff]
      %v3377 = vld [vmem:[%s3375 + $0x8] sm:$0xff]
      %v3378 = vld [vmem:[%s3375 + $0x10] sm:$0xff]
      %v3379 = vld [vmem:[%s3375 + $0x18] sm:$0xff]
      %v3381 = vsel %vm409, %v3335, 0
      %v3384 = vsel %vm409, %v3336, 0
      %v3387 = vsel %vm409, %v3337, 0
      %v3390 = vsel %vm409, %v3338, 0
      %v3393 = vsel %vm409, %v3339, 0
      %v3396 = vsel %vm409, %v3340, 0
      %v3399 = vsel %vm409, %v3341, 0
      %v3402 = vsel %vm409, %v3342, 0
      %v3405 = vsel %vm409, %v3343, 0
      %v3408 = vsel %vm409, %v3344, 0
      %v3411 = vsel %vm409, %v3345, 0
      %v3414 = vsel %vm409, %v3346, 0
      %v3417 = vsel %vm409, %v3347, 0
      %v3420 = vsel %vm409, %v3348, 0
      %v3423 = vsel %vm409, %v3349, 0
      %v3426 = vsel %vm409, %v3350, 0
      %v3429 = vsel %vm409, %v3351, 0
      %v3432 = vsel %vm409, %v3352, 0
      %v3435 = vsel %vm409, %v3353, 0
      %v3438 = vsel %vm409, %v3354, 0
      %v3441 = vsel %vm409, %v3355, 0
      %v3444 = vsel %vm409, %v3356, 0
      %v3447 = vsel %vm409, %v3357, 0
      %v3450 = vsel %vm409, %v3358, 0
      %v3453 = vsel %vm409, %v3359, 0
      %v3456 = vsel %vm409, %v3360, 0
      %v3459 = vsel %vm409, %v3361, 0
      %v3462 = vsel %vm409, %v3362, 0
      %v3465 = vsel %vm409, %v3363, 0
      %v3468 = vsel %vm409, %v3364, 0
      %v3471 = vsel %vm409, %v3365, 0
      %v3474 = vsel %vm409, %v3366, 0
      %v3477 = vsel %vm409, %v3367, 0
      %v3480 = vsel %vm409, %v3368, 0
      %v3483 = vsel %vm409, %v3369, 0
      %v3486 = vsel %vm409, %v3370, 0
      %v3489 = vsel %vm409, %v3371, 0
      %v3492 = vsel %vm409, %v3372, 0
      %v3495 = vsel %vm409, %v3373, 0
      %v3498 = vsel %vm409, %v3374, 0
      %3500 = vmatpush.msra.mxu0 0.0
      %3501 = vmatpush.msra.mxu0 0.0
      %3502 = vmatpush.msra.mxu0 0.0
      %3503 = vmatpush.msra.mxu0 0.0
      %3504 = vmatpush.msra.mxu0 0.0
      %3505 = vmatpush.msra.mxu0 0.0
      %3506 = vmatpush.msra.mxu0 0.0
      %3507 = vmatpush.msra.mxu0 0.0
      %3508 = vmatpush.msra.mxu0 0.0
      %3509 = vmatpush.msra.mxu0 0.0
      %3510 = vmatpush.msra.mxu0 0.0
      %3511 = vmatpush.msra.mxu0 0.0
      %3512 = vmatpush.msra.mxu0 %v3379
      %3513 = vmatpush.msra.mxu0 %v3378
      %3514 = vmatpush.msra.mxu0 %v3377
      %3515 = vmatpush.msra.mxu0 %v3376
      %3516 = vmatmul.f32.gmra.mxu0 %v3381
      %v3517 = vpop.f32.mrf.mxu0
      %v3518 = vadd.f32 0.0, %v3517
      %3519 = vmatmul.f32.gmra.mxu0 %v3384
      %v3520 = vpop.f32.mrf.mxu0
      %v3521 = vadd.f32 0.0, %v3520
      %3522 = vmatmul.f32.gmra.mxu0 %v3387
      %v3523 = vpop.f32.mrf.mxu0
      %v3524 = vadd.f32 0.0, %v3523
      %3525 = vmatmul.f32.gmra.mxu0 %v3390
      %v3526 = vpop.f32.mrf.mxu0
      %v3527 = vadd.f32 0.0, %v3526
      %3528 = vmatmul.f32.gmra.mxu0 %v3393
      %v3529 = vpop.f32.mrf.mxu0
      %v3530 = vadd.f32 0.0, %v3529
      %3531 = vmatmul.f32.gmra.mxu0 %v3396
      %v3532 = vpop.f32.mrf.mxu0
      %v3533 = vadd.f32 0.0, %v3532
      %3534 = vmatmul.f32.gmra.mxu0 %v3399
      %v3535 = vpop.f32.mrf.mxu0
      %v3536 = vadd.f32 0.0, %v3535
      %3537 = vmatmul.f32.gmra.mxu0 %v3402
      %v3538 = vpop.f32.mrf.mxu0
      %v3539 = vadd.f32 0.0, %v3538
      %3540 = vmatmul.f32.gmra.mxu0 %v3405
      %v3541 = vpop.f32.mrf.mxu0
      %v3542 = vadd.f32 0.0, %v3541
      %3543 = vmatmul.f32.gmra.mxu0 %v3408
      %v3544 = vpop.f32.mrf.mxu0
      %v3545 = vadd.f32 0.0, %v3544
      %3546 = vmatmul.f32.gmra.mxu0 %v3411
      %v3547 = vpop.f32.mrf.mxu0
      %v3548 = vadd.f32 0.0, %v3547
      %3549 = vmatmul.f32.gmra.mxu0 %v3414
      %v3550 = vpop.f32.mrf.mxu0
      %v3551 = vadd.f32 0.0, %v3550
      %3552 = vmatmul.f32.gmra.mxu0 %v3417
      %v3553 = vpop.f32.mrf.mxu0
      %v3554 = vadd.f32 0.0, %v3553
      %3555 = vmatmul.f32.gmra.mxu0 %v3420
      %v3556 = vpop.f32.mrf.mxu0
      %v3557 = vadd.f32 0.0, %v3556
      %3558 = vmatmul.f32.gmra.mxu0 %v3423
      %v3559 = vpop.f32.mrf.mxu0
      %v3560 = vadd.f32 0.0, %v3559
      %3561 = vmatmul.f32.gmra.mxu0 %v3426
      %v3562 = vpop.f32.mrf.mxu0
      %v3563 = vadd.f32 0.0, %v3562
      %3564 = vmatmul.f32.gmra.mxu0 %v3429
      %v3565 = vpop.f32.mrf.mxu0
      %v3566 = vadd.f32 0.0, %v3565
      %3567 = vmatmul.f32.gmra.mxu0 %v3432
      %v3568 = vpop.f32.mrf.mxu0
      %v3569 = vadd.f32 0.0, %v3568
      %3570 = vmatmul.f32.gmra.mxu0 %v3435
      %v3571 = vpop.f32.mrf.mxu0
      %v3572 = vadd.f32 0.0, %v3571
      %3573 = vmatmul.f32.gmra.mxu0 %v3438
      %v3574 = vpop.f32.mrf.mxu0
      %v3575 = vadd.f32 0.0, %v3574
      %3576 = vmatmul.f32.gmra.mxu0 %v3441
      %v3577 = vpop.f32.mrf.mxu0
      %v3578 = vadd.f32 0.0, %v3577
      %3579 = vmatmul.f32.gmra.mxu0 %v3444
      %v3580 = vpop.f32.mrf.mxu0
      %v3581 = vadd.f32 0.0, %v3580
      %3582 = vmatmul.f32.gmra.mxu0 %v3447
      %v3583 = vpop.f32.mrf.mxu0
      %v3584 = vadd.f32 0.0, %v3583
      %3585 = vmatmul.f32.gmra.mxu0 %v3450
      %v3586 = vpop.f32.mrf.mxu0
      %v3587 = vadd.f32 0.0, %v3586
      %3588 = vmatmul.f32.gmra.mxu0 %v3453
      %v3589 = vpop.f32.mrf.mxu0
      %v3590 = vadd.f32 0.0, %v3589
      %3591 = vmatmul.f32.gmra.mxu0 %v3456
      %v3592 = vpop.f32.mrf.mxu0
      %v3593 = vadd.f32 0.0, %v3592
      %3594 = vmatmul.f32.gmra.mxu0 %v3459
      %v3595 = vpop.f32.mrf.mxu0
      %v3596 = vadd.f32 0.0, %v3595
      %3597 = vmatmul.f32.gmra.mxu0 %v3462
      %v3598 = vpop.f32.mrf.mxu0
      %v3599 = vadd.f32 0.0, %v3598
      %3600 = vmatmul.f32.gmra.mxu0 %v3465
      %v3601 = vpop.f32.mrf.mxu0
      %v3602 = vadd.f32 0.0, %v3601
      %3603 = vmatmul.f32.gmra.mxu0 %v3468
      %v3604 = vpop.f32.mrf.mxu0
      %v3605 = vadd.f32 0.0, %v3604
      %3606 = vmatmul.f32.gmra.mxu0 %v3471
      %v3607 = vpop.f32.mrf.mxu0
      %v3608 = vadd.f32 0.0, %v3607
      %3609 = vmatmul.f32.gmra.mxu0 %v3474
      %v3610 = vpop.f32.mrf.mxu0
      %v3611 = vadd.f32 0.0, %v3610
      %3612 = vmatmul.f32.gmra.mxu0 %v3477
      %v3613 = vpop.f32.mrf.mxu0
      %v3614 = vadd.f32 0.0, %v3613
      %3615 = vmatmul.f32.gmra.mxu0 %v3480
      %v3616 = vpop.f32.mrf.mxu0
      %v3617 = vadd.f32 0.0, %v3616
      %3618 = vmatmul.f32.gmra.mxu0 %v3483
      %v3619 = vpop.f32.mrf.mxu0
      %v3620 = vadd.f32 0.0, %v3619
      %3621 = vmatmul.f32.gmra.mxu0 %v3486
      %v3622 = vpop.f32.mrf.mxu0
      %v3623 = vadd.f32 0.0, %v3622
      %3624 = vmatmul.f32.gmra.mxu0 %v3489
      %v3625 = vpop.f32.mrf.mxu0
      %v3626 = vadd.f32 0.0, %v3625
      %3627 = vmatmul.f32.gmra.mxu0 %v3492
      %v3628 = vpop.f32.mrf.mxu0
      %v3629 = vadd.f32 0.0, %v3628
      %3630 = vmatmul.f32.gmra.mxu0 %v3495
      %v3631 = vpop.f32.mrf.mxu0
      %v3632 = vadd.f32 0.0, %v3631
      %3633 = vmatmul.f32.gmra.mxu0 %v3498
      %v3634 = vpop.f32.mrf.mxu0
      %v3635 = vadd.f32 0.0, %v3634
      %3636 = vdwg.mxu0
      %v3637 = vadd.f32 %v3216, %v3518
      %v3638 = vadd.f32 %v3219, %v3521
      %v3639 = vadd.f32 %v3222, %v3524
      %v3640 = vadd.f32 %v3225, %v3527
      %v3641 = vadd.f32 %v3228, %v3530
      %v3642 = vadd.f32 %v3231, %v3533
      %v3643 = vadd.f32 %v3234, %v3536
      %v3644 = vadd.f32 %v3237, %v3539
      %v3645 = vadd.f32 %v3240, %v3542
      %v3646 = vadd.f32 %v3243, %v3545
      %v3647 = vadd.f32 %v3246, %v3548
      %v3648 = vadd.f32 %v3249, %v3551
      %v3649 = vadd.f32 %v3252, %v3554
      %v3650 = vadd.f32 %v3255, %v3557
      %v3651 = vadd.f32 %v3258, %v3560
      %v3652 = vadd.f32 %v3261, %v3563
      %v3653 = vadd.f32 %v3264, %v3566
      %v3654 = vadd.f32 %v3267, %v3569
      %v3655 = vadd.f32 %v3270, %v3572
      %v3656 = vadd.f32 %v3273, %v3575
      %v3657 = vadd.f32 %v3276, %v3578
      %v3658 = vadd.f32 %v3279, %v3581
      %v3659 = vadd.f32 %v3282, %v3584
      %v3660 = vadd.f32 %v3285, %v3587
      %v3661 = vadd.f32 %v3288, %v3590
      %v3662 = vadd.f32 %v3291, %v3593
      %v3663 = vadd.f32 %v3294, %v3596
      %v3664 = vadd.f32 %v3297, %v3599
      %v3665 = vadd.f32 %v3300, %v3602
      %v3666 = vadd.f32 %v3303, %v3605
      %v3667 = vadd.f32 %v3306, %v3608
      %v3668 = vadd.f32 %v3309, %v3611
      %v3669 = vadd.f32 %v3312, %v3614
      %v3670 = vadd.f32 %v3315, %v3617
      %v3671 = vadd.f32 %v3318, %v3620
      %v3672 = vadd.f32 %v3321, %v3623
      %v3673 = vadd.f32 %v3324, %v3626
      %v3674 = vadd.f32 %v3327, %v3629
      %v3675 = vadd.f32 %v3330, %v3632
      %v3676 = vadd.f32 %v3333, %v3635
      %v3677 = vld [vmem:[#allocation4 + $0x3] sm:$0xff]
      %v3678 = vld [vmem:[#allocation4 + $0xb] sm:$0xff]
      %v3679 = vld [vmem:[#allocation4 + $0x13] sm:$0xff]
      %v3680 = vld [vmem:[#allocation4 + $0x1b] sm:$0xff]
      %v3681 = vld [vmem:[#allocation4 + $0x23] sm:$0xff]
      %v3682 = vld [vmem:[#allocation4 + $0x2b] sm:$0xff]
      %v3683 = vld [vmem:[#allocation4 + $0x33] sm:$0xff]
      %v3684 = vld [vmem:[#allocation4 + $0x3b] sm:$0xff]
      %v3685 = vld [vmem:[#allocation4 + $0x43] sm:$0xff]
      %v3686 = vld [vmem:[#allocation4 + $0x4b] sm:$0xff]
      %v3687 = vld [vmem:[#allocation4 + $0x53] sm:$0xff]
      %v3688 = vld [vmem:[#allocation4 + $0x5b] sm:$0xff]
      %v3689 = vld [vmem:[#allocation4 + $0x63] sm:$0xff]
      %v3690 = vld [vmem:[#allocation4 + $0x6b] sm:$0xff]
      %v3691 = vld [vmem:[#allocation4 + $0x73] sm:$0xff]
      %v3692 = vld [vmem:[#allocation4 + $0x7b] sm:$0xff]
      %v3693 = vld [vmem:[#allocation4 + $0x83] sm:$0xff]
      %v3694 = vld [vmem:[#allocation4 + $0x8b] sm:$0xff]
      %v3695 = vld [vmem:[#allocation4 + $0x93] sm:$0xff]
      %v3696 = vld [vmem:[#allocation4 + $0x9b] sm:$0xff]
      %v3697 = vld [vmem:[#allocation4 + $0xa3] sm:$0xff]
      %v3698 = vld [vmem:[#allocation4 + $0xab] sm:$0xff]
      %v3699 = vld [vmem:[#allocation4 + $0xb3] sm:$0xff]
      %v3700 = vld [vmem:[#allocation4 + $0xbb] sm:$0xff]
      %v3701 = vld [vmem:[#allocation4 + $0xc3] sm:$0xff]
      %v3702 = vld [vmem:[#allocation4 + $0xcb] sm:$0xff]
      %v3703 = vld [vmem:[#allocation4 + $0xd3] sm:$0xff]
      %v3704 = vld [vmem:[#allocation4 + $0xdb] sm:$0xff]
      %v3705 = vld [vmem:[#allocation4 + $0xe3] sm:$0xff]
      %v3706 = vld [vmem:[#allocation4 + $0xeb] sm:$0xff]
      %v3707 = vld [vmem:[#allocation4 + $0xf3] sm:$0xff]
      %v3708 = vld [vmem:[#allocation4 + $0xfb] sm:$0xff]
      %v3709 = vld [vmem:[#allocation4 + $0x103] sm:$0xff]
      %v3710 = vld [vmem:[#allocation4 + $0x10b] sm:$0xff]
      %v3711 = vld [vmem:[#allocation4 + $0x113] sm:$0xff]
      %v3712 = vld [vmem:[#allocation4 + $0x11b] sm:$0xff]
      %v3713 = vld [vmem:[#allocation4 + $0x123] sm:$0xff]
      %v3714 = vld [vmem:[#allocation4 + $0x12b] sm:$0xff]
      %v3715 = vld [vmem:[#allocation4 + $0x133] sm:$0xff]
      %v3716 = vld [vmem:[#allocation4 + $0x13b] sm:$0xff]
      %s3717 = scalar_lea.vmem %s7, 96
      %v3718 = vld [vmem:[%s3717] sm:$0xff]
      %v3719 = vld [vmem:[%s3717 + $0x8] sm:$0xff]
      %v3720 = vld [vmem:[%s3717 + $0x10] sm:$0xff]
      %v3721 = vld [vmem:[%s3717 + $0x18] sm:$0xff]
      %v3723 = vsel %vm409, %v3677, 0
      %v3726 = vsel %vm409, %v3678, 0
      %v3729 = vsel %vm409, %v3679, 0
      %v3732 = vsel %vm409, %v3680, 0
      %v3735 = vsel %vm409, %v3681, 0
      %v3738 = vsel %vm409, %v3682, 0
      %v3741 = vsel %vm409, %v3683, 0
      %v3744 = vsel %vm409, %v3684, 0
      %v3747 = vsel %vm409, %v3685, 0
      %v3750 = vsel %vm409, %v3686, 0
      %v3753 = vsel %vm409, %v3687, 0
      %v3756 = vsel %vm409, %v3688, 0
      %v3759 = vsel %vm409, %v3689, 0
      %v3762 = vsel %vm409, %v3690, 0
      %v3765 = vsel %vm409, %v3691, 0
      %v3768 = vsel %vm409, %v3692, 0
      %v3771 = vsel %vm409, %v3693, 0
      %v3774 = vsel %vm409, %v3694, 0
      %v3777 = vsel %vm409, %v3695, 0
      %v3780 = vsel %vm409, %v3696, 0
      %v3783 = vsel %vm409, %v3697, 0
      %v3786 = vsel %vm409, %v3698, 0
      %v3789 = vsel %vm409, %v3699, 0
      %v3792 = vsel %vm409, %v3700, 0
      %v3795 = vsel %vm409, %v3701, 0
      %v3798 = vsel %vm409, %v3702, 0
      %v3801 = vsel %vm409, %v3703, 0
      %v3804 = vsel %vm409, %v3704, 0
      %v3807 = vsel %vm409, %v3705, 0
      %v3810 = vsel %vm409, %v3706, 0
      %v3813 = vsel %vm409, %v3707, 0
      %v3816 = vsel %vm409, %v3708, 0
      %v3819 = vsel %vm409, %v3709, 0
      %v3822 = vsel %vm409, %v3710, 0
      %v3825 = vsel %vm409, %v3711, 0
      %v3828 = vsel %vm409, %v3712, 0
      %v3831 = vsel %vm409, %v3713, 0
      %v3834 = vsel %vm409, %v3714, 0
      %v3837 = vsel %vm409, %v3715, 0
      %v3840 = vsel %vm409, %v3716, 0
      %3842 = vmatpush.msra.mxu0 0.0
      %3843 = vmatpush.msra.mxu0 0.0
      %3844 = vmatpush.msra.mxu0 0.0
      %3845 = vmatpush.msra.mxu0 0.0
      %3846 = vmatpush.msra.mxu0 0.0
      %3847 = vmatpush.msra.mxu0 0.0
      %3848 = vmatpush.msra.mxu0 0.0
      %3849 = vmatpush.msra.mxu0 0.0
      %3850 = vmatpush.msra.mxu0 0.0
      %3851 = vmatpush.msra.mxu0 0.0
      %3852 = vmatpush.msra.mxu0 0.0
      %3853 = vmatpush.msra.mxu0 0.0
      %3854 = vmatpush.msra.mxu0 %v3721
      %3855 = vmatpush.msra.mxu0 %v3720
      %3856 = vmatpush.msra.mxu0 %v3719
      %3857 = vmatpush.msra.mxu0 %v3718
      %3858 = vmatmul.f32.gmra.mxu0 %v3723
      %v3859 = vpop.f32.mrf.mxu0
      %v3860 = vadd.f32 0.0, %v3859
      %3861 = vmatmul.f32.gmra.mxu0 %v3726
      %v3862 = vpop.f32.mrf.mxu0
      %v3863 = vadd.f32 0.0, %v3862
      %3864 = vmatmul.f32.gmra.mxu0 %v3729
      %v3865 = vpop.f32.mrf.mxu0
      %v3866 = vadd.f32 0.0, %v3865
      %3867 = vmatmul.f32.gmra.mxu0 %v3732
      %v3868 = vpop.f32.mrf.mxu0
      %v3869 = vadd.f32 0.0, %v3868
      %3870 = vmatmul.f32.gmra.mxu0 %v3735
      %v3871 = vpop.f32.mrf.mxu0
      %v3872 = vadd.f32 0.0, %v3871
      %3873 = vmatmul.f32.gmra.mxu0 %v3738
      %v3874 = vpop.f32.mrf.mxu0
      %v3875 = vadd.f32 0.0, %v3874
      %3876 = vmatmul.f32.gmra.mxu0 %v3741
      %v3877 = vpop.f32.mrf.mxu0
      %v3878 = vadd.f32 0.0, %v3877
      %3879 = vmatmul.f32.gmra.mxu0 %v3744
      %v3880 = vpop.f32.mrf.mxu0
      %v3881 = vadd.f32 0.0, %v3880
      %3882 = vmatmul.f32.gmra.mxu0 %v3747
      %v3883 = vpop.f32.mrf.mxu0
      %v3884 = vadd.f32 0.0, %v3883
      %3885 = vmatmul.f32.gmra.mxu0 %v3750
      %v3886 = vpop.f32.mrf.mxu0
      %v3887 = vadd.f32 0.0, %v3886
      %3888 = vmatmul.f32.gmra.mxu0 %v3753
      %v3889 = vpop.f32.mrf.mxu0
      %v3890 = vadd.f32 0.0, %v3889
      %3891 = vmatmul.f32.gmra.mxu0 %v3756
      %v3892 = vpop.f32.mrf.mxu0
      %v3893 = vadd.f32 0.0, %v3892
      %3894 = vmatmul.f32.gmra.mxu0 %v3759
      %v3895 = vpop.f32.mrf.mxu0
      %v3896 = vadd.f32 0.0, %v3895
      %3897 = vmatmul.f32.gmra.mxu0 %v3762
      %v3898 = vpop.f32.mrf.mxu0
      %v3899 = vadd.f32 0.0, %v3898
      %3900 = vmatmul.f32.gmra.mxu0 %v3765
      %v3901 = vpop.f32.mrf.mxu0
      %v3902 = vadd.f32 0.0, %v3901
      %3903 = vmatmul.f32.gmra.mxu0 %v3768
      %v3904 = vpop.f32.mrf.mxu0
      %v3905 = vadd.f32 0.0, %v3904
      %3906 = vmatmul.f32.gmra.mxu0 %v3771
      %v3907 = vpop.f32.mrf.mxu0
      %v3908 = vadd.f32 0.0, %v3907
      %3909 = vmatmul.f32.gmra.mxu0 %v3774
      %v3910 = vpop.f32.mrf.mxu0
      %v3911 = vadd.f32 0.0, %v3910
      %3912 = vmatmul.f32.gmra.mxu0 %v3777
      %v3913 = vpop.f32.mrf.mxu0
      %v3914 = vadd.f32 0.0, %v3913
      %3915 = vmatmul.f32.gmra.mxu0 %v3780
      %v3916 = vpop.f32.mrf.mxu0
      %v3917 = vadd.f32 0.0, %v3916
      %3918 = vmatmul.f32.gmra.mxu0 %v3783
      %v3919 = vpop.f32.mrf.mxu0
      %v3920 = vadd.f32 0.0, %v3919
      %3921 = vmatmul.f32.gmra.mxu0 %v3786
      %v3922 = vpop.f32.mrf.mxu0
      %v3923 = vadd.f32 0.0, %v3922
      %3924 = vmatmul.f32.gmra.mxu0 %v3789
      %v3925 = vpop.f32.mrf.mxu0
      %v3926 = vadd.f32 0.0, %v3925
      %3927 = vmatmul.f32.gmra.mxu0 %v3792
      %v3928 = vpop.f32.mrf.mxu0
      %v3929 = vadd.f32 0.0, %v3928
      %3930 = vmatmul.f32.gmra.mxu0 %v3795
      %v3931 = vpop.f32.mrf.mxu0
      %v3932 = vadd.f32 0.0, %v3931
      %3933 = vmatmul.f32.gmra.mxu0 %v3798
      %v3934 = vpop.f32.mrf.mxu0
      %v3935 = vadd.f32 0.0, %v3934
      %3936 = vmatmul.f32.gmra.mxu0 %v3801
      %v3937 = vpop.f32.mrf.mxu0
      %v3938 = vadd.f32 0.0, %v3937
      %3939 = vmatmul.f32.gmra.mxu0 %v3804
      %v3940 = vpop.f32.mrf.mxu0
      %v3941 = vadd.f32 0.0, %v3940
      %3942 = vmatmul.f32.gmra.mxu0 %v3807
      %v3943 = vpop.f32.mrf.mxu0
      %v3944 = vadd.f32 0.0, %v3943
      %3945 = vmatmul.f32.gmra.mxu0 %v3810
      %v3946 = vpop.f32.mrf.mxu0
      %v3947 = vadd.f32 0.0, %v3946
      %3948 = vmatmul.f32.gmra.mxu0 %v3813
      %v3949 = vpop.f32.mrf.mxu0
      %v3950 = vadd.f32 0.0, %v3949
      %3951 = vmatmul.f32.gmra.mxu0 %v3816
      %v3952 = vpop.f32.mrf.mxu0
      %v3953 = vadd.f32 0.0, %v3952
      %3954 = vmatmul.f32.gmra.mxu0 %v3819
      %v3955 = vpop.f32.mrf.mxu0
      %v3956 = vadd.f32 0.0, %v3955
      %3957 = vmatmul.f32.gmra.mxu0 %v3822
      %v3958 = vpop.f32.mrf.mxu0
      %v3959 = vadd.f32 0.0, %v3958
      %3960 = vmatmul.f32.gmra.mxu0 %v3825
      %v3961 = vpop.f32.mrf.mxu0
      %v3962 = vadd.f32 0.0, %v3961
      %3963 = vmatmul.f32.gmra.mxu0 %v3828
      %v3964 = vpop.f32.mrf.mxu0
      %v3965 = vadd.f32 0.0, %v3964
      %3966 = vmatmul.f32.gmra.mxu0 %v3831
      %v3967 = vpop.f32.mrf.mxu0
      %v3968 = vadd.f32 0.0, %v3967
      %3969 = vmatmul.f32.gmra.mxu0 %v3834
      %v3970 = vpop.f32.mrf.mxu0
      %v3971 = vadd.f32 0.0, %v3970
      %3972 = vmatmul.f32.gmra.mxu0 %v3837
      %v3973 = vpop.f32.mrf.mxu0
      %v3974 = vadd.f32 0.0, %v3973
      %3975 = vmatmul.f32.gmra.mxu0 %v3840
      %v3976 = vpop.f32.mrf.mxu0
      %v3977 = vadd.f32 0.0, %v3976
      %3978 = vdwg.mxu0
      %v3979 = vadd.f32 %v3637, %v3860
      %v3980 = vadd.f32 %v3638, %v3863
      %v3981 = vadd.f32 %v3639, %v3866
      %v3982 = vadd.f32 %v3640, %v3869
      %v3983 = vadd.f32 %v3641, %v3872
      %v3984 = vadd.f32 %v3642, %v3875
      %v3985 = vadd.f32 %v3643, %v3878
      %v3986 = vadd.f32 %v3644, %v3881
      %v3987 = vadd.f32 %v3645, %v3884
      %v3988 = vadd.f32 %v3646, %v3887
      %v3989 = vadd.f32 %v3647, %v3890
      %v3990 = vadd.f32 %v3648, %v3893
      %v3991 = vadd.f32 %v3649, %v3896
      %v3992 = vadd.f32 %v3650, %v3899
      %v3993 = vadd.f32 %v3651, %v3902
      %v3994 = vadd.f32 %v3652, %v3905
      %v3995 = vadd.f32 %v3653, %v3908
      %v3996 = vadd.f32 %v3654, %v3911
      %v3997 = vadd.f32 %v3655, %v3914
      %v3998 = vadd.f32 %v3656, %v3917
      %v3999 = vadd.f32 %v3657, %v3920
      %v4000 = vadd.f32 %v3658, %v3923
      %v4001 = vadd.f32 %v3659, %v3926
      %v4002 = vadd.f32 %v3660, %v3929
      %v4003 = vadd.f32 %v3661, %v3932
      %v4004 = vadd.f32 %v3662, %v3935
      %v4005 = vadd.f32 %v3663, %v3938
      %v4006 = vadd.f32 %v3664, %v3941
      %v4007 = vadd.f32 %v3665, %v3944
      %v4008 = vadd.f32 %v3666, %v3947
      %v4009 = vadd.f32 %v3667, %v3950
      %v4010 = vadd.f32 %v3668, %v3953
      %v4011 = vadd.f32 %v3669, %v3956
      %v4012 = vadd.f32 %v3670, %v3959
      %v4013 = vadd.f32 %v3671, %v3962
      %v4014 = vadd.f32 %v3672, %v3965
      %v4015 = vadd.f32 %v3673, %v3968
      %v4016 = vadd.f32 %v3674, %v3971
      %v4017 = vadd.f32 %v3675, %v3974
      %v4018 = vadd.f32 %v3676, %v3977
      %v4019 = vld [vmem:[#allocation4 + $0x4] sm:$0xff]
      %v4020 = vld [vmem:[#allocation4 + $0xc] sm:$0xff]
      %v4021 = vld [vmem:[#allocation4 + $0x14] sm:$0xff]
      %v4022 = vld [vmem:[#allocation4 + $0x1c] sm:$0xff]
      %v4023 = vld [vmem:[#allocation4 + $0x24] sm:$0xff]
      %v4024 = vld [vmem:[#allocation4 + $0x2c] sm:$0xff]
      %v4025 = vld [vmem:[#allocation4 + $0x34] sm:$0xff]
      %v4026 = vld [vmem:[#allocation4 + $0x3c] sm:$0xff]
      %v4027 = vld [vmem:[#allocation4 + $0x44] sm:$0xff]
      %v4028 = vld [vmem:[#allocation4 + $0x4c] sm:$0xff]
      %v4029 = vld [vmem:[#allocation4 + $0x54] sm:$0xff]
      %v4030 = vld [vmem:[#allocation4 + $0x5c] sm:$0xff]
      %v4031 = vld [vmem:[#allocation4 + $0x64] sm:$0xff]
      %v4032 = vld [vmem:[#allocation4 + $0x6c] sm:$0xff]
      %v4033 = vld [vmem:[#allocation4 + $0x74] sm:$0xff]
      %v4034 = vld [vmem:[#allocation4 + $0x7c] sm:$0xff]
      %v4035 = vld [vmem:[#allocation4 + $0x84] sm:$0xff]
      %v4036 = vld [vmem:[#allocation4 + $0x8c] sm:$0xff]
      %v4037 = vld [vmem:[#allocation4 + $0x94] sm:$0xff]
      %v4038 = vld [vmem:[#allocation4 + $0x9c] sm:$0xff]
      %v4039 = vld [vmem:[#allocation4 + $0xa4] sm:$0xff]
      %v4040 = vld [vmem:[#allocation4 + $0xac] sm:$0xff]
      %v4041 = vld [vmem:[#allocation4 + $0xb4] sm:$0xff]
      %v4042 = vld [vmem:[#allocation4 + $0xbc] sm:$0xff]
      %v4043 = vld [vmem:[#allocation4 + $0xc4] sm:$0xff]
      %v4044 = vld [vmem:[#allocation4 + $0xcc] sm:$0xff]
      %v4045 = vld [vmem:[#allocation4 + $0xd4] sm:$0xff]
      %v4046 = vld [vmem:[#allocation4 + $0xdc] sm:$0xff]
      %v4047 = vld [vmem:[#allocation4 + $0xe4] sm:$0xff]
      %v4048 = vld [vmem:[#allocation4 + $0xec] sm:$0xff]
      %v4049 = vld [vmem:[#allocation4 + $0xf4] sm:$0xff]
      %v4050 = vld [vmem:[#allocation4 + $0xfc] sm:$0xff]
      %v4051 = vld [vmem:[#allocation4 + $0x104] sm:$0xff]
      %v4052 = vld [vmem:[#allocation4 + $0x10c] sm:$0xff]
      %v4053 = vld [vmem:[#allocation4 + $0x114] sm:$0xff]
      %v4054 = vld [vmem:[#allocation4 + $0x11c] sm:$0xff]
      %v4055 = vld [vmem:[#allocation4 + $0x124] sm:$0xff]
      %v4056 = vld [vmem:[#allocation4 + $0x12c] sm:$0xff]
      %v4057 = vld [vmem:[#allocation4 + $0x134] sm:$0xff]
      %v4058 = vld [vmem:[#allocation4 + $0x13c] sm:$0xff]
      %s4059 = scalar_lea.vmem %s7, 128
      %v4060 = vld [vmem:[%s4059] sm:$0xff]
      %v4061 = vld [vmem:[%s4059 + $0x8] sm:$0xff]
      %v4062 = vld [vmem:[%s4059 + $0x10] sm:$0xff]
      %v4063 = vld [vmem:[%s4059 + $0x18] sm:$0xff]
      %v4065 = vsel %vm409, %v4019, 0
      %v4068 = vsel %vm409, %v4020, 0
      %v4071 = vsel %vm409, %v4021, 0
      %v4074 = vsel %vm409, %v4022, 0
      %v4077 = vsel %vm409, %v4023, 0
      %v4080 = vsel %vm409, %v4024, 0
      %v4083 = vsel %vm409, %v4025, 0
      %v4086 = vsel %vm409, %v4026, 0
      %v4089 = vsel %vm409, %v4027, 0
      %v4092 = vsel %vm409, %v4028, 0
      %v4095 = vsel %vm409, %v4029, 0
      %v4098 = vsel %vm409, %v4030, 0
      %v4101 = vsel %vm409, %v4031, 0
      %v4104 = vsel %vm409, %v4032, 0
      %v4107 = vsel %vm409, %v4033, 0
      %v4110 = vsel %vm409, %v4034, 0
      %v4113 = vsel %vm409, %v4035, 0
      %v4116 = vsel %vm409, %v4036, 0
      %v4119 = vsel %vm409, %v4037, 0
      %v4122 = vsel %vm409, %v4038, 0
      %v4125 = vsel %vm409, %v4039, 0
      %v4128 = vsel %vm409, %v4040, 0
      %v4131 = vsel %vm409, %v4041, 0
      %v4134 = vsel %vm409, %v4042, 0
      %v4137 = vsel %vm409, %v4043, 0
      %v4140 = vsel %vm409, %v4044, 0
      %v4143 = vsel %vm409, %v4045, 0
      %v4146 = vsel %vm409, %v4046, 0
      %v4149 = vsel %vm409, %v4047, 0
      %v4152 = vsel %vm409, %v4048, 0
      %v4155 = vsel %vm409, %v4049, 0
      %v4158 = vsel %vm409, %v4050, 0
      %v4161 = vsel %vm409, %v4051, 0
      %v4164 = vsel %vm409, %v4052, 0
      %v4167 = vsel %vm409, %v4053, 0
      %v4170 = vsel %vm409, %v4054, 0
      %v4173 = vsel %vm409, %v4055, 0
      %v4176 = vsel %vm409, %v4056, 0
      %v4179 = vsel %vm409, %v4057, 0
      %v4182 = vsel %vm409, %v4058, 0
      %4184 = vmatpush.msra.mxu0 0.0
      %4185 = vmatpush.msra.mxu0 0.0
      %4186 = vmatpush.msra.mxu0 0.0
      %4187 = vmatpush.msra.mxu0 0.0
      %4188 = vmatpush.msra.mxu0 0.0
      %4189 = vmatpush.msra.mxu0 0.0
      %4190 = vmatpush.msra.mxu0 0.0
      %4191 = vmatpush.msra.mxu0 0.0
      %4192 = vmatpush.msra.mxu0 0.0
      %4193 = vmatpush.msra.mxu0 0.0
      %4194 = vmatpush.msra.mxu0 0.0
      %4195 = vmatpush.msra.mxu0 0.0
      %4196 = vmatpush.msra.mxu0 %v4063
      %4197 = vmatpush.msra.mxu0 %v4062
      %4198 = vmatpush.msra.mxu0 %v4061
      %4199 = vmatpush.msra.mxu0 %v4060
      %4200 = vmatmul.f32.gmra.mxu0 %v4065
      %v4201 = vpop.f32.mrf.mxu0
      %v4202 = vadd.f32 0.0, %v4201
      %4203 = vmatmul.f32.gmra.mxu0 %v4068
      %v4204 = vpop.f32.mrf.mxu0
      %v4205 = vadd.f32 0.0, %v4204
      %4206 = vmatmul.f32.gmra.mxu0 %v4071
      %v4207 = vpop.f32.mrf.mxu0
      %v4208 = vadd.f32 0.0, %v4207
      %4209 = vmatmul.f32.gmra.mxu0 %v4074
      %v4210 = vpop.f32.mrf.mxu0
      %v4211 = vadd.f32 0.0, %v4210
      %4212 = vmatmul.f32.gmra.mxu0 %v4077
      %v4213 = vpop.f32.mrf.mxu0
      %v4214 = vadd.f32 0.0, %v4213
      %4215 = vmatmul.f32.gmra.mxu0 %v4080
      %v4216 = vpop.f32.mrf.mxu0
      %v4217 = vadd.f32 0.0, %v4216
      %4218 = vmatmul.f32.gmra.mxu0 %v4083
      %v4219 = vpop.f32.mrf.mxu0
      %v4220 = vadd.f32 0.0, %v4219
      %4221 = vmatmul.f32.gmra.mxu0 %v4086
      %v4222 = vpop.f32.mrf.mxu0
      %v4223 = vadd.f32 0.0, %v4222
      %4224 = vmatmul.f32.gmra.mxu0 %v4089
      %v4225 = vpop.f32.mrf.mxu0
      %v4226 = vadd.f32 0.0, %v4225
      %4227 = vmatmul.f32.gmra.mxu0 %v4092
      %v4228 = vpop.f32.mrf.mxu0
      %v4229 = vadd.f32 0.0, %v4228
      %4230 = vmatmul.f32.gmra.mxu0 %v4095
      %v4231 = vpop.f32.mrf.mxu0
      %v4232 = vadd.f32 0.0, %v4231
      %4233 = vmatmul.f32.gmra.mxu0 %v4098
      %v4234 = vpop.f32.mrf.mxu0
      %v4235 = vadd.f32 0.0, %v4234
      %4236 = vmatmul.f32.gmra.mxu0 %v4101
      %v4237 = vpop.f32.mrf.mxu0
      %v4238 = vadd.f32 0.0, %v4237
      %4239 = vmatmul.f32.gmra.mxu0 %v4104
      %v4240 = vpop.f32.mrf.mxu0
      %v4241 = vadd.f32 0.0, %v4240
      %4242 = vmatmul.f32.gmra.mxu0 %v4107
      %v4243 = vpop.f32.mrf.mxu0
      %v4244 = vadd.f32 0.0, %v4243
      %4245 = vmatmul.f32.gmra.mxu0 %v4110
      %v4246 = vpop.f32.mrf.mxu0
      %v4247 = vadd.f32 0.0, %v4246
      %4248 = vmatmul.f32.gmra.mxu0 %v4113
      %v4249 = vpop.f32.mrf.mxu0
      %v4250 = vadd.f32 0.0, %v4249
      %4251 = vmatmul.f32.gmra.mxu0 %v4116
      %v4252 = vpop.f32.mrf.mxu0
      %v4253 = vadd.f32 0.0, %v4252
      %4254 = vmatmul.f32.gmra.mxu0 %v4119
      %v4255 = vpop.f32.mrf.mxu0
      %v4256 = vadd.f32 0.0, %v4255
      %4257 = vmatmul.f32.gmra.mxu0 %v4122
      %v4258 = vpop.f32.mrf.mxu0
      %v4259 = vadd.f32 0.0, %v4258
      %4260 = vmatmul.f32.gmra.mxu0 %v4125
      %v4261 = vpop.f32.mrf.mxu0
      %v4262 = vadd.f32 0.0, %v4261
      %4263 = vmatmul.f32.gmra.mxu0 %v4128
      %v4264 = vpop.f32.mrf.mxu0
      %v4265 = vadd.f32 0.0, %v4264
      %4266 = vmatmul.f32.gmra.mxu0 %v4131
      %v4267 = vpop.f32.mrf.mxu0
      %v4268 = vadd.f32 0.0, %v4267
      %4269 = vmatmul.f32.gmra.mxu0 %v4134
      %v4270 = vpop.f32.mrf.mxu0
      %v4271 = vadd.f32 0.0, %v4270
      %4272 = vmatmul.f32.gmra.mxu0 %v4137
      %v4273 = vpop.f32.mrf.mxu0
      %v4274 = vadd.f32 0.0, %v4273
      %4275 = vmatmul.f32.gmra.mxu0 %v4140
      %v4276 = vpop.f32.mrf.mxu0
      %v4277 = vadd.f32 0.0, %v4276
      %4278 = vmatmul.f32.gmra.mxu0 %v4143
      %v4279 = vpop.f32.mrf.mxu0
      %v4280 = vadd.f32 0.0, %v4279
      %4281 = vmatmul.f32.gmra.mxu0 %v4146
      %v4282 = vpop.f32.mrf.mxu0
      %v4283 = vadd.f32 0.0, %v4282
      %4284 = vmatmul.f32.gmra.mxu0 %v4149
      %v4285 = vpop.f32.mrf.mxu0
      %v4286 = vadd.f32 0.0, %v4285
      %4287 = vmatmul.f32.gmra.mxu0 %v4152
      %v4288 = vpop.f32.mrf.mxu0
      %v4289 = vadd.f32 0.0, %v4288
      %4290 = vmatmul.f32.gmra.mxu0 %v4155
      %v4291 = vpop.f32.mrf.mxu0
      %v4292 = vadd.f32 0.0, %v4291
      %4293 = vmatmul.f32.gmra.mxu0 %v4158
      %v4294 = vpop.f32.mrf.mxu0
      %v4295 = vadd.f32 0.0, %v4294
      %4296 = vmatmul.f32.gmra.mxu0 %v4161
      %v4297 = vpop.f32.mrf.mxu0
      %v4298 = vadd.f32 0.0, %v4297
      %4299 = vmatmul.f32.gmra.mxu0 %v4164
      %v4300 = vpop.f32.mrf.mxu0
      %v4301 = vadd.f32 0.0, %v4300
      %4302 = vmatmul.f32.gmra.mxu0 %v4167
      %v4303 = vpop.f32.mrf.mxu0
      %v4304 = vadd.f32 0.0, %v4303
      %4305 = vmatmul.f32.gmra.mxu0 %v4170
      %v4306 = vpop.f32.mrf.mxu0
      %v4307 = vadd.f32 0.0, %v4306
      %4308 = vmatmul.f32.gmra.mxu0 %v4173
      %v4309 = vpop.f32.mrf.mxu0
      %v4310 = vadd.f32 0.0, %v4309
      %4311 = vmatmul.f32.gmra.mxu0 %v4176
      %v4312 = vpop.f32.mrf.mxu0
      %v4313 = vadd.f32 0.0, %v4312
      %4314 = vmatmul.f32.gmra.mxu0 %v4179
      %v4315 = vpop.f32.mrf.mxu0
      %v4316 = vadd.f32 0.0, %v4315
      %4317 = vmatmul.f32.gmra.mxu0 %v4182
      %v4318 = vpop.f32.mrf.mxu0
      %v4319 = vadd.f32 0.0, %v4318
      %4320 = vdwg.mxu0
      %v4321 = vadd.f32 %v3979, %v4202
      %v4322 = vadd.f32 %v3980, %v4205
      %v4323 = vadd.f32 %v3981, %v4208
      %v4324 = vadd.f32 %v3982, %v4211
      %v4325 = vadd.f32 %v3983, %v4214
      %v4326 = vadd.f32 %v3984, %v4217
      %v4327 = vadd.f32 %v3985, %v4220
      %v4328 = vadd.f32 %v3986, %v4223
      %v4329 = vadd.f32 %v3987, %v4226
      %v4330 = vadd.f32 %v3988, %v4229
      %v4331 = vadd.f32 %v3989, %v4232
      %v4332 = vadd.f32 %v3990, %v4235
      %v4333 = vadd.f32 %v3991, %v4238
      %v4334 = vadd.f32 %v3992, %v4241
      %v4335 = vadd.f32 %v3993, %v4244
      %v4336 = vadd.f32 %v3994, %v4247
      %v4337 = vadd.f32 %v3995, %v4250
      %v4338 = vadd.f32 %v3996, %v4253
      %v4339 = vadd.f32 %v3997, %v4256
      %v4340 = vadd.f32 %v3998, %v4259
      %v4341 = vadd.f32 %v3999, %v4262
      %v4342 = vadd.f32 %v4000, %v4265
      %v4343 = vadd.f32 %v4001, %v4268
      %v4344 = vadd.f32 %v4002, %v4271
      %v4345 = vadd.f32 %v4003, %v4274
      %v4346 = vadd.f32 %v4004, %v4277
      %v4347 = vadd.f32 %v4005, %v4280
      %v4348 = vadd.f32 %v4006, %v4283
      %v4349 = vadd.f32 %v4007, %v4286
      %v4350 = vadd.f32 %v4008, %v4289
      %v4351 = vadd.f32 %v4009, %v4292
      %v4352 = vadd.f32 %v4010, %v4295
      %v4353 = vadd.f32 %v4011, %v4298
      %v4354 = vadd.f32 %v4012, %v4301
      %v4355 = vadd.f32 %v4013, %v4304
      %v4356 = vadd.f32 %v4014, %v4307
      %v4357 = vadd.f32 %v4015, %v4310
      %v4358 = vadd.f32 %v4016, %v4313
      %v4359 = vadd.f32 %v4017, %v4316
      %v4360 = vadd.f32 %v4018, %v4319
      %v4361 = vld [vmem:[#allocation4 + $0x14] sm:$0xff]
      %v4362 = vld [vmem:[#allocation4 + $0x1c] sm:$0xff]
      %v4363 = vld [vmem:[#allocation4 + $0x24] sm:$0xff]
      %v4364 = vld [vmem:[#allocation4 + $0x2c] sm:$0xff]
      %v4365 = vld [vmem:[#allocation4 + $0x34] sm:$0xff]
      %v4366 = vld [vmem:[#allocation4 + $0x3c] sm:$0xff]
      %v4367 = vld [vmem:[#allocation4 + $0x44] sm:$0xff]
      %v4368 = vld [vmem:[#allocation4 + $0x4c] sm:$0xff]
      %v4369 = vld [vmem:[#allocation4 + $0x54] sm:$0xff]
      %v4370 = vld [vmem:[#allocation4 + $0x5c] sm:$0xff]
      %v4371 = vld [vmem:[#allocation4 + $0x64] sm:$0xff]
      %v4372 = vld [vmem:[#allocation4 + $0x6c] sm:$0xff]
      %v4373 = vld [vmem:[#allocation4 + $0x74] sm:$0xff]
      %v4374 = vld [vmem:[#allocation4 + $0x7c] sm:$0xff]
      %v4375 = vld [vmem:[#allocation4 + $0x84] sm:$0xff]
      %v4376 = vld [vmem:[#allocation4 + $0x8c] sm:$0xff]
      %v4377 = vld [vmem:[#allocation4 + $0x94] sm:$0xff]
      %v4378 = vld [vmem:[#allocation4 + $0x9c] sm:$0xff]
      %v4379 = vld [vmem:[#allocation4 + $0xa4] sm:$0xff]
      %v4380 = vld [vmem:[#allocation4 + $0xac] sm:$0xff]
      %v4381 = vld [vmem:[#allocation4 + $0xb4] sm:$0xff]
      %v4382 = vld [vmem:[#allocation4 + $0xbc] sm:$0xff]
      %v4383 = vld [vmem:[#allocation4 + $0xc4] sm:$0xff]
      %v4384 = vld [vmem:[#allocation4 + $0xcc] sm:$0xff]
      %v4385 = vld [vmem:[#allocation4 + $0xd4] sm:$0xff]
      %v4386 = vld [vmem:[#allocation4 + $0xdc] sm:$0xff]
      %v4387 = vld [vmem:[#allocation4 + $0xe4] sm:$0xff]
      %v4388 = vld [vmem:[#allocation4 + $0xec] sm:$0xff]
      %v4389 = vld [vmem:[#allocation4 + $0xf4] sm:$0xff]
      %v4390 = vld [vmem:[#allocation4 + $0xfc] sm:$0xff]
      %v4391 = vld [vmem:[#allocation4 + $0x104] sm:$0xff]
      %v4392 = vld [vmem:[#allocation4 + $0x10c] sm:$0xff]
      %v4393 = vld [vmem:[#allocation4 + $0x114] sm:$0xff]
      %v4394 = vld [vmem:[#allocation4 + $0x11c] sm:$0xff]
      %v4395 = vld [vmem:[#allocation4 + $0x124] sm:$0xff]
      %v4396 = vld [vmem:[#allocation4 + $0x12c] sm:$0xff]
      %v4397 = vld [vmem:[#allocation4 + $0x134] sm:$0xff]
      %v4398 = vld [vmem:[#allocation4 + $0x13c] sm:$0xff]
      %v4399 = vld [vmem:[#allocation4 + $0x144] sm:$0xff]
      %v4400 = vld [vmem:[#allocation4 + $0x14c] sm:$0xff]
      %s4401 = scalar_lea.vmem %s7, 160
      %v4402 = vld [vmem:[%s4401] sm:$0xff]
      %v4403 = vld [vmem:[%s4401 + $0x8] sm:$0xff]
      %v4404 = vld [vmem:[%s4401 + $0x10] sm:$0xff]
      %v4405 = vld [vmem:[%s4401 + $0x18] sm:$0xff]
      %v4407 = vsel %vm409, %v4361, 0
      %v4410 = vsel %vm409, %v4362, 0
      %v4413 = vsel %vm409, %v4363, 0
      %v4416 = vsel %vm409, %v4364, 0
      %v4419 = vsel %vm409, %v4365, 0
      %v4422 = vsel %vm409, %v4366, 0
      %v4425 = vsel %vm409, %v4367, 0
      %v4428 = vsel %vm409, %v4368, 0
      %v4431 = vsel %vm409, %v4369, 0
      %v4434 = vsel %vm409, %v4370, 0
      %v4437 = vsel %vm409, %v4371, 0
      %v4440 = vsel %vm409, %v4372, 0
      %v4443 = vsel %vm409, %v4373, 0
      %v4446 = vsel %vm409, %v4374, 0
      %v4449 = vsel %vm409, %v4375, 0
      %v4452 = vsel %vm409, %v4376, 0
      %v4455 = vsel %vm409, %v4377, 0
      %v4458 = vsel %vm409, %v4378, 0
      %v4461 = vsel %vm409, %v4379, 0
      %v4464 = vsel %vm409, %v4380, 0
      %v4467 = vsel %vm409, %v4381, 0
      %v4470 = vsel %vm409, %v4382, 0
      %v4473 = vsel %vm409, %v4383, 0
      %v4476 = vsel %vm409, %v4384, 0
      %v4479 = vsel %vm409, %v4385, 0
      %v4482 = vsel %vm409, %v4386, 0
      %v4485 = vsel %vm409, %v4387, 0
      %v4488 = vsel %vm409, %v4388, 0
      %v4491 = vsel %vm409, %v4389, 0
      %v4494 = vsel %vm409, %v4390, 0
      %v4497 = vsel %vm409, %v4391, 0
      %v4500 = vsel %vm409, %v4392, 0
      %v4503 = vsel %vm409, %v4393, 0
      %v4506 = vsel %vm409, %v4394, 0
      %v4509 = vsel %vm409, %v4395, 0
      %v4512 = vsel %vm409, %v4396, 0
      %v4515 = vsel %vm409, %v4397, 0
      %v4518 = vsel %vm409, %v4398, 0
      %v4521 = vsel %vm409, %v4399, 0
      %v4524 = vsel %vm409, %v4400, 0
      %4526 = vmatpush.msra.mxu0 0.0
      %4527 = vmatpush.msra.mxu0 0.0
      %4528 = vmatpush.msra.mxu0 0.0
      %4529 = vmatpush.msra.mxu0 0.0
      %4530 = vmatpush.msra.mxu0 0.0
      %4531 = vmatpush.msra.mxu0 0.0
      %4532 = vmatpush.msra.mxu0 0.0
      %4533 = vmatpush.msra.mxu0 0.0
      %4534 = vmatpush.msra.mxu0 0.0
      %4535 = vmatpush.msra.mxu0 0.0
      %4536 = vmatpush.msra.mxu0 0.0
      %4537 = vmatpush.msra.mxu0 0.0
      %4538 = vmatpush.msra.mxu0 %v4405
      %4539 = vmatpush.msra.mxu0 %v4404
      %4540 = vmatpush.msra.mxu0 %v4403
      %4541 = vmatpush.msra.mxu0 %v4402
      %4542 = vmatmul.f32.gmra.mxu0 %v4407
      %v4543 = vpop.f32.mrf.mxu0
      %v4544 = vadd.f32 0.0, %v4543
      %4545 = vmatmul.f32.gmra.mxu0 %v4410
      %v4546 = vpop.f32.mrf.mxu0
      %v4547 = vadd.f32 0.0, %v4546
      %4548 = vmatmul.f32.gmra.mxu0 %v4413
      %v4549 = vpop.f32.mrf.mxu0
      %v4550 = vadd.f32 0.0, %v4549
      %4551 = vmatmul.f32.gmra.mxu0 %v4416
      %v4552 = vpop.f32.mrf.mxu0
      %v4553 = vadd.f32 0.0, %v4552
      %4554 = vmatmul.f32.gmra.mxu0 %v4419
      %v4555 = vpop.f32.mrf.mxu0
      %v4556 = vadd.f32 0.0, %v4555
      %4557 = vmatmul.f32.gmra.mxu0 %v4422
      %v4558 = vpop.f32.mrf.mxu0
      %v4559 = vadd.f32 0.0, %v4558
      %4560 = vmatmul.f32.gmra.mxu0 %v4425
      %v4561 = vpop.f32.mrf.mxu0
      %v4562 = vadd.f32 0.0, %v4561
      %4563 = vmatmul.f32.gmra.mxu0 %v4428
      %v4564 = vpop.f32.mrf.mxu0
      %v4565 = vadd.f32 0.0, %v4564
      %4566 = vmatmul.f32.gmra.mxu0 %v4431
      %v4567 = vpop.f32.mrf.mxu0
      %v4568 = vadd.f32 0.0, %v4567
      %4569 = vmatmul.f32.gmra.mxu0 %v4434
      %v4570 = vpop.f32.mrf.mxu0
      %v4571 = vadd.f32 0.0, %v4570
      %4572 = vmatmul.f32.gmra.mxu0 %v4437
      %v4573 = vpop.f32.mrf.mxu0
      %v4574 = vadd.f32 0.0, %v4573
      %4575 = vmatmul.f32.gmra.mxu0 %v4440
      %v4576 = vpop.f32.mrf.mxu0
      %v4577 = vadd.f32 0.0, %v4576
      %4578 = vmatmul.f32.gmra.mxu0 %v4443
      %v4579 = vpop.f32.mrf.mxu0
      %v4580 = vadd.f32 0.0, %v4579
      %4581 = vmatmul.f32.gmra.mxu0 %v4446
      %v4582 = vpop.f32.mrf.mxu0
      %v4583 = vadd.f32 0.0, %v4582
      %4584 = vmatmul.f32.gmra.mxu0 %v4449
      %v4585 = vpop.f32.mrf.mxu0
      %v4586 = vadd.f32 0.0, %v4585
      %4587 = vmatmul.f32.gmra.mxu0 %v4452
      %v4588 = vpop.f32.mrf.mxu0
      %v4589 = vadd.f32 0.0, %v4588
      %4590 = vmatmul.f32.gmra.mxu0 %v4455
      %v4591 = vpop.f32.mrf.mxu0
      %v4592 = vadd.f32 0.0, %v4591
      %4593 = vmatmul.f32.gmra.mxu0 %v4458
      %v4594 = vpop.f32.mrf.mxu0
      %v4595 = vadd.f32 0.0, %v4594
      %4596 = vmatmul.f32.gmra.mxu0 %v4461
      %v4597 = vpop.f32.mrf.mxu0
      %v4598 = vadd.f32 0.0, %v4597
      %4599 = vmatmul.f32.gmra.mxu0 %v4464
      %v4600 = vpop.f32.mrf.mxu0
      %v4601 = vadd.f32 0.0, %v4600
      %4602 = vmatmul.f32.gmra.mxu0 %v4467
      %v4603 = vpop.f32.mrf.mxu0
      %v4604 = vadd.f32 0.0, %v4603
      %4605 = vmatmul.f32.gmra.mxu0 %v4470
      %v4606 = vpop.f32.mrf.mxu0
      %v4607 = vadd.f32 0.0, %v4606
      %4608 = vmatmul.f32.gmra.mxu0 %v4473
      %v4609 = vpop.f32.mrf.mxu0
      %v4610 = vadd.f32 0.0, %v4609
      %4611 = vmatmul.f32.gmra.mxu0 %v4476
      %v4612 = vpop.f32.mrf.mxu0
      %v4613 = vadd.f32 0.0, %v4612
      %4614 = vmatmul.f32.gmra.mxu0 %v4479
      %v4615 = vpop.f32.mrf.mxu0
      %v4616 = vadd.f32 0.0, %v4615
      %4617 = vmatmul.f32.gmra.mxu0 %v4482
      %v4618 = vpop.f32.mrf.mxu0
      %v4619 = vadd.f32 0.0, %v4618
      %4620 = vmatmul.f32.gmra.mxu0 %v4485
      %v4621 = vpop.f32.mrf.mxu0
      %v4622 = vadd.f32 0.0, %v4621
      %4623 = vmatmul.f32.gmra.mxu0 %v4488
      %v4624 = vpop.f32.mrf.mxu0
      %v4625 = vadd.f32 0.0, %v4624
      %4626 = vmatmul.f32.gmra.mxu0 %v4491
      %v4627 = vpop.f32.mrf.mxu0
      %v4628 = vadd.f32 0.0, %v4627
      %4629 = vmatmul.f32.gmra.mxu0 %v4494
      %v4630 = vpop.f32.mrf.mxu0
      %v4631 = vadd.f32 0.0, %v4630
      %4632 = vmatmul.f32.gmra.mxu0 %v4497
      %v4633 = vpop.f32.mrf.mxu0
      %v4634 = vadd.f32 0.0, %v4633
      %4635 = vmatmul.f32.gmra.mxu0 %v4500
      %v4636 = vpop.f32.mrf.mxu0
      %v4637 = vadd.f32 0.0, %v4636
      %4638 = vmatmul.f32.gmra.mxu0 %v4503
      %v4639 = vpop.f32.mrf.mxu0
      %v4640 = vadd.f32 0.0, %v4639
      %4641 = vmatmul.f32.gmra.mxu0 %v4506
      %v4642 = vpop.f32.mrf.mxu0
      %v4643 = vadd.f32 0.0, %v4642
      %4644 = vmatmul.f32.gmra.mxu0 %v4509
      %v4645 = vpop.f32.mrf.mxu0
      %v4646 = vadd.f32 0.0, %v4645
      %4647 = vmatmul.f32.gmra.mxu0 %v4512
      %v4648 = vpop.f32.mrf.mxu0
      %v4649 = vadd.f32 0.0, %v4648
      %4650 = vmatmul.f32.gmra.mxu0 %v4515
      %v4651 = vpop.f32.mrf.mxu0
      %v4652 = vadd.f32 0.0, %v4651
      %4653 = vmatmul.f32.gmra.mxu0 %v4518
      %v4654 = vpop.f32.mrf.mxu0
      %v4655 = vadd.f32 0.0, %v4654
      %4656 = vmatmul.f32.gmra.mxu0 %v4521
      %v4657 = vpop.f32.mrf.mxu0
      %v4658 = vadd.f32 0.0, %v4657
      %4659 = vmatmul.f32.gmra.mxu0 %v4524
      %v4660 = vpop.f32.mrf.mxu0
      %v4661 = vadd.f32 0.0, %v4660
      %4662 = vdwg.mxu0
      %v4663 = vadd.f32 %v4321, %v4544
      %v4664 = vadd.f32 %v4322, %v4547
      %v4665 = vadd.f32 %v4323, %v4550
      %v4666 = vadd.f32 %v4324, %v4553
      %v4667 = vadd.f32 %v4325, %v4556
      %v4668 = vadd.f32 %v4326, %v4559
      %v4669 = vadd.f32 %v4327, %v4562
      %v4670 = vadd.f32 %v4328, %v4565
      %v4671 = vadd.f32 %v4329, %v4568
      %v4672 = vadd.f32 %v4330, %v4571
      %v4673 = vadd.f32 %v4331, %v4574
      %v4674 = vadd.f32 %v4332, %v4577
      %v4675 = vadd.f32 %v4333, %v4580
      %v4676 = vadd.f32 %v4334, %v4583
      %v4677 = vadd.f32 %v4335, %v4586
      %v4678 = vadd.f32 %v4336, %v4589
      %v4679 = vadd.f32 %v4337, %v4592
      %v4680 = vadd.f32 %v4338, %v4595
      %v4681 = vadd.f32 %v4339, %v4598
      %v4682 = vadd.f32 %v4340, %v4601
      %v4683 = vadd.f32 %v4341, %v4604
      %v4684 = vadd.f32 %v4342, %v4607
      %v4685 = vadd.f32 %v4343, %v4610
      %v4686 = vadd.f32 %v4344, %v4613
      %v4687 = vadd.f32 %v4345, %v4616
      %v4688 = vadd.f32 %v4346, %v4619
      %v4689 = vadd.f32 %v4347, %v4622
      %v4690 = vadd.f32 %v4348, %v4625
      %v4691 = vadd.f32 %v4349, %v4628
      %v4692 = vadd.f32 %v4350, %v4631
      %v4693 = vadd.f32 %v4351, %v4634
      %v4694 = vadd.f32 %v4352, %v4637
      %v4695 = vadd.f32 %v4353, %v4640
      %v4696 = vadd.f32 %v4354, %v4643
      %v4697 = vadd.f32 %v4355, %v4646
      %v4698 = vadd.f32 %v4356, %v4649
      %v4699 = vadd.f32 %v4357, %v4652
      %v4700 = vadd.f32 %v4358, %v4655
      %v4701 = vadd.f32 %v4359, %v4658
      %v4702 = vadd.f32 %v4360, %v4661
      %v4703 = vld [vmem:[#allocation4 + $0x15] sm:$0xff]
      %v4704 = vld [vmem:[#allocation4 + $0x1d] sm:$0xff]
      %v4705 = vld [vmem:[#allocation4 + $0x25] sm:$0xff]
      %v4706 = vld [vmem:[#allocation4 + $0x2d] sm:$0xff]
      %v4707 = vld [vmem:[#allocation4 + $0x35] sm:$0xff]
      %v4708 = vld [vmem:[#allocation4 + $0x3d] sm:$0xff]
      %v4709 = vld [vmem:[#allocation4 + $0x45] sm:$0xff]
      %v4710 = vld [vmem:[#allocation4 + $0x4d] sm:$0xff]
      %v4711 = vld [vmem:[#allocation4 + $0x55] sm:$0xff]
      %v4712 = vld [vmem:[#allocation4 + $0x5d] sm:$0xff]
      %v4713 = vld [vmem:[#allocation4 + $0x65] sm:$0xff]
      %v4714 = vld [vmem:[#allocation4 + $0x6d] sm:$0xff]
      %v4715 = vld [vmem:[#allocation4 + $0x75] sm:$0xff]
      %v4716 = vld [vmem:[#allocation4 + $0x7d] sm:$0xff]
      %v4717 = vld [vmem:[#allocation4 + $0x85] sm:$0xff]
      %v4718 = vld [vmem:[#allocation4 + $0x8d] sm:$0xff]
      %v4719 = vld [vmem:[#allocation4 + $0x95] sm:$0xff]
      %v4720 = vld [vmem:[#allocation4 + $0x9d] sm:$0xff]
      %v4721 = vld [vmem:[#allocation4 + $0xa5] sm:$0xff]
      %v4722 = vld [vmem:[#allocation4 + $0xad] sm:$0xff]
      %v4723 = vld [vmem:[#allocation4 + $0xb5] sm:$0xff]
      %v4724 = vld [vmem:[#allocation4 + $0xbd] sm:$0xff]
      %v4725 = vld [vmem:[#allocation4 + $0xc5] sm:$0xff]
      %v4726 = vld [vmem:[#allocation4 + $0xcd] sm:$0xff]
      %v4727 = vld [vmem:[#allocation4 + $0xd5] sm:$0xff]
      %v4728 = vld [vmem:[#allocation4 + $0xdd] sm:$0xff]
      %v4729 = vld [vmem:[#allocation4 + $0xe5] sm:$0xff]
      %v4730 = vld [vmem:[#allocation4 + $0xed] sm:$0xff]
      %v4731 = vld [vmem:[#allocation4 + $0xf5] sm:$0xff]
      %v4732 = vld [vmem:[#allocation4 + $0xfd] sm:$0xff]
      %v4733 = vld [vmem:[#allocation4 + $0x105] sm:$0xff]
      %v4734 = vld [vmem:[#allocation4 + $0x10d] sm:$0xff]
      %v4735 = vld [vmem:[#allocation4 + $0x115] sm:$0xff]
      %v4736 = vld [vmem:[#allocation4 + $0x11d] sm:$0xff]
      %v4737 = vld [vmem:[#allocation4 + $0x125] sm:$0xff]
      %v4738 = vld [vmem:[#allocation4 + $0x12d] sm:$0xff]
      %v4739 = vld [vmem:[#allocation4 + $0x135] sm:$0xff]
      %v4740 = vld [vmem:[#allocation4 + $0x13d] sm:$0xff]
      %v4741 = vld [vmem:[#allocation4 + $0x145] sm:$0xff]
      %v4742 = vld [vmem:[#allocation4 + $0x14d] sm:$0xff]
      %s4743 = scalar_lea.vmem %s7, 192
      %v4744 = vld [vmem:[%s4743] sm:$0xff]
      %v4745 = vld [vmem:[%s4743 + $0x8] sm:$0xff]
      %v4746 = vld [vmem:[%s4743 + $0x10] sm:$0xff]
      %v4747 = vld [vmem:[%s4743 + $0x18] sm:$0xff]
      %v4749 = vsel %vm409, %v4703, 0
      %v4752 = vsel %vm409, %v4704, 0
      %v4755 = vsel %vm409, %v4705, 0
      %v4758 = vsel %vm409, %v4706, 0
      %v4761 = vsel %vm409, %v4707, 0
      %v4764 = vsel %vm409, %v4708, 0
      %v4767 = vsel %vm409, %v4709, 0
      %v4770 = vsel %vm409, %v4710, 0
      %v4773 = vsel %vm409, %v4711, 0
      %v4776 = vsel %vm409, %v4712, 0
      %v4779 = vsel %vm409, %v4713, 0
      %v4782 = vsel %vm409, %v4714, 0
      %v4785 = vsel %vm409, %v4715, 0
      %v4788 = vsel %vm409, %v4716, 0
      %v4791 = vsel %vm409, %v4717, 0
      %v4794 = vsel %vm409, %v4718, 0
      %v4797 = vsel %vm409, %v4719, 0
      %v4800 = vsel %vm409, %v4720, 0
      %v4803 = vsel %vm409, %v4721, 0
      %v4806 = vsel %vm409, %v4722, 0
      %v4809 = vsel %vm409, %v4723, 0
      %v4812 = vsel %vm409, %v4724, 0
      %v4815 = vsel %vm409, %v4725, 0
      %v4818 = vsel %vm409, %v4726, 0
      %v4821 = vsel %vm409, %v4727, 0
      %v4824 = vsel %vm409, %v4728, 0
      %v4827 = vsel %vm409, %v4729, 0
      %v4830 = vsel %vm409, %v4730, 0
      %v4833 = vsel %vm409, %v4731, 0
      %v4836 = vsel %vm409, %v4732, 0
      %v4839 = vsel %vm409, %v4733, 0
      %v4842 = vsel %vm409, %v4734, 0
      %v4845 = vsel %vm409, %v4735, 0
      %v4848 = vsel %vm409, %v4736, 0
      %v4851 = vsel %vm409, %v4737, 0
      %v4854 = vsel %vm409, %v4738, 0
      %v4857 = vsel %vm409, %v4739, 0
      %v4860 = vsel %vm409, %v4740, 0
      %v4863 = vsel %vm409, %v4741, 0
      %v4866 = vsel %vm409, %v4742, 0
      %4868 = vmatpush.msra.mxu0 0.0
      %4869 = vmatpush.msra.mxu0 0.0
      %4870 = vmatpush.msra.mxu0 0.0
      %4871 = vmatpush.msra.mxu0 0.0
      %4872 = vmatpush.msra.mxu0 0.0
      %4873 = vmatpush.msra.mxu0 0.0
      %4874 = vmatpush.msra.mxu0 0.0
      %4875 = vmatpush.msra.mxu0 0.0
      %4876 = vmatpush.msra.mxu0 0.0
      %4877 = vmatpush.msra.mxu0 0.0
      %4878 = vmatpush.msra.mxu0 0.0
      %4879 = vmatpush.msra.mxu0 0.0
      %4880 = vmatpush.msra.mxu0 %v4747
      %4881 = vmatpush.msra.mxu0 %v4746
      %4882 = vmatpush.msra.mxu0 %v4745
      %4883 = vmatpush.msra.mxu0 %v4744
      %4884 = vmatmul.f32.gmra.mxu0 %v4749
      %v4885 = vpop.f32.mrf.mxu0
      %v4886 = vadd.f32 0.0, %v4885
      %4887 = vmatmul.f32.gmra.mxu0 %v4752
      %v4888 = vpop.f32.mrf.mxu0
      %v4889 = vadd.f32 0.0, %v4888
      %4890 = vmatmul.f32.gmra.mxu0 %v4755
      %v4891 = vpop.f32.mrf.mxu0
      %v4892 = vadd.f32 0.0, %v4891
      %4893 = vmatmul.f32.gmra.mxu0 %v4758
      %v4894 = vpop.f32.mrf.mxu0
      %v4895 = vadd.f32 0.0, %v4894
      %4896 = vmatmul.f32.gmra.mxu0 %v4761
      %v4897 = vpop.f32.mrf.mxu0
      %v4898 = vadd.f32 0.0, %v4897
      %4899 = vmatmul.f32.gmra.mxu0 %v4764
      %v4900 = vpop.f32.mrf.mxu0
      %v4901 = vadd.f32 0.0, %v4900
      %4902 = vmatmul.f32.gmra.mxu0 %v4767
      %v4903 = vpop.f32.mrf.mxu0
      %v4904 = vadd.f32 0.0, %v4903
      %4905 = vmatmul.f32.gmra.mxu0 %v4770
      %v4906 = vpop.f32.mrf.mxu0
      %v4907 = vadd.f32 0.0, %v4906
      %4908 = vmatmul.f32.gmra.mxu0 %v4773
      %v4909 = vpop.f32.mrf.mxu0
      %v4910 = vadd.f32 0.0, %v4909
      %4911 = vmatmul.f32.gmra.mxu0 %v4776
      %v4912 = vpop.f32.mrf.mxu0
      %v4913 = vadd.f32 0.0, %v4912
      %4914 = vmatmul.f32.gmra.mxu0 %v4779
      %v4915 = vpop.f32.mrf.mxu0
      %v4916 = vadd.f32 0.0, %v4915
      %4917 = vmatmul.f32.gmra.mxu0 %v4782
      %v4918 = vpop.f32.mrf.mxu0
      %v4919 = vadd.f32 0.0, %v4918
      %4920 = vmatmul.f32.gmra.mxu0 %v4785
      %v4921 = vpop.f32.mrf.mxu0
      %v4922 = vadd.f32 0.0, %v4921
      %4923 = vmatmul.f32.gmra.mxu0 %v4788
      %v4924 = vpop.f32.mrf.mxu0
      %v4925 = vadd.f32 0.0, %v4924
      %4926 = vmatmul.f32.gmra.mxu0 %v4791
      %v4927 = vpop.f32.mrf.mxu0
      %v4928 = vadd.f32 0.0, %v4927
      %4929 = vmatmul.f32.gmra.mxu0 %v4794
      %v4930 = vpop.f32.mrf.mxu0
      %v4931 = vadd.f32 0.0, %v4930
      %4932 = vmatmul.f32.gmra.mxu0 %v4797
      %v4933 = vpop.f32.mrf.mxu0
      %v4934 = vadd.f32 0.0, %v4933
      %4935 = vmatmul.f32.gmra.mxu0 %v4800
      %v4936 = vpop.f32.mrf.mxu0
      %v4937 = vadd.f32 0.0, %v4936
      %4938 = vmatmul.f32.gmra.mxu0 %v4803
      %v4939 = vpop.f32.mrf.mxu0
      %v4940 = vadd.f32 0.0, %v4939
      %4941 = vmatmul.f32.gmra.mxu0 %v4806
      %v4942 = vpop.f32.mrf.mxu0
      %v4943 = vadd.f32 0.0, %v4942
      %4944 = vmatmul.f32.gmra.mxu0 %v4809
      %v4945 = vpop.f32.mrf.mxu0
      %v4946 = vadd.f32 0.0, %v4945
      %4947 = vmatmul.f32.gmra.mxu0 %v4812
      %v4948 = vpop.f32.mrf.mxu0
      %v4949 = vadd.f32 0.0, %v4948
      %4950 = vmatmul.f32.gmra.mxu0 %v4815
      %v4951 = vpop.f32.mrf.mxu0
      %v4952 = vadd.f32 0.0, %v4951
      %4953 = vmatmul.f32.gmra.mxu0 %v4818
      %v4954 = vpop.f32.mrf.mxu0
      %v4955 = vadd.f32 0.0, %v4954
      %4956 = vmatmul.f32.gmra.mxu0 %v4821
      %v4957 = vpop.f32.mrf.mxu0
      %v4958 = vadd.f32 0.0, %v4957
      %4959 = vmatmul.f32.gmra.mxu0 %v4824
      %v4960 = vpop.f32.mrf.mxu0
      %v4961 = vadd.f32 0.0, %v4960
      %4962 = vmatmul.f32.gmra.mxu0 %v4827
      %v4963 = vpop.f32.mrf.mxu0
      %v4964 = vadd.f32 0.0, %v4963
      %4965 = vmatmul.f32.gmra.mxu0 %v4830
      %v4966 = vpop.f32.mrf.mxu0
      %v4967 = vadd.f32 0.0, %v4966
      %4968 = vmatmul.f32.gmra.mxu0 %v4833
      %v4969 = vpop.f32.mrf.mxu0
      %v4970 = vadd.f32 0.0, %v4969
      %4971 = vmatmul.f32.gmra.mxu0 %v4836
      %v4972 = vpop.f32.mrf.mxu0
      %v4973 = vadd.f32 0.0, %v4972
      %4974 = vmatmul.f32.gmra.mxu0 %v4839
      %v4975 = vpop.f32.mrf.mxu0
      %v4976 = vadd.f32 0.0, %v4975
      %4977 = vmatmul.f32.gmra.mxu0 %v4842
      %v4978 = vpop.f32.mrf.mxu0
      %v4979 = vadd.f32 0.0, %v4978
      %4980 = vmatmul.f32.gmra.mxu0 %v4845
      %v4981 = vpop.f32.mrf.mxu0
      %v4982 = vadd.f32 0.0, %v4981
      %4983 = vmatmul.f32.gmra.mxu0 %v4848
      %v4984 = vpop.f32.mrf.mxu0
      %v4985 = vadd.f32 0.0, %v4984
      %4986 = vmatmul.f32.gmra.mxu0 %v4851
      %v4987 = vpop.f32.mrf.mxu0
      %v4988 = vadd.f32 0.0, %v4987
      %4989 = vmatmul.f32.gmra.mxu0 %v4854
      %v4990 = vpop.f32.mrf.mxu0
      %v4991 = vadd.f32 0.0, %v4990
      %4992 = vmatmul.f32.gmra.mxu0 %v4857
      %v4993 = vpop.f32.mrf.mxu0
      %v4994 = vadd.f32 0.0, %v4993
      %4995 = vmatmul.f32.gmra.mxu0 %v4860
      %v4996 = vpop.f32.mrf.mxu0
      %v4997 = vadd.f32 0.0, %v4996
      %4998 = vmatmul.f32.gmra.mxu0 %v4863
      %v4999 = vpop.f32.mrf.mxu0
      %v5000 = vadd.f32 0.0, %v4999
      %5001 = vmatmul.f32.gmra.mxu0 %v4866
      %v5002 = vpop.f32.mrf.mxu0
      %v5003 = vadd.f32 0.0, %v5002
      %5004 = vdwg.mxu0
      %v5005 = vadd.f32 %v4663, %v4886
      %v5006 = vadd.f32 %v4664, %v4889
      %v5007 = vadd.f32 %v4665, %v4892
      %v5008 = vadd.f32 %v4666, %v4895
      %v5009 = vadd.f32 %v4667, %v4898
      %v5010 = vadd.f32 %v4668, %v4901
      %v5011 = vadd.f32 %v4669, %v4904
      %v5012 = vadd.f32 %v4670, %v4907
      %v5013 = vadd.f32 %v4671, %v4910
      %v5014 = vadd.f32 %v4672, %v4913
      %v5015 = vadd.f32 %v4673, %v4916
      %v5016 = vadd.f32 %v4674, %v4919
      %v5017 = vadd.f32 %v4675, %v4922
      %v5018 = vadd.f32 %v4676, %v4925
      %v5019 = vadd.f32 %v4677, %v4928
      %v5020 = vadd.f32 %v4678, %v4931
      %v5021 = vadd.f32 %v4679, %v4934
      %v5022 = vadd.f32 %v4680, %v4937
      %v5023 = vadd.f32 %v4681, %v4940
      %v5024 = vadd.f32 %v4682, %v4943
      %v5025 = vadd.f32 %v4683, %v4946
      %v5026 = vadd.f32 %v4684, %v4949
      %v5027 = vadd.f32 %v4685, %v4952
      %v5028 = vadd.f32 %v4686, %v4955
      %v5029 = vadd.f32 %v4687, %v4958
      %v5030 = vadd.f32 %v4688, %v4961
      %v5031 = vadd.f32 %v4689, %v4964
      %v5032 = vadd.f32 %v4690, %v4967
      %v5033 = vadd.f32 %v4691, %v4970
      %v5034 = vadd.f32 %v4692, %v4973
      %v5035 = vadd.f32 %v4693, %v4976
      %v5036 = vadd.f32 %v4694, %v4979
      %v5037 = vadd.f32 %v4695, %v4982
      %v5038 = vadd.f32 %v4696, %v4985
      %v5039 = vadd.f32 %v4697, %v4988
      %v5040 = vadd.f32 %v4698, %v4991
      %v5041 = vadd.f32 %v4699, %v4994
      %v5042 = vadd.f32 %v4700, %v4997
      %v5043 = vadd.f32 %v4701, %v5000
      %v5044 = vadd.f32 %v4702, %v5003
      %v5045 = vld [vmem:[#allocation4 + $0x16] sm:$0xff]
      %v5046 = vld [vmem:[#allocation4 + $0x1e] sm:$0xff]
      %v5047 = vld [vmem:[#allocation4 + $0x26] sm:$0xff]
      %v5048 = vld [vmem:[#allocation4 + $0x2e] sm:$0xff]
      %v5049 = vld [vmem:[#allocation4 + $0x36] sm:$0xff]
      %v5050 = vld [vmem:[#allocation4 + $0x3e] sm:$0xff]
      %v5051 = vld [vmem:[#allocation4 + $0x46] sm:$0xff]
      %v5052 = vld [vmem:[#allocation4 + $0x4e] sm:$0xff]
      %v5053 = vld [vmem:[#allocation4 + $0x56] sm:$0xff]
      %v5054 = vld [vmem:[#allocation4 + $0x5e] sm:$0xff]
      %v5055 = vld [vmem:[#allocation4 + $0x66] sm:$0xff]
      %v5056 = vld [vmem:[#allocation4 + $0x6e] sm:$0xff]
      %v5057 = vld [vmem:[#allocation4 + $0x76] sm:$0xff]
      %v5058 = vld [vmem:[#allocation4 + $0x7e] sm:$0xff]
      %v5059 = vld [vmem:[#allocation4 + $0x86] sm:$0xff]
      %v5060 = vld [vmem:[#allocation4 + $0x8e] sm:$0xff]
      %v5061 = vld [vmem:[#allocation4 + $0x96] sm:$0xff]
      %v5062 = vld [vmem:[#allocation4 + $0x9e] sm:$0xff]
      %v5063 = vld [vmem:[#allocation4 + $0xa6] sm:$0xff]
      %v5064 = vld [vmem:[#allocation4 + $0xae] sm:$0xff]
      %v5065 = vld [vmem:[#allocation4 + $0xb6] sm:$0xff]
      %v5066 = vld [vmem:[#allocation4 + $0xbe] sm:$0xff]
      %v5067 = vld [vmem:[#allocation4 + $0xc6] sm:$0xff]
      %v5068 = vld [vmem:[#allocation4 + $0xce] sm:$0xff]
      %v5069 = vld [vmem:[#allocation4 + $0xd6] sm:$0xff]
      %v5070 = vld [vmem:[#allocation4 + $0xde] sm:$0xff]
      %v5071 = vld [vmem:[#allocation4 + $0xe6] sm:$0xff]
      %v5072 = vld [vmem:[#allocation4 + $0xee] sm:$0xff]
      %v5073 = vld [vmem:[#allocation4 + $0xf6] sm:$0xff]
      %v5074 = vld [vmem:[#allocation4 + $0xfe] sm:$0xff]
      %v5075 = vld [vmem:[#allocation4 + $0x106] sm:$0xff]
      %v5076 = vld [vmem:[#allocation4 + $0x10e] sm:$0xff]
      %v5077 = vld [vmem:[#allocation4 + $0x116] sm:$0xff]
      %v5078 = vld [vmem:[#allocation4 + $0x11e] sm:$0xff]
      %v5079 = vld [vmem:[#allocation4 + $0x126] sm:$0xff]
      %v5080 = vld [vmem:[#allocation4 + $0x12e] sm:$0xff]
      %v5081 = vld [vmem:[#allocation4 + $0x136] sm:$0xff]
      %v5082 = vld [vmem:[#allocation4 + $0x13e] sm:$0xff]
      %v5083 = vld [vmem:[#allocation4 + $0x146] sm:$0xff]
      %v5084 = vld [vmem:[#allocation4 + $0x14e] sm:$0xff]
      %s5085 = scalar_lea.vmem %s7, 224
      %v5086 = vld [vmem:[%s5085] sm:$0xff]
      %v5087 = vld [vmem:[%s5085 + $0x8] sm:$0xff]
      %v5088 = vld [vmem:[%s5085 + $0x10] sm:$0xff]
      %v5089 = vld [vmem:[%s5085 + $0x18] sm:$0xff]
      %v5091 = vsel %vm409, %v5045, 0
      %v5094 = vsel %vm409, %v5046, 0
      %v5097 = vsel %vm409, %v5047, 0
      %v5100 = vsel %vm409, %v5048, 0
      %v5103 = vsel %vm409, %v5049, 0
      %v5106 = vsel %vm409, %v5050, 0
      %v5109 = vsel %vm409, %v5051, 0
      %v5112 = vsel %vm409, %v5052, 0
      %v5115 = vsel %vm409, %v5053, 0
      %v5118 = vsel %vm409, %v5054, 0
      %v5121 = vsel %vm409, %v5055, 0
      %v5124 = vsel %vm409, %v5056, 0
      %v5127 = vsel %vm409, %v5057, 0
      %v5130 = vsel %vm409, %v5058, 0
      %v5133 = vsel %vm409, %v5059, 0
      %v5136 = vsel %vm409, %v5060, 0
      %v5139 = vsel %vm409, %v5061, 0
      %v5142 = vsel %vm409, %v5062, 0
      %v5145 = vsel %vm409, %v5063, 0
      %v5148 = vsel %vm409, %v5064, 0
      %v5151 = vsel %vm409, %v5065, 0
      %v5154 = vsel %vm409, %v5066, 0
      %v5157 = vsel %vm409, %v5067, 0
      %v5160 = vsel %vm409, %v5068, 0
      %v5163 = vsel %vm409, %v5069, 0
      %v5166 = vsel %vm409, %v5070, 0
      %v5169 = vsel %vm409, %v5071, 0
      %v5172 = vsel %vm409, %v5072, 0
      %v5175 = vsel %vm409, %v5073, 0
      %v5178 = vsel %vm409, %v5074, 0
      %v5181 = vsel %vm409, %v5075, 0
      %v5184 = vsel %vm409, %v5076, 0
      %v5187 = vsel %vm409, %v5077, 0
      %v5190 = vsel %vm409, %v5078, 0
      %v5193 = vsel %vm409, %v5079, 0
      %v5196 = vsel %vm409, %v5080, 0
      %v5199 = vsel %vm409, %v5081, 0
      %v5202 = vsel %vm409, %v5082, 0
      %v5205 = vsel %vm409, %v5083, 0
      %v5208 = vsel %vm409, %v5084, 0
      %5210 = vmatpush.msra.mxu0 0.0
      %5211 = vmatpush.msra.mxu0 0.0
      %5212 = vmatpush.msra.mxu0 0.0
      %5213 = vmatpush.msra.mxu0 0.0
      %5214 = vmatpush.msra.mxu0 0.0
      %5215 = vmatpush.msra.mxu0 0.0
      %5216 = vmatpush.msra.mxu0 0.0
      %5217 = vmatpush.msra.mxu0 0.0
      %5218 = vmatpush.msra.mxu0 0.0
      %5219 = vmatpush.msra.mxu0 0.0
      %5220 = vmatpush.msra.mxu0 0.0
      %5221 = vmatpush.msra.mxu0 0.0
      %5222 = vmatpush.msra.mxu0 %v5089
      %5223 = vmatpush.msra.mxu0 %v5088
      %5224 = vmatpush.msra.mxu0 %v5087
      %5225 = vmatpush.msra.mxu0 %v5086
      %5226 = vmatmul.f32.gmra.mxu0 %v5091
      %v5227 = vpop.f32.mrf.mxu0
      %v5228 = vadd.f32 0.0, %v5227
      %5229 = vmatmul.f32.gmra.mxu0 %v5094
      %v5230 = vpop.f32.mrf.mxu0
      %v5231 = vadd.f32 0.0, %v5230
      %5232 = vmatmul.f32.gmra.mxu0 %v5097
      %v5233 = vpop.f32.mrf.mxu0
      %v5234 = vadd.f32 0.0, %v5233
      %5235 = vmatmul.f32.gmra.mxu0 %v5100
      %v5236 = vpop.f32.mrf.mxu0
      %v5237 = vadd.f32 0.0, %v5236
      %5238 = vmatmul.f32.gmra.mxu0 %v5103
      %v5239 = vpop.f32.mrf.mxu0
      %v5240 = vadd.f32 0.0, %v5239
      %5241 = vmatmul.f32.gmra.mxu0 %v5106
      %v5242 = vpop.f32.mrf.mxu0
      %v5243 = vadd.f32 0.0, %v5242
      %5244 = vmatmul.f32.gmra.mxu0 %v5109
      %v5245 = vpop.f32.mrf.mxu0
      %v5246 = vadd.f32 0.0, %v5245
      %5247 = vmatmul.f32.gmra.mxu0 %v5112
      %v5248 = vpop.f32.mrf.mxu0
      %v5249 = vadd.f32 0.0, %v5248
      %5250 = vmatmul.f32.gmra.mxu0 %v5115
      %v5251 = vpop.f32.mrf.mxu0
      %v5252 = vadd.f32 0.0, %v5251
      %5253 = vmatmul.f32.gmra.mxu0 %v5118
      %v5254 = vpop.f32.mrf.mxu0
      %v5255 = vadd.f32 0.0, %v5254
      %5256 = vmatmul.f32.gmra.mxu0 %v5121
      %v5257 = vpop.f32.mrf.mxu0
      %v5258 = vadd.f32 0.0, %v5257
      %5259 = vmatmul.f32.gmra.mxu0 %v5124
      %v5260 = vpop.f32.mrf.mxu0
      %v5261 = vadd.f32 0.0, %v5260
      %5262 = vmatmul.f32.gmra.mxu0 %v5127
      %v5263 = vpop.f32.mrf.mxu0
      %v5264 = vadd.f32 0.0, %v5263
      %5265 = vmatmul.f32.gmra.mxu0 %v5130
      %v5266 = vpop.f32.mrf.mxu0
      %v5267 = vadd.f32 0.0, %v5266
      %5268 = vmatmul.f32.gmra.mxu0 %v5133
      %v5269 = vpop.f32.mrf.mxu0
      %v5270 = vadd.f32 0.0, %v5269
      %5271 = vmatmul.f32.gmra.mxu0 %v5136
      %v5272 = vpop.f32.mrf.mxu0
      %v5273 = vadd.f32 0.0, %v5272
      %5274 = vmatmul.f32.gmra.mxu0 %v5139
      %v5275 = vpop.f32.mrf.mxu0
      %v5276 = vadd.f32 0.0, %v5275
      %5277 = vmatmul.f32.gmra.mxu0 %v5142
      %v5278 = vpop.f32.mrf.mxu0
      %v5279 = vadd.f32 0.0, %v5278
      %5280 = vmatmul.f32.gmra.mxu0 %v5145
      %v5281 = vpop.f32.mrf.mxu0
      %v5282 = vadd.f32 0.0, %v5281
      %5283 = vmatmul.f32.gmra.mxu0 %v5148
      %v5284 = vpop.f32.mrf.mxu0
      %v5285 = vadd.f32 0.0, %v5284
      %5286 = vmatmul.f32.gmra.mxu0 %v5151
      %v5287 = vpop.f32.mrf.mxu0
      %v5288 = vadd.f32 0.0, %v5287
      %5289 = vmatmul.f32.gmra.mxu0 %v5154
      %v5290 = vpop.f32.mrf.mxu0
      %v5291 = vadd.f32 0.0, %v5290
      %5292 = vmatmul.f32.gmra.mxu0 %v5157
      %v5293 = vpop.f32.mrf.mxu0
      %v5294 = vadd.f32 0.0, %v5293
      %5295 = vmatmul.f32.gmra.mxu0 %v5160
      %v5296 = vpop.f32.mrf.mxu0
      %v5297 = vadd.f32 0.0, %v5296
      %5298 = vmatmul.f32.gmra.mxu0 %v5163
      %v5299 = vpop.f32.mrf.mxu0
      %v5300 = vadd.f32 0.0, %v5299
      %5301 = vmatmul.f32.gmra.mxu0 %v5166
      %v5302 = vpop.f32.mrf.mxu0
      %v5303 = vadd.f32 0.0, %v5302
      %5304 = vmatmul.f32.gmra.mxu0 %v5169
      %v5305 = vpop.f32.mrf.mxu0
      %v5306 = vadd.f32 0.0, %v5305
      %5307 = vmatmul.f32.gmra.mxu0 %v5172
      %v5308 = vpop.f32.mrf.mxu0
      %v5309 = vadd.f32 0.0, %v5308
      %5310 = vmatmul.f32.gmra.mxu0 %v5175
      %v5311 = vpop.f32.mrf.mxu0
      %v5312 = vadd.f32 0.0, %v5311
      %5313 = vmatmul.f32.gmra.mxu0 %v5178
      %v5314 = vpop.f32.mrf.mxu0
      %v5315 = vadd.f32 0.0, %v5314
      %5316 = vmatmul.f32.gmra.mxu0 %v5181
      %v5317 = vpop.f32.mrf.mxu0
      %v5318 = vadd.f32 0.0, %v5317
      %5319 = vmatmul.f32.gmra.mxu0 %v5184
      %v5320 = vpop.f32.mrf.mxu0
      %v5321 = vadd.f32 0.0, %v5320
      %5322 = vmatmul.f32.gmra.mxu0 %v5187
      %v5323 = vpop.f32.mrf.mxu0
      %v5324 = vadd.f32 0.0, %v5323
      %5325 = vmatmul.f32.gmra.mxu0 %v5190
      %v5326 = vpop.f32.mrf.mxu0
      %v5327 = vadd.f32 0.0, %v5326
      %5328 = vmatmul.f32.gmra.mxu0 %v5193
      %v5329 = vpop.f32.mrf.mxu0
      %v5330 = vadd.f32 0.0, %v5329
      %5331 = vmatmul.f32.gmra.mxu0 %v5196
      %v5332 = vpop.f32.mrf.mxu0
      %v5333 = vadd.f32 0.0, %v5332
      %5334 = vmatmul.f32.gmra.mxu0 %v5199
      %v5335 = vpop.f32.mrf.mxu0
      %v5336 = vadd.f32 0.0, %v5335
      %5337 = vmatmul.f32.gmra.mxu0 %v5202
      %v5338 = vpop.f32.mrf.mxu0
      %v5339 = vadd.f32 0.0, %v5338
      %5340 = vmatmul.f32.gmra.mxu0 %v5205
      %v5341 = vpop.f32.mrf.mxu0
      %v5342 = vadd.f32 0.0, %v5341
      %5343 = vmatmul.f32.gmra.mxu0 %v5208
      %v5344 = vpop.f32.mrf.mxu0
      %v5345 = vadd.f32 0.0, %v5344
      %5346 = vdwg.mxu0
      %v5347 = vadd.f32 %v5005, %v5228
      %v5348 = vadd.f32 %v5006, %v5231
      %v5349 = vadd.f32 %v5007, %v5234
      %v5350 = vadd.f32 %v5008, %v5237
      %v5351 = vadd.f32 %v5009, %v5240
      %v5352 = vadd.f32 %v5010, %v5243
      %v5353 = vadd.f32 %v5011, %v5246
      %v5354 = vadd.f32 %v5012, %v5249
      %v5355 = vadd.f32 %v5013, %v5252
      %v5356 = vadd.f32 %v5014, %v5255
      %v5357 = vadd.f32 %v5015, %v5258
      %v5358 = vadd.f32 %v5016, %v5261
      %v5359 = vadd.f32 %v5017, %v5264
      %v5360 = vadd.f32 %v5018, %v5267
      %v5361 = vadd.f32 %v5019, %v5270
      %v5362 = vadd.f32 %v5020, %v5273
      %v5363 = vadd.f32 %v5021, %v5276
      %v5364 = vadd.f32 %v5022, %v5279
      %v5365 = vadd.f32 %v5023, %v5282
      %v5366 = vadd.f32 %v5024, %v5285
      %v5367 = vadd.f32 %v5025, %v5288
      %v5368 = vadd.f32 %v5026, %v5291
      %v5369 = vadd.f32 %v5027, %v5294
      %v5370 = vadd.f32 %v5028, %v5297
      %v5371 = vadd.f32 %v5029, %v5300
      %v5372 = vadd.f32 %v5030, %v5303
      %v5373 = vadd.f32 %v5031, %v5306
      %v5374 = vadd.f32 %v5032, %v5309
      %v5375 = vadd.f32 %v5033, %v5312
      %v5376 = vadd.f32 %v5034, %v5315
      %v5377 = vadd.f32 %v5035, %v5318
      %v5378 = vadd.f32 %v5036, %v5321
      %v5379 = vadd.f32 %v5037, %v5324
      %v5380 = vadd.f32 %v5038, %v5327
      %v5381 = vadd.f32 %v5039, %v5330
      %v5382 = vadd.f32 %v5040, %v5333
      %v5383 = vadd.f32 %v5041, %v5336
      %v5384 = vadd.f32 %v5042, %v5339
      %v5385 = vadd.f32 %v5043, %v5342
      %v5386 = vadd.f32 %v5044, %v5345
      %v5387 = vld [vmem:[#allocation4 + $0x17] sm:$0xff]
      %v5388 = vld [vmem:[#allocation4 + $0x1f] sm:$0xff]
      %v5389 = vld [vmem:[#allocation4 + $0x27] sm:$0xff]
      %v5390 = vld [vmem:[#allocation4 + $0x2f] sm:$0xff]
      %v5391 = vld [vmem:[#allocation4 + $0x37] sm:$0xff]
      %v5392 = vld [vmem:[#allocation4 + $0x3f] sm:$0xff]
      %v5393 = vld [vmem:[#allocation4 + $0x47] sm:$0xff]
      %v5394 = vld [vmem:[#allocation4 + $0x4f] sm:$0xff]
      %v5395 = vld [vmem:[#allocation4 + $0x57] sm:$0xff]
      %v5396 = vld [vmem:[#allocation4 + $0x5f] sm:$0xff]
      %v5397 = vld [vmem:[#allocation4 + $0x67] sm:$0xff]
      %v5398 = vld [vmem:[#allocation4 + $0x6f] sm:$0xff]
      %v5399 = vld [vmem:[#allocation4 + $0x77] sm:$0xff]
      %v5400 = vld [vmem:[#allocation4 + $0x7f] sm:$0xff]
      %v5401 = vld [vmem:[#allocation4 + $0x87] sm:$0xff]
      %v5402 = vld [vmem:[#allocation4 + $0x8f] sm:$0xff]
      %v5403 = vld [vmem:[#allocation4 + $0x97] sm:$0xff]
      %v5404 = vld [vmem:[#allocation4 + $0x9f] sm:$0xff]
      %v5405 = vld [vmem:[#allocation4 + $0xa7] sm:$0xff]
      %v5406 = vld [vmem:[#allocation4 + $0xaf] sm:$0xff]
      %v5407 = vld [vmem:[#allocation4 + $0xb7] sm:$0xff]
      %v5408 = vld [vmem:[#allocation4 + $0xbf] sm:$0xff]
      %v5409 = vld [vmem:[#allocation4 + $0xc7] sm:$0xff]
      %v5410 = vld [vmem:[#allocation4 + $0xcf] sm:$0xff]
      %v5411 = vld [vmem:[#allocation4 + $0xd7] sm:$0xff]
      %v5412 = vld [vmem:[#allocation4 + $0xdf] sm:$0xff]
      %v5413 = vld [vmem:[#allocation4 + $0xe7] sm:$0xff]
      %v5414 = vld [vmem:[#allocation4 + $0xef] sm:$0xff]
      %v5415 = vld [vmem:[#allocation4 + $0xf7] sm:$0xff]
      %v5416 = vld [vmem:[#allocation4 + $0xff] sm:$0xff]
      %v5417 = vld [vmem:[#allocation4 + $0x107] sm:$0xff]
      %v5418 = vld [vmem:[#allocation4 + $0x10f] sm:$0xff]
      %v5419 = vld [vmem:[#allocation4 + $0x117] sm:$0xff]
      %v5420 = vld [vmem:[#allocation4 + $0x11f] sm:$0xff]
      %v5421 = vld [vmem:[#allocation4 + $0x127] sm:$0xff]
      %v5422 = vld [vmem:[#allocation4 + $0x12f] sm:$0xff]
      %v5423 = vld [vmem:[#allocation4 + $0x137] sm:$0xff]
      %v5424 = vld [vmem:[#allocation4 + $0x13f] sm:$0xff]
      %v5425 = vld [vmem:[#allocation4 + $0x147] sm:$0xff]
      %v5426 = vld [vmem:[#allocation4 + $0x14f] sm:$0xff]
      %s5427 = scalar_lea.vmem %s7, 256
      %v5428 = vld [vmem:[%s5427] sm:$0xff]
      %v5429 = vld [vmem:[%s5427 + $0x8] sm:$0xff]
      %v5430 = vld [vmem:[%s5427 + $0x10] sm:$0xff]
      %v5431 = vld [vmem:[%s5427 + $0x18] sm:$0xff]
      %v5433 = vsel %vm409, %v5387, 0
      %v5436 = vsel %vm409, %v5388, 0
      %v5439 = vsel %vm409, %v5389, 0
      %v5442 = vsel %vm409, %v5390, 0
      %v5445 = vsel %vm409, %v5391, 0
      %v5448 = vsel %vm409, %v5392, 0
      %v5451 = vsel %vm409, %v5393, 0
      %v5454 = vsel %vm409, %v5394, 0
      %v5457 = vsel %vm409, %v5395, 0
      %v5460 = vsel %vm409, %v5396, 0
      %v5463 = vsel %vm409, %v5397, 0
      %v5466 = vsel %vm409, %v5398, 0
      %v5469 = vsel %vm409, %v5399, 0
      %v5472 = vsel %vm409, %v5400, 0
      %v5475 = vsel %vm409, %v5401, 0
      %v5478 = vsel %vm409, %v5402, 0
      %v5481 = vsel %vm409, %v5403, 0
      %v5484 = vsel %vm409, %v5404, 0
      %v5487 = vsel %vm409, %v5405, 0
      %v5490 = vsel %vm409, %v5406, 0
      %v5493 = vsel %vm409, %v5407, 0
      %v5496 = vsel %vm409, %v5408, 0
      %v5499 = vsel %vm409, %v5409, 0
      %v5502 = vsel %vm409, %v5410, 0
      %v5505 = vsel %vm409, %v5411, 0
      %v5508 = vsel %vm409, %v5412, 0
      %v5511 = vsel %vm409, %v5413, 0
      %v5514 = vsel %vm409, %v5414, 0
      %v5517 = vsel %vm409, %v5415, 0
      %v5520 = vsel %vm409, %v5416, 0
      %v5523 = vsel %vm409, %v5417, 0
      %v5526 = vsel %vm409, %v5418, 0
      %v5529 = vsel %vm409, %v5419, 0
      %v5532 = vsel %vm409, %v5420, 0
      %v5535 = vsel %vm409, %v5421, 0
      %v5538 = vsel %vm409, %v5422, 0
      %v5541 = vsel %vm409, %v5423, 0
      %v5544 = vsel %vm409, %v5424, 0
      %v5547 = vsel %vm409, %v5425, 0
      %v5550 = vsel %vm409, %v5426, 0
      %5552 = vmatpush.msra.mxu0 0.0
      %5553 = vmatpush.msra.mxu0 0.0
      %5554 = vmatpush.msra.mxu0 0.0
      %5555 = vmatpush.msra.mxu0 0.0
      %5556 = vmatpush.msra.mxu0 0.0
      %5557 = vmatpush.msra.mxu0 0.0
      %5558 = vmatpush.msra.mxu0 0.0
      %5559 = vmatpush.msra.mxu0 0.0
      %5560 = vmatpush.msra.mxu0 0.0
      %5561 = vmatpush.msra.mxu0 0.0
      %5562 = vmatpush.msra.mxu0 0.0
      %5563 = vmatpush.msra.mxu0 0.0
      %5564 = vmatpush.msra.mxu0 %v5431
      %5565 = vmatpush.msra.mxu0 %v5430
      %5566 = vmatpush.msra.mxu0 %v5429
      %5567 = vmatpush.msra.mxu0 %v5428
      %5568 = vmatmul.f32.gmra.mxu0 %v5433
      %v5569 = vpop.f32.mrf.mxu0
      %v5570 = vadd.f32 0.0, %v5569
      %5571 = vmatmul.f32.gmra.mxu0 %v5436
      %v5572 = vpop.f32.mrf.mxu0
      %v5573 = vadd.f32 0.0, %v5572
      %5574 = vmatmul.f32.gmra.mxu0 %v5439
      %v5575 = vpop.f32.mrf.mxu0
      %v5576 = vadd.f32 0.0, %v5575
      %5577 = vmatmul.f32.gmra.mxu0 %v5442
      %v5578 = vpop.f32.mrf.mxu0
      %v5579 = vadd.f32 0.0, %v5578
      %5580 = vmatmul.f32.gmra.mxu0 %v5445
      %v5581 = vpop.f32.mrf.mxu0
      %v5582 = vadd.f32 0.0, %v5581
      %5583 = vmatmul.f32.gmra.mxu0 %v5448
      %v5584 = vpop.f32.mrf.mxu0
      %v5585 = vadd.f32 0.0, %v5584
      %5586 = vmatmul.f32.gmra.mxu0 %v5451
      %v5587 = vpop.f32.mrf.mxu0
      %v5588 = vadd.f32 0.0, %v5587
      %5589 = vmatmul.f32.gmra.mxu0 %v5454
      %v5590 = vpop.f32.mrf.mxu0
      %v5591 = vadd.f32 0.0, %v5590
      %5592 = vmatmul.f32.gmra.mxu0 %v5457
      %v5593 = vpop.f32.mrf.mxu0
      %v5594 = vadd.f32 0.0, %v5593
      %5595 = vmatmul.f32.gmra.mxu0 %v5460
      %v5596 = vpop.f32.mrf.mxu0
      %v5597 = vadd.f32 0.0, %v5596
      %5598 = vmatmul.f32.gmra.mxu0 %v5463
      %v5599 = vpop.f32.mrf.mxu0
      %v5600 = vadd.f32 0.0, %v5599
      %5601 = vmatmul.f32.gmra.mxu0 %v5466
      %v5602 = vpop.f32.mrf.mxu0
      %v5603 = vadd.f32 0.0, %v5602
      %5604 = vmatmul.f32.gmra.mxu0 %v5469
      %v5605 = vpop.f32.mrf.mxu0
      %v5606 = vadd.f32 0.0, %v5605
      %5607 = vmatmul.f32.gmra.mxu0 %v5472
      %v5608 = vpop.f32.mrf.mxu0
      %v5609 = vadd.f32 0.0, %v5608
      %5610 = vmatmul.f32.gmra.mxu0 %v5475
      %v5611 = vpop.f32.mrf.mxu0
      %v5612 = vadd.f32 0.0, %v5611
      %5613 = vmatmul.f32.gmra.mxu0 %v5478
      %v5614 = vpop.f32.mrf.mxu0
      %v5615 = vadd.f32 0.0, %v5614
      %5616 = vmatmul.f32.gmra.mxu0 %v5481
      %v5617 = vpop.f32.mrf.mxu0
      %v5618 = vadd.f32 0.0, %v5617
      %5619 = vmatmul.f32.gmra.mxu0 %v5484
      %v5620 = vpop.f32.mrf.mxu0
      %v5621 = vadd.f32 0.0, %v5620
      %5622 = vmatmul.f32.gmra.mxu0 %v5487
      %v5623 = vpop.f32.mrf.mxu0
      %v5624 = vadd.f32 0.0, %v5623
      %5625 = vmatmul.f32.gmra.mxu0 %v5490
      %v5626 = vpop.f32.mrf.mxu0
      %v5627 = vadd.f32 0.0, %v5626
      %5628 = vmatmul.f32.gmra.mxu0 %v5493
      %v5629 = vpop.f32.mrf.mxu0
      %v5630 = vadd.f32 0.0, %v5629
      %5631 = vmatmul.f32.gmra.mxu0 %v5496
      %v5632 = vpop.f32.mrf.mxu0
      %v5633 = vadd.f32 0.0, %v5632
      %5634 = vmatmul.f32.gmra.mxu0 %v5499
      %v5635 = vpop.f32.mrf.mxu0
      %v5636 = vadd.f32 0.0, %v5635
      %5637 = vmatmul.f32.gmra.mxu0 %v5502
      %v5638 = vpop.f32.mrf.mxu0
      %v5639 = vadd.f32 0.0, %v5638
      %5640 = vmatmul.f32.gmra.mxu0 %v5505
      %v5641 = vpop.f32.mrf.mxu0
      %v5642 = vadd.f32 0.0, %v5641
      %5643 = vmatmul.f32.gmra.mxu0 %v5508
      %v5644 = vpop.f32.mrf.mxu0
      %v5645 = vadd.f32 0.0, %v5644
      %5646 = vmatmul.f32.gmra.mxu0 %v5511
      %v5647 = vpop.f32.mrf.mxu0
      %v5648 = vadd.f32 0.0, %v5647
      %5649 = vmatmul.f32.gmra.mxu0 %v5514
      %v5650 = vpop.f32.mrf.mxu0
      %v5651 = vadd.f32 0.0, %v5650
      %5652 = vmatmul.f32.gmra.mxu0 %v5517
      %v5653 = vpop.f32.mrf.mxu0
      %v5654 = vadd.f32 0.0, %v5653
      %5655 = vmatmul.f32.gmra.mxu0 %v5520
      %v5656 = vpop.f32.mrf.mxu0
      %v5657 = vadd.f32 0.0, %v5656
      %5658 = vmatmul.f32.gmra.mxu0 %v5523
      %v5659 = vpop.f32.mrf.mxu0
      %v5660 = vadd.f32 0.0, %v5659
      %5661 = vmatmul.f32.gmra.mxu0 %v5526
      %v5662 = vpop.f32.mrf.mxu0
      %v5663 = vadd.f32 0.0, %v5662
      %5664 = vmatmul.f32.gmra.mxu0 %v5529
      %v5665 = vpop.f32.mrf.mxu0
      %v5666 = vadd.f32 0.0, %v5665
      %5667 = vmatmul.f32.gmra.mxu0 %v5532
      %v5668 = vpop.f32.mrf.mxu0
      %v5669 = vadd.f32 0.0, %v5668
      %5670 = vmatmul.f32.gmra.mxu0 %v5535
      %v5671 = vpop.f32.mrf.mxu0
      %v5672 = vadd.f32 0.0, %v5671
      %5673 = vmatmul.f32.gmra.mxu0 %v5538
      %v5674 = vpop.f32.mrf.mxu0
      %v5675 = vadd.f32 0.0, %v5674
      %5676 = vmatmul.f32.gmra.mxu0 %v5541
      %v5677 = vpop.f32.mrf.mxu0
      %v5678 = vadd.f32 0.0, %v5677
      %5679 = vmatmul.f32.gmra.mxu0 %v5544
      %v5680 = vpop.f32.mrf.mxu0
      %v5681 = vadd.f32 0.0, %v5680
      %5682 = vmatmul.f32.gmra.mxu0 %v5547
      %v5683 = vpop.f32.mrf.mxu0
      %v5684 = vadd.f32 0.0, %v5683
      %5685 = vmatmul.f32.gmra.mxu0 %v5550
      %v5686 = vpop.f32.mrf.mxu0
      %v5687 = vadd.f32 0.0, %v5686
      %5688 = vdwg.mxu0
      %v5689 = vadd.f32 %v5347, %v5570
      %v5690 = vadd.f32 %v5348, %v5573
      %v5691 = vadd.f32 %v5349, %v5576
      %v5692 = vadd.f32 %v5350, %v5579
      %v5693 = vadd.f32 %v5351, %v5582
      %v5694 = vadd.f32 %v5352, %v5585
      %v5695 = vadd.f32 %v5353, %v5588
      %v5696 = vadd.f32 %v5354, %v5591
      %v5697 = vadd.f32 %v5355, %v5594
      %v5698 = vadd.f32 %v5356, %v5597
      %v5699 = vadd.f32 %v5357, %v5600
      %v5700 = vadd.f32 %v5358, %v5603
      %v5701 = vadd.f32 %v5359, %v5606
      %v5702 = vadd.f32 %v5360, %v5609
      %v5703 = vadd.f32 %v5361, %v5612
      %v5704 = vadd.f32 %v5362, %v5615
      %v5705 = vadd.f32 %v5363, %v5618
      %v5706 = vadd.f32 %v5364, %v5621
      %v5707 = vadd.f32 %v5365, %v5624
      %v5708 = vadd.f32 %v5366, %v5627
      %v5709 = vadd.f32 %v5367, %v5630
      %v5710 = vadd.f32 %v5368, %v5633
      %v5711 = vadd.f32 %v5369, %v5636
      %v5712 = vadd.f32 %v5370, %v5639
      %v5713 = vadd.f32 %v5371, %v5642
      %v5714 = vadd.f32 %v5372, %v5645
      %v5715 = vadd.f32 %v5373, %v5648
      %v5716 = vadd.f32 %v5374, %v5651
      %v5717 = vadd.f32 %v5375, %v5654
      %v5718 = vadd.f32 %v5376, %v5657
      %v5719 = vadd.f32 %v5377, %v5660
      %v5720 = vadd.f32 %v5378, %v5663
      %v5721 = vadd.f32 %v5379, %v5666
      %v5722 = vadd.f32 %v5380, %v5669
      %v5723 = vadd.f32 %v5381, %v5672
      %v5724 = vadd.f32 %v5382, %v5675
      %v5725 = vadd.f32 %v5383, %v5678
      %v5726 = vadd.f32 %v5384, %v5681
      %v5727 = vadd.f32 %v5385, %v5684
      %v5728 = vadd.f32 %v5386, %v5687
      %v5729 = vld [vmem:[#allocation4 + $0x18] sm:$0xff]
      %v5730 = vld [vmem:[#allocation4 + $0x20] sm:$0xff]
      %v5731 = vld [vmem:[#allocation4 + $0x28] sm:$0xff]
      %v5732 = vld [vmem:[#allocation4 + $0x30] sm:$0xff]
      %v5733 = vld [vmem:[#allocation4 + $0x38] sm:$0xff]
      %v5734 = vld [vmem:[#allocation4 + $0x40] sm:$0xff]
      %v5735 = vld [vmem:[#allocation4 + $0x48] sm:$0xff]
      %v5736 = vld [vmem:[#allocation4 + $0x50] sm:$0xff]
      %v5737 = vld [vmem:[#allocation4 + $0x58] sm:$0xff]
      %v5738 = vld [vmem:[#allocation4 + $0x60] sm:$0xff]
      %v5739 = vld [vmem:[#allocation4 + $0x68] sm:$0xff]
      %v5740 = vld [vmem:[#allocation4 + $0x70] sm:$0xff]
      %v5741 = vld [vmem:[#allocation4 + $0x78] sm:$0xff]
      %v5742 = vld [vmem:[#allocation4 + $0x80] sm:$0xff]
      %v5743 = vld [vmem:[#allocation4 + $0x88] sm:$0xff]
      %v5744 = vld [vmem:[#allocation4 + $0x90] sm:$0xff]
      %v5745 = vld [vmem:[#allocation4 + $0x98] sm:$0xff]
      %v5746 = vld [vmem:[#allocation4 + $0xa0] sm:$0xff]
      %v5747 = vld [vmem:[#allocation4 + $0xa8] sm:$0xff]
      %v5748 = vld [vmem:[#allocation4 + $0xb0] sm:$0xff]
      %v5749 = vld [vmem:[#allocation4 + $0xb8] sm:$0xff]
      %v5750 = vld [vmem:[#allocation4 + $0xc0] sm:$0xff]
      %v5751 = vld [vmem:[#allocation4 + $0xc8] sm:$0xff]
      %v5752 = vld [vmem:[#allocation4 + $0xd0] sm:$0xff]
      %v5753 = vld [vmem:[#allocation4 + $0xd8] sm:$0xff]
      %v5754 = vld [vmem:[#allocation4 + $0xe0] sm:$0xff]
      %v5755 = vld [vmem:[#allocation4 + $0xe8] sm:$0xff]
      %v5756 = vld [vmem:[#allocation4 + $0xf0] sm:$0xff]
      %v5757 = vld [vmem:[#allocation4 + $0xf8] sm:$0xff]
      %v5758 = vld [vmem:[#allocation4 + $0x100] sm:$0xff]
      %v5759 = vld [vmem:[#allocation4 + $0x108] sm:$0xff]
      %v5760 = vld [vmem:[#allocation4 + $0x110] sm:$0xff]
      %v5761 = vld [vmem:[#allocation4 + $0x118] sm:$0xff]
      %v5762 = vld [vmem:[#allocation4 + $0x120] sm:$0xff]
      %v5763 = vld [vmem:[#allocation4 + $0x128] sm:$0xff]
      %v5764 = vld [vmem:[#allocation4 + $0x130] sm:$0xff]
      %v5765 = vld [vmem:[#allocation4 + $0x138] sm:$0xff]
      %v5766 = vld [vmem:[#allocation4 + $0x140] sm:$0xff]
      %v5767 = vld [vmem:[#allocation4 + $0x148] sm:$0xff]
      %v5768 = vld [vmem:[#allocation4 + $0x150] sm:$0xff]
      %s5769 = scalar_lea.vmem %s7, 288
      %v5770 = vld [vmem:[%s5769] sm:$0xff]
      %v5771 = vld [vmem:[%s5769 + $0x8] sm:$0xff]
      %v5772 = vld [vmem:[%s5769 + $0x10] sm:$0xff]
      %v5773 = vld [vmem:[%s5769 + $0x18] sm:$0xff]
      %v5775 = vsel %vm409, %v5729, 0
      %v5778 = vsel %vm409, %v5730, 0
      %v5781 = vsel %vm409, %v5731, 0
      %v5784 = vsel %vm409, %v5732, 0
      %v5787 = vsel %vm409, %v5733, 0
      %v5790 = vsel %vm409, %v5734, 0
      %v5793 = vsel %vm409, %v5735, 0
      %v5796 = vsel %vm409, %v5736, 0
      %v5799 = vsel %vm409, %v5737, 0
      %v5802 = vsel %vm409, %v5738, 0
      %v5805 = vsel %vm409, %v5739, 0
      %v5808 = vsel %vm409, %v5740, 0
      %v5811 = vsel %vm409, %v5741, 0
      %v5814 = vsel %vm409, %v5742, 0
      %v5817 = vsel %vm409, %v5743, 0
      %v5820 = vsel %vm409, %v5744, 0
      %v5823 = vsel %vm409, %v5745, 0
      %v5826 = vsel %vm409, %v5746, 0
      %v5829 = vsel %vm409, %v5747, 0
      %v5832 = vsel %vm409, %v5748, 0
      %v5835 = vsel %vm409, %v5749, 0
      %v5838 = vsel %vm409, %v5750, 0
      %v5841 = vsel %vm409, %v5751, 0
      %v5844 = vsel %vm409, %v5752, 0
      %v5847 = vsel %vm409, %v5753, 0
      %v5850 = vsel %vm409, %v5754, 0
      %v5853 = vsel %vm409, %v5755, 0
      %v5856 = vsel %vm409, %v5756, 0
      %v5859 = vsel %vm409, %v5757, 0
      %v5862 = vsel %vm409, %v5758, 0
      %v5865 = vsel %vm409, %v5759, 0
      %v5868 = vsel %vm409, %v5760, 0
      %v5871 = vsel %vm409, %v5761, 0
      %v5874 = vsel %vm409, %v5762, 0
      %v5877 = vsel %vm409, %v5763, 0
      %v5880 = vsel %vm409, %v5764, 0
      %v5883 = vsel %vm409, %v5765, 0
      %v5886 = vsel %vm409, %v5766, 0
      %v5889 = vsel %vm409, %v5767, 0
      %v5892 = vsel %vm409, %v5768, 0
      %5894 = vmatpush.msra.mxu0 0.0
      %5895 = vmatpush.msra.mxu0 0.0
      %5896 = vmatpush.msra.mxu0 0.0
      %5897 = vmatpush.msra.mxu0 0.0
      %5898 = vmatpush.msra.mxu0 0.0
      %5899 = vmatpush.msra.mxu0 0.0
      %5900 = vmatpush.msra.mxu0 0.0
      %5901 = vmatpush.msra.mxu0 0.0
      %5902 = vmatpush.msra.mxu0 0.0
      %5903 = vmatpush.msra.mxu0 0.0
      %5904 = vmatpush.msra.mxu0 0.0
      %5905 = vmatpush.msra.mxu0 0.0
      %5906 = vmatpush.msra.mxu0 %v5773
      %5907 = vmatpush.msra.mxu0 %v5772
      %5908 = vmatpush.msra.mxu0 %v5771
      %5909 = vmatpush.msra.mxu0 %v5770
      %5910 = vmatmul.f32.gmra.mxu0 %v5775
      %v5911 = vpop.f32.mrf.mxu0
      %v5912 = vadd.f32 0.0, %v5911
      %5913 = vmatmul.f32.gmra.mxu0 %v5778
      %v5914 = vpop.f32.mrf.mxu0
      %v5915 = vadd.f32 0.0, %v5914
      %5916 = vmatmul.f32.gmra.mxu0 %v5781
      %v5917 = vpop.f32.mrf.mxu0
      %v5918 = vadd.f32 0.0, %v5917
      %5919 = vmatmul.f32.gmra.mxu0 %v5784
      %v5920 = vpop.f32.mrf.mxu0
      %v5921 = vadd.f32 0.0, %v5920
      %5922 = vmatmul.f32.gmra.mxu0 %v5787
      %v5923 = vpop.f32.mrf.mxu0
      %v5924 = vadd.f32 0.0, %v5923
      %5925 = vmatmul.f32.gmra.mxu0 %v5790
      %v5926 = vpop.f32.mrf.mxu0
      %v5927 = vadd.f32 0.0, %v5926
      %5928 = vmatmul.f32.gmra.mxu0 %v5793
      %v5929 = vpop.f32.mrf.mxu0
      %v5930 = vadd.f32 0.0, %v5929
      %5931 = vmatmul.f32.gmra.mxu0 %v5796
      %v5932 = vpop.f32.mrf.mxu0
      %v5933 = vadd.f32 0.0, %v5932
      %5934 = vmatmul.f32.gmra.mxu0 %v5799
      %v5935 = vpop.f32.mrf.mxu0
      %v5936 = vadd.f32 0.0, %v5935
      %5937 = vmatmul.f32.gmra.mxu0 %v5802
      %v5938 = vpop.f32.mrf.mxu0
      %v5939 = vadd.f32 0.0, %v5938
      %5940 = vmatmul.f32.gmra.mxu0 %v5805
      %v5941 = vpop.f32.mrf.mxu0
      %v5942 = vadd.f32 0.0, %v5941
      %5943 = vmatmul.f32.gmra.mxu0 %v5808
      %v5944 = vpop.f32.mrf.mxu0
      %v5945 = vadd.f32 0.0, %v5944
      %5946 = vmatmul.f32.gmra.mxu0 %v5811
      %v5947 = vpop.f32.mrf.mxu0
      %v5948 = vadd.f32 0.0, %v5947
      %5949 = vmatmul.f32.gmra.mxu0 %v5814
      %v5950 = vpop.f32.mrf.mxu0
      %v5951 = vadd.f32 0.0, %v5950
      %5952 = vmatmul.f32.gmra.mxu0 %v5817
      %v5953 = vpop.f32.mrf.mxu0
      %v5954 = vadd.f32 0.0, %v5953
      %5955 = vmatmul.f32.gmra.mxu0 %v5820
      %v5956 = vpop.f32.mrf.mxu0
      %v5957 = vadd.f32 0.0, %v5956
      %5958 = vmatmul.f32.gmra.mxu0 %v5823
      %v5959 = vpop.f32.mrf.mxu0
      %v5960 = vadd.f32 0.0, %v5959
      %5961 = vmatmul.f32.gmra.mxu0 %v5826
      %v5962 = vpop.f32.mrf.mxu0
      %v5963 = vadd.f32 0.0, %v5962
      %5964 = vmatmul.f32.gmra.mxu0 %v5829
      %v5965 = vpop.f32.mrf.mxu0
      %v5966 = vadd.f32 0.0, %v5965
      %5967 = vmatmul.f32.gmra.mxu0 %v5832
      %v5968 = vpop.f32.mrf.mxu0
      %v5969 = vadd.f32 0.0, %v5968
      %5970 = vmatmul.f32.gmra.mxu0 %v5835
      %v5971 = vpop.f32.mrf.mxu0
      %v5972 = vadd.f32 0.0, %v5971
      %5973 = vmatmul.f32.gmra.mxu0 %v5838
      %v5974 = vpop.f32.mrf.mxu0
      %v5975 = vadd.f32 0.0, %v5974
      %5976 = vmatmul.f32.gmra.mxu0 %v5841
      %v5977 = vpop.f32.mrf.mxu0
      %v5978 = vadd.f32 0.0, %v5977
      %5979 = vmatmul.f32.gmra.mxu0 %v5844
      %v5980 = vpop.f32.mrf.mxu0
      %v5981 = vadd.f32 0.0, %v5980
      %5982 = vmatmul.f32.gmra.mxu0 %v5847
      %v5983 = vpop.f32.mrf.mxu0
      %v5984 = vadd.f32 0.0, %v5983
      %5985 = vmatmul.f32.gmra.mxu0 %v5850
      %v5986 = vpop.f32.mrf.mxu0
      %v5987 = vadd.f32 0.0, %v5986
      %5988 = vmatmul.f32.gmra.mxu0 %v5853
      %v5989 = vpop.f32.mrf.mxu0
      %v5990 = vadd.f32 0.0, %v5989
      %5991 = vmatmul.f32.gmra.mxu0 %v5856
      %v5992 = vpop.f32.mrf.mxu0
      %v5993 = vadd.f32 0.0, %v5992
      %5994 = vmatmul.f32.gmra.mxu0 %v5859
      %v5995 = vpop.f32.mrf.mxu0
      %v5996 = vadd.f32 0.0, %v5995
      %5997 = vmatmul.f32.gmra.mxu0 %v5862
      %v5998 = vpop.f32.mrf.mxu0
      %v5999 = vadd.f32 0.0, %v5998
      %6000 = vmatmul.f32.gmra.mxu0 %v5865
      %v6001 = vpop.f32.mrf.mxu0
      %v6002 = vadd.f32 0.0, %v6001
      %6003 = vmatmul.f32.gmra.mxu0 %v5868
      %v6004 = vpop.f32.mrf.mxu0
      %v6005 = vadd.f32 0.0, %v6004
      %6006 = vmatmul.f32.gmra.mxu0 %v5871
      %v6007 = vpop.f32.mrf.mxu0
      %v6008 = vadd.f32 0.0, %v6007
      %6009 = vmatmul.f32.gmra.mxu0 %v5874
      %v6010 = vpop.f32.mrf.mxu0
      %v6011 = vadd.f32 0.0, %v6010
      %6012 = vmatmul.f32.gmra.mxu0 %v5877
      %v6013 = vpop.f32.mrf.mxu0
      %v6014 = vadd.f32 0.0, %v6013
      %6015 = vmatmul.f32.gmra.mxu0 %v5880
      %v6016 = vpop.f32.mrf.mxu0
      %v6017 = vadd.f32 0.0, %v6016
      %6018 = vmatmul.f32.gmra.mxu0 %v5883
      %v6019 = vpop.f32.mrf.mxu0
      %v6020 = vadd.f32 0.0, %v6019
      %6021 = vmatmul.f32.gmra.mxu0 %v5886
      %v6022 = vpop.f32.mrf.mxu0
      %v6023 = vadd.f32 0.0, %v6022
      %6024 = vmatmul.f32.gmra.mxu0 %v5889
      %v6025 = vpop.f32.mrf.mxu0
      %v6026 = vadd.f32 0.0, %v6025
      %6027 = vmatmul.f32.gmra.mxu0 %v5892
      %v6028 = vpop.f32.mrf.mxu0
      %v6029 = vadd.f32 0.0, %v6028
      %6030 = vdwg.mxu0
      %v6031 = vadd.f32 %v5689, %v5912
      %v6032 = vadd.f32 %v5690, %v5915
      %v6033 = vadd.f32 %v5691, %v5918
      %v6034 = vadd.f32 %v5692, %v5921
      %v6035 = vadd.f32 %v5693, %v5924
      %v6036 = vadd.f32 %v5694, %v5927
      %v6037 = vadd.f32 %v5695, %v5930
      %v6038 = vadd.f32 %v5696, %v5933
      %v6039 = vadd.f32 %v5697, %v5936
      %v6040 = vadd.f32 %v5698, %v5939
      %v6041 = vadd.f32 %v5699, %v5942
      %v6042 = vadd.f32 %v5700, %v5945
      %v6043 = vadd.f32 %v5701, %v5948
      %v6044 = vadd.f32 %v5702, %v5951
      %v6045 = vadd.f32 %v5703, %v5954
      %v6046 = vadd.f32 %v5704, %v5957
      %v6047 = vadd.f32 %v5705, %v5960
      %v6048 = vadd.f32 %v5706, %v5963
      %v6049 = vadd.f32 %v5707, %v5966
      %v6050 = vadd.f32 %v5708, %v5969
      %v6051 = vadd.f32 %v5709, %v5972
      %v6052 = vadd.f32 %v5710, %v5975
      %v6053 = vadd.f32 %v5711, %v5978
      %v6054 = vadd.f32 %v5712, %v5981
      %v6055 = vadd.f32 %v5713, %v5984
      %v6056 = vadd.f32 %v5714, %v5987
      %v6057 = vadd.f32 %v5715, %v5990
      %v6058 = vadd.f32 %v5716, %v5993
      %v6059 = vadd.f32 %v5717, %v5996
      %v6060 = vadd.f32 %v5718, %v5999
      %v6061 = vadd.f32 %v5719, %v6002
      %v6062 = vadd.f32 %v5720, %v6005
      %v6063 = vadd.f32 %v5721, %v6008
      %v6064 = vadd.f32 %v5722, %v6011
      %v6065 = vadd.f32 %v5723, %v6014
      %v6066 = vadd.f32 %v5724, %v6017
      %v6067 = vadd.f32 %v5725, %v6020
      %v6068 = vadd.f32 %v5726, %v6023
      %v6069 = vadd.f32 %v5727, %v6026
      %v6070 = vadd.f32 %v5728, %v6029
      %v6071 = vld [vmem:[#allocation4 + $0x28] sm:$0xff]
      %v6072 = vld [vmem:[#allocation4 + $0x30] sm:$0xff]
      %v6073 = vld [vmem:[#allocation4 + $0x38] sm:$0xff]
      %v6074 = vld [vmem:[#allocation4 + $0x40] sm:$0xff]
      %v6075 = vld [vmem:[#allocation4 + $0x48] sm:$0xff]
      %v6076 = vld [vmem:[#allocation4 + $0x50] sm:$0xff]
      %v6077 = vld [vmem:[#allocation4 + $0x58] sm:$0xff]
      %v6078 = vld [vmem:[#allocation4 + $0x60] sm:$0xff]
      %v6079 = vld [vmem:[#allocation4 + $0x68] sm:$0xff]
      %v6080 = vld [vmem:[#allocation4 + $0x70] sm:$0xff]
      %v6081 = vld [vmem:[#allocation4 + $0x78] sm:$0xff]
      %v6082 = vld [vmem:[#allocation4 + $0x80] sm:$0xff]
      %v6083 = vld [vmem:[#allocation4 + $0x88] sm:$0xff]
      %v6084 = vld [vmem:[#allocation4 + $0x90] sm:$0xff]
      %v6085 = vld [vmem:[#allocation4 + $0x98] sm:$0xff]
      %v6086 = vld [vmem:[#allocation4 + $0xa0] sm:$0xff]
      %v6087 = vld [vmem:[#allocation4 + $0xa8] sm:$0xff]
      %v6088 = vld [vmem:[#allocation4 + $0xb0] sm:$0xff]
      %v6089 = vld [vmem:[#allocation4 + $0xb8] sm:$0xff]
      %v6090 = vld [vmem:[#allocation4 + $0xc0] sm:$0xff]
      %v6091 = vld [vmem:[#allocation4 + $0xc8] sm:$0xff]
      %v6092 = vld [vmem:[#allocation4 + $0xd0] sm:$0xff]
      %v6093 = vld [vmem:[#allocation4 + $0xd8] sm:$0xff]
      %v6094 = vld [vmem:[#allocation4 + $0xe0] sm:$0xff]
      %v6095 = vld [vmem:[#allocation4 + $0xe8] sm:$0xff]
      %v6096 = vld [vmem:[#allocation4 + $0xf0] sm:$0xff]
      %v6097 = vld [vmem:[#allocation4 + $0xf8] sm:$0xff]
      %v6098 = vld [vmem:[#allocation4 + $0x100] sm:$0xff]
      %v6099 = vld [vmem:[#allocation4 + $0x108] sm:$0xff]
      %v6100 = vld [vmem:[#allocation4 + $0x110] sm:$0xff]
      %v6101 = vld [vmem:[#allocation4 + $0x118] sm:$0xff]
      %v6102 = vld [vmem:[#allocation4 + $0x120] sm:$0xff]
      %v6103 = vld [vmem:[#allocation4 + $0x128] sm:$0xff]
      %v6104 = vld [vmem:[#allocation4 + $0x130] sm:$0xff]
      %v6105 = vld [vmem:[#allocation4 + $0x138] sm:$0xff]
      %v6106 = vld [vmem:[#allocation4 + $0x140] sm:$0xff]
      %v6107 = vld [vmem:[#allocation4 + $0x148] sm:$0xff]
      %v6108 = vld [vmem:[#allocation4 + $0x150] sm:$0xff]
      %v6109 = vld [vmem:[#allocation4 + $0x158] sm:$0xff]
      %v6110 = vld [vmem:[#allocation4 + $0x160] sm:$0xff]
      %s6111 = scalar_lea.vmem %s7, 320
      %v6112 = vld [vmem:[%s6111] sm:$0xff]
      %v6113 = vld [vmem:[%s6111 + $0x8] sm:$0xff]
      %v6114 = vld [vmem:[%s6111 + $0x10] sm:$0xff]
      %v6115 = vld [vmem:[%s6111 + $0x18] sm:$0xff]
      %v6117 = vsel %vm409, %v6071, 0
      %v6120 = vsel %vm409, %v6072, 0
      %v6123 = vsel %vm409, %v6073, 0
      %v6126 = vsel %vm409, %v6074, 0
      %v6129 = vsel %vm409, %v6075, 0
      %v6132 = vsel %vm409, %v6076, 0
      %v6135 = vsel %vm409, %v6077, 0
      %v6138 = vsel %vm409, %v6078, 0
      %v6141 = vsel %vm409, %v6079, 0
      %v6144 = vsel %vm409, %v6080, 0
      %v6147 = vsel %vm409, %v6081, 0
      %v6150 = vsel %vm409, %v6082, 0
      %v6153 = vsel %vm409, %v6083, 0
      %v6156 = vsel %vm409, %v6084, 0
      %v6159 = vsel %vm409, %v6085, 0
      %v6162 = vsel %vm409, %v6086, 0
      %v6165 = vsel %vm409, %v6087, 0
      %v6168 = vsel %vm409, %v6088, 0
      %v6171 = vsel %vm409, %v6089, 0
      %v6174 = vsel %vm409, %v6090, 0
      %v6177 = vsel %vm409, %v6091, 0
      %v6180 = vsel %vm409, %v6092, 0
      %v6183 = vsel %vm409, %v6093, 0
      %v6186 = vsel %vm409, %v6094, 0
      %v6189 = vsel %vm409, %v6095, 0
      %v6192 = vsel %vm409, %v6096, 0
      %v6195 = vsel %vm409, %v6097, 0
      %v6198 = vsel %vm409, %v6098, 0
      %v6201 = vsel %vm409, %v6099, 0
      %v6204 = vsel %vm409, %v6100, 0
      %v6207 = vsel %vm409, %v6101, 0
      %v6210 = vsel %vm409, %v6102, 0
      %v6213 = vsel %vm409, %v6103, 0
      %v6216 = vsel %vm409, %v6104, 0
      %v6219 = vsel %vm409, %v6105, 0
      %v6222 = vsel %vm409, %v6106, 0
      %v6225 = vsel %vm409, %v6107, 0
      %v6228 = vsel %vm409, %v6108, 0
      %v6231 = vsel %vm409, %v6109, 0
      %v6234 = vsel %vm409, %v6110, 0
      %6236 = vmatpush.msra.mxu0 0.0
      %6237 = vmatpush.msra.mxu0 0.0
      %6238 = vmatpush.msra.mxu0 0.0
      %6239 = vmatpush.msra.mxu0 0.0
      %6240 = vmatpush.msra.mxu0 0.0
      %6241 = vmatpush.msra.mxu0 0.0
      %6242 = vmatpush.msra.mxu0 0.0
      %6243 = vmatpush.msra.mxu0 0.0
      %6244 = vmatpush.msra.mxu0 0.0
      %6245 = vmatpush.msra.mxu0 0.0
      %6246 = vmatpush.msra.mxu0 0.0
      %6247 = vmatpush.msra.mxu0 0.0
      %6248 = vmatpush.msra.mxu0 %v6115
      %6249 = vmatpush.msra.mxu0 %v6114
      %6250 = vmatpush.msra.mxu0 %v6113
      %6251 = vmatpush.msra.mxu0 %v6112
      %6252 = vmatmul.f32.gmra.mxu0 %v6117
      %v6253 = vpop.f32.mrf.mxu0
      %v6254 = vadd.f32 0.0, %v6253
      %6255 = vmatmul.f32.gmra.mxu0 %v6120
      %v6256 = vpop.f32.mrf.mxu0
      %v6257 = vadd.f32 0.0, %v6256
      %6258 = vmatmul.f32.gmra.mxu0 %v6123
      %v6259 = vpop.f32.mrf.mxu0
      %v6260 = vadd.f32 0.0, %v6259
      %6261 = vmatmul.f32.gmra.mxu0 %v6126
      %v6262 = vpop.f32.mrf.mxu0
      %v6263 = vadd.f32 0.0, %v6262
      %6264 = vmatmul.f32.gmra.mxu0 %v6129
      %v6265 = vpop.f32.mrf.mxu0
      %v6266 = vadd.f32 0.0, %v6265
      %6267 = vmatmul.f32.gmra.mxu0 %v6132
      %v6268 = vpop.f32.mrf.mxu0
      %v6269 = vadd.f32 0.0, %v6268
      %6270 = vmatmul.f32.gmra.mxu0 %v6135
      %v6271 = vpop.f32.mrf.mxu0
      %v6272 = vadd.f32 0.0, %v6271
      %6273 = vmatmul.f32.gmra.mxu0 %v6138
      %v6274 = vpop.f32.mrf.mxu0
      %v6275 = vadd.f32 0.0, %v6274
      %6276 = vmatmul.f32.gmra.mxu0 %v6141
      %v6277 = vpop.f32.mrf.mxu0
      %v6278 = vadd.f32 0.0, %v6277
      %6279 = vmatmul.f32.gmra.mxu0 %v6144
      %v6280 = vpop.f32.mrf.mxu0
      %v6281 = vadd.f32 0.0, %v6280
      %6282 = vmatmul.f32.gmra.mxu0 %v6147
      %v6283 = vpop.f32.mrf.mxu0
      %v6284 = vadd.f32 0.0, %v6283
      %6285 = vmatmul.f32.gmra.mxu0 %v6150
      %v6286 = vpop.f32.mrf.mxu0
      %v6287 = vadd.f32 0.0, %v6286
      %6288 = vmatmul.f32.gmra.mxu0 %v6153
      %v6289 = vpop.f32.mrf.mxu0
      %v6290 = vadd.f32 0.0, %v6289
      %6291 = vmatmul.f32.gmra.mxu0 %v6156
      %v6292 = vpop.f32.mrf.mxu0
      %v6293 = vadd.f32 0.0, %v6292
      %6294 = vmatmul.f32.gmra.mxu0 %v6159
      %v6295 = vpop.f32.mrf.mxu0
      %v6296 = vadd.f32 0.0, %v6295
      %6297 = vmatmul.f32.gmra.mxu0 %v6162
      %v6298 = vpop.f32.mrf.mxu0
      %v6299 = vadd.f32 0.0, %v6298
      %6300 = vmatmul.f32.gmra.mxu0 %v6165
      %v6301 = vpop.f32.mrf.mxu0
      %v6302 = vadd.f32 0.0, %v6301
      %6303 = vmatmul.f32.gmra.mxu0 %v6168
      %v6304 = vpop.f32.mrf.mxu0
      %v6305 = vadd.f32 0.0, %v6304
      %6306 = vmatmul.f32.gmra.mxu0 %v6171
      %v6307 = vpop.f32.mrf.mxu0
      %v6308 = vadd.f32 0.0, %v6307
      %6309 = vmatmul.f32.gmra.mxu0 %v6174
      %v6310 = vpop.f32.mrf.mxu0
      %v6311 = vadd.f32 0.0, %v6310
      %6312 = vmatmul.f32.gmra.mxu0 %v6177
      %v6313 = vpop.f32.mrf.mxu0
      %v6314 = vadd.f32 0.0, %v6313
      %6315 = vmatmul.f32.gmra.mxu0 %v6180
      %v6316 = vpop.f32.mrf.mxu0
      %v6317 = vadd.f32 0.0, %v6316
      %6318 = vmatmul.f32.gmra.mxu0 %v6183
      %v6319 = vpop.f32.mrf.mxu0
      %v6320 = vadd.f32 0.0, %v6319
      %6321 = vmatmul.f32.gmra.mxu0 %v6186
      %v6322 = vpop.f32.mrf.mxu0
      %v6323 = vadd.f32 0.0, %v6322
      %6324 = vmatmul.f32.gmra.mxu0 %v6189
      %v6325 = vpop.f32.mrf.mxu0
      %v6326 = vadd.f32 0.0, %v6325
      %6327 = vmatmul.f32.gmra.mxu0 %v6192
      %v6328 = vpop.f32.mrf.mxu0
      %v6329 = vadd.f32 0.0, %v6328
      %6330 = vmatmul.f32.gmra.mxu0 %v6195
      %v6331 = vpop.f32.mrf.mxu0
      %v6332 = vadd.f32 0.0, %v6331
      %6333 = vmatmul.f32.gmra.mxu0 %v6198
      %v6334 = vpop.f32.mrf.mxu0
      %v6335 = vadd.f32 0.0, %v6334
      %6336 = vmatmul.f32.gmra.mxu0 %v6201
      %v6337 = vpop.f32.mrf.mxu0
      %v6338 = vadd.f32 0.0, %v6337
      %6339 = vmatmul.f32.gmra.mxu0 %v6204
      %v6340 = vpop.f32.mrf.mxu0
      %v6341 = vadd.f32 0.0, %v6340
      %6342 = vmatmul.f32.gmra.mxu0 %v6207
      %v6343 = vpop.f32.mrf.mxu0
      %v6344 = vadd.f32 0.0, %v6343
      %6345 = vmatmul.f32.gmra.mxu0 %v6210
      %v6346 = vpop.f32.mrf.mxu0
      %v6347 = vadd.f32 0.0, %v6346
      %6348 = vmatmul.f32.gmra.mxu0 %v6213
      %v6349 = vpop.f32.mrf.mxu0
      %v6350 = vadd.f32 0.0, %v6349
      %6351 = vmatmul.f32.gmra.mxu0 %v6216
      %v6352 = vpop.f32.mrf.mxu0
      %v6353 = vadd.f32 0.0, %v6352
      %6354 = vmatmul.f32.gmra.mxu0 %v6219
      %v6355 = vpop.f32.mrf.mxu0
      %v6356 = vadd.f32 0.0, %v6355
      %6357 = vmatmul.f32.gmra.mxu0 %v6222
      %v6358 = vpop.f32.mrf.mxu0
      %v6359 = vadd.f32 0.0, %v6358
      %6360 = vmatmul.f32.gmra.mxu0 %v6225
      %v6361 = vpop.f32.mrf.mxu0
      %v6362 = vadd.f32 0.0, %v6361
      %6363 = vmatmul.f32.gmra.mxu0 %v6228
      %v6364 = vpop.f32.mrf.mxu0
      %v6365 = vadd.f32 0.0, %v6364
      %6366 = vmatmul.f32.gmra.mxu0 %v6231
      %v6367 = vpop.f32.mrf.mxu0
      %v6368 = vadd.f32 0.0, %v6367
      %6369 = vmatmul.f32.gmra.mxu0 %v6234
      %v6370 = vpop.f32.mrf.mxu0
      %v6371 = vadd.f32 0.0, %v6370
      %6372 = vdwg.mxu0
      %v6373 = vadd.f32 %v6031, %v6254
      %v6374 = vadd.f32 %v6032, %v6257
      %v6375 = vadd.f32 %v6033, %v6260
      %v6376 = vadd.f32 %v6034, %v6263
      %v6377 = vadd.f32 %v6035, %v6266
      %v6378 = vadd.f32 %v6036, %v6269
      %v6379 = vadd.f32 %v6037, %v6272
      %v6380 = vadd.f32 %v6038, %v6275
      %v6381 = vadd.f32 %v6039, %v6278
      %v6382 = vadd.f32 %v6040, %v6281
      %v6383 = vadd.f32 %v6041, %v6284
      %v6384 = vadd.f32 %v6042, %v6287
      %v6385 = vadd.f32 %v6043, %v6290
      %v6386 = vadd.f32 %v6044, %v6293
      %v6387 = vadd.f32 %v6045, %v6296
      %v6388 = vadd.f32 %v6046, %v6299
      %v6389 = vadd.f32 %v6047, %v6302
      %v6390 = vadd.f32 %v6048, %v6305
      %v6391 = vadd.f32 %v6049, %v6308
      %v6392 = vadd.f32 %v6050, %v6311
      %v6393 = vadd.f32 %v6051, %v6314
      %v6394 = vadd.f32 %v6052, %v6317
      %v6395 = vadd.f32 %v6053, %v6320
      %v6396 = vadd.f32 %v6054, %v6323
      %v6397 = vadd.f32 %v6055, %v6326
      %v6398 = vadd.f32 %v6056, %v6329
      %v6399 = vadd.f32 %v6057, %v6332
      %v6400 = vadd.f32 %v6058, %v6335
      %v6401 = vadd.f32 %v6059, %v6338
      %v6402 = vadd.f32 %v6060, %v6341
      %v6403 = vadd.f32 %v6061, %v6344
      %v6404 = vadd.f32 %v6062, %v6347
      %v6405 = vadd.f32 %v6063, %v6350
      %v6406 = vadd.f32 %v6064, %v6353
      %v6407 = vadd.f32 %v6065, %v6356
      %v6408 = vadd.f32 %v6066, %v6359
      %v6409 = vadd.f32 %v6067, %v6362
      %v6410 = vadd.f32 %v6068, %v6365
      %v6411 = vadd.f32 %v6069, %v6368
      %v6412 = vadd.f32 %v6070, %v6371
      %v6413 = vld [vmem:[#allocation4 + $0x29] sm:$0xff]
      %v6414 = vld [vmem:[#allocation4 + $0x31] sm:$0xff]
      %v6415 = vld [vmem:[#allocation4 + $0x39] sm:$0xff]
      %v6416 = vld [vmem:[#allocation4 + $0x41] sm:$0xff]
      %v6417 = vld [vmem:[#allocation4 + $0x49] sm:$0xff]
      %v6418 = vld [vmem:[#allocation4 + $0x51] sm:$0xff]
      %v6419 = vld [vmem:[#allocation4 + $0x59] sm:$0xff]
      %v6420 = vld [vmem:[#allocation4 + $0x61] sm:$0xff]
      %v6421 = vld [vmem:[#allocation4 + $0x69] sm:$0xff]
      %v6422 = vld [vmem:[#allocation4 + $0x71] sm:$0xff]
      %v6423 = vld [vmem:[#allocation4 + $0x79] sm:$0xff]
      %v6424 = vld [vmem:[#allocation4 + $0x81] sm:$0xff]
      %v6425 = vld [vmem:[#allocation4 + $0x89] sm:$0xff]
      %v6426 = vld [vmem:[#allocation4 + $0x91] sm:$0xff]
      %v6427 = vld [vmem:[#allocation4 + $0x99] sm:$0xff]
      %v6428 = vld [vmem:[#allocation4 + $0xa1] sm:$0xff]
      %v6429 = vld [vmem:[#allocation4 + $0xa9] sm:$0xff]
      %v6430 = vld [vmem:[#allocation4 + $0xb1] sm:$0xff]
      %v6431 = vld [vmem:[#allocation4 + $0xb9] sm:$0xff]
      %v6432 = vld [vmem:[#allocation4 + $0xc1] sm:$0xff]
      %v6433 = vld [vmem:[#allocation4 + $0xc9] sm:$0xff]
      %v6434 = vld [vmem:[#allocation4 + $0xd1] sm:$0xff]
      %v6435 = vld [vmem:[#allocation4 + $0xd9] sm:$0xff]
      %v6436 = vld [vmem:[#allocation4 + $0xe1] sm:$0xff]
      %v6437 = vld [vmem:[#allocation4 + $0xe9] sm:$0xff]
      %v6438 = vld [vmem:[#allocation4 + $0xf1] sm:$0xff]
      %v6439 = vld [vmem:[#allocation4 + $0xf9] sm:$0xff]
      %v6440 = vld [vmem:[#allocation4 + $0x101] sm:$0xff]
      %v6441 = vld [vmem:[#allocation4 + $0x109] sm:$0xff]
      %v6442 = vld [vmem:[#allocation4 + $0x111] sm:$0xff]
      %v6443 = vld [vmem:[#allocation4 + $0x119] sm:$0xff]
      %v6444 = vld [vmem:[#allocation4 + $0x121] sm:$0xff]
      %v6445 = vld [vmem:[#allocation4 + $0x129] sm:$0xff]
      %v6446 = vld [vmem:[#allocation4 + $0x131] sm:$0xff]
      %v6447 = vld [vmem:[#allocation4 + $0x139] sm:$0xff]
      %v6448 = vld [vmem:[#allocation4 + $0x141] sm:$0xff]
      %v6449 = vld [vmem:[#allocation4 + $0x149] sm:$0xff]
      %v6450 = vld [vmem:[#allocation4 + $0x151] sm:$0xff]
      %v6451 = vld [vmem:[#allocation4 + $0x159] sm:$0xff]
      %v6452 = vld [vmem:[#allocation4 + $0x161] sm:$0xff]
      %s6453 = scalar_lea.vmem %s7, 352
      %v6454 = vld [vmem:[%s6453] sm:$0xff]
      %v6455 = vld [vmem:[%s6453 + $0x8] sm:$0xff]
      %v6456 = vld [vmem:[%s6453 + $0x10] sm:$0xff]
      %v6457 = vld [vmem:[%s6453 + $0x18] sm:$0xff]
      %v6459 = vsel %vm409, %v6413, 0
      %v6462 = vsel %vm409, %v6414, 0
      %v6465 = vsel %vm409, %v6415, 0
      %v6468 = vsel %vm409, %v6416, 0
      %v6471 = vsel %vm409, %v6417, 0
      %v6474 = vsel %vm409, %v6418, 0
      %v6477 = vsel %vm409, %v6419, 0
      %v6480 = vsel %vm409, %v6420, 0
      %v6483 = vsel %vm409, %v6421, 0
      %v6486 = vsel %vm409, %v6422, 0
      %v6489 = vsel %vm409, %v6423, 0
      %v6492 = vsel %vm409, %v6424, 0
      %v6495 = vsel %vm409, %v6425, 0
      %v6498 = vsel %vm409, %v6426, 0
      %v6501 = vsel %vm409, %v6427, 0
      %v6504 = vsel %vm409, %v6428, 0
      %v6507 = vsel %vm409, %v6429, 0
      %v6510 = vsel %vm409, %v6430, 0
      %v6513 = vsel %vm409, %v6431, 0
      %v6516 = vsel %vm409, %v6432, 0
      %v6519 = vsel %vm409, %v6433, 0
      %v6522 = vsel %vm409, %v6434, 0
      %v6525 = vsel %vm409, %v6435, 0
      %v6528 = vsel %vm409, %v6436, 0
      %v6531 = vsel %vm409, %v6437, 0
      %v6534 = vsel %vm409, %v6438, 0
      %v6537 = vsel %vm409, %v6439, 0
      %v6540 = vsel %vm409, %v6440, 0
      %v6543 = vsel %vm409, %v6441, 0
      %v6546 = vsel %vm409, %v6442, 0
      %v6549 = vsel %vm409, %v6443, 0
      %v6552 = vsel %vm409, %v6444, 0
      %v6555 = vsel %vm409, %v6445, 0
      %v6558 = vsel %vm409, %v6446, 0
      %v6561 = vsel %vm409, %v6447, 0
      %v6564 = vsel %vm409, %v6448, 0
      %v6567 = vsel %vm409, %v6449, 0
      %v6570 = vsel %vm409, %v6450, 0
      %v6573 = vsel %vm409, %v6451, 0
      %v6576 = vsel %vm409, %v6452, 0
      %6578 = vmatpush.msra.mxu0 0.0
      %6579 = vmatpush.msra.mxu0 0.0
      %6580 = vmatpush.msra.mxu0 0.0
      %6581 = vmatpush.msra.mxu0 0.0
      %6582 = vmatpush.msra.mxu0 0.0
      %6583 = vmatpush.msra.mxu0 0.0
      %6584 = vmatpush.msra.mxu0 0.0
      %6585 = vmatpush.msra.mxu0 0.0
      %6586 = vmatpush.msra.mxu0 0.0
      %6587 = vmatpush.msra.mxu0 0.0
      %6588 = vmatpush.msra.mxu0 0.0
      %6589 = vmatpush.msra.mxu0 0.0
      %6590 = vmatpush.msra.mxu0 %v6457
      %6591 = vmatpush.msra.mxu0 %v6456
      %6592 = vmatpush.msra.mxu0 %v6455
      %6593 = vmatpush.msra.mxu0 %v6454
      %6594 = vmatmul.f32.gmra.mxu0 %v6459
      %v6595 = vpop.f32.mrf.mxu0
      %v6596 = vadd.f32 0.0, %v6595
      %6597 = vmatmul.f32.gmra.mxu0 %v6462
      %v6598 = vpop.f32.mrf.mxu0
      %v6599 = vadd.f32 0.0, %v6598
      %6600 = vmatmul.f32.gmra.mxu0 %v6465
      %v6601 = vpop.f32.mrf.mxu0
      %v6602 = vadd.f32 0.0, %v6601
      %6603 = vmatmul.f32.gmra.mxu0 %v6468
      %v6604 = vpop.f32.mrf.mxu0
      %v6605 = vadd.f32 0.0, %v6604
      %6606 = vmatmul.f32.gmra.mxu0 %v6471
      %v6607 = vpop.f32.mrf.mxu0
      %v6608 = vadd.f32 0.0, %v6607
      %6609 = vmatmul.f32.gmra.mxu0 %v6474
      %v6610 = vpop.f32.mrf.mxu0
      %v6611 = vadd.f32 0.0, %v6610
      %6612 = vmatmul.f32.gmra.mxu0 %v6477
      %v6613 = vpop.f32.mrf.mxu0
      %v6614 = vadd.f32 0.0, %v6613
      %6615 = vmatmul.f32.gmra.mxu0 %v6480
      %v6616 = vpop.f32.mrf.mxu0
      %v6617 = vadd.f32 0.0, %v6616
      %6618 = vmatmul.f32.gmra.mxu0 %v6483
      %v6619 = vpop.f32.mrf.mxu0
      %v6620 = vadd.f32 0.0, %v6619
      %6621 = vmatmul.f32.gmra.mxu0 %v6486
      %v6622 = vpop.f32.mrf.mxu0
      %v6623 = vadd.f32 0.0, %v6622
      %6624 = vmatmul.f32.gmra.mxu0 %v6489
      %v6625 = vpop.f32.mrf.mxu0
      %v6626 = vadd.f32 0.0, %v6625
      %6627 = vmatmul.f32.gmra.mxu0 %v6492
      %v6628 = vpop.f32.mrf.mxu0
      %v6629 = vadd.f32 0.0, %v6628
      %6630 = vmatmul.f32.gmra.mxu0 %v6495
      %v6631 = vpop.f32.mrf.mxu0
      %v6632 = vadd.f32 0.0, %v6631
      %6633 = vmatmul.f32.gmra.mxu0 %v6498
      %v6634 = vpop.f32.mrf.mxu0
      %v6635 = vadd.f32 0.0, %v6634
      %6636 = vmatmul.f32.gmra.mxu0 %v6501
      %v6637 = vpop.f32.mrf.mxu0
      %v6638 = vadd.f32 0.0, %v6637
      %6639 = vmatmul.f32.gmra.mxu0 %v6504
      %v6640 = vpop.f32.mrf.mxu0
      %v6641 = vadd.f32 0.0, %v6640
      %6642 = vmatmul.f32.gmra.mxu0 %v6507
      %v6643 = vpop.f32.mrf.mxu0
      %v6644 = vadd.f32 0.0, %v6643
      %6645 = vmatmul.f32.gmra.mxu0 %v6510
      %v6646 = vpop.f32.mrf.mxu0
      %v6647 = vadd.f32 0.0, %v6646
      %6648 = vmatmul.f32.gmra.mxu0 %v6513
      %v6649 = vpop.f32.mrf.mxu0
      %v6650 = vadd.f32 0.0, %v6649
      %6651 = vmatmul.f32.gmra.mxu0 %v6516
      %v6652 = vpop.f32.mrf.mxu0
      %v6653 = vadd.f32 0.0, %v6652
      %6654 = vmatmul.f32.gmra.mxu0 %v6519
      %v6655 = vpop.f32.mrf.mxu0
      %v6656 = vadd.f32 0.0, %v6655
      %6657 = vmatmul.f32.gmra.mxu0 %v6522
      %v6658 = vpop.f32.mrf.mxu0
      %v6659 = vadd.f32 0.0, %v6658
      %6660 = vmatmul.f32.gmra.mxu0 %v6525
      %v6661 = vpop.f32.mrf.mxu0
      %v6662 = vadd.f32 0.0, %v6661
      %6663 = vmatmul.f32.gmra.mxu0 %v6528
      %v6664 = vpop.f32.mrf.mxu0
      %v6665 = vadd.f32 0.0, %v6664
      %6666 = vmatmul.f32.gmra.mxu0 %v6531
      %v6667 = vpop.f32.mrf.mxu0
      %v6668 = vadd.f32 0.0, %v6667
      %6669 = vmatmul.f32.gmra.mxu0 %v6534
      %v6670 = vpop.f32.mrf.mxu0
      %v6671 = vadd.f32 0.0, %v6670
      %6672 = vmatmul.f32.gmra.mxu0 %v6537
      %v6673 = vpop.f32.mrf.mxu0
      %v6674 = vadd.f32 0.0, %v6673
      %6675 = vmatmul.f32.gmra.mxu0 %v6540
      %v6676 = vpop.f32.mrf.mxu0
      %v6677 = vadd.f32 0.0, %v6676
      %6678 = vmatmul.f32.gmra.mxu0 %v6543
      %v6679 = vpop.f32.mrf.mxu0
      %v6680 = vadd.f32 0.0, %v6679
      %6681 = vmatmul.f32.gmra.mxu0 %v6546
      %v6682 = vpop.f32.mrf.mxu0
      %v6683 = vadd.f32 0.0, %v6682
      %6684 = vmatmul.f32.gmra.mxu0 %v6549
      %v6685 = vpop.f32.mrf.mxu0
      %v6686 = vadd.f32 0.0, %v6685
      %6687 = vmatmul.f32.gmra.mxu0 %v6552
      %v6688 = vpop.f32.mrf.mxu0
      %v6689 = vadd.f32 0.0, %v6688
      %6690 = vmatmul.f32.gmra.mxu0 %v6555
      %v6691 = vpop.f32.mrf.mxu0
      %v6692 = vadd.f32 0.0, %v6691
      %6693 = vmatmul.f32.gmra.mxu0 %v6558
      %v6694 = vpop.f32.mrf.mxu0
      %v6695 = vadd.f32 0.0, %v6694
      %6696 = vmatmul.f32.gmra.mxu0 %v6561
      %v6697 = vpop.f32.mrf.mxu0
      %v6698 = vadd.f32 0.0, %v6697
      %6699 = vmatmul.f32.gmra.mxu0 %v6564
      %v6700 = vpop.f32.mrf.mxu0
      %v6701 = vadd.f32 0.0, %v6700
      %6702 = vmatmul.f32.gmra.mxu0 %v6567
      %v6703 = vpop.f32.mrf.mxu0
      %v6704 = vadd.f32 0.0, %v6703
      %6705 = vmatmul.f32.gmra.mxu0 %v6570
      %v6706 = vpop.f32.mrf.mxu0
      %v6707 = vadd.f32 0.0, %v6706
      %6708 = vmatmul.f32.gmra.mxu0 %v6573
      %v6709 = vpop.f32.mrf.mxu0
      %v6710 = vadd.f32 0.0, %v6709
      %6711 = vmatmul.f32.gmra.mxu0 %v6576
      %v6712 = vpop.f32.mrf.mxu0
      %v6713 = vadd.f32 0.0, %v6712
      %6714 = vdwg.mxu0
      %v6715 = vadd.f32 %v6373, %v6596
      %v6716 = vadd.f32 %v6374, %v6599
      %v6717 = vadd.f32 %v6375, %v6602
      %v6718 = vadd.f32 %v6376, %v6605
      %v6719 = vadd.f32 %v6377, %v6608
      %v6720 = vadd.f32 %v6378, %v6611
      %v6721 = vadd.f32 %v6379, %v6614
      %v6722 = vadd.f32 %v6380, %v6617
      %v6723 = vadd.f32 %v6381, %v6620
      %v6724 = vadd.f32 %v6382, %v6623
      %v6725 = vadd.f32 %v6383, %v6626
      %v6726 = vadd.f32 %v6384, %v6629
      %v6727 = vadd.f32 %v6385, %v6632
      %v6728 = vadd.f32 %v6386, %v6635
      %v6729 = vadd.f32 %v6387, %v6638
      %v6730 = vadd.f32 %v6388, %v6641
      %v6731 = vadd.f32 %v6389, %v6644
      %v6732 = vadd.f32 %v6390, %v6647
      %v6733 = vadd.f32 %v6391, %v6650
      %v6734 = vadd.f32 %v6392, %v6653
      %v6735 = vadd.f32 %v6393, %v6656
      %v6736 = vadd.f32 %v6394, %v6659
      %v6737 = vadd.f32 %v6395, %v6662
      %v6738 = vadd.f32 %v6396, %v6665
      %v6739 = vadd.f32 %v6397, %v6668
      %v6740 = vadd.f32 %v6398, %v6671
      %v6741 = vadd.f32 %v6399, %v6674
      %v6742 = vadd.f32 %v6400, %v6677
      %v6743 = vadd.f32 %v6401, %v6680
      %v6744 = vadd.f32 %v6402, %v6683
      %v6745 = vadd.f32 %v6403, %v6686
      %v6746 = vadd.f32 %v6404, %v6689
      %v6747 = vadd.f32 %v6405, %v6692
      %v6748 = vadd.f32 %v6406, %v6695
      %v6749 = vadd.f32 %v6407, %v6698
      %v6750 = vadd.f32 %v6408, %v6701
      %v6751 = vadd.f32 %v6409, %v6704
      %v6752 = vadd.f32 %v6410, %v6707
      %v6753 = vadd.f32 %v6411, %v6710
      %v6754 = vadd.f32 %v6412, %v6713
      %v6755 = vld [vmem:[#allocation4 + $0x2a] sm:$0xff]
      %v6756 = vld [vmem:[#allocation4 + $0x32] sm:$0xff]
      %v6757 = vld [vmem:[#allocation4 + $0x3a] sm:$0xff]
      %v6758 = vld [vmem:[#allocation4 + $0x42] sm:$0xff]
      %v6759 = vld [vmem:[#allocation4 + $0x4a] sm:$0xff]
      %v6760 = vld [vmem:[#allocation4 + $0x52] sm:$0xff]
      %v6761 = vld [vmem:[#allocation4 + $0x5a] sm:$0xff]
      %v6762 = vld [vmem:[#allocation4 + $0x62] sm:$0xff]
      %v6763 = vld [vmem:[#allocation4 + $0x6a] sm:$0xff]
      %v6764 = vld [vmem:[#allocation4 + $0x72] sm:$0xff]
      %v6765 = vld [vmem:[#allocation4 + $0x7a] sm:$0xff]
      %v6766 = vld [vmem:[#allocation4 + $0x82] sm:$0xff]
      %v6767 = vld [vmem:[#allocation4 + $0x8a] sm:$0xff]
      %v6768 = vld [vmem:[#allocation4 + $0x92] sm:$0xff]
      %v6769 = vld [vmem:[#allocation4 + $0x9a] sm:$0xff]
      %v6770 = vld [vmem:[#allocation4 + $0xa2] sm:$0xff]
      %v6771 = vld [vmem:[#allocation4 + $0xaa] sm:$0xff]
      %v6772 = vld [vmem:[#allocation4 + $0xb2] sm:$0xff]
      %v6773 = vld [vmem:[#allocation4 + $0xba] sm:$0xff]
      %v6774 = vld [vmem:[#allocation4 + $0xc2] sm:$0xff]
      %v6775 = vld [vmem:[#allocation4 + $0xca] sm:$0xff]
      %v6776 = vld [vmem:[#allocation4 + $0xd2] sm:$0xff]
      %v6777 = vld [vmem:[#allocation4 + $0xda] sm:$0xff]
      %v6778 = vld [vmem:[#allocation4 + $0xe2] sm:$0xff]
      %v6779 = vld [vmem:[#allocation4 + $0xea] sm:$0xff]
      %v6780 = vld [vmem:[#allocation4 + $0xf2] sm:$0xff]
      %v6781 = vld [vmem:[#allocation4 + $0xfa] sm:$0xff]
      %v6782 = vld [vmem:[#allocation4 + $0x102] sm:$0xff]
      %v6783 = vld [vmem:[#allocation4 + $0x10a] sm:$0xff]
      %v6784 = vld [vmem:[#allocation4 + $0x112] sm:$0xff]
      %v6785 = vld [vmem:[#allocation4 + $0x11a] sm:$0xff]
      %v6786 = vld [vmem:[#allocation4 + $0x122] sm:$0xff]
      %v6787 = vld [vmem:[#allocation4 + $0x12a] sm:$0xff]
      %v6788 = vld [vmem:[#allocation4 + $0x132] sm:$0xff]
      %v6789 = vld [vmem:[#allocation4 + $0x13a] sm:$0xff]
      %v6790 = vld [vmem:[#allocation4 + $0x142] sm:$0xff]
      %v6791 = vld [vmem:[#allocation4 + $0x14a] sm:$0xff]
      %v6792 = vld [vmem:[#allocation4 + $0x152] sm:$0xff]
      %v6793 = vld [vmem:[#allocation4 + $0x15a] sm:$0xff]
      %v6794 = vld [vmem:[#allocation4 + $0x162] sm:$0xff]
      %s6795 = scalar_lea.vmem %s7, 384
      %v6796 = vld [vmem:[%s6795] sm:$0xff]
      %v6797 = vld [vmem:[%s6795 + $0x8] sm:$0xff]
      %v6798 = vld [vmem:[%s6795 + $0x10] sm:$0xff]
      %v6799 = vld [vmem:[%s6795 + $0x18] sm:$0xff]
      %v6801 = vsel %vm409, %v6755, 0
      %v6804 = vsel %vm409, %v6756, 0
      %v6807 = vsel %vm409, %v6757, 0
      %v6810 = vsel %vm409, %v6758, 0
      %v6813 = vsel %vm409, %v6759, 0
      %v6816 = vsel %vm409, %v6760, 0
      %v6819 = vsel %vm409, %v6761, 0
      %v6822 = vsel %vm409, %v6762, 0
      %v6825 = vsel %vm409, %v6763, 0
      %v6828 = vsel %vm409, %v6764, 0
      %v6831 = vsel %vm409, %v6765, 0
      %v6834 = vsel %vm409, %v6766, 0
      %v6837 = vsel %vm409, %v6767, 0
      %v6840 = vsel %vm409, %v6768, 0
      %v6843 = vsel %vm409, %v6769, 0
      %v6846 = vsel %vm409, %v6770, 0
      %v6849 = vsel %vm409, %v6771, 0
      %v6852 = vsel %vm409, %v6772, 0
      %v6855 = vsel %vm409, %v6773, 0
      %v6858 = vsel %vm409, %v6774, 0
      %v6861 = vsel %vm409, %v6775, 0
      %v6864 = vsel %vm409, %v6776, 0
      %v6867 = vsel %vm409, %v6777, 0
      %v6870 = vsel %vm409, %v6778, 0
      %v6873 = vsel %vm409, %v6779, 0
      %v6876 = vsel %vm409, %v6780, 0
      %v6879 = vsel %vm409, %v6781, 0
      %v6882 = vsel %vm409, %v6782, 0
      %v6885 = vsel %vm409, %v6783, 0
      %v6888 = vsel %vm409, %v6784, 0
      %v6891 = vsel %vm409, %v6785, 0
      %v6894 = vsel %vm409, %v6786, 0
      %v6897 = vsel %vm409, %v6787, 0
      %v6900 = vsel %vm409, %v6788, 0
      %v6903 = vsel %vm409, %v6789, 0
      %v6906 = vsel %vm409, %v6790, 0
      %v6909 = vsel %vm409, %v6791, 0
      %v6912 = vsel %vm409, %v6792, 0
      %v6915 = vsel %vm409, %v6793, 0
      %v6918 = vsel %vm409, %v6794, 0
      %6920 = vmatpush.msra.mxu0 0.0
      %6921 = vmatpush.msra.mxu0 0.0
      %6922 = vmatpush.msra.mxu0 0.0
      %6923 = vmatpush.msra.mxu0 0.0
      %6924 = vmatpush.msra.mxu0 0.0
      %6925 = vmatpush.msra.mxu0 0.0
      %6926 = vmatpush.msra.mxu0 0.0
      %6927 = vmatpush.msra.mxu0 0.0
      %6928 = vmatpush.msra.mxu0 0.0
      %6929 = vmatpush.msra.mxu0 0.0
      %6930 = vmatpush.msra.mxu0 0.0
      %6931 = vmatpush.msra.mxu0 0.0
      %6932 = vmatpush.msra.mxu0 %v6799
      %6933 = vmatpush.msra.mxu0 %v6798
      %6934 = vmatpush.msra.mxu0 %v6797
      %6935 = vmatpush.msra.mxu0 %v6796
      %6936 = vmatmul.f32.gmra.mxu0 %v6801
      %v6937 = vpop.f32.mrf.mxu0
      %v6938 = vadd.f32 0.0, %v6937
      %6939 = vmatmul.f32.gmra.mxu0 %v6804
      %v6940 = vpop.f32.mrf.mxu0
      %v6941 = vadd.f32 0.0, %v6940
      %6942 = vmatmul.f32.gmra.mxu0 %v6807
      %v6943 = vpop.f32.mrf.mxu0
      %v6944 = vadd.f32 0.0, %v6943
      %6945 = vmatmul.f32.gmra.mxu0 %v6810
      %v6946 = vpop.f32.mrf.mxu0
      %v6947 = vadd.f32 0.0, %v6946
      %6948 = vmatmul.f32.gmra.mxu0 %v6813
      %v6949 = vpop.f32.mrf.mxu0
      %v6950 = vadd.f32 0.0, %v6949
      %6951 = vmatmul.f32.gmra.mxu0 %v6816
      %v6952 = vpop.f32.mrf.mxu0
      %v6953 = vadd.f32 0.0, %v6952
      %6954 = vmatmul.f32.gmra.mxu0 %v6819
      %v6955 = vpop.f32.mrf.mxu0
      %v6956 = vadd.f32 0.0, %v6955
      %6957 = vmatmul.f32.gmra.mxu0 %v6822
      %v6958 = vpop.f32.mrf.mxu0
      %v6959 = vadd.f32 0.0, %v6958
      %6960 = vmatmul.f32.gmra.mxu0 %v6825
      %v6961 = vpop.f32.mrf.mxu0
      %v6962 = vadd.f32 0.0, %v6961
      %6963 = vmatmul.f32.gmra.mxu0 %v6828
      %v6964 = vpop.f32.mrf.mxu0
      %v6965 = vadd.f32 0.0, %v6964
      %6966 = vmatmul.f32.gmra.mxu0 %v6831
      %v6967 = vpop.f32.mrf.mxu0
      %v6968 = vadd.f32 0.0, %v6967
      %6969 = vmatmul.f32.gmra.mxu0 %v6834
      %v6970 = vpop.f32.mrf.mxu0
      %v6971 = vadd.f32 0.0, %v6970
      %6972 = vmatmul.f32.gmra.mxu0 %v6837
      %v6973 = vpop.f32.mrf.mxu0
      %v6974 = vadd.f32 0.0, %v6973
      %6975 = vmatmul.f32.gmra.mxu0 %v6840
      %v6976 = vpop.f32.mrf.mxu0
      %v6977 = vadd.f32 0.0, %v6976
      %6978 = vmatmul.f32.gmra.mxu0 %v6843
      %v6979 = vpop.f32.mrf.mxu0
      %v6980 = vadd.f32 0.0, %v6979
      %6981 = vmatmul.f32.gmra.mxu0 %v6846
      %v6982 = vpop.f32.mrf.mxu0
      %v6983 = vadd.f32 0.0, %v6982
      %6984 = vmatmul.f32.gmra.mxu0 %v6849
      %v6985 = vpop.f32.mrf.mxu0
      %v6986 = vadd.f32 0.0, %v6985
      %6987 = vmatmul.f32.gmra.mxu0 %v6852
      %v6988 = vpop.f32.mrf.mxu0
      %v6989 = vadd.f32 0.0, %v6988
      %6990 = vmatmul.f32.gmra.mxu0 %v6855
      %v6991 = vpop.f32.mrf.mxu0
      %v6992 = vadd.f32 0.0, %v6991
      %6993 = vmatmul.f32.gmra.mxu0 %v6858
      %v6994 = vpop.f32.mrf.mxu0
      %v6995 = vadd.f32 0.0, %v6994
      %6996 = vmatmul.f32.gmra.mxu0 %v6861
      %v6997 = vpop.f32.mrf.mxu0
      %v6998 = vadd.f32 0.0, %v6997
      %6999 = vmatmul.f32.gmra.mxu0 %v6864
      %v7000 = vpop.f32.mrf.mxu0
      %v7001 = vadd.f32 0.0, %v7000
      %7002 = vmatmul.f32.gmra.mxu0 %v6867
      %v7003 = vpop.f32.mrf.mxu0
      %v7004 = vadd.f32 0.0, %v7003
      %7005 = vmatmul.f32.gmra.mxu0 %v6870
      %v7006 = vpop.f32.mrf.mxu0
      %v7007 = vadd.f32 0.0, %v7006
      %7008 = vmatmul.f32.gmra.mxu0 %v6873
      %v7009 = vpop.f32.mrf.mxu0
      %v7010 = vadd.f32 0.0, %v7009
      %7011 = vmatmul.f32.gmra.mxu0 %v6876
      %v7012 = vpop.f32.mrf.mxu0
      %v7013 = vadd.f32 0.0, %v7012
      %7014 = vmatmul.f32.gmra.mxu0 %v6879
      %v7015 = vpop.f32.mrf.mxu0
      %v7016 = vadd.f32 0.0, %v7015
      %7017 = vmatmul.f32.gmra.mxu0 %v6882
      %v7018 = vpop.f32.mrf.mxu0
      %v7019 = vadd.f32 0.0, %v7018
      %7020 = vmatmul.f32.gmra.mxu0 %v6885
      %v7021 = vpop.f32.mrf.mxu0
      %v7022 = vadd.f32 0.0, %v7021
      %7023 = vmatmul.f32.gmra.mxu0 %v6888
      %v7024 = vpop.f32.mrf.mxu0
      %v7025 = vadd.f32 0.0, %v7024
      %7026 = vmatmul.f32.gmra.mxu0 %v6891
      %v7027 = vpop.f32.mrf.mxu0
      %v7028 = vadd.f32 0.0, %v7027
      %7029 = vmatmul.f32.gmra.mxu0 %v6894
      %v7030 = vpop.f32.mrf.mxu0
      %v7031 = vadd.f32 0.0, %v7030
      %7032 = vmatmul.f32.gmra.mxu0 %v6897
      %v7033 = vpop.f32.mrf.mxu0
      %v7034 = vadd.f32 0.0, %v7033
      %7035 = vmatmul.f32.gmra.mxu0 %v6900
      %v7036 = vpop.f32.mrf.mxu0
      %v7037 = vadd.f32 0.0, %v7036
      %7038 = vmatmul.f32.gmra.mxu0 %v6903
      %v7039 = vpop.f32.mrf.mxu0
      %v7040 = vadd.f32 0.0, %v7039
      %7041 = vmatmul.f32.gmra.mxu0 %v6906
      %v7042 = vpop.f32.mrf.mxu0
      %v7043 = vadd.f32 0.0, %v7042
      %7044 = vmatmul.f32.gmra.mxu0 %v6909
      %v7045 = vpop.f32.mrf.mxu0
      %v7046 = vadd.f32 0.0, %v7045
      %7047 = vmatmul.f32.gmra.mxu0 %v6912
      %v7048 = vpop.f32.mrf.mxu0
      %v7049 = vadd.f32 0.0, %v7048
      %7050 = vmatmul.f32.gmra.mxu0 %v6915
      %v7051 = vpop.f32.mrf.mxu0
      %v7052 = vadd.f32 0.0, %v7051
      %7053 = vmatmul.f32.gmra.mxu0 %v6918
      %v7054 = vpop.f32.mrf.mxu0
      %v7055 = vadd.f32 0.0, %v7054
      %7056 = vdwg.mxu0
      %v7057 = vadd.f32 %v6715, %v6938
      %v7058 = vadd.f32 %v6716, %v6941
      %v7059 = vadd.f32 %v6717, %v6944
      %v7060 = vadd.f32 %v6718, %v6947
      %v7061 = vadd.f32 %v6719, %v6950
      %v7062 = vadd.f32 %v6720, %v6953
      %v7063 = vadd.f32 %v6721, %v6956
      %v7064 = vadd.f32 %v6722, %v6959
      %v7065 = vadd.f32 %v6723, %v6962
      %v7066 = vadd.f32 %v6724, %v6965
      %v7067 = vadd.f32 %v6725, %v6968
      %v7068 = vadd.f32 %v6726, %v6971
      %v7069 = vadd.f32 %v6727, %v6974
      %v7070 = vadd.f32 %v6728, %v6977
      %v7071 = vadd.f32 %v6729, %v6980
      %v7072 = vadd.f32 %v6730, %v6983
      %v7073 = vadd.f32 %v6731, %v6986
      %v7074 = vadd.f32 %v6732, %v6989
      %v7075 = vadd.f32 %v6733, %v6992
      %v7076 = vadd.f32 %v6734, %v6995
      %v7077 = vadd.f32 %v6735, %v6998
      %v7078 = vadd.f32 %v6736, %v7001
      %v7079 = vadd.f32 %v6737, %v7004
      %v7080 = vadd.f32 %v6738, %v7007
      %v7081 = vadd.f32 %v6739, %v7010
      %v7082 = vadd.f32 %v6740, %v7013
      %v7083 = vadd.f32 %v6741, %v7016
      %v7084 = vadd.f32 %v6742, %v7019
      %v7085 = vadd.f32 %v6743, %v7022
      %v7086 = vadd.f32 %v6744, %v7025
      %v7087 = vadd.f32 %v6745, %v7028
      %v7088 = vadd.f32 %v6746, %v7031
      %v7089 = vadd.f32 %v6747, %v7034
      %v7090 = vadd.f32 %v6748, %v7037
      %v7091 = vadd.f32 %v6749, %v7040
      %v7092 = vadd.f32 %v6750, %v7043
      %v7093 = vadd.f32 %v6751, %v7046
      %v7094 = vadd.f32 %v6752, %v7049
      %v7095 = vadd.f32 %v6753, %v7052
      %v7096 = vadd.f32 %v6754, %v7055
      %v7097 = vld [vmem:[#allocation4 + $0x2b] sm:$0xff]
      %v7098 = vld [vmem:[#allocation4 + $0x33] sm:$0xff]
      %v7099 = vld [vmem:[#allocation4 + $0x3b] sm:$0xff]
      %v7100 = vld [vmem:[#allocation4 + $0x43] sm:$0xff]
      %v7101 = vld [vmem:[#allocation4 + $0x4b] sm:$0xff]
      %v7102 = vld [vmem:[#allocation4 + $0x53] sm:$0xff]
      %v7103 = vld [vmem:[#allocation4 + $0x5b] sm:$0xff]
      %v7104 = vld [vmem:[#allocation4 + $0x63] sm:$0xff]
      %v7105 = vld [vmem:[#allocation4 + $0x6b] sm:$0xff]
      %v7106 = vld [vmem:[#allocation4 + $0x73] sm:$0xff]
      %v7107 = vld [vmem:[#allocation4 + $0x7b] sm:$0xff]
      %v7108 = vld [vmem:[#allocation4 + $0x83] sm:$0xff]
      %v7109 = vld [vmem:[#allocation4 + $0x8b] sm:$0xff]
      %v7110 = vld [vmem:[#allocation4 + $0x93] sm:$0xff]
      %v7111 = vld [vmem:[#allocation4 + $0x9b] sm:$0xff]
      %v7112 = vld [vmem:[#allocation4 + $0xa3] sm:$0xff]
      %v7113 = vld [vmem:[#allocation4 + $0xab] sm:$0xff]
      %v7114 = vld [vmem:[#allocation4 + $0xb3] sm:$0xff]
      %v7115 = vld [vmem:[#allocation4 + $0xbb] sm:$0xff]
      %v7116 = vld [vmem:[#allocation4 + $0xc3] sm:$0xff]
      %v7117 = vld [vmem:[#allocation4 + $0xcb] sm:$0xff]
      %v7118 = vld [vmem:[#allocation4 + $0xd3] sm:$0xff]
      %v7119 = vld [vmem:[#allocation4 + $0xdb] sm:$0xff]
      %v7120 = vld [vmem:[#allocation4 + $0xe3] sm:$0xff]
      %v7121 = vld [vmem:[#allocation4 + $0xeb] sm:$0xff]
      %v7122 = vld [vmem:[#allocation4 + $0xf3] sm:$0xff]
      %v7123 = vld [vmem:[#allocation4 + $0xfb] sm:$0xff]
      %v7124 = vld [vmem:[#allocation4 + $0x103] sm:$0xff]
      %v7125 = vld [vmem:[#allocation4 + $0x10b] sm:$0xff]
      %v7126 = vld [vmem:[#allocation4 + $0x113] sm:$0xff]
      %v7127 = vld [vmem:[#allocation4 + $0x11b] sm:$0xff]
      %v7128 = vld [vmem:[#allocation4 + $0x123] sm:$0xff]
      %v7129 = vld [vmem:[#allocation4 + $0x12b] sm:$0xff]
      %v7130 = vld [vmem:[#allocation4 + $0x133] sm:$0xff]
      %v7131 = vld [vmem:[#allocation4 + $0x13b] sm:$0xff]
      %v7132 = vld [vmem:[#allocation4 + $0x143] sm:$0xff]
      %v7133 = vld [vmem:[#allocation4 + $0x14b] sm:$0xff]
      %v7134 = vld [vmem:[#allocation4 + $0x153] sm:$0xff]
      %v7135 = vld [vmem:[#allocation4 + $0x15b] sm:$0xff]
      %v7136 = vld [vmem:[#allocation4 + $0x163] sm:$0xff]
      %s7137 = scalar_lea.vmem %s7, 416
      %v7138 = vld [vmem:[%s7137] sm:$0xff]
      %v7139 = vld [vmem:[%s7137 + $0x8] sm:$0xff]
      %v7140 = vld [vmem:[%s7137 + $0x10] sm:$0xff]
      %v7141 = vld [vmem:[%s7137 + $0x18] sm:$0xff]
      %v7143 = vsel %vm409, %v7097, 0
      %v7146 = vsel %vm409, %v7098, 0
      %v7149 = vsel %vm409, %v7099, 0
      %v7152 = vsel %vm409, %v7100, 0
      %v7155 = vsel %vm409, %v7101, 0
      %v7158 = vsel %vm409, %v7102, 0
      %v7161 = vsel %vm409, %v7103, 0
      %v7164 = vsel %vm409, %v7104, 0
      %v7167 = vsel %vm409, %v7105, 0
      %v7170 = vsel %vm409, %v7106, 0
      %v7173 = vsel %vm409, %v7107, 0
      %v7176 = vsel %vm409, %v7108, 0
      %v7179 = vsel %vm409, %v7109, 0
      %v7182 = vsel %vm409, %v7110, 0
      %v7185 = vsel %vm409, %v7111, 0
      %v7188 = vsel %vm409, %v7112, 0
      %v7191 = vsel %vm409, %v7113, 0
      %v7194 = vsel %vm409, %v7114, 0
      %v7197 = vsel %vm409, %v7115, 0
      %v7200 = vsel %vm409, %v7116, 0
      %v7203 = vsel %vm409, %v7117, 0
      %v7206 = vsel %vm409, %v7118, 0
      %v7209 = vsel %vm409, %v7119, 0
      %v7212 = vsel %vm409, %v7120, 0
      %v7215 = vsel %vm409, %v7121, 0
      %v7218 = vsel %vm409, %v7122, 0
      %v7221 = vsel %vm409, %v7123, 0
      %v7224 = vsel %vm409, %v7124, 0
      %v7227 = vsel %vm409, %v7125, 0
      %v7230 = vsel %vm409, %v7126, 0
      %v7233 = vsel %vm409, %v7127, 0
      %v7236 = vsel %vm409, %v7128, 0
      %v7239 = vsel %vm409, %v7129, 0
      %v7242 = vsel %vm409, %v7130, 0
      %v7245 = vsel %vm409, %v7131, 0
      %v7248 = vsel %vm409, %v7132, 0
      %v7251 = vsel %vm409, %v7133, 0
      %v7254 = vsel %vm409, %v7134, 0
      %v7257 = vsel %vm409, %v7135, 0
      %v7260 = vsel %vm409, %v7136, 0
      %7262 = vmatpush.msra.mxu0 0.0
      %7263 = vmatpush.msra.mxu0 0.0
      %7264 = vmatpush.msra.mxu0 0.0
      %7265 = vmatpush.msra.mxu0 0.0
      %7266 = vmatpush.msra.mxu0 0.0
      %7267 = vmatpush.msra.mxu0 0.0
      %7268 = vmatpush.msra.mxu0 0.0
      %7269 = vmatpush.msra.mxu0 0.0
      %7270 = vmatpush.msra.mxu0 0.0
      %7271 = vmatpush.msra.mxu0 0.0
      %7272 = vmatpush.msra.mxu0 0.0
      %7273 = vmatpush.msra.mxu0 0.0
      %7274 = vmatpush.msra.mxu0 %v7141
      %7275 = vmatpush.msra.mxu0 %v7140
      %7276 = vmatpush.msra.mxu0 %v7139
      %7277 = vmatpush.msra.mxu0 %v7138
      %7278 = vmatmul.f32.gmra.mxu0 %v7143
      %v7279 = vpop.f32.mrf.mxu0
      %v7280 = vadd.f32 0.0, %v7279
      %7281 = vmatmul.f32.gmra.mxu0 %v7146
      %v7282 = vpop.f32.mrf.mxu0
      %v7283 = vadd.f32 0.0, %v7282
      %7284 = vmatmul.f32.gmra.mxu0 %v7149
      %v7285 = vpop.f32.mrf.mxu0
      %v7286 = vadd.f32 0.0, %v7285
      %7287 = vmatmul.f32.gmra.mxu0 %v7152
      %v7288 = vpop.f32.mrf.mxu0
      %v7289 = vadd.f32 0.0, %v7288
      %7290 = vmatmul.f32.gmra.mxu0 %v7155
      %v7291 = vpop.f32.mrf.mxu0
      %v7292 = vadd.f32 0.0, %v7291
      %7293 = vmatmul.f32.gmra.mxu0 %v7158
      %v7294 = vpop.f32.mrf.mxu0
      %v7295 = vadd.f32 0.0, %v7294
      %7296 = vmatmul.f32.gmra.mxu0 %v7161
      %v7297 = vpop.f32.mrf.mxu0
      %v7298 = vadd.f32 0.0, %v7297
      %7299 = vmatmul.f32.gmra.mxu0 %v7164
      %v7300 = vpop.f32.mrf.mxu0
      %v7301 = vadd.f32 0.0, %v7300
      %7302 = vmatmul.f32.gmra.mxu0 %v7167
      %v7303 = vpop.f32.mrf.mxu0
      %v7304 = vadd.f32 0.0, %v7303
      %7305 = vmatmul.f32.gmra.mxu0 %v7170
      %v7306 = vpop.f32.mrf.mxu0
      %v7307 = vadd.f32 0.0, %v7306
      %7308 = vmatmul.f32.gmra.mxu0 %v7173
      %v7309 = vpop.f32.mrf.mxu0
      %v7310 = vadd.f32 0.0, %v7309
      %7311 = vmatmul.f32.gmra.mxu0 %v7176
      %v7312 = vpop.f32.mrf.mxu0
      %v7313 = vadd.f32 0.0, %v7312
      %7314 = vmatmul.f32.gmra.mxu0 %v7179
      %v7315 = vpop.f32.mrf.mxu0
      %v7316 = vadd.f32 0.0, %v7315
      %7317 = vmatmul.f32.gmra.mxu0 %v7182
      %v7318 = vpop.f32.mrf.mxu0
      %v7319 = vadd.f32 0.0, %v7318
      %7320 = vmatmul.f32.gmra.mxu0 %v7185
      %v7321 = vpop.f32.mrf.mxu0
      %v7322 = vadd.f32 0.0, %v7321
      %7323 = vmatmul.f32.gmra.mxu0 %v7188
      %v7324 = vpop.f32.mrf.mxu0
      %v7325 = vadd.f32 0.0, %v7324
      %7326 = vmatmul.f32.gmra.mxu0 %v7191
      %v7327 = vpop.f32.mrf.mxu0
      %v7328 = vadd.f32 0.0, %v7327
      %7329 = vmatmul.f32.gmra.mxu0 %v7194
      %v7330 = vpop.f32.mrf.mxu0
      %v7331 = vadd.f32 0.0, %v7330
      %7332 = vmatmul.f32.gmra.mxu0 %v7197
      %v7333 = vpop.f32.mrf.mxu0
      %v7334 = vadd.f32 0.0, %v7333
      %7335 = vmatmul.f32.gmra.mxu0 %v7200
      %v7336 = vpop.f32.mrf.mxu0
      %v7337 = vadd.f32 0.0, %v7336
      %7338 = vmatmul.f32.gmra.mxu0 %v7203
      %v7339 = vpop.f32.mrf.mxu0
      %v7340 = vadd.f32 0.0, %v7339
      %7341 = vmatmul.f32.gmra.mxu0 %v7206
      %v7342 = vpop.f32.mrf.mxu0
      %v7343 = vadd.f32 0.0, %v7342
      %7344 = vmatmul.f32.gmra.mxu0 %v7209
      %v7345 = vpop.f32.mrf.mxu0
      %v7346 = vadd.f32 0.0, %v7345
      %7347 = vmatmul.f32.gmra.mxu0 %v7212
      %v7348 = vpop.f32.mrf.mxu0
      %v7349 = vadd.f32 0.0, %v7348
      %7350 = vmatmul.f32.gmra.mxu0 %v7215
      %v7351 = vpop.f32.mrf.mxu0
      %v7352 = vadd.f32 0.0, %v7351
      %7353 = vmatmul.f32.gmra.mxu0 %v7218
      %v7354 = vpop.f32.mrf.mxu0
      %v7355 = vadd.f32 0.0, %v7354
      %7356 = vmatmul.f32.gmra.mxu0 %v7221
      %v7357 = vpop.f32.mrf.mxu0
      %v7358 = vadd.f32 0.0, %v7357
      %7359 = vmatmul.f32.gmra.mxu0 %v7224
      %v7360 = vpop.f32.mrf.mxu0
      %v7361 = vadd.f32 0.0, %v7360
      %7362 = vmatmul.f32.gmra.mxu0 %v7227
      %v7363 = vpop.f32.mrf.mxu0
      %v7364 = vadd.f32 0.0, %v7363
      %7365 = vmatmul.f32.gmra.mxu0 %v7230
      %v7366 = vpop.f32.mrf.mxu0
      %v7367 = vadd.f32 0.0, %v7366
      %7368 = vmatmul.f32.gmra.mxu0 %v7233
      %v7369 = vpop.f32.mrf.mxu0
      %v7370 = vadd.f32 0.0, %v7369
      %7371 = vmatmul.f32.gmra.mxu0 %v7236
      %v7372 = vpop.f32.mrf.mxu0
      %v7373 = vadd.f32 0.0, %v7372
      %7374 = vmatmul.f32.gmra.mxu0 %v7239
      %v7375 = vpop.f32.mrf.mxu0
      %v7376 = vadd.f32 0.0, %v7375
      %7377 = vmatmul.f32.gmra.mxu0 %v7242
      %v7378 = vpop.f32.mrf.mxu0
      %v7379 = vadd.f32 0.0, %v7378
      %7380 = vmatmul.f32.gmra.mxu0 %v7245
      %v7381 = vpop.f32.mrf.mxu0
      %v7382 = vadd.f32 0.0, %v7381
      %7383 = vmatmul.f32.gmra.mxu0 %v7248
      %v7384 = vpop.f32.mrf.mxu0
      %v7385 = vadd.f32 0.0, %v7384
      %7386 = vmatmul.f32.gmra.mxu0 %v7251
      %v7387 = vpop.f32.mrf.mxu0
      %v7388 = vadd.f32 0.0, %v7387
      %7389 = vmatmul.f32.gmra.mxu0 %v7254
      %v7390 = vpop.f32.mrf.mxu0
      %v7391 = vadd.f32 0.0, %v7390
      %7392 = vmatmul.f32.gmra.mxu0 %v7257
      %v7393 = vpop.f32.mrf.mxu0
      %v7394 = vadd.f32 0.0, %v7393
      %7395 = vmatmul.f32.gmra.mxu0 %v7260
      %v7396 = vpop.f32.mrf.mxu0
      %v7397 = vadd.f32 0.0, %v7396
      %7398 = vdwg.mxu0
      %v7399 = vadd.f32 %v7057, %v7280
      %v7400 = vadd.f32 %v7058, %v7283
      %v7401 = vadd.f32 %v7059, %v7286
      %v7402 = vadd.f32 %v7060, %v7289
      %v7403 = vadd.f32 %v7061, %v7292
      %v7404 = vadd.f32 %v7062, %v7295
      %v7405 = vadd.f32 %v7063, %v7298
      %v7406 = vadd.f32 %v7064, %v7301
      %v7407 = vadd.f32 %v7065, %v7304
      %v7408 = vadd.f32 %v7066, %v7307
      %v7409 = vadd.f32 %v7067, %v7310
      %v7410 = vadd.f32 %v7068, %v7313
      %v7411 = vadd.f32 %v7069, %v7316
      %v7412 = vadd.f32 %v7070, %v7319
      %v7413 = vadd.f32 %v7071, %v7322
      %v7414 = vadd.f32 %v7072, %v7325
      %v7415 = vadd.f32 %v7073, %v7328
      %v7416 = vadd.f32 %v7074, %v7331
      %v7417 = vadd.f32 %v7075, %v7334
      %v7418 = vadd.f32 %v7076, %v7337
      %v7419 = vadd.f32 %v7077, %v7340
      %v7420 = vadd.f32 %v7078, %v7343
      %v7421 = vadd.f32 %v7079, %v7346
      %v7422 = vadd.f32 %v7080, %v7349
      %v7423 = vadd.f32 %v7081, %v7352
      %v7424 = vadd.f32 %v7082, %v7355
      %v7425 = vadd.f32 %v7083, %v7358
      %v7426 = vadd.f32 %v7084, %v7361
      %v7427 = vadd.f32 %v7085, %v7364
      %v7428 = vadd.f32 %v7086, %v7367
      %v7429 = vadd.f32 %v7087, %v7370
      %v7430 = vadd.f32 %v7088, %v7373
      %v7431 = vadd.f32 %v7089, %v7376
      %v7432 = vadd.f32 %v7090, %v7379
      %v7433 = vadd.f32 %v7091, %v7382
      %v7434 = vadd.f32 %v7092, %v7385
      %v7435 = vadd.f32 %v7093, %v7388
      %v7436 = vadd.f32 %v7094, %v7391
      %v7437 = vadd.f32 %v7095, %v7394
      %v7438 = vadd.f32 %v7096, %v7397
      %v7439 = vld [vmem:[#allocation4 + $0x2c] sm:$0xff]
      %v7440 = vld [vmem:[#allocation4 + $0x34] sm:$0xff]
      %v7441 = vld [vmem:[#allocation4 + $0x3c] sm:$0xff]
      %v7442 = vld [vmem:[#allocation4 + $0x44] sm:$0xff]
      %v7443 = vld [vmem:[#allocation4 + $0x4c] sm:$0xff]
      %v7444 = vld [vmem:[#allocation4 + $0x54] sm:$0xff]
      %v7445 = vld [vmem:[#allocation4 + $0x5c] sm:$0xff]
      %v7446 = vld [vmem:[#allocation4 + $0x64] sm:$0xff]
      %v7447 = vld [vmem:[#allocation4 + $0x6c] sm:$0xff]
      %v7448 = vld [vmem:[#allocation4 + $0x74] sm:$0xff]
      %v7449 = vld [vmem:[#allocation4 + $0x7c] sm:$0xff]
      %v7450 = vld [vmem:[#allocation4 + $0x84] sm:$0xff]
      %v7451 = vld [vmem:[#allocation4 + $0x8c] sm:$0xff]
      %v7452 = vld [vmem:[#allocation4 + $0x94] sm:$0xff]
      %v7453 = vld [vmem:[#allocation4 + $0x9c] sm:$0xff]
      %v7454 = vld [vmem:[#allocation4 + $0xa4] sm:$0xff]
      %v7455 = vld [vmem:[#allocation4 + $0xac] sm:$0xff]
      %v7456 = vld [vmem:[#allocation4 + $0xb4] sm:$0xff]
      %v7457 = vld [vmem:[#allocation4 + $0xbc] sm:$0xff]
      %v7458 = vld [vmem:[#allocation4 + $0xc4] sm:$0xff]
      %v7459 = vld [vmem:[#allocation4 + $0xcc] sm:$0xff]
      %v7460 = vld [vmem:[#allocation4 + $0xd4] sm:$0xff]
      %v7461 = vld [vmem:[#allocation4 + $0xdc] sm:$0xff]
      %v7462 = vld [vmem:[#allocation4 + $0xe4] sm:$0xff]
      %v7463 = vld [vmem:[#allocation4 + $0xec] sm:$0xff]
      %v7464 = vld [vmem:[#allocation4 + $0xf4] sm:$0xff]
      %v7465 = vld [vmem:[#allocation4 + $0xfc] sm:$0xff]
      %v7466 = vld [vmem:[#allocation4 + $0x104] sm:$0xff]
      %v7467 = vld [vmem:[#allocation4 + $0x10c] sm:$0xff]
      %v7468 = vld [vmem:[#allocation4 + $0x114] sm:$0xff]
      %v7469 = vld [vmem:[#allocation4 + $0x11c] sm:$0xff]
      %v7470 = vld [vmem:[#allocation4 + $0x124] sm:$0xff]
      %v7471 = vld [vmem:[#allocation4 + $0x12c] sm:$0xff]
      %v7472 = vld [vmem:[#allocation4 + $0x134] sm:$0xff]
      %v7473 = vld [vmem:[#allocation4 + $0x13c] sm:$0xff]
      %v7474 = vld [vmem:[#allocation4 + $0x144] sm:$0xff]
      %v7475 = vld [vmem:[#allocation4 + $0x14c] sm:$0xff]
      %v7476 = vld [vmem:[#allocation4 + $0x154] sm:$0xff]
      %v7477 = vld [vmem:[#allocation4 + $0x15c] sm:$0xff]
      %v7478 = vld [vmem:[#allocation4 + $0x164] sm:$0xff]
      %s7479 = scalar_lea.vmem %s7, 448
      %v7480 = vld [vmem:[%s7479] sm:$0xff]
      %v7481 = vld [vmem:[%s7479 + $0x8] sm:$0xff]
      %v7482 = vld [vmem:[%s7479 + $0x10] sm:$0xff]
      %v7483 = vld [vmem:[%s7479 + $0x18] sm:$0xff]
      %v7485 = vsel %vm409, %v7439, 0
      %v7488 = vsel %vm409, %v7440, 0
      %v7491 = vsel %vm409, %v7441, 0
      %v7494 = vsel %vm409, %v7442, 0
      %v7497 = vsel %vm409, %v7443, 0
      %v7500 = vsel %vm409, %v7444, 0
      %v7503 = vsel %vm409, %v7445, 0
      %v7506 = vsel %vm409, %v7446, 0
      %v7509 = vsel %vm409, %v7447, 0
      %v7512 = vsel %vm409, %v7448, 0
      %v7515 = vsel %vm409, %v7449, 0
      %v7518 = vsel %vm409, %v7450, 0
      %v7521 = vsel %vm409, %v7451, 0
      %v7524 = vsel %vm409, %v7452, 0
      %v7527 = vsel %vm409, %v7453, 0
      %v7530 = vsel %vm409, %v7454, 0
      %v7533 = vsel %vm409, %v7455, 0
      %v7536 = vsel %vm409, %v7456, 0
      %v7539 = vsel %vm409, %v7457, 0
      %v7542 = vsel %vm409, %v7458, 0
      %v7545 = vsel %vm409, %v7459, 0
      %v7548 = vsel %vm409, %v7460, 0
      %v7551 = vsel %vm409, %v7461, 0
      %v7554 = vsel %vm409, %v7462, 0
      %v7557 = vsel %vm409, %v7463, 0
      %v7560 = vsel %vm409, %v7464, 0
      %v7563 = vsel %vm409, %v7465, 0
      %v7566 = vsel %vm409, %v7466, 0
      %v7569 = vsel %vm409, %v7467, 0
      %v7572 = vsel %vm409, %v7468, 0
      %v7575 = vsel %vm409, %v7469, 0
      %v7578 = vsel %vm409, %v7470, 0
      %v7581 = vsel %vm409, %v7471, 0
      %v7584 = vsel %vm409, %v7472, 0
      %v7587 = vsel %vm409, %v7473, 0
      %v7590 = vsel %vm409, %v7474, 0
      %v7593 = vsel %vm409, %v7475, 0
      %v7596 = vsel %vm409, %v7476, 0
      %v7599 = vsel %vm409, %v7477, 0
      %v7602 = vsel %vm409, %v7478, 0
      %7604 = vmatpush.msra.mxu0 0.0
      %7605 = vmatpush.msra.mxu0 0.0
      %7606 = vmatpush.msra.mxu0 0.0
      %7607 = vmatpush.msra.mxu0 0.0
      %7608 = vmatpush.msra.mxu0 0.0
      %7609 = vmatpush.msra.mxu0 0.0
      %7610 = vmatpush.msra.mxu0 0.0
      %7611 = vmatpush.msra.mxu0 0.0
      %7612 = vmatpush.msra.mxu0 0.0
      %7613 = vmatpush.msra.mxu0 0.0
      %7614 = vmatpush.msra.mxu0 0.0
      %7615 = vmatpush.msra.mxu0 0.0
      %7616 = vmatpush.msra.mxu0 %v7483
      %7617 = vmatpush.msra.mxu0 %v7482
      %7618 = vmatpush.msra.mxu0 %v7481
      %7619 = vmatpush.msra.mxu0 %v7480
      %7620 = vmatmul.f32.gmra.mxu0 %v7485
      %v7621 = vpop.f32.mrf.mxu0
      %v7622 = vadd.f32 0.0, %v7621
      %7623 = vmatmul.f32.gmra.mxu0 %v7488
      %v7624 = vpop.f32.mrf.mxu0
      %v7625 = vadd.f32 0.0, %v7624
      %7626 = vmatmul.f32.gmra.mxu0 %v7491
      %v7627 = vpop.f32.mrf.mxu0
      %v7628 = vadd.f32 0.0, %v7627
      %7629 = vmatmul.f32.gmra.mxu0 %v7494
      %v7630 = vpop.f32.mrf.mxu0
      %v7631 = vadd.f32 0.0, %v7630
      %7632 = vmatmul.f32.gmra.mxu0 %v7497
      %v7633 = vpop.f32.mrf.mxu0
      %v7634 = vadd.f32 0.0, %v7633
      %7635 = vmatmul.f32.gmra.mxu0 %v7500
      %v7636 = vpop.f32.mrf.mxu0
      %v7637 = vadd.f32 0.0, %v7636
      %7638 = vmatmul.f32.gmra.mxu0 %v7503
      %v7639 = vpop.f32.mrf.mxu0
      %v7640 = vadd.f32 0.0, %v7639
      %7641 = vmatmul.f32.gmra.mxu0 %v7506
      %v7642 = vpop.f32.mrf.mxu0
      %v7643 = vadd.f32 0.0, %v7642
      %7644 = vmatmul.f32.gmra.mxu0 %v7509
      %v7645 = vpop.f32.mrf.mxu0
      %v7646 = vadd.f32 0.0, %v7645
      %7647 = vmatmul.f32.gmra.mxu0 %v7512
      %v7648 = vpop.f32.mrf.mxu0
      %v7649 = vadd.f32 0.0, %v7648
      %7650 = vmatmul.f32.gmra.mxu0 %v7515
      %v7651 = vpop.f32.mrf.mxu0
      %v7652 = vadd.f32 0.0, %v7651
      %7653 = vmatmul.f32.gmra.mxu0 %v7518
      %v7654 = vpop.f32.mrf.mxu0
      %v7655 = vadd.f32 0.0, %v7654
      %7656 = vmatmul.f32.gmra.mxu0 %v7521
      %v7657 = vpop.f32.mrf.mxu0
      %v7658 = vadd.f32 0.0, %v7657
      %7659 = vmatmul.f32.gmra.mxu0 %v7524
      %v7660 = vpop.f32.mrf.mxu0
      %v7661 = vadd.f32 0.0, %v7660
      %7662 = vmatmul.f32.gmra.mxu0 %v7527
      %v7663 = vpop.f32.mrf.mxu0
      %v7664 = vadd.f32 0.0, %v7663
      %7665 = vmatmul.f32.gmra.mxu0 %v7530
      %v7666 = vpop.f32.mrf.mxu0
      %v7667 = vadd.f32 0.0, %v7666
      %7668 = vmatmul.f32.gmra.mxu0 %v7533
      %v7669 = vpop.f32.mrf.mxu0
      %v7670 = vadd.f32 0.0, %v7669
      %7671 = vmatmul.f32.gmra.mxu0 %v7536
      %v7672 = vpop.f32.mrf.mxu0
      %v7673 = vadd.f32 0.0, %v7672
      %7674 = vmatmul.f32.gmra.mxu0 %v7539
      %v7675 = vpop.f32.mrf.mxu0
      %v7676 = vadd.f32 0.0, %v7675
      %7677 = vmatmul.f32.gmra.mxu0 %v7542
      %v7678 = vpop.f32.mrf.mxu0
      %v7679 = vadd.f32 0.0, %v7678
      %7680 = vmatmul.f32.gmra.mxu0 %v7545
      %v7681 = vpop.f32.mrf.mxu0
      %v7682 = vadd.f32 0.0, %v7681
      %7683 = vmatmul.f32.gmra.mxu0 %v7548
      %v7684 = vpop.f32.mrf.mxu0
      %v7685 = vadd.f32 0.0, %v7684
      %7686 = vmatmul.f32.gmra.mxu0 %v7551
      %v7687 = vpop.f32.mrf.mxu0
      %v7688 = vadd.f32 0.0, %v7687
      %7689 = vmatmul.f32.gmra.mxu0 %v7554
      %v7690 = vpop.f32.mrf.mxu0
      %v7691 = vadd.f32 0.0, %v7690
      %7692 = vmatmul.f32.gmra.mxu0 %v7557
      %v7693 = vpop.f32.mrf.mxu0
      %v7694 = vadd.f32 0.0, %v7693
      %7695 = vmatmul.f32.gmra.mxu0 %v7560
      %v7696 = vpop.f32.mrf.mxu0
      %v7697 = vadd.f32 0.0, %v7696
      %7698 = vmatmul.f32.gmra.mxu0 %v7563
      %v7699 = vpop.f32.mrf.mxu0
      %v7700 = vadd.f32 0.0, %v7699
      %7701 = vmatmul.f32.gmra.mxu0 %v7566
      %v7702 = vpop.f32.mrf.mxu0
      %v7703 = vadd.f32 0.0, %v7702
      %7704 = vmatmul.f32.gmra.mxu0 %v7569
      %v7705 = vpop.f32.mrf.mxu0
      %v7706 = vadd.f32 0.0, %v7705
      %7707 = vmatmul.f32.gmra.mxu0 %v7572
      %v7708 = vpop.f32.mrf.mxu0
      %v7709 = vadd.f32 0.0, %v7708
      %7710 = vmatmul.f32.gmra.mxu0 %v7575
      %v7711 = vpop.f32.mrf.mxu0
      %v7712 = vadd.f32 0.0, %v7711
      %7713 = vmatmul.f32.gmra.mxu0 %v7578
      %v7714 = vpop.f32.mrf.mxu0
      %v7715 = vadd.f32 0.0, %v7714
      %7716 = vmatmul.f32.gmra.mxu0 %v7581
      %v7717 = vpop.f32.mrf.mxu0
      %v7718 = vadd.f32 0.0, %v7717
      %7719 = vmatmul.f32.gmra.mxu0 %v7584
      %v7720 = vpop.f32.mrf.mxu0
      %v7721 = vadd.f32 0.0, %v7720
      %7722 = vmatmul.f32.gmra.mxu0 %v7587
      %v7723 = vpop.f32.mrf.mxu0
      %v7724 = vadd.f32 0.0, %v7723
      %7725 = vmatmul.f32.gmra.mxu0 %v7590
      %v7726 = vpop.f32.mrf.mxu0
      %v7727 = vadd.f32 0.0, %v7726
      %7728 = vmatmul.f32.gmra.mxu0 %v7593
      %v7729 = vpop.f32.mrf.mxu0
      %v7730 = vadd.f32 0.0, %v7729
      %7731 = vmatmul.f32.gmra.mxu0 %v7596
      %v7732 = vpop.f32.mrf.mxu0
      %v7733 = vadd.f32 0.0, %v7732
      %7734 = vmatmul.f32.gmra.mxu0 %v7599
      %v7735 = vpop.f32.mrf.mxu0
      %v7736 = vadd.f32 0.0, %v7735
      %7737 = vmatmul.f32.gmra.mxu0 %v7602
      %v7738 = vpop.f32.mrf.mxu0
      %v7739 = vadd.f32 0.0, %v7738
      %7740 = vdwg.mxu0
      %v7741 = vadd.f32 %v7399, %v7622
      %v7742 = vadd.f32 %v7400, %v7625
      %v7743 = vadd.f32 %v7401, %v7628
      %v7744 = vadd.f32 %v7402, %v7631
      %v7745 = vadd.f32 %v7403, %v7634
      %v7746 = vadd.f32 %v7404, %v7637
      %v7747 = vadd.f32 %v7405, %v7640
      %v7748 = vadd.f32 %v7406, %v7643
      %v7749 = vadd.f32 %v7407, %v7646
      %v7750 = vadd.f32 %v7408, %v7649
      %v7751 = vadd.f32 %v7409, %v7652
      %v7752 = vadd.f32 %v7410, %v7655
      %v7753 = vadd.f32 %v7411, %v7658
      %v7754 = vadd.f32 %v7412, %v7661
      %v7755 = vadd.f32 %v7413, %v7664
      %v7756 = vadd.f32 %v7414, %v7667
      %v7757 = vadd.f32 %v7415, %v7670
      %v7758 = vadd.f32 %v7416, %v7673
      %v7759 = vadd.f32 %v7417, %v7676
      %v7760 = vadd.f32 %v7418, %v7679
      %v7761 = vadd.f32 %v7419, %v7682
      %v7762 = vadd.f32 %v7420, %v7685
      %v7763 = vadd.f32 %v7421, %v7688
      %v7764 = vadd.f32 %v7422, %v7691
      %v7765 = vadd.f32 %v7423, %v7694
      %v7766 = vadd.f32 %v7424, %v7697
      %v7767 = vadd.f32 %v7425, %v7700
      %v7768 = vadd.f32 %v7426, %v7703
      %v7769 = vadd.f32 %v7427, %v7706
      %v7770 = vadd.f32 %v7428, %v7709
      %v7771 = vadd.f32 %v7429, %v7712
      %v7772 = vadd.f32 %v7430, %v7715
      %v7773 = vadd.f32 %v7431, %v7718
      %v7774 = vadd.f32 %v7432, %v7721
      %v7775 = vadd.f32 %v7433, %v7724
      %v7776 = vadd.f32 %v7434, %v7727
      %v7777 = vadd.f32 %v7435, %v7730
      %v7778 = vadd.f32 %v7436, %v7733
      %v7779 = vadd.f32 %v7437, %v7736
      %v7780 = vadd.f32 %v7438, %v7739
      %v7781 = vld [vmem:[#allocation4 + $0x3c] sm:$0xff]
      %v7782 = vld [vmem:[#allocation4 + $0x44] sm:$0xff]
      %v7783 = vld [vmem:[#allocation4 + $0x4c] sm:$0xff]
      %v7784 = vld [vmem:[#allocation4 + $0x54] sm:$0xff]
      %v7785 = vld [vmem:[#allocation4 + $0x5c] sm:$0xff]
      %v7786 = vld [vmem:[#allocation4 + $0x64] sm:$0xff]
      %v7787 = vld [vmem:[#allocation4 + $0x6c] sm:$0xff]
      %v7788 = vld [vmem:[#allocation4 + $0x74] sm:$0xff]
      %v7789 = vld [vmem:[#allocation4 + $0x7c] sm:$0xff]
      %v7790 = vld [vmem:[#allocation4 + $0x84] sm:$0xff]
      %v7791 = vld [vmem:[#allocation4 + $0x8c] sm:$0xff]
      %v7792 = vld [vmem:[#allocation4 + $0x94] sm:$0xff]
      %v7793 = vld [vmem:[#allocation4 + $0x9c] sm:$0xff]
      %v7794 = vld [vmem:[#allocation4 + $0xa4] sm:$0xff]
      %v7795 = vld [vmem:[#allocation4 + $0xac] sm:$0xff]
      %v7796 = vld [vmem:[#allocation4 + $0xb4] sm:$0xff]
      %v7797 = vld [vmem:[#allocation4 + $0xbc] sm:$0xff]
      %v7798 = vld [vmem:[#allocation4 + $0xc4] sm:$0xff]
      %v7799 = vld [vmem:[#allocation4 + $0xcc] sm:$0xff]
      %v7800 = vld [vmem:[#allocation4 + $0xd4] sm:$0xff]
      %v7801 = vld [vmem:[#allocation4 + $0xdc] sm:$0xff]
      %v7802 = vld [vmem:[#allocation4 + $0xe4] sm:$0xff]
      %v7803 = vld [vmem:[#allocation4 + $0xec] sm:$0xff]
      %v7804 = vld [vmem:[#allocation4 + $0xf4] sm:$0xff]
      %v7805 = vld [vmem:[#allocation4 + $0xfc] sm:$0xff]
      %v7806 = vld [vmem:[#allocation4 + $0x104] sm:$0xff]
      %v7807 = vld [vmem:[#allocation4 + $0x10c] sm:$0xff]
      %v7808 = vld [vmem:[#allocation4 + $0x114] sm:$0xff]
      %v7809 = vld [vmem:[#allocation4 + $0x11c] sm:$0xff]
      %v7810 = vld [vmem:[#allocation4 + $0x124] sm:$0xff]
      %v7811 = vld [vmem:[#allocation4 + $0x12c] sm:$0xff]
      %v7812 = vld [vmem:[#allocation4 + $0x134] sm:$0xff]
      %v7813 = vld [vmem:[#allocation4 + $0x13c] sm:$0xff]
      %v7814 = vld [vmem:[#allocation4 + $0x144] sm:$0xff]
      %v7815 = vld [vmem:[#allocation4 + $0x14c] sm:$0xff]
      %v7816 = vld [vmem:[#allocation4 + $0x154] sm:$0xff]
      %v7817 = vld [vmem:[#allocation4 + $0x15c] sm:$0xff]
      %v7818 = vld [vmem:[#allocation4 + $0x164] sm:$0xff]
      %v7819 = vld [vmem:[#allocation4 + $0x16c] sm:$0xff]
      %v7820 = vld [vmem:[#allocation4 + $0x174] sm:$0xff]
      %s7821 = scalar_lea.vmem %s7, 480
      %v7822 = vld [vmem:[%s7821] sm:$0xff]
      %v7823 = vld [vmem:[%s7821 + $0x8] sm:$0xff]
      %v7824 = vld [vmem:[%s7821 + $0x10] sm:$0xff]
      %v7825 = vld [vmem:[%s7821 + $0x18] sm:$0xff]
      %v7827 = vsel %vm409, %v7781, 0
      %v7830 = vsel %vm409, %v7782, 0
      %v7833 = vsel %vm409, %v7783, 0
      %v7836 = vsel %vm409, %v7784, 0
      %v7839 = vsel %vm409, %v7785, 0
      %v7842 = vsel %vm409, %v7786, 0
      %v7845 = vsel %vm409, %v7787, 0
      %v7848 = vsel %vm409, %v7788, 0
      %v7851 = vsel %vm409, %v7789, 0
      %v7854 = vsel %vm409, %v7790, 0
      %v7857 = vsel %vm409, %v7791, 0
      %v7860 = vsel %vm409, %v7792, 0
      %v7863 = vsel %vm409, %v7793, 0
      %v7866 = vsel %vm409, %v7794, 0
      %v7869 = vsel %vm409, %v7795, 0
      %v7872 = vsel %vm409, %v7796, 0
      %v7875 = vsel %vm409, %v7797, 0
      %v7878 = vsel %vm409, %v7798, 0
      %v7881 = vsel %vm409, %v7799, 0
      %v7884 = vsel %vm409, %v7800, 0
      %v7887 = vsel %vm409, %v7801, 0
      %v7890 = vsel %vm409, %v7802, 0
      %v7893 = vsel %vm409, %v7803, 0
      %v7896 = vsel %vm409, %v7804, 0
      %v7899 = vsel %vm409, %v7805, 0
      %v7902 = vsel %vm409, %v7806, 0
      %v7905 = vsel %vm409, %v7807, 0
      %v7908 = vsel %vm409, %v7808, 0
      %v7911 = vsel %vm409, %v7809, 0
      %v7914 = vsel %vm409, %v7810, 0
      %v7917 = vsel %vm409, %v7811, 0
      %v7920 = vsel %vm409, %v7812, 0
      %v7923 = vsel %vm409, %v7813, 0
      %v7926 = vsel %vm409, %v7814, 0
      %v7929 = vsel %vm409, %v7815, 0
      %v7932 = vsel %vm409, %v7816, 0
      %v7935 = vsel %vm409, %v7817, 0
      %v7938 = vsel %vm409, %v7818, 0
      %v7941 = vsel %vm409, %v7819, 0
      %v7944 = vsel %vm409, %v7820, 0
      %7946 = vmatpush.msra.mxu0 0.0
      %7947 = vmatpush.msra.mxu0 0.0
      %7948 = vmatpush.msra.mxu0 0.0
      %7949 = vmatpush.msra.mxu0 0.0
      %7950 = vmatpush.msra.mxu0 0.0
      %7951 = vmatpush.msra.mxu0 0.0
      %7952 = vmatpush.msra.mxu0 0.0
      %7953 = vmatpush.msra.mxu0 0.0
      %7954 = vmatpush.msra.mxu0 0.0
      %7955 = vmatpush.msra.mxu0 0.0
      %7956 = vmatpush.msra.mxu0 0.0
      %7957 = vmatpush.msra.mxu0 0.0
      %7958 = vmatpush.msra.mxu0 %v7825
      %7959 = vmatpush.msra.mxu0 %v7824
      %7960 = vmatpush.msra.mxu0 %v7823
      %7961 = vmatpush.msra.mxu0 %v7822
      %7962 = vmatmul.f32.gmra.mxu0 %v7827
      %v7963 = vpop.f32.mrf.mxu0
      %v7964 = vadd.f32 0.0, %v7963
      %7965 = vmatmul.f32.gmra.mxu0 %v7830
      %v7966 = vpop.f32.mrf.mxu0
      %v7967 = vadd.f32 0.0, %v7966
      %7968 = vmatmul.f32.gmra.mxu0 %v7833
      %v7969 = vpop.f32.mrf.mxu0
      %v7970 = vadd.f32 0.0, %v7969
      %7971 = vmatmul.f32.gmra.mxu0 %v7836
      %v7972 = vpop.f32.mrf.mxu0
      %v7973 = vadd.f32 0.0, %v7972
      %7974 = vmatmul.f32.gmra.mxu0 %v7839
      %v7975 = vpop.f32.mrf.mxu0
      %v7976 = vadd.f32 0.0, %v7975
      %7977 = vmatmul.f32.gmra.mxu0 %v7842
      %v7978 = vpop.f32.mrf.mxu0
      %v7979 = vadd.f32 0.0, %v7978
      %7980 = vmatmul.f32.gmra.mxu0 %v7845
      %v7981 = vpop.f32.mrf.mxu0
      %v7982 = vadd.f32 0.0, %v7981
      %7983 = vmatmul.f32.gmra.mxu0 %v7848
      %v7984 = vpop.f32.mrf.mxu0
      %v7985 = vadd.f32 0.0, %v7984
      %7986 = vmatmul.f32.gmra.mxu0 %v7851
      %v7987 = vpop.f32.mrf.mxu0
      %v7988 = vadd.f32 0.0, %v7987
      %7989 = vmatmul.f32.gmra.mxu0 %v7854
      %v7990 = vpop.f32.mrf.mxu0
      %v7991 = vadd.f32 0.0, %v7990
      %7992 = vmatmul.f32.gmra.mxu0 %v7857
      %v7993 = vpop.f32.mrf.mxu0
      %v7994 = vadd.f32 0.0, %v7993
      %7995 = vmatmul.f32.gmra.mxu0 %v7860
      %v7996 = vpop.f32.mrf.mxu0
      %v7997 = vadd.f32 0.0, %v7996
      %7998 = vmatmul.f32.gmra.mxu0 %v7863
      %v7999 = vpop.f32.mrf.mxu0
      %v8000 = vadd.f32 0.0, %v7999
      %8001 = vmatmul.f32.gmra.mxu0 %v7866
      %v8002 = vpop.f32.mrf.mxu0
      %v8003 = vadd.f32 0.0, %v8002
      %8004 = vmatmul.f32.gmra.mxu0 %v7869
      %v8005 = vpop.f32.mrf.mxu0
      %v8006 = vadd.f32 0.0, %v8005
      %8007 = vmatmul.f32.gmra.mxu0 %v7872
      %v8008 = vpop.f32.mrf.mxu0
      %v8009 = vadd.f32 0.0, %v8008
      %8010 = vmatmul.f32.gmra.mxu0 %v7875
      %v8011 = vpop.f32.mrf.mxu0
      %v8012 = vadd.f32 0.0, %v8011
      %8013 = vmatmul.f32.gmra.mxu0 %v7878
      %v8014 = vpop.f32.mrf.mxu0
      %v8015 = vadd.f32 0.0, %v8014
      %8016 = vmatmul.f32.gmra.mxu0 %v7881
      %v8017 = vpop.f32.mrf.mxu0
      %v8018 = vadd.f32 0.0, %v8017
      %8019 = vmatmul.f32.gmra.mxu0 %v7884
      %v8020 = vpop.f32.mrf.mxu0
      %v8021 = vadd.f32 0.0, %v8020
      %8022 = vmatmul.f32.gmra.mxu0 %v7887
      %v8023 = vpop.f32.mrf.mxu0
      %v8024 = vadd.f32 0.0, %v8023
      %8025 = vmatmul.f32.gmra.mxu0 %v7890
      %v8026 = vpop.f32.mrf.mxu0
      %v8027 = vadd.f32 0.0, %v8026
      %8028 = vmatmul.f32.gmra.mxu0 %v7893
      %v8029 = vpop.f32.mrf.mxu0
      %v8030 = vadd.f32 0.0, %v8029
      %8031 = vmatmul.f32.gmra.mxu0 %v7896
      %v8032 = vpop.f32.mrf.mxu0
      %v8033 = vadd.f32 0.0, %v8032
      %8034 = vmatmul.f32.gmra.mxu0 %v7899
      %v8035 = vpop.f32.mrf.mxu0
      %v8036 = vadd.f32 0.0, %v8035
      %8037 = vmatmul.f32.gmra.mxu0 %v7902
      %v8038 = vpop.f32.mrf.mxu0
      %v8039 = vadd.f32 0.0, %v8038
      %8040 = vmatmul.f32.gmra.mxu0 %v7905
      %v8041 = vpop.f32.mrf.mxu0
      %v8042 = vadd.f32 0.0, %v8041
      %8043 = vmatmul.f32.gmra.mxu0 %v7908
      %v8044 = vpop.f32.mrf.mxu0
      %v8045 = vadd.f32 0.0, %v8044
      %8046 = vmatmul.f32.gmra.mxu0 %v7911
      %v8047 = vpop.f32.mrf.mxu0
      %v8048 = vadd.f32 0.0, %v8047
      %8049 = vmatmul.f32.gmra.mxu0 %v7914
      %v8050 = vpop.f32.mrf.mxu0
      %v8051 = vadd.f32 0.0, %v8050
      %8052 = vmatmul.f32.gmra.mxu0 %v7917
      %v8053 = vpop.f32.mrf.mxu0
      %v8054 = vadd.f32 0.0, %v8053
      %8055 = vmatmul.f32.gmra.mxu0 %v7920
      %v8056 = vpop.f32.mrf.mxu0
      %v8057 = vadd.f32 0.0, %v8056
      %8058 = vmatmul.f32.gmra.mxu0 %v7923
      %v8059 = vpop.f32.mrf.mxu0
      %v8060 = vadd.f32 0.0, %v8059
      %8061 = vmatmul.f32.gmra.mxu0 %v7926
      %v8062 = vpop.f32.mrf.mxu0
      %v8063 = vadd.f32 0.0, %v8062
      %8064 = vmatmul.f32.gmra.mxu0 %v7929
      %v8065 = vpop.f32.mrf.mxu0
      %v8066 = vadd.f32 0.0, %v8065
      %8067 = vmatmul.f32.gmra.mxu0 %v7932
      %v8068 = vpop.f32.mrf.mxu0
      %v8069 = vadd.f32 0.0, %v8068
      %8070 = vmatmul.f32.gmra.mxu0 %v7935
      %v8071 = vpop.f32.mrf.mxu0
      %v8072 = vadd.f32 0.0, %v8071
      %8073 = vmatmul.f32.gmra.mxu0 %v7938
      %v8074 = vpop.f32.mrf.mxu0
      %v8075 = vadd.f32 0.0, %v8074
      %8076 = vmatmul.f32.gmra.mxu0 %v7941
      %v8077 = vpop.f32.mrf.mxu0
      %v8078 = vadd.f32 0.0, %v8077
      %8079 = vmatmul.f32.gmra.mxu0 %v7944
      %v8080 = vpop.f32.mrf.mxu0
      %v8081 = vadd.f32 0.0, %v8080
      %8082 = vdwg.mxu0
      %v8083 = vadd.f32 %v7741, %v7964
      %v8084 = vadd.f32 %v7742, %v7967
      %v8085 = vadd.f32 %v7743, %v7970
      %v8086 = vadd.f32 %v7744, %v7973
      %v8087 = vadd.f32 %v7745, %v7976
      %v8088 = vadd.f32 %v7746, %v7979
      %v8089 = vadd.f32 %v7747, %v7982
      %v8090 = vadd.f32 %v7748, %v7985
      %v8091 = vadd.f32 %v7749, %v7988
      %v8092 = vadd.f32 %v7750, %v7991
      %v8093 = vadd.f32 %v7751, %v7994
      %v8094 = vadd.f32 %v7752, %v7997
      %v8095 = vadd.f32 %v7753, %v8000
      %v8096 = vadd.f32 %v7754, %v8003
      %v8097 = vadd.f32 %v7755, %v8006
      %v8098 = vadd.f32 %v7756, %v8009
      %v8099 = vadd.f32 %v7757, %v8012
      %v8100 = vadd.f32 %v7758, %v8015
      %v8101 = vadd.f32 %v7759, %v8018
      %v8102 = vadd.f32 %v7760, %v8021
      %v8103 = vadd.f32 %v7761, %v8024
      %v8104 = vadd.f32 %v7762, %v8027
      %v8105 = vadd.f32 %v7763, %v8030
      %v8106 = vadd.f32 %v7764, %v8033
      %v8107 = vadd.f32 %v7765, %v8036
      %v8108 = vadd.f32 %v7766, %v8039
      %v8109 = vadd.f32 %v7767, %v8042
      %v8110 = vadd.f32 %v7768, %v8045
      %v8111 = vadd.f32 %v7769, %v8048
      %v8112 = vadd.f32 %v7770, %v8051
      %v8113 = vadd.f32 %v7771, %v8054
      %v8114 = vadd.f32 %v7772, %v8057
      %v8115 = vadd.f32 %v7773, %v8060
      %v8116 = vadd.f32 %v7774, %v8063
      %v8117 = vadd.f32 %v7775, %v8066
      %v8118 = vadd.f32 %v7776, %v8069
      %v8119 = vadd.f32 %v7777, %v8072
      %v8120 = vadd.f32 %v7778, %v8075
      %v8121 = vadd.f32 %v7779, %v8078
      %v8122 = vadd.f32 %v7780, %v8081
      %v8123 = vld [vmem:[#allocation4 + $0x3d] sm:$0xff]
      %v8124 = vld [vmem:[#allocation4 + $0x45] sm:$0xff]
      %v8125 = vld [vmem:[#allocation4 + $0x4d] sm:$0xff]
      %v8126 = vld [vmem:[#allocation4 + $0x55] sm:$0xff]
      %v8127 = vld [vmem:[#allocation4 + $0x5d] sm:$0xff]
      %v8128 = vld [vmem:[#allocation4 + $0x65] sm:$0xff]
      %v8129 = vld [vmem:[#allocation4 + $0x6d] sm:$0xff]
      %v8130 = vld [vmem:[#allocation4 + $0x75] sm:$0xff]
      %v8131 = vld [vmem:[#allocation4 + $0x7d] sm:$0xff]
      %v8132 = vld [vmem:[#allocation4 + $0x85] sm:$0xff]
      %v8133 = vld [vmem:[#allocation4 + $0x8d] sm:$0xff]
      %v8134 = vld [vmem:[#allocation4 + $0x95] sm:$0xff]
      %v8135 = vld [vmem:[#allocation4 + $0x9d] sm:$0xff]
      %v8136 = vld [vmem:[#allocation4 + $0xa5] sm:$0xff]
      %v8137 = vld [vmem:[#allocation4 + $0xad] sm:$0xff]
      %v8138 = vld [vmem:[#allocation4 + $0xb5] sm:$0xff]
      %v8139 = vld [vmem:[#allocation4 + $0xbd] sm:$0xff]
      %v8140 = vld [vmem:[#allocation4 + $0xc5] sm:$0xff]
      %v8141 = vld [vmem:[#allocation4 + $0xcd] sm:$0xff]
      %v8142 = vld [vmem:[#allocation4 + $0xd5] sm:$0xff]
      %v8143 = vld [vmem:[#allocation4 + $0xdd] sm:$0xff]
      %v8144 = vld [vmem:[#allocation4 + $0xe5] sm:$0xff]
      %v8145 = vld [vmem:[#allocation4 + $0xed] sm:$0xff]
      %v8146 = vld [vmem:[#allocation4 + $0xf5] sm:$0xff]
      %v8147 = vld [vmem:[#allocation4 + $0xfd] sm:$0xff]
      %v8148 = vld [vmem:[#allocation4 + $0x105] sm:$0xff]
      %v8149 = vld [vmem:[#allocation4 + $0x10d] sm:$0xff]
      %v8150 = vld [vmem:[#allocation4 + $0x115] sm:$0xff]
      %v8151 = vld [vmem:[#allocation4 + $0x11d] sm:$0xff]
      %v8152 = vld [vmem:[#allocation4 + $0x125] sm:$0xff]
      %v8153 = vld [vmem:[#allocation4 + $0x12d] sm:$0xff]
      %v8154 = vld [vmem:[#allocation4 + $0x135] sm:$0xff]
      %v8155 = vld [vmem:[#allocation4 + $0x13d] sm:$0xff]
      %v8156 = vld [vmem:[#allocation4 + $0x145] sm:$0xff]
      %v8157 = vld [vmem:[#allocation4 + $0x14d] sm:$0xff]
      %v8158 = vld [vmem:[#allocation4 + $0x155] sm:$0xff]
      %v8159 = vld [vmem:[#allocation4 + $0x15d] sm:$0xff]
      %v8160 = vld [vmem:[#allocation4 + $0x165] sm:$0xff]
      %v8161 = vld [vmem:[#allocation4 + $0x16d] sm:$0xff]
      %v8162 = vld [vmem:[#allocation4 + $0x175] sm:$0xff]
      %s8163 = scalar_lea.vmem %s7, 512
      %v8164 = vld [vmem:[%s8163] sm:$0xff]
      %v8165 = vld [vmem:[%s8163 + $0x8] sm:$0xff]
      %v8166 = vld [vmem:[%s8163 + $0x10] sm:$0xff]
      %v8167 = vld [vmem:[%s8163 + $0x18] sm:$0xff]
      %v8169 = vsel %vm409, %v8123, 0
      %v8172 = vsel %vm409, %v8124, 0
      %v8175 = vsel %vm409, %v8125, 0
      %v8178 = vsel %vm409, %v8126, 0
      %v8181 = vsel %vm409, %v8127, 0
      %v8184 = vsel %vm409, %v8128, 0
      %v8187 = vsel %vm409, %v8129, 0
      %v8190 = vsel %vm409, %v8130, 0
      %v8193 = vsel %vm409, %v8131, 0
      %v8196 = vsel %vm409, %v8132, 0
      %v8199 = vsel %vm409, %v8133, 0
      %v8202 = vsel %vm409, %v8134, 0
      %v8205 = vsel %vm409, %v8135, 0
      %v8208 = vsel %vm409, %v8136, 0
      %v8211 = vsel %vm409, %v8137, 0
      %v8214 = vsel %vm409, %v8138, 0
      %v8217 = vsel %vm409, %v8139, 0
      %v8220 = vsel %vm409, %v8140, 0
      %v8223 = vsel %vm409, %v8141, 0
      %v8226 = vsel %vm409, %v8142, 0
      %v8229 = vsel %vm409, %v8143, 0
      %v8232 = vsel %vm409, %v8144, 0
      %v8235 = vsel %vm409, %v8145, 0
      %v8238 = vsel %vm409, %v8146, 0
      %v8241 = vsel %vm409, %v8147, 0
      %v8244 = vsel %vm409, %v8148, 0
      %v8247 = vsel %vm409, %v8149, 0
      %v8250 = vsel %vm409, %v8150, 0
      %v8253 = vsel %vm409, %v8151, 0
      %v8256 = vsel %vm409, %v8152, 0
      %v8259 = vsel %vm409, %v8153, 0
      %v8262 = vsel %vm409, %v8154, 0
      %v8265 = vsel %vm409, %v8155, 0
      %v8268 = vsel %vm409, %v8156, 0
      %v8271 = vsel %vm409, %v8157, 0
      %v8274 = vsel %vm409, %v8158, 0
      %v8277 = vsel %vm409, %v8159, 0
      %v8280 = vsel %vm409, %v8160, 0
      %v8283 = vsel %vm409, %v8161, 0
      %v8286 = vsel %vm409, %v8162, 0
      %8288 = vmatpush.msra.mxu0 0.0
      %8289 = vmatpush.msra.mxu0 0.0
      %8290 = vmatpush.msra.mxu0 0.0
      %8291 = vmatpush.msra.mxu0 0.0
      %8292 = vmatpush.msra.mxu0 0.0
      %8293 = vmatpush.msra.mxu0 0.0
      %8294 = vmatpush.msra.mxu0 0.0
      %8295 = vmatpush.msra.mxu0 0.0
      %8296 = vmatpush.msra.mxu0 0.0
      %8297 = vmatpush.msra.mxu0 0.0
      %8298 = vmatpush.msra.mxu0 0.0
      %8299 = vmatpush.msra.mxu0 0.0
      %8300 = vmatpush.msra.mxu0 %v8167
      %8301 = vmatpush.msra.mxu0 %v8166
      %8302 = vmatpush.msra.mxu0 %v8165
      %8303 = vmatpush.msra.mxu0 %v8164
      %8304 = vmatmul.f32.gmra.mxu0 %v8169
      %v8305 = vpop.f32.mrf.mxu0
      %v8306 = vadd.f32 0.0, %v8305
      %8307 = vmatmul.f32.gmra.mxu0 %v8172
      %v8308 = vpop.f32.mrf.mxu0
      %v8309 = vadd.f32 0.0, %v8308
      %8310 = vmatmul.f32.gmra.mxu0 %v8175
      %v8311 = vpop.f32.mrf.mxu0
      %v8312 = vadd.f32 0.0, %v8311
      %8313 = vmatmul.f32.gmra.mxu0 %v8178
      %v8314 = vpop.f32.mrf.mxu0
      %v8315 = vadd.f32 0.0, %v8314
      %8316 = vmatmul.f32.gmra.mxu0 %v8181
      %v8317 = vpop.f32.mrf.mxu0
      %v8318 = vadd.f32 0.0, %v8317
      %8319 = vmatmul.f32.gmra.mxu0 %v8184
      %v8320 = vpop.f32.mrf.mxu0
      %v8321 = vadd.f32 0.0, %v8320
      %8322 = vmatmul.f32.gmra.mxu0 %v8187
      %v8323 = vpop.f32.mrf.mxu0
      %v8324 = vadd.f32 0.0, %v8323
      %8325 = vmatmul.f32.gmra.mxu0 %v8190
      %v8326 = vpop.f32.mrf.mxu0
      %v8327 = vadd.f32 0.0, %v8326
      %8328 = vmatmul.f32.gmra.mxu0 %v8193
      %v8329 = vpop.f32.mrf.mxu0
      %v8330 = vadd.f32 0.0, %v8329
      %8331 = vmatmul.f32.gmra.mxu0 %v8196
      %v8332 = vpop.f32.mrf.mxu0
      %v8333 = vadd.f32 0.0, %v8332
      %8334 = vmatmul.f32.gmra.mxu0 %v8199
      %v8335 = vpop.f32.mrf.mxu0
      %v8336 = vadd.f32 0.0, %v8335
      %8337 = vmatmul.f32.gmra.mxu0 %v8202
      %v8338 = vpop.f32.mrf.mxu0
      %v8339 = vadd.f32 0.0, %v8338
      %8340 = vmatmul.f32.gmra.mxu0 %v8205
      %v8341 = vpop.f32.mrf.mxu0
      %v8342 = vadd.f32 0.0, %v8341
      %8343 = vmatmul.f32.gmra.mxu0 %v8208
      %v8344 = vpop.f32.mrf.mxu0
      %v8345 = vadd.f32 0.0, %v8344
      %8346 = vmatmul.f32.gmra.mxu0 %v8211
      %v8347 = vpop.f32.mrf.mxu0
      %v8348 = vadd.f32 0.0, %v8347
      %8349 = vmatmul.f32.gmra.mxu0 %v8214
      %v8350 = vpop.f32.mrf.mxu0
      %v8351 = vadd.f32 0.0, %v8350
      %8352 = vmatmul.f32.gmra.mxu0 %v8217
      %v8353 = vpop.f32.mrf.mxu0
      %v8354 = vadd.f32 0.0, %v8353
      %8355 = vmatmul.f32.gmra.mxu0 %v8220
      %v8356 = vpop.f32.mrf.mxu0
      %v8357 = vadd.f32 0.0, %v8356
      %8358 = vmatmul.f32.gmra.mxu0 %v8223
      %v8359 = vpop.f32.mrf.mxu0
      %v8360 = vadd.f32 0.0, %v8359
      %8361 = vmatmul.f32.gmra.mxu0 %v8226
      %v8362 = vpop.f32.mrf.mxu0
      %v8363 = vadd.f32 0.0, %v8362
      %8364 = vmatmul.f32.gmra.mxu0 %v8229
      %v8365 = vpop.f32.mrf.mxu0
      %v8366 = vadd.f32 0.0, %v8365
      %8367 = vmatmul.f32.gmra.mxu0 %v8232
      %v8368 = vpop.f32.mrf.mxu0
      %v8369 = vadd.f32 0.0, %v8368
      %8370 = vmatmul.f32.gmra.mxu0 %v8235
      %v8371 = vpop.f32.mrf.mxu0
      %v8372 = vadd.f32 0.0, %v8371
      %8373 = vmatmul.f32.gmra.mxu0 %v8238
      %v8374 = vpop.f32.mrf.mxu0
      %v8375 = vadd.f32 0.0, %v8374
      %8376 = vmatmul.f32.gmra.mxu0 %v8241
      %v8377 = vpop.f32.mrf.mxu0
      %v8378 = vadd.f32 0.0, %v8377
      %8379 = vmatmul.f32.gmra.mxu0 %v8244
      %v8380 = vpop.f32.mrf.mxu0
      %v8381 = vadd.f32 0.0, %v8380
      %8382 = vmatmul.f32.gmra.mxu0 %v8247
      %v8383 = vpop.f32.mrf.mxu0
      %v8384 = vadd.f32 0.0, %v8383
      %8385 = vmatmul.f32.gmra.mxu0 %v8250
      %v8386 = vpop.f32.mrf.mxu0
      %v8387 = vadd.f32 0.0, %v8386
      %8388 = vmatmul.f32.gmra.mxu0 %v8253
      %v8389 = vpop.f32.mrf.mxu0
      %v8390 = vadd.f32 0.0, %v8389
      %8391 = vmatmul.f32.gmra.mxu0 %v8256
      %v8392 = vpop.f32.mrf.mxu0
      %v8393 = vadd.f32 0.0, %v8392
      %8394 = vmatmul.f32.gmra.mxu0 %v8259
      %v8395 = vpop.f32.mrf.mxu0
      %v8396 = vadd.f32 0.0, %v8395
      %8397 = vmatmul.f32.gmra.mxu0 %v8262
      %v8398 = vpop.f32.mrf.mxu0
      %v8399 = vadd.f32 0.0, %v8398
      %8400 = vmatmul.f32.gmra.mxu0 %v8265
      %v8401 = vpop.f32.mrf.mxu0
      %v8402 = vadd.f32 0.0, %v8401
      %8403 = vmatmul.f32.gmra.mxu0 %v8268
      %v8404 = vpop.f32.mrf.mxu0
      %v8405 = vadd.f32 0.0, %v8404
      %8406 = vmatmul.f32.gmra.mxu0 %v8271
      %v8407 = vpop.f32.mrf.mxu0
      %v8408 = vadd.f32 0.0, %v8407
      %8409 = vmatmul.f32.gmra.mxu0 %v8274
      %v8410 = vpop.f32.mrf.mxu0
      %v8411 = vadd.f32 0.0, %v8410
      %8412 = vmatmul.f32.gmra.mxu0 %v8277
      %v8413 = vpop.f32.mrf.mxu0
      %v8414 = vadd.f32 0.0, %v8413
      %8415 = vmatmul.f32.gmra.mxu0 %v8280
      %v8416 = vpop.f32.mrf.mxu0
      %v8417 = vadd.f32 0.0, %v8416
      %8418 = vmatmul.f32.gmra.mxu0 %v8283
      %v8419 = vpop.f32.mrf.mxu0
      %v8420 = vadd.f32 0.0, %v8419
      %8421 = vmatmul.f32.gmra.mxu0 %v8286
      %v8422 = vpop.f32.mrf.mxu0
      %v8423 = vadd.f32 0.0, %v8422
      %8424 = vdwg.mxu0
      %v8425 = vadd.f32 %v8083, %v8306
      %v8426 = vadd.f32 %v8084, %v8309
      %v8427 = vadd.f32 %v8085, %v8312
      %v8428 = vadd.f32 %v8086, %v8315
      %v8429 = vadd.f32 %v8087, %v8318
      %v8430 = vadd.f32 %v8088, %v8321
      %v8431 = vadd.f32 %v8089, %v8324
      %v8432 = vadd.f32 %v8090, %v8327
      %v8433 = vadd.f32 %v8091, %v8330
      %v8434 = vadd.f32 %v8092, %v8333
      %v8435 = vadd.f32 %v8093, %v8336
      %v8436 = vadd.f32 %v8094, %v8339
      %v8437 = vadd.f32 %v8095, %v8342
      %v8438 = vadd.f32 %v8096, %v8345
      %v8439 = vadd.f32 %v8097, %v8348
      %v8440 = vadd.f32 %v8098, %v8351
      %v8441 = vadd.f32 %v8099, %v8354
      %v8442 = vadd.f32 %v8100, %v8357
      %v8443 = vadd.f32 %v8101, %v8360
      %v8444 = vadd.f32 %v8102, %v8363
      %v8445 = vadd.f32 %v8103, %v8366
      %v8446 = vadd.f32 %v8104, %v8369
      %v8447 = vadd.f32 %v8105, %v8372
      %v8448 = vadd.f32 %v8106, %v8375
      %v8449 = vadd.f32 %v8107, %v8378
      %v8450 = vadd.f32 %v8108, %v8381
      %v8451 = vadd.f32 %v8109, %v8384
      %v8452 = vadd.f32 %v8110, %v8387
      %v8453 = vadd.f32 %v8111, %v8390
      %v8454 = vadd.f32 %v8112, %v8393
      %v8455 = vadd.f32 %v8113, %v8396
      %v8456 = vadd.f32 %v8114, %v8399
      %v8457 = vadd.f32 %v8115, %v8402
      %v8458 = vadd.f32 %v8116, %v8405
      %v8459 = vadd.f32 %v8117, %v8408
      %v8460 = vadd.f32 %v8118, %v8411
      %v8461 = vadd.f32 %v8119, %v8414
      %v8462 = vadd.f32 %v8120, %v8417
      %v8463 = vadd.f32 %v8121, %v8420
      %v8464 = vadd.f32 %v8122, %v8423
      %v8465 = vld [vmem:[#allocation4 + $0x3e] sm:$0xff]
      %v8466 = vld [vmem:[#allocation4 + $0x46] sm:$0xff]
      %v8467 = vld [vmem:[#allocation4 + $0x4e] sm:$0xff]
      %v8468 = vld [vmem:[#allocation4 + $0x56] sm:$0xff]
      %v8469 = vld [vmem:[#allocation4 + $0x5e] sm:$0xff]
      %v8470 = vld [vmem:[#allocation4 + $0x66] sm:$0xff]
      %v8471 = vld [vmem:[#allocation4 + $0x6e] sm:$0xff]
      %v8472 = vld [vmem:[#allocation4 + $0x76] sm:$0xff]
      %v8473 = vld [vmem:[#allocation4 + $0x7e] sm:$0xff]
      %v8474 = vld [vmem:[#allocation4 + $0x86] sm:$0xff]
      %v8475 = vld [vmem:[#allocation4 + $0x8e] sm:$0xff]
      %v8476 = vld [vmem:[#allocation4 + $0x96] sm:$0xff]
      %v8477 = vld [vmem:[#allocation4 + $0x9e] sm:$0xff]
      %v8478 = vld [vmem:[#allocation4 + $0xa6] sm:$0xff]
      %v8479 = vld [vmem:[#allocation4 + $0xae] sm:$0xff]
      %v8480 = vld [vmem:[#allocation4 + $0xb6] sm:$0xff]
      %v8481 = vld [vmem:[#allocation4 + $0xbe] sm:$0xff]
      %v8482 = vld [vmem:[#allocation4 + $0xc6] sm:$0xff]
      %v8483 = vld [vmem:[#allocation4 + $0xce] sm:$0xff]
      %v8484 = vld [vmem:[#allocation4 + $0xd6] sm:$0xff]
      %v8485 = vld [vmem:[#allocation4 + $0xde] sm:$0xff]
      %v8486 = vld [vmem:[#allocation4 + $0xe6] sm:$0xff]
      %v8487 = vld [vmem:[#allocation4 + $0xee] sm:$0xff]
      %v8488 = vld [vmem:[#allocation4 + $0xf6] sm:$0xff]
      %v8489 = vld [vmem:[#allocation4 + $0xfe] sm:$0xff]
      %v8490 = vld [vmem:[#allocation4 + $0x106] sm:$0xff]
      %v8491 = vld [vmem:[#allocation4 + $0x10e] sm:$0xff]
      %v8492 = vld [vmem:[#allocation4 + $0x116] sm:$0xff]
      %v8493 = vld [vmem:[#allocation4 + $0x11e] sm:$0xff]
      %v8494 = vld [vmem:[#allocation4 + $0x126] sm:$0xff]
      %v8495 = vld [vmem:[#allocation4 + $0x12e] sm:$0xff]
      %v8496 = vld [vmem:[#allocation4 + $0x136] sm:$0xff]
      %v8497 = vld [vmem:[#allocation4 + $0x13e] sm:$0xff]
      %v8498 = vld [vmem:[#allocation4 + $0x146] sm:$0xff]
      %v8499 = vld [vmem:[#allocation4 + $0x14e] sm:$0xff]
      %v8500 = vld [vmem:[#allocation4 + $0x156] sm:$0xff]
      %v8501 = vld [vmem:[#allocation4 + $0x15e] sm:$0xff]
      %v8502 = vld [vmem:[#allocation4 + $0x166] sm:$0xff]
      %v8503 = vld [vmem:[#allocation4 + $0x16e] sm:$0xff]
      %v8504 = vld [vmem:[#allocation4 + $0x176] sm:$0xff]
      %s8505 = scalar_lea.vmem %s7, 544
      %v8506 = vld [vmem:[%s8505] sm:$0xff]
      %v8507 = vld [vmem:[%s8505 + $0x8] sm:$0xff]
      %v8508 = vld [vmem:[%s8505 + $0x10] sm:$0xff]
      %v8509 = vld [vmem:[%s8505 + $0x18] sm:$0xff]
      %v8511 = vsel %vm409, %v8465, 0
      %v8514 = vsel %vm409, %v8466, 0
      %v8517 = vsel %vm409, %v8467, 0
      %v8520 = vsel %vm409, %v8468, 0
      %v8523 = vsel %vm409, %v8469, 0
      %v8526 = vsel %vm409, %v8470, 0
      %v8529 = vsel %vm409, %v8471, 0
      %v8532 = vsel %vm409, %v8472, 0
      %v8535 = vsel %vm409, %v8473, 0
      %v8538 = vsel %vm409, %v8474, 0
      %v8541 = vsel %vm409, %v8475, 0
      %v8544 = vsel %vm409, %v8476, 0
      %v8547 = vsel %vm409, %v8477, 0
      %v8550 = vsel %vm409, %v8478, 0
      %v8553 = vsel %vm409, %v8479, 0
      %v8556 = vsel %vm409, %v8480, 0
      %v8559 = vsel %vm409, %v8481, 0
      %v8562 = vsel %vm409, %v8482, 0
      %v8565 = vsel %vm409, %v8483, 0
      %v8568 = vsel %vm409, %v8484, 0
      %v8571 = vsel %vm409, %v8485, 0
      %v8574 = vsel %vm409, %v8486, 0
      %v8577 = vsel %vm409, %v8487, 0
      %v8580 = vsel %vm409, %v8488, 0
      %v8583 = vsel %vm409, %v8489, 0
      %v8586 = vsel %vm409, %v8490, 0
      %v8589 = vsel %vm409, %v8491, 0
      %v8592 = vsel %vm409, %v8492, 0
      %v8595 = vsel %vm409, %v8493, 0
      %v8598 = vsel %vm409, %v8494, 0
      %v8601 = vsel %vm409, %v8495, 0
      %v8604 = vsel %vm409, %v8496, 0
      %v8607 = vsel %vm409, %v8497, 0
      %v8610 = vsel %vm409, %v8498, 0
      %v8613 = vsel %vm409, %v8499, 0
      %v8616 = vsel %vm409, %v8500, 0
      %v8619 = vsel %vm409, %v8501, 0
      %v8622 = vsel %vm409, %v8502, 0
      %v8625 = vsel %vm409, %v8503, 0
      %v8628 = vsel %vm409, %v8504, 0
      %8630 = vmatpush.msra.mxu0 0.0
      %8631 = vmatpush.msra.mxu0 0.0
      %8632 = vmatpush.msra.mxu0 0.0
      %8633 = vmatpush.msra.mxu0 0.0
      %8634 = vmatpush.msra.mxu0 0.0
      %8635 = vmatpush.msra.mxu0 0.0
      %8636 = vmatpush.msra.mxu0 0.0
      %8637 = vmatpush.msra.mxu0 0.0
      %8638 = vmatpush.msra.mxu0 0.0
      %8639 = vmatpush.msra.mxu0 0.0
      %8640 = vmatpush.msra.mxu0 0.0
      %8641 = vmatpush.msra.mxu0 0.0
      %8642 = vmatpush.msra.mxu0 %v8509
      %8643 = vmatpush.msra.mxu0 %v8508
      %8644 = vmatpush.msra.mxu0 %v8507
      %8645 = vmatpush.msra.mxu0 %v8506
      %8646 = vmatmul.f32.gmra.mxu0 %v8511
      %v8647 = vpop.f32.mrf.mxu0
      %v8648 = vadd.f32 0.0, %v8647
      %8649 = vmatmul.f32.gmra.mxu0 %v8514
      %v8650 = vpop.f32.mrf.mxu0
      %v8651 = vadd.f32 0.0, %v8650
      %8652 = vmatmul.f32.gmra.mxu0 %v8517
      %v8653 = vpop.f32.mrf.mxu0
      %v8654 = vadd.f32 0.0, %v8653
      %8655 = vmatmul.f32.gmra.mxu0 %v8520
      %v8656 = vpop.f32.mrf.mxu0
      %v8657 = vadd.f32 0.0, %v8656
      %8658 = vmatmul.f32.gmra.mxu0 %v8523
      %v8659 = vpop.f32.mrf.mxu0
      %v8660 = vadd.f32 0.0, %v8659
      %8661 = vmatmul.f32.gmra.mxu0 %v8526
      %v8662 = vpop.f32.mrf.mxu0
      %v8663 = vadd.f32 0.0, %v8662
      %8664 = vmatmul.f32.gmra.mxu0 %v8529
      %v8665 = vpop.f32.mrf.mxu0
      %v8666 = vadd.f32 0.0, %v8665
      %8667 = vmatmul.f32.gmra.mxu0 %v8532
      %v8668 = vpop.f32.mrf.mxu0
      %v8669 = vadd.f32 0.0, %v8668
      %8670 = vmatmul.f32.gmra.mxu0 %v8535
      %v8671 = vpop.f32.mrf.mxu0
      %v8672 = vadd.f32 0.0, %v8671
      %8673 = vmatmul.f32.gmra.mxu0 %v8538
      %v8674 = vpop.f32.mrf.mxu0
      %v8675 = vadd.f32 0.0, %v8674
      %8676 = vmatmul.f32.gmra.mxu0 %v8541
      %v8677 = vpop.f32.mrf.mxu0
      %v8678 = vadd.f32 0.0, %v8677
      %8679 = vmatmul.f32.gmra.mxu0 %v8544
      %v8680 = vpop.f32.mrf.mxu0
      %v8681 = vadd.f32 0.0, %v8680
      %8682 = vmatmul.f32.gmra.mxu0 %v8547
      %v8683 = vpop.f32.mrf.mxu0
      %v8684 = vadd.f32 0.0, %v8683
      %8685 = vmatmul.f32.gmra.mxu0 %v8550
      %v8686 = vpop.f32.mrf.mxu0
      %v8687 = vadd.f32 0.0, %v8686
      %8688 = vmatmul.f32.gmra.mxu0 %v8553
      %v8689 = vpop.f32.mrf.mxu0
      %v8690 = vadd.f32 0.0, %v8689
      %8691 = vmatmul.f32.gmra.mxu0 %v8556
      %v8692 = vpop.f32.mrf.mxu0
      %v8693 = vadd.f32 0.0, %v8692
      %8694 = vmatmul.f32.gmra.mxu0 %v8559
      %v8695 = vpop.f32.mrf.mxu0
      %v8696 = vadd.f32 0.0, %v8695
      %8697 = vmatmul.f32.gmra.mxu0 %v8562
      %v8698 = vpop.f32.mrf.mxu0
      %v8699 = vadd.f32 0.0, %v8698
      %8700 = vmatmul.f32.gmra.mxu0 %v8565
      %v8701 = vpop.f32.mrf.mxu0
      %v8702 = vadd.f32 0.0, %v8701
      %8703 = vmatmul.f32.gmra.mxu0 %v8568
      %v8704 = vpop.f32.mrf.mxu0
      %v8705 = vadd.f32 0.0, %v8704
      %8706 = vmatmul.f32.gmra.mxu0 %v8571
      %v8707 = vpop.f32.mrf.mxu0
      %v8708 = vadd.f32 0.0, %v8707
      %8709 = vmatmul.f32.gmra.mxu0 %v8574
      %v8710 = vpop.f32.mrf.mxu0
      %v8711 = vadd.f32 0.0, %v8710
      %8712 = vmatmul.f32.gmra.mxu0 %v8577
      %v8713 = vpop.f32.mrf.mxu0
      %v8714 = vadd.f32 0.0, %v8713
      %8715 = vmatmul.f32.gmra.mxu0 %v8580
      %v8716 = vpop.f32.mrf.mxu0
      %v8717 = vadd.f32 0.0, %v8716
      %8718 = vmatmul.f32.gmra.mxu0 %v8583
      %v8719 = vpop.f32.mrf.mxu0
      %v8720 = vadd.f32 0.0, %v8719
      %8721 = vmatmul.f32.gmra.mxu0 %v8586
      %v8722 = vpop.f32.mrf.mxu0
      %v8723 = vadd.f32 0.0, %v8722
      %8724 = vmatmul.f32.gmra.mxu0 %v8589
      %v8725 = vpop.f32.mrf.mxu0
      %v8726 = vadd.f32 0.0, %v8725
      %8727 = vmatmul.f32.gmra.mxu0 %v8592
      %v8728 = vpop.f32.mrf.mxu0
      %v8729 = vadd.f32 0.0, %v8728
      %8730 = vmatmul.f32.gmra.mxu0 %v8595
      %v8731 = vpop.f32.mrf.mxu0
      %v8732 = vadd.f32 0.0, %v8731
      %8733 = vmatmul.f32.gmra.mxu0 %v8598
      %v8734 = vpop.f32.mrf.mxu0
      %v8735 = vadd.f32 0.0, %v8734
      %8736 = vmatmul.f32.gmra.mxu0 %v8601
      %v8737 = vpop.f32.mrf.mxu0
      %v8738 = vadd.f32 0.0, %v8737
      %8739 = vmatmul.f32.gmra.mxu0 %v8604
      %v8740 = vpop.f32.mrf.mxu0
      %v8741 = vadd.f32 0.0, %v8740
      %8742 = vmatmul.f32.gmra.mxu0 %v8607
      %v8743 = vpop.f32.mrf.mxu0
      %v8744 = vadd.f32 0.0, %v8743
      %8745 = vmatmul.f32.gmra.mxu0 %v8610
      %v8746 = vpop.f32.mrf.mxu0
      %v8747 = vadd.f32 0.0, %v8746
      %8748 = vmatmul.f32.gmra.mxu0 %v8613
      %v8749 = vpop.f32.mrf.mxu0
      %v8750 = vadd.f32 0.0, %v8749
      %8751 = vmatmul.f32.gmra.mxu0 %v8616
      %v8752 = vpop.f32.mrf.mxu0
      %v8753 = vadd.f32 0.0, %v8752
      %8754 = vmatmul.f32.gmra.mxu0 %v8619
      %v8755 = vpop.f32.mrf.mxu0
      %v8756 = vadd.f32 0.0, %v8755
      %8757 = vmatmul.f32.gmra.mxu0 %v8622
      %v8758 = vpop.f32.mrf.mxu0
      %v8759 = vadd.f32 0.0, %v8758
      %8760 = vmatmul.f32.gmra.mxu0 %v8625
      %v8761 = vpop.f32.mrf.mxu0
      %v8762 = vadd.f32 0.0, %v8761
      %8763 = vmatmul.f32.gmra.mxu0 %v8628
      %v8764 = vpop.f32.mrf.mxu0
      %v8765 = vadd.f32 0.0, %v8764
      %8766 = vdwg.mxu0
      %v8767 = vadd.f32 %v8425, %v8648
      %v8768 = vadd.f32 %v8426, %v8651
      %v8769 = vadd.f32 %v8427, %v8654
      %v8770 = vadd.f32 %v8428, %v8657
      %v8771 = vadd.f32 %v8429, %v8660
      %v8772 = vadd.f32 %v8430, %v8663
      %v8773 = vadd.f32 %v8431, %v8666
      %v8774 = vadd.f32 %v8432, %v8669
      %v8775 = vadd.f32 %v8433, %v8672
      %v8776 = vadd.f32 %v8434, %v8675
      %v8777 = vadd.f32 %v8435, %v8678
      %v8778 = vadd.f32 %v8436, %v8681
      %v8779 = vadd.f32 %v8437, %v8684
      %v8780 = vadd.f32 %v8438, %v8687
      %v8781 = vadd.f32 %v8439, %v8690
      %v8782 = vadd.f32 %v8440, %v8693
      %v8783 = vadd.f32 %v8441, %v8696
      %v8784 = vadd.f32 %v8442, %v8699
      %v8785 = vadd.f32 %v8443, %v8702
      %v8786 = vadd.f32 %v8444, %v8705
      %v8787 = vadd.f32 %v8445, %v8708
      %v8788 = vadd.f32 %v8446, %v8711
      %v8789 = vadd.f32 %v8447, %v8714
      %v8790 = vadd.f32 %v8448, %v8717
      %v8791 = vadd.f32 %v8449, %v8720
      %v8792 = vadd.f32 %v8450, %v8723
      %v8793 = vadd.f32 %v8451, %v8726
      %v8794 = vadd.f32 %v8452, %v8729
      %v8795 = vadd.f32 %v8453, %v8732
      %v8796 = vadd.f32 %v8454, %v8735
      %v8797 = vadd.f32 %v8455, %v8738
      %v8798 = vadd.f32 %v8456, %v8741
      %v8799 = vadd.f32 %v8457, %v8744
      %v8800 = vadd.f32 %v8458, %v8747
      %v8801 = vadd.f32 %v8459, %v8750
      %v8802 = vadd.f32 %v8460, %v8753
      %v8803 = vadd.f32 %v8461, %v8756
      %v8804 = vadd.f32 %v8462, %v8759
      %v8805 = vadd.f32 %v8463, %v8762
      %v8806 = vadd.f32 %v8464, %v8765
      %v8807 = vld [vmem:[#allocation4 + $0x3f] sm:$0xff]
      %v8808 = vld [vmem:[#allocation4 + $0x47] sm:$0xff]
      %v8809 = vld [vmem:[#allocation4 + $0x4f] sm:$0xff]
      %v8810 = vld [vmem:[#allocation4 + $0x57] sm:$0xff]
      %v8811 = vld [vmem:[#allocation4 + $0x5f] sm:$0xff]
      %v8812 = vld [vmem:[#allocation4 + $0x67] sm:$0xff]
      %v8813 = vld [vmem:[#allocation4 + $0x6f] sm:$0xff]
      %v8814 = vld [vmem:[#allocation4 + $0x77] sm:$0xff]
      %v8815 = vld [vmem:[#allocation4 + $0x7f] sm:$0xff]
      %v8816 = vld [vmem:[#allocation4 + $0x87] sm:$0xff]
      %v8817 = vld [vmem:[#allocation4 + $0x8f] sm:$0xff]
      %v8818 = vld [vmem:[#allocation4 + $0x97] sm:$0xff]
      %v8819 = vld [vmem:[#allocation4 + $0x9f] sm:$0xff]
      %v8820 = vld [vmem:[#allocation4 + $0xa7] sm:$0xff]
      %v8821 = vld [vmem:[#allocation4 + $0xaf] sm:$0xff]
      %v8822 = vld [vmem:[#allocation4 + $0xb7] sm:$0xff]
      %v8823 = vld [vmem:[#allocation4 + $0xbf] sm:$0xff]
      %v8824 = vld [vmem:[#allocation4 + $0xc7] sm:$0xff]
      %v8825 = vld [vmem:[#allocation4 + $0xcf] sm:$0xff]
      %v8826 = vld [vmem:[#allocation4 + $0xd7] sm:$0xff]
      %v8827 = vld [vmem:[#allocation4 + $0xdf] sm:$0xff]
      %v8828 = vld [vmem:[#allocation4 + $0xe7] sm:$0xff]
      %v8829 = vld [vmem:[#allocation4 + $0xef] sm:$0xff]
      %v8830 = vld [vmem:[#allocation4 + $0xf7] sm:$0xff]
      %v8831 = vld [vmem:[#allocation4 + $0xff] sm:$0xff]
      %v8832 = vld [vmem:[#allocation4 + $0x107] sm:$0xff]
      %v8833 = vld [vmem:[#allocation4 + $0x10f] sm:$0xff]
      %v8834 = vld [vmem:[#allocation4 + $0x117] sm:$0xff]
      %v8835 = vld [vmem:[#allocation4 + $0x11f] sm:$0xff]
      %v8836 = vld [vmem:[#allocation4 + $0x127] sm:$0xff]
      %v8837 = vld [vmem:[#allocation4 + $0x12f] sm:$0xff]
      %v8838 = vld [vmem:[#allocation4 + $0x137] sm:$0xff]
      %v8839 = vld [vmem:[#allocation4 + $0x13f] sm:$0xff]
      %v8840 = vld [vmem:[#allocation4 + $0x147] sm:$0xff]
      %v8841 = vld [vmem:[#allocation4 + $0x14f] sm:$0xff]
      %v8842 = vld [vmem:[#allocation4 + $0x157] sm:$0xff]
      %v8843 = vld [vmem:[#allocation4 + $0x15f] sm:$0xff]
      %v8844 = vld [vmem:[#allocation4 + $0x167] sm:$0xff]
      %v8845 = vld [vmem:[#allocation4 + $0x16f] sm:$0xff]
      %v8846 = vld [vmem:[#allocation4 + $0x177] sm:$0xff]
      %s8847 = scalar_lea.vmem %s7, 576
      %v8848 = vld [vmem:[%s8847] sm:$0xff]
      %v8849 = vld [vmem:[%s8847 + $0x8] sm:$0xff]
      %v8850 = vld [vmem:[%s8847 + $0x10] sm:$0xff]
      %v8851 = vld [vmem:[%s8847 + $0x18] sm:$0xff]
      %v8853 = vsel %vm409, %v8807, 0
      %v8856 = vsel %vm409, %v8808, 0
      %v8859 = vsel %vm409, %v8809, 0
      %v8862 = vsel %vm409, %v8810, 0
      %v8865 = vsel %vm409, %v8811, 0
      %v8868 = vsel %vm409, %v8812, 0
      %v8871 = vsel %vm409, %v8813, 0
      %v8874 = vsel %vm409, %v8814, 0
      %v8877 = vsel %vm409, %v8815, 0
      %v8880 = vsel %vm409, %v8816, 0
      %v8883 = vsel %vm409, %v8817, 0
      %v8886 = vsel %vm409, %v8818, 0
      %v8889 = vsel %vm409, %v8819, 0
      %v8892 = vsel %vm409, %v8820, 0
      %v8895 = vsel %vm409, %v8821, 0
      %v8898 = vsel %vm409, %v8822, 0
      %v8901 = vsel %vm409, %v8823, 0
      %v8904 = vsel %vm409, %v8824, 0
      %v8907 = vsel %vm409, %v8825, 0
      %v8910 = vsel %vm409, %v8826, 0
      %v8913 = vsel %vm409, %v8827, 0
      %v8916 = vsel %vm409, %v8828, 0
      %v8919 = vsel %vm409, %v8829, 0
      %v8922 = vsel %vm409, %v8830, 0
      %v8925 = vsel %vm409, %v8831, 0
      %v8928 = vsel %vm409, %v8832, 0
      %v8931 = vsel %vm409, %v8833, 0
      %v8934 = vsel %vm409, %v8834, 0
      %v8937 = vsel %vm409, %v8835, 0
      %v8940 = vsel %vm409, %v8836, 0
      %v8943 = vsel %vm409, %v8837, 0
      %v8946 = vsel %vm409, %v8838, 0
      %v8949 = vsel %vm409, %v8839, 0
      %v8952 = vsel %vm409, %v8840, 0
      %v8955 = vsel %vm409, %v8841, 0
      %v8958 = vsel %vm409, %v8842, 0
      %v8961 = vsel %vm409, %v8843, 0
      %v8964 = vsel %vm409, %v8844, 0
      %v8967 = vsel %vm409, %v8845, 0
      %v8970 = vsel %vm409, %v8846, 0
      %8972 = vmatpush.msra.mxu0 0.0
      %8973 = vmatpush.msra.mxu0 0.0
      %8974 = vmatpush.msra.mxu0 0.0
      %8975 = vmatpush.msra.mxu0 0.0
      %8976 = vmatpush.msra.mxu0 0.0
      %8977 = vmatpush.msra.mxu0 0.0
      %8978 = vmatpush.msra.mxu0 0.0
      %8979 = vmatpush.msra.mxu0 0.0
      %8980 = vmatpush.msra.mxu0 0.0
      %8981 = vmatpush.msra.mxu0 0.0
      %8982 = vmatpush.msra.mxu0 0.0
      %8983 = vmatpush.msra.mxu0 0.0
      %8984 = vmatpush.msra.mxu0 %v8851
      %8985 = vmatpush.msra.mxu0 %v8850
      %8986 = vmatpush.msra.mxu0 %v8849
      %8987 = vmatpush.msra.mxu0 %v8848
      %8988 = vmatmul.f32.gmra.mxu0 %v8853
      %v8989 = vpop.f32.mrf.mxu0
      %v8990 = vadd.f32 0.0, %v8989
      %8991 = vmatmul.f32.gmra.mxu0 %v8856
      %v8992 = vpop.f32.mrf.mxu0
      %v8993 = vadd.f32 0.0, %v8992
      %8994 = vmatmul.f32.gmra.mxu0 %v8859
      %v8995 = vpop.f32.mrf.mxu0
      %v8996 = vadd.f32 0.0, %v8995
      %8997 = vmatmul.f32.gmra.mxu0 %v8862
      %v8998 = vpop.f32.mrf.mxu0
      %v8999 = vadd.f32 0.0, %v8998
      %9000 = vmatmul.f32.gmra.mxu0 %v8865
      %v9001 = vpop.f32.mrf.mxu0
      %v9002 = vadd.f32 0.0, %v9001
      %9003 = vmatmul.f32.gmra.mxu0 %v8868
      %v9004 = vpop.f32.mrf.mxu0
      %v9005 = vadd.f32 0.0, %v9004
      %9006 = vmatmul.f32.gmra.mxu0 %v8871
      %v9007 = vpop.f32.mrf.mxu0
      %v9008 = vadd.f32 0.0, %v9007
      %9009 = vmatmul.f32.gmra.mxu0 %v8874
      %v9010 = vpop.f32.mrf.mxu0
      %v9011 = vadd.f32 0.0, %v9010
      %9012 = vmatmul.f32.gmra.mxu0 %v8877
      %v9013 = vpop.f32.mrf.mxu0
      %v9014 = vadd.f32 0.0, %v9013
      %9015 = vmatmul.f32.gmra.mxu0 %v8880
      %v9016 = vpop.f32.mrf.mxu0
      %v9017 = vadd.f32 0.0, %v9016
      %9018 = vmatmul.f32.gmra.mxu0 %v8883
      %v9019 = vpop.f32.mrf.mxu0
      %v9020 = vadd.f32 0.0, %v9019
      %9021 = vmatmul.f32.gmra.mxu0 %v8886
      %v9022 = vpop.f32.mrf.mxu0
      %v9023 = vadd.f32 0.0, %v9022
      %9024 = vmatmul.f32.gmra.mxu0 %v8889
      %v9025 = vpop.f32.mrf.mxu0
      %v9026 = vadd.f32 0.0, %v9025
      %9027 = vmatmul.f32.gmra.mxu0 %v8892
      %v9028 = vpop.f32.mrf.mxu0
      %v9029 = vadd.f32 0.0, %v9028
      %9030 = vmatmul.f32.gmra.mxu0 %v8895
      %v9031 = vpop.f32.mrf.mxu0
      %v9032 = vadd.f32 0.0, %v9031
      %9033 = vmatmul.f32.gmra.mxu0 %v8898
      %v9034 = vpop.f32.mrf.mxu0
      %v9035 = vadd.f32 0.0, %v9034
      %9036 = vmatmul.f32.gmra.mxu0 %v8901
      %v9037 = vpop.f32.mrf.mxu0
      %v9038 = vadd.f32 0.0, %v9037
      %9039 = vmatmul.f32.gmra.mxu0 %v8904
      %v9040 = vpop.f32.mrf.mxu0
      %v9041 = vadd.f32 0.0, %v9040
      %9042 = vmatmul.f32.gmra.mxu0 %v8907
      %v9043 = vpop.f32.mrf.mxu0
      %v9044 = vadd.f32 0.0, %v9043
      %9045 = vmatmul.f32.gmra.mxu0 %v8910
      %v9046 = vpop.f32.mrf.mxu0
      %v9047 = vadd.f32 0.0, %v9046
      %9048 = vmatmul.f32.gmra.mxu0 %v8913
      %v9049 = vpop.f32.mrf.mxu0
      %v9050 = vadd.f32 0.0, %v9049
      %9051 = vmatmul.f32.gmra.mxu0 %v8916
      %v9052 = vpop.f32.mrf.mxu0
      %v9053 = vadd.f32 0.0, %v9052
      %9054 = vmatmul.f32.gmra.mxu0 %v8919
      %v9055 = vpop.f32.mrf.mxu0
      %v9056 = vadd.f32 0.0, %v9055
      %9057 = vmatmul.f32.gmra.mxu0 %v8922
      %v9058 = vpop.f32.mrf.mxu0
      %v9059 = vadd.f32 0.0, %v9058
      %9060 = vmatmul.f32.gmra.mxu0 %v8925
      %v9061 = vpop.f32.mrf.mxu0
      %v9062 = vadd.f32 0.0, %v9061
      %9063 = vmatmul.f32.gmra.mxu0 %v8928
      %v9064 = vpop.f32.mrf.mxu0
      %v9065 = vadd.f32 0.0, %v9064
      %9066 = vmatmul.f32.gmra.mxu0 %v8931
      %v9067 = vpop.f32.mrf.mxu0
      %v9068 = vadd.f32 0.0, %v9067
      %9069 = vmatmul.f32.gmra.mxu0 %v8934
      %v9070 = vpop.f32.mrf.mxu0
      %v9071 = vadd.f32 0.0, %v9070
      %9072 = vmatmul.f32.gmra.mxu0 %v8937
      %v9073 = vpop.f32.mrf.mxu0
      %v9074 = vadd.f32 0.0, %v9073
      %9075 = vmatmul.f32.gmra.mxu0 %v8940
      %v9076 = vpop.f32.mrf.mxu0
      %v9077 = vadd.f32 0.0, %v9076
      %9078 = vmatmul.f32.gmra.mxu0 %v8943
      %v9079 = vpop.f32.mrf.mxu0
      %v9080 = vadd.f32 0.0, %v9079
      %9081 = vmatmul.f32.gmra.mxu0 %v8946
      %v9082 = vpop.f32.mrf.mxu0
      %v9083 = vadd.f32 0.0, %v9082
      %9084 = vmatmul.f32.gmra.mxu0 %v8949
      %v9085 = vpop.f32.mrf.mxu0
      %v9086 = vadd.f32 0.0, %v9085
      %9087 = vmatmul.f32.gmra.mxu0 %v8952
      %v9088 = vpop.f32.mrf.mxu0
      %v9089 = vadd.f32 0.0, %v9088
      %9090 = vmatmul.f32.gmra.mxu0 %v8955
      %v9091 = vpop.f32.mrf.mxu0
      %v9092 = vadd.f32 0.0, %v9091
      %9093 = vmatmul.f32.gmra.mxu0 %v8958
      %v9094 = vpop.f32.mrf.mxu0
      %v9095 = vadd.f32 0.0, %v9094
      %9096 = vmatmul.f32.gmra.mxu0 %v8961
      %v9097 = vpop.f32.mrf.mxu0
      %v9098 = vadd.f32 0.0, %v9097
      %9099 = vmatmul.f32.gmra.mxu0 %v8964
      %v9100 = vpop.f32.mrf.mxu0
      %v9101 = vadd.f32 0.0, %v9100
      %9102 = vmatmul.f32.gmra.mxu0 %v8967
      %v9103 = vpop.f32.mrf.mxu0
      %v9104 = vadd.f32 0.0, %v9103
      %9105 = vmatmul.f32.gmra.mxu0 %v8970
      %v9106 = vpop.f32.mrf.mxu0
      %v9107 = vadd.f32 0.0, %v9106
      %9108 = vdwg.mxu0
      %v9109 = vadd.f32 %v8767, %v8990
      %v9110 = vadd.f32 %v8768, %v8993
      %v9111 = vadd.f32 %v8769, %v8996
      %v9112 = vadd.f32 %v8770, %v8999
      %v9113 = vadd.f32 %v8771, %v9002
      %v9114 = vadd.f32 %v8772, %v9005
      %v9115 = vadd.f32 %v8773, %v9008
      %v9116 = vadd.f32 %v8774, %v9011
      %v9117 = vadd.f32 %v8775, %v9014
      %v9118 = vadd.f32 %v8776, %v9017
      %v9119 = vadd.f32 %v8777, %v9020
      %v9120 = vadd.f32 %v8778, %v9023
      %v9121 = vadd.f32 %v8779, %v9026
      %v9122 = vadd.f32 %v8780, %v9029
      %v9123 = vadd.f32 %v8781, %v9032
      %v9124 = vadd.f32 %v8782, %v9035
      %v9125 = vadd.f32 %v8783, %v9038
      %v9126 = vadd.f32 %v8784, %v9041
      %v9127 = vadd.f32 %v8785, %v9044
      %v9128 = vadd.f32 %v8786, %v9047
      %v9129 = vadd.f32 %v8787, %v9050
      %v9130 = vadd.f32 %v8788, %v9053
      %v9131 = vadd.f32 %v8789, %v9056
      %v9132 = vadd.f32 %v8790, %v9059
      %v9133 = vadd.f32 %v8791, %v9062
      %v9134 = vadd.f32 %v8792, %v9065
      %v9135 = vadd.f32 %v8793, %v9068
      %v9136 = vadd.f32 %v8794, %v9071
      %v9137 = vadd.f32 %v8795, %v9074
      %v9138 = vadd.f32 %v8796, %v9077
      %v9139 = vadd.f32 %v8797, %v9080
      %v9140 = vadd.f32 %v8798, %v9083
      %v9141 = vadd.f32 %v8799, %v9086
      %v9142 = vadd.f32 %v8800, %v9089
      %v9143 = vadd.f32 %v8801, %v9092
      %v9144 = vadd.f32 %v8802, %v9095
      %v9145 = vadd.f32 %v8803, %v9098
      %v9146 = vadd.f32 %v8804, %v9101
      %v9147 = vadd.f32 %v8805, %v9104
      %v9148 = vadd.f32 %v8806, %v9107
      %v9149 = vld [vmem:[#allocation4 + $0x40] sm:$0xff]
      %v9150 = vld [vmem:[#allocation4 + $0x48] sm:$0xff]
      %v9151 = vld [vmem:[#allocation4 + $0x50] sm:$0xff]
      %v9152 = vld [vmem:[#allocation4 + $0x58] sm:$0xff]
      %v9153 = vld [vmem:[#allocation4 + $0x60] sm:$0xff]
      %v9154 = vld [vmem:[#allocation4 + $0x68] sm:$0xff]
      %v9155 = vld [vmem:[#allocation4 + $0x70] sm:$0xff]
      %v9156 = vld [vmem:[#allocation4 + $0x78] sm:$0xff]
      %v9157 = vld [vmem:[#allocation4 + $0x80] sm:$0xff]
      %v9158 = vld [vmem:[#allocation4 + $0x88] sm:$0xff]
      %v9159 = vld [vmem:[#allocation4 + $0x90] sm:$0xff]
      %v9160 = vld [vmem:[#allocation4 + $0x98] sm:$0xff]
      %v9161 = vld [vmem:[#allocation4 + $0xa0] sm:$0xff]
      %v9162 = vld [vmem:[#allocation4 + $0xa8] sm:$0xff]
      %v9163 = vld [vmem:[#allocation4 + $0xb0] sm:$0xff]
      %v9164 = vld [vmem:[#allocation4 + $0xb8] sm:$0xff]
      %v9165 = vld [vmem:[#allocation4 + $0xc0] sm:$0xff]
      %v9166 = vld [vmem:[#allocation4 + $0xc8] sm:$0xff]
      %v9167 = vld [vmem:[#allocation4 + $0xd0] sm:$0xff]
      %v9168 = vld [vmem:[#allocation4 + $0xd8] sm:$0xff]
      %v9169 = vld [vmem:[#allocation4 + $0xe0] sm:$0xff]
      %v9170 = vld [vmem:[#allocation4 + $0xe8] sm:$0xff]
      %v9171 = vld [vmem:[#allocation4 + $0xf0] sm:$0xff]
      %v9172 = vld [vmem:[#allocation4 + $0xf8] sm:$0xff]
      %v9173 = vld [vmem:[#allocation4 + $0x100] sm:$0xff]
      %v9174 = vld [vmem:[#allocation4 + $0x108] sm:$0xff]
      %v9175 = vld [vmem:[#allocation4 + $0x110] sm:$0xff]
      %v9176 = vld [vmem:[#allocation4 + $0x118] sm:$0xff]
      %v9177 = vld [vmem:[#allocation4 + $0x120] sm:$0xff]
      %v9178 = vld [vmem:[#allocation4 + $0x128] sm:$0xff]
      %v9179 = vld [vmem:[#allocation4 + $0x130] sm:$0xff]
      %v9180 = vld [vmem:[#allocation4 + $0x138] sm:$0xff]
      %v9181 = vld [vmem:[#allocation4 + $0x140] sm:$0xff]
      %v9182 = vld [vmem:[#allocation4 + $0x148] sm:$0xff]
      %v9183 = vld [vmem:[#allocation4 + $0x150] sm:$0xff]
      %v9184 = vld [vmem:[#allocation4 + $0x158] sm:$0xff]
      %v9185 = vld [vmem:[#allocation4 + $0x160] sm:$0xff]
      %v9186 = vld [vmem:[#allocation4 + $0x168] sm:$0xff]
      %v9187 = vld [vmem:[#allocation4 + $0x170] sm:$0xff]
      %v9188 = vld [vmem:[#allocation4 + $0x178] sm:$0xff]
      %s9189 = scalar_lea.vmem %s7, 608
      %v9190 = vld [vmem:[%s9189] sm:$0xff]
      %v9191 = vld [vmem:[%s9189 + $0x8] sm:$0xff]
      %v9192 = vld [vmem:[%s9189 + $0x10] sm:$0xff]
      %v9193 = vld [vmem:[%s9189 + $0x18] sm:$0xff]
      %v9195 = vsel %vm409, %v9149, 0
      %v9198 = vsel %vm409, %v9150, 0
      %v9201 = vsel %vm409, %v9151, 0
      %v9204 = vsel %vm409, %v9152, 0
      %v9207 = vsel %vm409, %v9153, 0
      %v9210 = vsel %vm409, %v9154, 0
      %v9213 = vsel %vm409, %v9155, 0
      %v9216 = vsel %vm409, %v9156, 0
      %v9219 = vsel %vm409, %v9157, 0
      %v9222 = vsel %vm409, %v9158, 0
      %v9225 = vsel %vm409, %v9159, 0
      %v9228 = vsel %vm409, %v9160, 0
      %v9231 = vsel %vm409, %v9161, 0
      %v9234 = vsel %vm409, %v9162, 0
      %v9237 = vsel %vm409, %v9163, 0
      %v9240 = vsel %vm409, %v9164, 0
      %v9243 = vsel %vm409, %v9165, 0
      %v9246 = vsel %vm409, %v9166, 0
      %v9249 = vsel %vm409, %v9167, 0
      %v9252 = vsel %vm409, %v9168, 0
      %v9255 = vsel %vm409, %v9169, 0
      %v9258 = vsel %vm409, %v9170, 0
      %v9261 = vsel %vm409, %v9171, 0
      %v9264 = vsel %vm409, %v9172, 0
      %v9267 = vsel %vm409, %v9173, 0
      %v9270 = vsel %vm409, %v9174, 0
      %v9273 = vsel %vm409, %v9175, 0
      %v9276 = vsel %vm409, %v9176, 0
      %v9279 = vsel %vm409, %v9177, 0
      %v9282 = vsel %vm409, %v9178, 0
      %v9285 = vsel %vm409, %v9179, 0
      %v9288 = vsel %vm409, %v9180, 0
      %v9291 = vsel %vm409, %v9181, 0
      %v9294 = vsel %vm409, %v9182, 0
      %v9297 = vsel %vm409, %v9183, 0
      %v9300 = vsel %vm409, %v9184, 0
      %v9303 = vsel %vm409, %v9185, 0
      %v9306 = vsel %vm409, %v9186, 0
      %v9309 = vsel %vm409, %v9187, 0
      %v9312 = vsel %vm409, %v9188, 0
      %9314 = vmatpush.msra.mxu0 0.0
      %9315 = vmatpush.msra.mxu0 0.0
      %9316 = vmatpush.msra.mxu0 0.0
      %9317 = vmatpush.msra.mxu0 0.0
      %9318 = vmatpush.msra.mxu0 0.0
      %9319 = vmatpush.msra.mxu0 0.0
      %9320 = vmatpush.msra.mxu0 0.0
      %9321 = vmatpush.msra.mxu0 0.0
      %9322 = vmatpush.msra.mxu0 0.0
      %9323 = vmatpush.msra.mxu0 0.0
      %9324 = vmatpush.msra.mxu0 0.0
      %9325 = vmatpush.msra.mxu0 0.0
      %9326 = vmatpush.msra.mxu0 %v9193
      %9327 = vmatpush.msra.mxu0 %v9192
      %9328 = vmatpush.msra.mxu0 %v9191
      %9329 = vmatpush.msra.mxu0 %v9190
      %9330 = vmatmul.f32.gmra.mxu0 %v9195
      %v9331 = vpop.f32.mrf.mxu0
      %v9332 = vadd.f32 0.0, %v9331
      %9333 = vmatmul.f32.gmra.mxu0 %v9198
      %v9334 = vpop.f32.mrf.mxu0
      %v9335 = vadd.f32 0.0, %v9334
      %9336 = vmatmul.f32.gmra.mxu0 %v9201
      %v9337 = vpop.f32.mrf.mxu0
      %v9338 = vadd.f32 0.0, %v9337
      %9339 = vmatmul.f32.gmra.mxu0 %v9204
      %v9340 = vpop.f32.mrf.mxu0
      %v9341 = vadd.f32 0.0, %v9340
      %9342 = vmatmul.f32.gmra.mxu0 %v9207
      %v9343 = vpop.f32.mrf.mxu0
      %v9344 = vadd.f32 0.0, %v9343
      %9345 = vmatmul.f32.gmra.mxu0 %v9210
      %v9346 = vpop.f32.mrf.mxu0
      %v9347 = vadd.f32 0.0, %v9346
      %9348 = vmatmul.f32.gmra.mxu0 %v9213
      %v9349 = vpop.f32.mrf.mxu0
      %v9350 = vadd.f32 0.0, %v9349
      %9351 = vmatmul.f32.gmra.mxu0 %v9216
      %v9352 = vpop.f32.mrf.mxu0
      %v9353 = vadd.f32 0.0, %v9352
      %9354 = vmatmul.f32.gmra.mxu0 %v9219
      %v9355 = vpop.f32.mrf.mxu0
      %v9356 = vadd.f32 0.0, %v9355
      %9357 = vmatmul.f32.gmra.mxu0 %v9222
      %v9358 = vpop.f32.mrf.mxu0
      %v9359 = vadd.f32 0.0, %v9358
      %9360 = vmatmul.f32.gmra.mxu0 %v9225
      %v9361 = vpop.f32.mrf.mxu0
      %v9362 = vadd.f32 0.0, %v9361
      %9363 = vmatmul.f32.gmra.mxu0 %v9228
      %v9364 = vpop.f32.mrf.mxu0
      %v9365 = vadd.f32 0.0, %v9364
      %9366 = vmatmul.f32.gmra.mxu0 %v9231
      %v9367 = vpop.f32.mrf.mxu0
      %v9368 = vadd.f32 0.0, %v9367
      %9369 = vmatmul.f32.gmra.mxu0 %v9234
      %v9370 = vpop.f32.mrf.mxu0
      %v9371 = vadd.f32 0.0, %v9370
      %9372 = vmatmul.f32.gmra.mxu0 %v9237
      %v9373 = vpop.f32.mrf.mxu0
      %v9374 = vadd.f32 0.0, %v9373
      %9375 = vmatmul.f32.gmra.mxu0 %v9240
      %v9376 = vpop.f32.mrf.mxu0
      %v9377 = vadd.f32 0.0, %v9376
      %9378 = vmatmul.f32.gmra.mxu0 %v9243
      %v9379 = vpop.f32.mrf.mxu0
      %v9380 = vadd.f32 0.0, %v9379
      %9381 = vmatmul.f32.gmra.mxu0 %v9246
      %v9382 = vpop.f32.mrf.mxu0
      %v9383 = vadd.f32 0.0, %v9382
      %9384 = vmatmul.f32.gmra.mxu0 %v9249
      %v9385 = vpop.f32.mrf.mxu0
      %v9386 = vadd.f32 0.0, %v9385
      %9387 = vmatmul.f32.gmra.mxu0 %v9252
      %v9388 = vpop.f32.mrf.mxu0
      %v9389 = vadd.f32 0.0, %v9388
      %9390 = vmatmul.f32.gmra.mxu0 %v9255
      %v9391 = vpop.f32.mrf.mxu0
      %v9392 = vadd.f32 0.0, %v9391
      %9393 = vmatmul.f32.gmra.mxu0 %v9258
      %v9394 = vpop.f32.mrf.mxu0
      %v9395 = vadd.f32 0.0, %v9394
      %9396 = vmatmul.f32.gmra.mxu0 %v9261
      %v9397 = vpop.f32.mrf.mxu0
      %v9398 = vadd.f32 0.0, %v9397
      %9399 = vmatmul.f32.gmra.mxu0 %v9264
      %v9400 = vpop.f32.mrf.mxu0
      %v9401 = vadd.f32 0.0, %v9400
      %9402 = vmatmul.f32.gmra.mxu0 %v9267
      %v9403 = vpop.f32.mrf.mxu0
      %v9404 = vadd.f32 0.0, %v9403
      %9405 = vmatmul.f32.gmra.mxu0 %v9270
      %v9406 = vpop.f32.mrf.mxu0
      %v9407 = vadd.f32 0.0, %v9406
      %9408 = vmatmul.f32.gmra.mxu0 %v9273
      %v9409 = vpop.f32.mrf.mxu0
      %v9410 = vadd.f32 0.0, %v9409
      %9411 = vmatmul.f32.gmra.mxu0 %v9276
      %v9412 = vpop.f32.mrf.mxu0
      %v9413 = vadd.f32 0.0, %v9412
      %9414 = vmatmul.f32.gmra.mxu0 %v9279
      %v9415 = vpop.f32.mrf.mxu0
      %v9416 = vadd.f32 0.0, %v9415
      %9417 = vmatmul.f32.gmra.mxu0 %v9282
      %v9418 = vpop.f32.mrf.mxu0
      %v9419 = vadd.f32 0.0, %v9418
      %9420 = vmatmul.f32.gmra.mxu0 %v9285
      %v9421 = vpop.f32.mrf.mxu0
      %v9422 = vadd.f32 0.0, %v9421
      %9423 = vmatmul.f32.gmra.mxu0 %v9288
      %v9424 = vpop.f32.mrf.mxu0
      %v9425 = vadd.f32 0.0, %v9424
      %9426 = vmatmul.f32.gmra.mxu0 %v9291
      %v9427 = vpop.f32.mrf.mxu0
      %v9428 = vadd.f32 0.0, %v9427
      %9429 = vmatmul.f32.gmra.mxu0 %v9294
      %v9430 = vpop.f32.mrf.mxu0
      %v9431 = vadd.f32 0.0, %v9430
      %9432 = vmatmul.f32.gmra.mxu0 %v9297
      %v9433 = vpop.f32.mrf.mxu0
      %v9434 = vadd.f32 0.0, %v9433
      %9435 = vmatmul.f32.gmra.mxu0 %v9300
      %v9436 = vpop.f32.mrf.mxu0
      %v9437 = vadd.f32 0.0, %v9436
      %9438 = vmatmul.f32.gmra.mxu0 %v9303
      %v9439 = vpop.f32.mrf.mxu0
      %v9440 = vadd.f32 0.0, %v9439
      %9441 = vmatmul.f32.gmra.mxu0 %v9306
      %v9442 = vpop.f32.mrf.mxu0
      %v9443 = vadd.f32 0.0, %v9442
      %9444 = vmatmul.f32.gmra.mxu0 %v9309
      %v9445 = vpop.f32.mrf.mxu0
      %v9446 = vadd.f32 0.0, %v9445
      %9447 = vmatmul.f32.gmra.mxu0 %v9312
      %v9448 = vpop.f32.mrf.mxu0
      %v9449 = vadd.f32 0.0, %v9448
      %9450 = vdwg.mxu0
      %v9451 = vadd.f32 %v9109, %v9332
      %v9452 = vadd.f32 %v9110, %v9335
      %v9453 = vadd.f32 %v9111, %v9338
      %v9454 = vadd.f32 %v9112, %v9341
      %v9455 = vadd.f32 %v9113, %v9344
      %v9456 = vadd.f32 %v9114, %v9347
      %v9457 = vadd.f32 %v9115, %v9350
      %v9458 = vadd.f32 %v9116, %v9353
      %v9459 = vadd.f32 %v9117, %v9356
      %v9460 = vadd.f32 %v9118, %v9359
      %v9461 = vadd.f32 %v9119, %v9362
      %v9462 = vadd.f32 %v9120, %v9365
      %v9463 = vadd.f32 %v9121, %v9368
      %v9464 = vadd.f32 %v9122, %v9371
      %v9465 = vadd.f32 %v9123, %v9374
      %v9466 = vadd.f32 %v9124, %v9377
      %v9467 = vadd.f32 %v9125, %v9380
      %v9468 = vadd.f32 %v9126, %v9383
      %v9469 = vadd.f32 %v9127, %v9386
      %v9470 = vadd.f32 %v9128, %v9389
      %v9471 = vadd.f32 %v9129, %v9392
      %v9472 = vadd.f32 %v9130, %v9395
      %v9473 = vadd.f32 %v9131, %v9398
      %v9474 = vadd.f32 %v9132, %v9401
      %v9475 = vadd.f32 %v9133, %v9404
      %v9476 = vadd.f32 %v9134, %v9407
      %v9477 = vadd.f32 %v9135, %v9410
      %v9478 = vadd.f32 %v9136, %v9413
      %v9479 = vadd.f32 %v9137, %v9416
      %v9480 = vadd.f32 %v9138, %v9419
      %v9481 = vadd.f32 %v9139, %v9422
      %v9482 = vadd.f32 %v9140, %v9425
      %v9483 = vadd.f32 %v9141, %v9428
      %v9484 = vadd.f32 %v9142, %v9431
      %v9485 = vadd.f32 %v9143, %v9434
      %v9486 = vadd.f32 %v9144, %v9437
      %v9487 = vadd.f32 %v9145, %v9440
      %v9488 = vadd.f32 %v9146, %v9443
      %v9489 = vadd.f32 %v9147, %v9446
      %v9490 = vadd.f32 %v9148, %v9449
      %v9491 = vld [vmem:[#allocation4 + $0x50] sm:$0xff]
      %v9492 = vld [vmem:[#allocation4 + $0x58] sm:$0xff]
      %v9493 = vld [vmem:[#allocation4 + $0x60] sm:$0xff]
      %v9494 = vld [vmem:[#allocation4 + $0x68] sm:$0xff]
      %v9495 = vld [vmem:[#allocation4 + $0x70] sm:$0xff]
      %v9496 = vld [vmem:[#allocation4 + $0x78] sm:$0xff]
      %v9497 = vld [vmem:[#allocation4 + $0x80] sm:$0xff]
      %v9498 = vld [vmem:[#allocation4 + $0x88] sm:$0xff]
      %v9499 = vld [vmem:[#allocation4 + $0x90] sm:$0xff]
      %v9500 = vld [vmem:[#allocation4 + $0x98] sm:$0xff]
      %v9501 = vld [vmem:[#allocation4 + $0xa0] sm:$0xff]
      %v9502 = vld [vmem:[#allocation4 + $0xa8] sm:$0xff]
      %v9503 = vld [vmem:[#allocation4 + $0xb0] sm:$0xff]
      %v9504 = vld [vmem:[#allocation4 + $0xb8] sm:$0xff]
      %v9505 = vld [vmem:[#allocation4 + $0xc0] sm:$0xff]
      %v9506 = vld [vmem:[#allocation4 + $0xc8] sm:$0xff]
      %v9507 = vld [vmem:[#allocation4 + $0xd0] sm:$0xff]
      %v9508 = vld [vmem:[#allocation4 + $0xd8] sm:$0xff]
      %v9509 = vld [vmem:[#allocation4 + $0xe0] sm:$0xff]
      %v9510 = vld [vmem:[#allocation4 + $0xe8] sm:$0xff]
      %v9511 = vld [vmem:[#allocation4 + $0xf0] sm:$0xff]
      %v9512 = vld [vmem:[#allocation4 + $0xf8] sm:$0xff]
      %v9513 = vld [vmem:[#allocation4 + $0x100] sm:$0xff]
      %v9514 = vld [vmem:[#allocation4 + $0x108] sm:$0xff]
      %v9515 = vld [vmem:[#allocation4 + $0x110] sm:$0xff]
      %v9516 = vld [vmem:[#allocation4 + $0x118] sm:$0xff]
      %v9517 = vld [vmem:[#allocation4 + $0x120] sm:$0xff]
      %v9518 = vld [vmem:[#allocation4 + $0x128] sm:$0xff]
      %v9519 = vld [vmem:[#allocation4 + $0x130] sm:$0xff]
      %v9520 = vld [vmem:[#allocation4 + $0x138] sm:$0xff]
      %v9521 = vld [vmem:[#allocation4 + $0x140] sm:$0xff]
      %v9522 = vld [vmem:[#allocation4 + $0x148] sm:$0xff]
      %v9523 = vld [vmem:[#allocation4 + $0x150] sm:$0xff]
      %v9524 = vld [vmem:[#allocation4 + $0x158] sm:$0xff]
      %v9525 = vld [vmem:[#allocation4 + $0x160] sm:$0xff]
      %v9526 = vld [vmem:[#allocation4 + $0x168] sm:$0xff]
      %v9527 = vld [vmem:[#allocation4 + $0x170] sm:$0xff]
      %v9528 = vld [vmem:[#allocation4 + $0x178] sm:$0xff]
      %v9529 = vld [vmem:[#allocation4 + $0x180] sm:$0xff]
      %v9530 = vld [vmem:[#allocation4 + $0x188] sm:$0xff]
      %s9531 = scalar_lea.vmem %s7, 640
      %v9532 = vld [vmem:[%s9531] sm:$0xff]
      %v9533 = vld [vmem:[%s9531 + $0x8] sm:$0xff]
      %v9534 = vld [vmem:[%s9531 + $0x10] sm:$0xff]
      %v9535 = vld [vmem:[%s9531 + $0x18] sm:$0xff]
      %v9537 = vsel %vm409, %v9491, 0
      %v9540 = vsel %vm409, %v9492, 0
      %v9543 = vsel %vm409, %v9493, 0
      %v9546 = vsel %vm409, %v9494, 0
      %v9549 = vsel %vm409, %v9495, 0
      %v9552 = vsel %vm409, %v9496, 0
      %v9555 = vsel %vm409, %v9497, 0
      %v9558 = vsel %vm409, %v9498, 0
      %v9561 = vsel %vm409, %v9499, 0
      %v9564 = vsel %vm409, %v9500, 0
      %v9567 = vsel %vm409, %v9501, 0
      %v9570 = vsel %vm409, %v9502, 0
      %v9573 = vsel %vm409, %v9503, 0
      %v9576 = vsel %vm409, %v9504, 0
      %v9579 = vsel %vm409, %v9505, 0
      %v9582 = vsel %vm409, %v9506, 0
      %v9585 = vsel %vm409, %v9507, 0
      %v9588 = vsel %vm409, %v9508, 0
      %v9591 = vsel %vm409, %v9509, 0
      %v9594 = vsel %vm409, %v9510, 0
      %v9597 = vsel %vm409, %v9511, 0
      %v9600 = vsel %vm409, %v9512, 0
      %v9603 = vsel %vm409, %v9513, 0
      %v9606 = vsel %vm409, %v9514, 0
      %v9609 = vsel %vm409, %v9515, 0
      %v9612 = vsel %vm409, %v9516, 0
      %v9615 = vsel %vm409, %v9517, 0
      %v9618 = vsel %vm409, %v9518, 0
      %v9621 = vsel %vm409, %v9519, 0
      %v9624 = vsel %vm409, %v9520, 0
      %v9627 = vsel %vm409, %v9521, 0
      %v9630 = vsel %vm409, %v9522, 0
      %v9633 = vsel %vm409, %v9523, 0
      %v9636 = vsel %vm409, %v9524, 0
      %v9639 = vsel %vm409, %v9525, 0
      %v9642 = vsel %vm409, %v9526, 0
      %v9645 = vsel %vm409, %v9527, 0
      %v9648 = vsel %vm409, %v9528, 0
      %v9651 = vsel %vm409, %v9529, 0
      %v9654 = vsel %vm409, %v9530, 0
      %9656 = vmatpush.msra.mxu0 0.0
      %9657 = vmatpush.msra.mxu0 0.0
      %9658 = vmatpush.msra.mxu0 0.0
      %9659 = vmatpush.msra.mxu0 0.0
      %9660 = vmatpush.msra.mxu0 0.0
      %9661 = vmatpush.msra.mxu0 0.0
      %9662 = vmatpush.msra.mxu0 0.0
      %9663 = vmatpush.msra.mxu0 0.0
      %9664 = vmatpush.msra.mxu0 0.0
      %9665 = vmatpush.msra.mxu0 0.0
      %9666 = vmatpush.msra.mxu0 0.0
      %9667 = vmatpush.msra.mxu0 0.0
      %9668 = vmatpush.msra.mxu0 %v9535
      %9669 = vmatpush.msra.mxu0 %v9534
      %9670 = vmatpush.msra.mxu0 %v9533
      %9671 = vmatpush.msra.mxu0 %v9532
      %9672 = vmatmul.f32.gmra.mxu0 %v9537
      %v9673 = vpop.f32.mrf.mxu0
      %v9674 = vadd.f32 0.0, %v9673
      %9675 = vmatmul.f32.gmra.mxu0 %v9540
      %v9676 = vpop.f32.mrf.mxu0
      %v9677 = vadd.f32 0.0, %v9676
      %9678 = vmatmul.f32.gmra.mxu0 %v9543
      %v9679 = vpop.f32.mrf.mxu0
      %v9680 = vadd.f32 0.0, %v9679
      %9681 = vmatmul.f32.gmra.mxu0 %v9546
      %v9682 = vpop.f32.mrf.mxu0
      %v9683 = vadd.f32 0.0, %v9682
      %9684 = vmatmul.f32.gmra.mxu0 %v9549
      %v9685 = vpop.f32.mrf.mxu0
      %v9686 = vadd.f32 0.0, %v9685
      %9687 = vmatmul.f32.gmra.mxu0 %v9552
      %v9688 = vpop.f32.mrf.mxu0
      %v9689 = vadd.f32 0.0, %v9688
      %9690 = vmatmul.f32.gmra.mxu0 %v9555
      %v9691 = vpop.f32.mrf.mxu0
      %v9692 = vadd.f32 0.0, %v9691
      %9693 = vmatmul.f32.gmra.mxu0 %v9558
      %v9694 = vpop.f32.mrf.mxu0
      %v9695 = vadd.f32 0.0, %v9694
      %9696 = vmatmul.f32.gmra.mxu0 %v9561
      %v9697 = vpop.f32.mrf.mxu0
      %v9698 = vadd.f32 0.0, %v9697
      %9699 = vmatmul.f32.gmra.mxu0 %v9564
      %v9700 = vpop.f32.mrf.mxu0
      %v9701 = vadd.f32 0.0, %v9700
      %9702 = vmatmul.f32.gmra.mxu0 %v9567
      %v9703 = vpop.f32.mrf.mxu0
      %v9704 = vadd.f32 0.0, %v9703
      %9705 = vmatmul.f32.gmra.mxu0 %v9570
      %v9706 = vpop.f32.mrf.mxu0
      %v9707 = vadd.f32 0.0, %v9706
      %9708 = vmatmul.f32.gmra.mxu0 %v9573
      %v9709 = vpop.f32.mrf.mxu0
      %v9710 = vadd.f32 0.0, %v9709
      %9711 = vmatmul.f32.gmra.mxu0 %v9576
      %v9712 = vpop.f32.mrf.mxu0
      %v9713 = vadd.f32 0.0, %v9712
      %9714 = vmatmul.f32.gmra.mxu0 %v9579
      %v9715 = vpop.f32.mrf.mxu0
      %v9716 = vadd.f32 0.0, %v9715
      %9717 = vmatmul.f32.gmra.mxu0 %v9582
      %v9718 = vpop.f32.mrf.mxu0
      %v9719 = vadd.f32 0.0, %v9718
      %9720 = vmatmul.f32.gmra.mxu0 %v9585
      %v9721 = vpop.f32.mrf.mxu0
      %v9722 = vadd.f32 0.0, %v9721
      %9723 = vmatmul.f32.gmra.mxu0 %v9588
      %v9724 = vpop.f32.mrf.mxu0
      %v9725 = vadd.f32 0.0, %v9724
      %9726 = vmatmul.f32.gmra.mxu0 %v9591
      %v9727 = vpop.f32.mrf.mxu0
      %v9728 = vadd.f32 0.0, %v9727
      %9729 = vmatmul.f32.gmra.mxu0 %v9594
      %v9730 = vpop.f32.mrf.mxu0
      %v9731 = vadd.f32 0.0, %v9730
      %9732 = vmatmul.f32.gmra.mxu0 %v9597
      %v9733 = vpop.f32.mrf.mxu0
      %v9734 = vadd.f32 0.0, %v9733
      %9735 = vmatmul.f32.gmra.mxu0 %v9600
      %v9736 = vpop.f32.mrf.mxu0
      %v9737 = vadd.f32 0.0, %v9736
      %9738 = vmatmul.f32.gmra.mxu0 %v9603
      %v9739 = vpop.f32.mrf.mxu0
      %v9740 = vadd.f32 0.0, %v9739
      %9741 = vmatmul.f32.gmra.mxu0 %v9606
      %v9742 = vpop.f32.mrf.mxu0
      %v9743 = vadd.f32 0.0, %v9742
      %9744 = vmatmul.f32.gmra.mxu0 %v9609
      %v9745 = vpop.f32.mrf.mxu0
      %v9746 = vadd.f32 0.0, %v9745
      %9747 = vmatmul.f32.gmra.mxu0 %v9612
      %v9748 = vpop.f32.mrf.mxu0
      %v9749 = vadd.f32 0.0, %v9748
      %9750 = vmatmul.f32.gmra.mxu0 %v9615
      %v9751 = vpop.f32.mrf.mxu0
      %v9752 = vadd.f32 0.0, %v9751
      %9753 = vmatmul.f32.gmra.mxu0 %v9618
      %v9754 = vpop.f32.mrf.mxu0
      %v9755 = vadd.f32 0.0, %v9754
      %9756 = vmatmul.f32.gmra.mxu0 %v9621
      %v9757 = vpop.f32.mrf.mxu0
      %v9758 = vadd.f32 0.0, %v9757
      %9759 = vmatmul.f32.gmra.mxu0 %v9624
      %v9760 = vpop.f32.mrf.mxu0
      %v9761 = vadd.f32 0.0, %v9760
      %9762 = vmatmul.f32.gmra.mxu0 %v9627
      %v9763 = vpop.f32.mrf.mxu0
      %v9764 = vadd.f32 0.0, %v9763
      %9765 = vmatmul.f32.gmra.mxu0 %v9630
      %v9766 = vpop.f32.mrf.mxu0
      %v9767 = vadd.f32 0.0, %v9766
      %9768 = vmatmul.f32.gmra.mxu0 %v9633
      %v9769 = vpop.f32.mrf.mxu0
      %v9770 = vadd.f32 0.0, %v9769
      %9771 = vmatmul.f32.gmra.mxu0 %v9636
      %v9772 = vpop.f32.mrf.mxu0
      %v9773 = vadd.f32 0.0, %v9772
      %9774 = vmatmul.f32.gmra.mxu0 %v9639
      %v9775 = vpop.f32.mrf.mxu0
      %v9776 = vadd.f32 0.0, %v9775
      %9777 = vmatmul.f32.gmra.mxu0 %v9642
      %v9778 = vpop.f32.mrf.mxu0
      %v9779 = vadd.f32 0.0, %v9778
      %9780 = vmatmul.f32.gmra.mxu0 %v9645
      %v9781 = vpop.f32.mrf.mxu0
      %v9782 = vadd.f32 0.0, %v9781
      %9783 = vmatmul.f32.gmra.mxu0 %v9648
      %v9784 = vpop.f32.mrf.mxu0
      %v9785 = vadd.f32 0.0, %v9784
      %9786 = vmatmul.f32.gmra.mxu0 %v9651
      %v9787 = vpop.f32.mrf.mxu0
      %v9788 = vadd.f32 0.0, %v9787
      %9789 = vmatmul.f32.gmra.mxu0 %v9654
      %v9790 = vpop.f32.mrf.mxu0
      %v9791 = vadd.f32 0.0, %v9790
      %9792 = vdwg.mxu0
      %v9793 = vadd.f32 %v9451, %v9674
      %v9794 = vadd.f32 %v9452, %v9677
      %v9795 = vadd.f32 %v9453, %v9680
      %v9796 = vadd.f32 %v9454, %v9683
      %v9797 = vadd.f32 %v9455, %v9686
      %v9798 = vadd.f32 %v9456, %v9689
      %v9799 = vadd.f32 %v9457, %v9692
      %v9800 = vadd.f32 %v9458, %v9695
      %v9801 = vadd.f32 %v9459, %v9698
      %v9802 = vadd.f32 %v9460, %v9701
      %v9803 = vadd.f32 %v9461, %v9704
      %v9804 = vadd.f32 %v9462, %v9707
      %v9805 = vadd.f32 %v9463, %v9710
      %v9806 = vadd.f32 %v9464, %v9713
      %v9807 = vadd.f32 %v9465, %v9716
      %v9808 = vadd.f32 %v9466, %v9719
      %v9809 = vadd.f32 %v9467, %v9722
      %v9810 = vadd.f32 %v9468, %v9725
      %v9811 = vadd.f32 %v9469, %v9728
      %v9812 = vadd.f32 %v9470, %v9731
      %v9813 = vadd.f32 %v9471, %v9734
      %v9814 = vadd.f32 %v9472, %v9737
      %v9815 = vadd.f32 %v9473, %v9740
      %v9816 = vadd.f32 %v9474, %v9743
      %v9817 = vadd.f32 %v9475, %v9746
      %v9818 = vadd.f32 %v9476, %v9749
      %v9819 = vadd.f32 %v9477, %v9752
      %v9820 = vadd.f32 %v9478, %v9755
      %v9821 = vadd.f32 %v9479, %v9758
      %v9822 = vadd.f32 %v9480, %v9761
      %v9823 = vadd.f32 %v9481, %v9764
      %v9824 = vadd.f32 %v9482, %v9767
      %v9825 = vadd.f32 %v9483, %v9770
      %v9826 = vadd.f32 %v9484, %v9773
      %v9827 = vadd.f32 %v9485, %v9776
      %v9828 = vadd.f32 %v9486, %v9779
      %v9829 = vadd.f32 %v9487, %v9782
      %v9830 = vadd.f32 %v9488, %v9785
      %v9831 = vadd.f32 %v9489, %v9788
      %v9832 = vadd.f32 %v9490, %v9791
      %v9833 = vld [vmem:[#allocation4 + $0x51] sm:$0xff]
      %v9834 = vld [vmem:[#allocation4 + $0x59] sm:$0xff]
      %v9835 = vld [vmem:[#allocation4 + $0x61] sm:$0xff]
      %v9836 = vld [vmem:[#allocation4 + $0x69] sm:$0xff]
      %v9837 = vld [vmem:[#allocation4 + $0x71] sm:$0xff]
      %v9838 = vld [vmem:[#allocation4 + $0x79] sm:$0xff]
      %v9839 = vld [vmem:[#allocation4 + $0x81] sm:$0xff]
      %v9840 = vld [vmem:[#allocation4 + $0x89] sm:$0xff]
      %v9841 = vld [vmem:[#allocation4 + $0x91] sm:$0xff]
      %v9842 = vld [vmem:[#allocation4 + $0x99] sm:$0xff]
      %v9843 = vld [vmem:[#allocation4 + $0xa1] sm:$0xff]
      %v9844 = vld [vmem:[#allocation4 + $0xa9] sm:$0xff]
      %v9845 = vld [vmem:[#allocation4 + $0xb1] sm:$0xff]
      %v9846 = vld [vmem:[#allocation4 + $0xb9] sm:$0xff]
      %v9847 = vld [vmem:[#allocation4 + $0xc1] sm:$0xff]
      %v9848 = vld [vmem:[#allocation4 + $0xc9] sm:$0xff]
      %v9849 = vld [vmem:[#allocation4 + $0xd1] sm:$0xff]
      %v9850 = vld [vmem:[#allocation4 + $0xd9] sm:$0xff]
      %v9851 = vld [vmem:[#allocation4 + $0xe1] sm:$0xff]
      %v9852 = vld [vmem:[#allocation4 + $0xe9] sm:$0xff]
      %v9853 = vld [vmem:[#allocation4 + $0xf1] sm:$0xff]
      %v9854 = vld [vmem:[#allocation4 + $0xf9] sm:$0xff]
      %v9855 = vld [vmem:[#allocation4 + $0x101] sm:$0xff]
      %v9856 = vld [vmem:[#allocation4 + $0x109] sm:$0xff]
      %v9857 = vld [vmem:[#allocation4 + $0x111] sm:$0xff]
      %v9858 = vld [vmem:[#allocation4 + $0x119] sm:$0xff]
      %v9859 = vld [vmem:[#allocation4 + $0x121] sm:$0xff]
      %v9860 = vld [vmem:[#allocation4 + $0x129] sm:$0xff]
      %v9861 = vld [vmem:[#allocation4 + $0x131] sm:$0xff]
      %v9862 = vld [vmem:[#allocation4 + $0x139] sm:$0xff]
      %v9863 = vld [vmem:[#allocation4 + $0x141] sm:$0xff]
      %v9864 = vld [vmem:[#allocation4 + $0x149] sm:$0xff]
      %v9865 = vld [vmem:[#allocation4 + $0x151] sm:$0xff]
      %v9866 = vld [vmem:[#allocation4 + $0x159] sm:$0xff]
      %v9867 = vld [vmem:[#allocation4 + $0x161] sm:$0xff]
      %v9868 = vld [vmem:[#allocation4 + $0x169] sm:$0xff]
      %v9869 = vld [vmem:[#allocation4 + $0x171] sm:$0xff]
      %v9870 = vld [vmem:[#allocation4 + $0x179] sm:$0xff]
      %v9871 = vld [vmem:[#allocation4 + $0x181] sm:$0xff]
      %v9872 = vld [vmem:[#allocation4 + $0x189] sm:$0xff]
      %s9873 = scalar_lea.vmem %s7, 672
      %v9874 = vld [vmem:[%s9873] sm:$0xff]
      %v9875 = vld [vmem:[%s9873 + $0x8] sm:$0xff]
      %v9876 = vld [vmem:[%s9873 + $0x10] sm:$0xff]
      %v9877 = vld [vmem:[%s9873 + $0x18] sm:$0xff]
      %v9879 = vsel %vm409, %v9833, 0
      %v9882 = vsel %vm409, %v9834, 0
      %v9885 = vsel %vm409, %v9835, 0
      %v9888 = vsel %vm409, %v9836, 0
      %v9891 = vsel %vm409, %v9837, 0
      %v9894 = vsel %vm409, %v9838, 0
      %v9897 = vsel %vm409, %v9839, 0
      %v9900 = vsel %vm409, %v9840, 0
      %v9903 = vsel %vm409, %v9841, 0
      %v9906 = vsel %vm409, %v9842, 0
      %v9909 = vsel %vm409, %v9843, 0
      %v9912 = vsel %vm409, %v9844, 0
      %v9915 = vsel %vm409, %v9845, 0
      %v9918 = vsel %vm409, %v9846, 0
      %v9921 = vsel %vm409, %v9847, 0
      %v9924 = vsel %vm409, %v9848, 0
      %v9927 = vsel %vm409, %v9849, 0
      %v9930 = vsel %vm409, %v9850, 0
      %v9933 = vsel %vm409, %v9851, 0
      %v9936 = vsel %vm409, %v9852, 0
      %v9939 = vsel %vm409, %v9853, 0
      %v9942 = vsel %vm409, %v9854, 0
      %v9945 = vsel %vm409, %v9855, 0
      %v9948 = vsel %vm409, %v9856, 0
      %v9951 = vsel %vm409, %v9857, 0
      %v9954 = vsel %vm409, %v9858, 0
      %v9957 = vsel %vm409, %v9859, 0
      %v9960 = vsel %vm409, %v9860, 0
      %v9963 = vsel %vm409, %v9861, 0
      %v9966 = vsel %vm409, %v9862, 0
      %v9969 = vsel %vm409, %v9863, 0
      %v9972 = vsel %vm409, %v9864, 0
      %v9975 = vsel %vm409, %v9865, 0
      %v9978 = vsel %vm409, %v9866, 0
      %v9981 = vsel %vm409, %v9867, 0
      %v9984 = vsel %vm409, %v9868, 0
      %v9987 = vsel %vm409, %v9869, 0
      %v9990 = vsel %vm409, %v9870, 0
      %v9993 = vsel %vm409, %v9871, 0
      %v9996 = vsel %vm409, %v9872, 0
      %9998 = vmatpush.msra.mxu0 0.0
      %9999 = vmatpush.msra.mxu0 0.0
      %10000 = vmatpush.msra.mxu0 0.0
      %10001 = vmatpush.msra.mxu0 0.0
      %10002 = vmatpush.msra.mxu0 0.0
      %10003 = vmatpush.msra.mxu0 0.0
      %10004 = vmatpush.msra.mxu0 0.0
      %10005 = vmatpush.msra.mxu0 0.0
      %10006 = vmatpush.msra.mxu0 0.0
      %10007 = vmatpush.msra.mxu0 0.0
      %10008 = vmatpush.msra.mxu0 0.0
      %10009 = vmatpush.msra.mxu0 0.0
      %10010 = vmatpush.msra.mxu0 %v9877
      %10011 = vmatpush.msra.mxu0 %v9876
      %10012 = vmatpush.msra.mxu0 %v9875
      %10013 = vmatpush.msra.mxu0 %v9874
      %10014 = vmatmul.f32.gmra.mxu0 %v9879
      %v10015 = vpop.f32.mrf.mxu0
      %v10016 = vadd.f32 0.0, %v10015
      %10017 = vmatmul.f32.gmra.mxu0 %v9882
      %v10018 = vpop.f32.mrf.mxu0
      %v10019 = vadd.f32 0.0, %v10018
      %10020 = vmatmul.f32.gmra.mxu0 %v9885
      %v10021 = vpop.f32.mrf.mxu0
      %v10022 = vadd.f32 0.0, %v10021
      %10023 = vmatmul.f32.gmra.mxu0 %v9888
      %v10024 = vpop.f32.mrf.mxu0
      %v10025 = vadd.f32 0.0, %v10024
      %10026 = vmatmul.f32.gmra.mxu0 %v9891
      %v10027 = vpop.f32.mrf.mxu0
      %v10028 = vadd.f32 0.0, %v10027
      %10029 = vmatmul.f32.gmra.mxu0 %v9894
      %v10030 = vpop.f32.mrf.mxu0
      %v10031 = vadd.f32 0.0, %v10030
      %10032 = vmatmul.f32.gmra.mxu0 %v9897
      %v10033 = vpop.f32.mrf.mxu0
      %v10034 = vadd.f32 0.0, %v10033
      %10035 = vmatmul.f32.gmra.mxu0 %v9900
      %v10036 = vpop.f32.mrf.mxu0
      %v10037 = vadd.f32 0.0, %v10036
      %10038 = vmatmul.f32.gmra.mxu0 %v9903
      %v10039 = vpop.f32.mrf.mxu0
      %v10040 = vadd.f32 0.0, %v10039
      %10041 = vmatmul.f32.gmra.mxu0 %v9906
      %v10042 = vpop.f32.mrf.mxu0
      %v10043 = vadd.f32 0.0, %v10042
      %10044 = vmatmul.f32.gmra.mxu0 %v9909
      %v10045 = vpop.f32.mrf.mxu0
      %v10046 = vadd.f32 0.0, %v10045
      %10047 = vmatmul.f32.gmra.mxu0 %v9912
      %v10048 = vpop.f32.mrf.mxu0
      %v10049 = vadd.f32 0.0, %v10048
      %10050 = vmatmul.f32.gmra.mxu0 %v9915
      %v10051 = vpop.f32.mrf.mxu0
      %v10052 = vadd.f32 0.0, %v10051
      %10053 = vmatmul.f32.gmra.mxu0 %v9918
      %v10054 = vpop.f32.mrf.mxu0
      %v10055 = vadd.f32 0.0, %v10054
      %10056 = vmatmul.f32.gmra.mxu0 %v9921
      %v10057 = vpop.f32.mrf.mxu0
      %v10058 = vadd.f32 0.0, %v10057
      %10059 = vmatmul.f32.gmra.mxu0 %v9924
      %v10060 = vpop.f32.mrf.mxu0
      %v10061 = vadd.f32 0.0, %v10060
      %10062 = vmatmul.f32.gmra.mxu0 %v9927
      %v10063 = vpop.f32.mrf.mxu0
      %v10064 = vadd.f32 0.0, %v10063
      %10065 = vmatmul.f32.gmra.mxu0 %v9930
      %v10066 = vpop.f32.mrf.mxu0
      %v10067 = vadd.f32 0.0, %v10066
      %10068 = vmatmul.f32.gmra.mxu0 %v9933
      %v10069 = vpop.f32.mrf.mxu0
      %v10070 = vadd.f32 0.0, %v10069
      %10071 = vmatmul.f32.gmra.mxu0 %v9936
      %v10072 = vpop.f32.mrf.mxu0
      %v10073 = vadd.f32 0.0, %v10072
      %10074 = vmatmul.f32.gmra.mxu0 %v9939
      %v10075 = vpop.f32.mrf.mxu0
      %v10076 = vadd.f32 0.0, %v10075
      %10077 = vmatmul.f32.gmra.mxu0 %v9942
      %v10078 = vpop.f32.mrf.mxu0
      %v10079 = vadd.f32 0.0, %v10078
      %10080 = vmatmul.f32.gmra.mxu0 %v9945
      %v10081 = vpop.f32.mrf.mxu0
      %v10082 = vadd.f32 0.0, %v10081
      %10083 = vmatmul.f32.gmra.mxu0 %v9948
      %v10084 = vpop.f32.mrf.mxu0
      %v10085 = vadd.f32 0.0, %v10084
      %10086 = vmatmul.f32.gmra.mxu0 %v9951
      %v10087 = vpop.f32.mrf.mxu0
      %v10088 = vadd.f32 0.0, %v10087
      %10089 = vmatmul.f32.gmra.mxu0 %v9954
      %v10090 = vpop.f32.mrf.mxu0
      %v10091 = vadd.f32 0.0, %v10090
      %10092 = vmatmul.f32.gmra.mxu0 %v9957
      %v10093 = vpop.f32.mrf.mxu0
      %v10094 = vadd.f32 0.0, %v10093
      %10095 = vmatmul.f32.gmra.mxu0 %v9960
      %v10096 = vpop.f32.mrf.mxu0
      %v10097 = vadd.f32 0.0, %v10096
      %10098 = vmatmul.f32.gmra.mxu0 %v9963
      %v10099 = vpop.f32.mrf.mxu0
      %v10100 = vadd.f32 0.0, %v10099
      %10101 = vmatmul.f32.gmra.mxu0 %v9966
      %v10102 = vpop.f32.mrf.mxu0
      %v10103 = vadd.f32 0.0, %v10102
      %10104 = vmatmul.f32.gmra.mxu0 %v9969
      %v10105 = vpop.f32.mrf.mxu0
      %v10106 = vadd.f32 0.0, %v10105
      %10107 = vmatmul.f32.gmra.mxu0 %v9972
      %v10108 = vpop.f32.mrf.mxu0
      %v10109 = vadd.f32 0.0, %v10108
      %10110 = vmatmul.f32.gmra.mxu0 %v9975
      %v10111 = vpop.f32.mrf.mxu0
      %v10112 = vadd.f32 0.0, %v10111
      %10113 = vmatmul.f32.gmra.mxu0 %v9978
      %v10114 = vpop.f32.mrf.mxu0
      %v10115 = vadd.f32 0.0, %v10114
      %10116 = vmatmul.f32.gmra.mxu0 %v9981
      %v10117 = vpop.f32.mrf.mxu0
      %v10118 = vadd.f32 0.0, %v10117
      %10119 = vmatmul.f32.gmra.mxu0 %v9984
      %v10120 = vpop.f32.mrf.mxu0
      %v10121 = vadd.f32 0.0, %v10120
      %10122 = vmatmul.f32.gmra.mxu0 %v9987
      %v10123 = vpop.f32.mrf.mxu0
      %v10124 = vadd.f32 0.0, %v10123
      %10125 = vmatmul.f32.gmra.mxu0 %v9990
      %v10126 = vpop.f32.mrf.mxu0
      %v10127 = vadd.f32 0.0, %v10126
      %10128 = vmatmul.f32.gmra.mxu0 %v9993
      %v10129 = vpop.f32.mrf.mxu0
      %v10130 = vadd.f32 0.0, %v10129
      %10131 = vmatmul.f32.gmra.mxu0 %v9996
      %v10132 = vpop.f32.mrf.mxu0
      %v10133 = vadd.f32 0.0, %v10132
      %10134 = vdwg.mxu0
      %v10135 = vadd.f32 %v9793, %v10016
      %v10136 = vadd.f32 %v9794, %v10019
      %v10137 = vadd.f32 %v9795, %v10022
      %v10138 = vadd.f32 %v9796, %v10025
      %v10139 = vadd.f32 %v9797, %v10028
      %v10140 = vadd.f32 %v9798, %v10031
      %v10141 = vadd.f32 %v9799, %v10034
      %v10142 = vadd.f32 %v9800, %v10037
      %v10143 = vadd.f32 %v9801, %v10040
      %v10144 = vadd.f32 %v9802, %v10043
      %v10145 = vadd.f32 %v9803, %v10046
      %v10146 = vadd.f32 %v9804, %v10049
      %v10147 = vadd.f32 %v9805, %v10052
      %v10148 = vadd.f32 %v9806, %v10055
      %v10149 = vadd.f32 %v9807, %v10058
      %v10150 = vadd.f32 %v9808, %v10061
      %v10151 = vadd.f32 %v9809, %v10064
      %v10152 = vadd.f32 %v9810, %v10067
      %v10153 = vadd.f32 %v9811, %v10070
      %v10154 = vadd.f32 %v9812, %v10073
      %v10155 = vadd.f32 %v9813, %v10076
      %v10156 = vadd.f32 %v9814, %v10079
      %v10157 = vadd.f32 %v9815, %v10082
      %v10158 = vadd.f32 %v9816, %v10085
      %v10159 = vadd.f32 %v9817, %v10088
      %v10160 = vadd.f32 %v9818, %v10091
      %v10161 = vadd.f32 %v9819, %v10094
      %v10162 = vadd.f32 %v9820, %v10097
      %v10163 = vadd.f32 %v9821, %v10100
      %v10164 = vadd.f32 %v9822, %v10103
      %v10165 = vadd.f32 %v9823, %v10106
      %v10166 = vadd.f32 %v9824, %v10109
      %v10167 = vadd.f32 %v9825, %v10112
      %v10168 = vadd.f32 %v9826, %v10115
      %v10169 = vadd.f32 %v9827, %v10118
      %v10170 = vadd.f32 %v9828, %v10121
      %v10171 = vadd.f32 %v9829, %v10124
      %v10172 = vadd.f32 %v9830, %v10127
      %v10173 = vadd.f32 %v9831, %v10130
      %v10174 = vadd.f32 %v9832, %v10133
      %v10175 = vld [vmem:[#allocation4 + $0x52] sm:$0xff]
      %v10176 = vld [vmem:[#allocation4 + $0x5a] sm:$0xff]
      %v10177 = vld [vmem:[#allocation4 + $0x62] sm:$0xff]
      %v10178 = vld [vmem:[#allocation4 + $0x6a] sm:$0xff]
      %v10179 = vld [vmem:[#allocation4 + $0x72] sm:$0xff]
      %v10180 = vld [vmem:[#allocation4 + $0x7a] sm:$0xff]
      %v10181 = vld [vmem:[#allocation4 + $0x82] sm:$0xff]
      %v10182 = vld [vmem:[#allocation4 + $0x8a] sm:$0xff]
      %v10183 = vld [vmem:[#allocation4 + $0x92] sm:$0xff]
      %v10184 = vld [vmem:[#allocation4 + $0x9a] sm:$0xff]
      %v10185 = vld [vmem:[#allocation4 + $0xa2] sm:$0xff]
      %v10186 = vld [vmem:[#allocation4 + $0xaa] sm:$0xff]
      %v10187 = vld [vmem:[#allocation4 + $0xb2] sm:$0xff]
      %v10188 = vld [vmem:[#allocation4 + $0xba] sm:$0xff]
      %v10189 = vld [vmem:[#allocation4 + $0xc2] sm:$0xff]
      %v10190 = vld [vmem:[#allocation4 + $0xca] sm:$0xff]
      %v10191 = vld [vmem:[#allocation4 + $0xd2] sm:$0xff]
      %v10192 = vld [vmem:[#allocation4 + $0xda] sm:$0xff]
      %v10193 = vld [vmem:[#allocation4 + $0xe2] sm:$0xff]
      %v10194 = vld [vmem:[#allocation4 + $0xea] sm:$0xff]
      %v10195 = vld [vmem:[#allocation4 + $0xf2] sm:$0xff]
      %v10196 = vld [vmem:[#allocation4 + $0xfa] sm:$0xff]
      %v10197 = vld [vmem:[#allocation4 + $0x102] sm:$0xff]
      %v10198 = vld [vmem:[#allocation4 + $0x10a] sm:$0xff]
      %v10199 = vld [vmem:[#allocation4 + $0x112] sm:$0xff]
      %v10200 = vld [vmem:[#allocation4 + $0x11a] sm:$0xff]
      %v10201 = vld [vmem:[#allocation4 + $0x122] sm:$0xff]
      %v10202 = vld [vmem:[#allocation4 + $0x12a] sm:$0xff]
      %v10203 = vld [vmem:[#allocation4 + $0x132] sm:$0xff]
      %v10204 = vld [vmem:[#allocation4 + $0x13a] sm:$0xff]
      %v10205 = vld [vmem:[#allocation4 + $0x142] sm:$0xff]
      %v10206 = vld [vmem:[#allocation4 + $0x14a] sm:$0xff]
      %v10207 = vld [vmem:[#allocation4 + $0x152] sm:$0xff]
      %v10208 = vld [vmem:[#allocation4 + $0x15a] sm:$0xff]
      %v10209 = vld [vmem:[#allocation4 + $0x162] sm:$0xff]
      %v10210 = vld [vmem:[#allocation4 + $0x16a] sm:$0xff]
      %v10211 = vld [vmem:[#allocation4 + $0x172] sm:$0xff]
      %v10212 = vld [vmem:[#allocation4 + $0x17a] sm:$0xff]
      %v10213 = vld [vmem:[#allocation4 + $0x182] sm:$0xff]
      %v10214 = vld [vmem:[#allocation4 + $0x18a] sm:$0xff]
      %s10215 = scalar_lea.vmem %s7, 704
      %v10216 = vld [vmem:[%s10215] sm:$0xff]
      %v10217 = vld [vmem:[%s10215 + $0x8] sm:$0xff]
      %v10218 = vld [vmem:[%s10215 + $0x10] sm:$0xff]
      %v10219 = vld [vmem:[%s10215 + $0x18] sm:$0xff]
      %v10221 = vsel %vm409, %v10175, 0
      %v10224 = vsel %vm409, %v10176, 0
      %v10227 = vsel %vm409, %v10177, 0
      %v10230 = vsel %vm409, %v10178, 0
      %v10233 = vsel %vm409, %v10179, 0
      %v10236 = vsel %vm409, %v10180, 0
      %v10239 = vsel %vm409, %v10181, 0
      %v10242 = vsel %vm409, %v10182, 0
      %v10245 = vsel %vm409, %v10183, 0
      %v10248 = vsel %vm409, %v10184, 0
      %v10251 = vsel %vm409, %v10185, 0
      %v10254 = vsel %vm409, %v10186, 0
      %v10257 = vsel %vm409, %v10187, 0
      %v10260 = vsel %vm409, %v10188, 0
      %v10263 = vsel %vm409, %v10189, 0
      %v10266 = vsel %vm409, %v10190, 0
      %v10269 = vsel %vm409, %v10191, 0
      %v10272 = vsel %vm409, %v10192, 0
      %v10275 = vsel %vm409, %v10193, 0
      %v10278 = vsel %vm409, %v10194, 0
      %v10281 = vsel %vm409, %v10195, 0
      %v10284 = vsel %vm409, %v10196, 0
      %v10287 = vsel %vm409, %v10197, 0
      %v10290 = vsel %vm409, %v10198, 0
      %v10293 = vsel %vm409, %v10199, 0
      %v10296 = vsel %vm409, %v10200, 0
      %v10299 = vsel %vm409, %v10201, 0
      %v10302 = vsel %vm409, %v10202, 0
      %v10305 = vsel %vm409, %v10203, 0
      %v10308 = vsel %vm409, %v10204, 0
      %v10311 = vsel %vm409, %v10205, 0
      %v10314 = vsel %vm409, %v10206, 0
      %v10317 = vsel %vm409, %v10207, 0
      %v10320 = vsel %vm409, %v10208, 0
      %v10323 = vsel %vm409, %v10209, 0
      %v10326 = vsel %vm409, %v10210, 0
      %v10329 = vsel %vm409, %v10211, 0
      %v10332 = vsel %vm409, %v10212, 0
      %v10335 = vsel %vm409, %v10213, 0
      %v10338 = vsel %vm409, %v10214, 0
      %10340 = vmatpush.msra.mxu0 0.0
      %10341 = vmatpush.msra.mxu0 0.0
      %10342 = vmatpush.msra.mxu0 0.0
      %10343 = vmatpush.msra.mxu0 0.0
      %10344 = vmatpush.msra.mxu0 0.0
      %10345 = vmatpush.msra.mxu0 0.0
      %10346 = vmatpush.msra.mxu0 0.0
      %10347 = vmatpush.msra.mxu0 0.0
      %10348 = vmatpush.msra.mxu0 0.0
      %10349 = vmatpush.msra.mxu0 0.0
      %10350 = vmatpush.msra.mxu0 0.0
      %10351 = vmatpush.msra.mxu0 0.0
      %10352 = vmatpush.msra.mxu0 %v10219
      %10353 = vmatpush.msra.mxu0 %v10218
      %10354 = vmatpush.msra.mxu0 %v10217
      %10355 = vmatpush.msra.mxu0 %v10216
      %10356 = vmatmul.f32.gmra.mxu0 %v10221
      %v10357 = vpop.f32.mrf.mxu0
      %v10358 = vadd.f32 0.0, %v10357
      %10359 = vmatmul.f32.gmra.mxu0 %v10224
      %v10360 = vpop.f32.mrf.mxu0
      %v10361 = vadd.f32 0.0, %v10360
      %10362 = vmatmul.f32.gmra.mxu0 %v10227
      %v10363 = vpop.f32.mrf.mxu0
      %v10364 = vadd.f32 0.0, %v10363
      %10365 = vmatmul.f32.gmra.mxu0 %v10230
      %v10366 = vpop.f32.mrf.mxu0
      %v10367 = vadd.f32 0.0, %v10366
      %10368 = vmatmul.f32.gmra.mxu0 %v10233
      %v10369 = vpop.f32.mrf.mxu0
      %v10370 = vadd.f32 0.0, %v10369
      %10371 = vmatmul.f32.gmra.mxu0 %v10236
      %v10372 = vpop.f32.mrf.mxu0
      %v10373 = vadd.f32 0.0, %v10372
      %10374 = vmatmul.f32.gmra.mxu0 %v10239
      %v10375 = vpop.f32.mrf.mxu0
      %v10376 = vadd.f32 0.0, %v10375
      %10377 = vmatmul.f32.gmra.mxu0 %v10242
      %v10378 = vpop.f32.mrf.mxu0
      %v10379 = vadd.f32 0.0, %v10378
      %10380 = vmatmul.f32.gmra.mxu0 %v10245
      %v10381 = vpop.f32.mrf.mxu0
      %v10382 = vadd.f32 0.0, %v10381
      %10383 = vmatmul.f32.gmra.mxu0 %v10248
      %v10384 = vpop.f32.mrf.mxu0
      %v10385 = vadd.f32 0.0, %v10384
      %10386 = vmatmul.f32.gmra.mxu0 %v10251
      %v10387 = vpop.f32.mrf.mxu0
      %v10388 = vadd.f32 0.0, %v10387
      %10389 = vmatmul.f32.gmra.mxu0 %v10254
      %v10390 = vpop.f32.mrf.mxu0
      %v10391 = vadd.f32 0.0, %v10390
      %10392 = vmatmul.f32.gmra.mxu0 %v10257
      %v10393 = vpop.f32.mrf.mxu0
      %v10394 = vadd.f32 0.0, %v10393
      %10395 = vmatmul.f32.gmra.mxu0 %v10260
      %v10396 = vpop.f32.mrf.mxu0
      %v10397 = vadd.f32 0.0, %v10396
      %10398 = vmatmul.f32.gmra.mxu0 %v10263
      %v10399 = vpop.f32.mrf.mxu0
      %v10400 = vadd.f32 0.0, %v10399
      %10401 = vmatmul.f32.gmra.mxu0 %v10266
      %v10402 = vpop.f32.mrf.mxu0
      %v10403 = vadd.f32 0.0, %v10402
      %10404 = vmatmul.f32.gmra.mxu0 %v10269
      %v10405 = vpop.f32.mrf.mxu0
      %v10406 = vadd.f32 0.0, %v10405
      %10407 = vmatmul.f32.gmra.mxu0 %v10272
      %v10408 = vpop.f32.mrf.mxu0
      %v10409 = vadd.f32 0.0, %v10408
      %10410 = vmatmul.f32.gmra.mxu0 %v10275
      %v10411 = vpop.f32.mrf.mxu0
      %v10412 = vadd.f32 0.0, %v10411
      %10413 = vmatmul.f32.gmra.mxu0 %v10278
      %v10414 = vpop.f32.mrf.mxu0
      %v10415 = vadd.f32 0.0, %v10414
      %10416 = vmatmul.f32.gmra.mxu0 %v10281
      %v10417 = vpop.f32.mrf.mxu0
      %v10418 = vadd.f32 0.0, %v10417
      %10419 = vmatmul.f32.gmra.mxu0 %v10284
      %v10420 = vpop.f32.mrf.mxu0
      %v10421 = vadd.f32 0.0, %v10420
      %10422 = vmatmul.f32.gmra.mxu0 %v10287
      %v10423 = vpop.f32.mrf.mxu0
      %v10424 = vadd.f32 0.0, %v10423
      %10425 = vmatmul.f32.gmra.mxu0 %v10290
      %v10426 = vpop.f32.mrf.mxu0
      %v10427 = vadd.f32 0.0, %v10426
      %10428 = vmatmul.f32.gmra.mxu0 %v10293
      %v10429 = vpop.f32.mrf.mxu0
      %v10430 = vadd.f32 0.0, %v10429
      %10431 = vmatmul.f32.gmra.mxu0 %v10296
      %v10432 = vpop.f32.mrf.mxu0
      %v10433 = vadd.f32 0.0, %v10432
      %10434 = vmatmul.f32.gmra.mxu0 %v10299
      %v10435 = vpop.f32.mrf.mxu0
      %v10436 = vadd.f32 0.0, %v10435
      %10437 = vmatmul.f32.gmra.mxu0 %v10302
      %v10438 = vpop.f32.mrf.mxu0
      %v10439 = vadd.f32 0.0, %v10438
      %10440 = vmatmul.f32.gmra.mxu0 %v10305
      %v10441 = vpop.f32.mrf.mxu0
      %v10442 = vadd.f32 0.0, %v10441
      %10443 = vmatmul.f32.gmra.mxu0 %v10308
      %v10444 = vpop.f32.mrf.mxu0
      %v10445 = vadd.f32 0.0, %v10444
      %10446 = vmatmul.f32.gmra.mxu0 %v10311
      %v10447 = vpop.f32.mrf.mxu0
      %v10448 = vadd.f32 0.0, %v10447
      %10449 = vmatmul.f32.gmra.mxu0 %v10314
      %v10450 = vpop.f32.mrf.mxu0
      %v10451 = vadd.f32 0.0, %v10450
      %10452 = vmatmul.f32.gmra.mxu0 %v10317
      %v10453 = vpop.f32.mrf.mxu0
      %v10454 = vadd.f32 0.0, %v10453
      %10455 = vmatmul.f32.gmra.mxu0 %v10320
      %v10456 = vpop.f32.mrf.mxu0
      %v10457 = vadd.f32 0.0, %v10456
      %10458 = vmatmul.f32.gmra.mxu0 %v10323
      %v10459 = vpop.f32.mrf.mxu0
      %v10460 = vadd.f32 0.0, %v10459
      %10461 = vmatmul.f32.gmra.mxu0 %v10326
      %v10462 = vpop.f32.mrf.mxu0
      %v10463 = vadd.f32 0.0, %v10462
      %10464 = vmatmul.f32.gmra.mxu0 %v10329
      %v10465 = vpop.f32.mrf.mxu0
      %v10466 = vadd.f32 0.0, %v10465
      %10467 = vmatmul.f32.gmra.mxu0 %v10332
      %v10468 = vpop.f32.mrf.mxu0
      %v10469 = vadd.f32 0.0, %v10468
      %10470 = vmatmul.f32.gmra.mxu0 %v10335
      %v10471 = vpop.f32.mrf.mxu0
      %v10472 = vadd.f32 0.0, %v10471
      %10473 = vmatmul.f32.gmra.mxu0 %v10338
      %v10474 = vpop.f32.mrf.mxu0
      %v10475 = vadd.f32 0.0, %v10474
      %10476 = vdwg.mxu0
      %v10477 = vadd.f32 %v10135, %v10358
      %v10478 = vadd.f32 %v10136, %v10361
      %v10479 = vadd.f32 %v10137, %v10364
      %v10480 = vadd.f32 %v10138, %v10367
      %v10481 = vadd.f32 %v10139, %v10370
      %v10482 = vadd.f32 %v10140, %v10373
      %v10483 = vadd.f32 %v10141, %v10376
      %v10484 = vadd.f32 %v10142, %v10379
      %v10485 = vadd.f32 %v10143, %v10382
      %v10486 = vadd.f32 %v10144, %v10385
      %v10487 = vadd.f32 %v10145, %v10388
      %v10488 = vadd.f32 %v10146, %v10391
      %v10489 = vadd.f32 %v10147, %v10394
      %v10490 = vadd.f32 %v10148, %v10397
      %v10491 = vadd.f32 %v10149, %v10400
      %v10492 = vadd.f32 %v10150, %v10403
      %v10493 = vadd.f32 %v10151, %v10406
      %v10494 = vadd.f32 %v10152, %v10409
      %v10495 = vadd.f32 %v10153, %v10412
      %v10496 = vadd.f32 %v10154, %v10415
      %v10497 = vadd.f32 %v10155, %v10418
      %v10498 = vadd.f32 %v10156, %v10421
      %v10499 = vadd.f32 %v10157, %v10424
      %v10500 = vadd.f32 %v10158, %v10427
      %v10501 = vadd.f32 %v10159, %v10430
      %v10502 = vadd.f32 %v10160, %v10433
      %v10503 = vadd.f32 %v10161, %v10436
      %v10504 = vadd.f32 %v10162, %v10439
      %v10505 = vadd.f32 %v10163, %v10442
      %v10506 = vadd.f32 %v10164, %v10445
      %v10507 = vadd.f32 %v10165, %v10448
      %v10508 = vadd.f32 %v10166, %v10451
      %v10509 = vadd.f32 %v10167, %v10454
      %v10510 = vadd.f32 %v10168, %v10457
      %v10511 = vadd.f32 %v10169, %v10460
      %v10512 = vadd.f32 %v10170, %v10463
      %v10513 = vadd.f32 %v10171, %v10466
      %v10514 = vadd.f32 %v10172, %v10469
      %v10515 = vadd.f32 %v10173, %v10472
      %v10516 = vadd.f32 %v10174, %v10475
      %v10517 = vld [vmem:[#allocation4 + $0x53] sm:$0xff]
      %v10518 = vld [vmem:[#allocation4 + $0x5b] sm:$0xff]
      %v10519 = vld [vmem:[#allocation4 + $0x63] sm:$0xff]
      %v10520 = vld [vmem:[#allocation4 + $0x6b] sm:$0xff]
      %v10521 = vld [vmem:[#allocation4 + $0x73] sm:$0xff]
      %v10522 = vld [vmem:[#allocation4 + $0x7b] sm:$0xff]
      %v10523 = vld [vmem:[#allocation4 + $0x83] sm:$0xff]
      %v10524 = vld [vmem:[#allocation4 + $0x8b] sm:$0xff]
      %v10525 = vld [vmem:[#allocation4 + $0x93] sm:$0xff]
      %v10526 = vld [vmem:[#allocation4 + $0x9b] sm:$0xff]
      %v10527 = vld [vmem:[#allocation4 + $0xa3] sm:$0xff]
      %v10528 = vld [vmem:[#allocation4 + $0xab] sm:$0xff]
      %v10529 = vld [vmem:[#allocation4 + $0xb3] sm:$0xff]
      %v10530 = vld [vmem:[#allocation4 + $0xbb] sm:$0xff]
      %v10531 = vld [vmem:[#allocation4 + $0xc3] sm:$0xff]
      %v10532 = vld [vmem:[#allocation4 + $0xcb] sm:$0xff]
      %v10533 = vld [vmem:[#allocation4 + $0xd3] sm:$0xff]
      %v10534 = vld [vmem:[#allocation4 + $0xdb] sm:$0xff]
      %v10535 = vld [vmem:[#allocation4 + $0xe3] sm:$0xff]
      %v10536 = vld [vmem:[#allocation4 + $0xeb] sm:$0xff]
      %v10537 = vld [vmem:[#allocation4 + $0xf3] sm:$0xff]
      %v10538 = vld [vmem:[#allocation4 + $0xfb] sm:$0xff]
      %v10539 = vld [vmem:[#allocation4 + $0x103] sm:$0xff]
      %v10540 = vld [vmem:[#allocation4 + $0x10b] sm:$0xff]
      %v10541 = vld [vmem:[#allocation4 + $0x113] sm:$0xff]
      %v10542 = vld [vmem:[#allocation4 + $0x11b] sm:$0xff]
      %v10543 = vld [vmem:[#allocation4 + $0x123] sm:$0xff]
      %v10544 = vld [vmem:[#allocation4 + $0x12b] sm:$0xff]
      %v10545 = vld [vmem:[#allocation4 + $0x133] sm:$0xff]
      %v10546 = vld [vmem:[#allocation4 + $0x13b] sm:$0xff]
      %v10547 = vld [vmem:[#allocation4 + $0x143] sm:$0xff]
      %v10548 = vld [vmem:[#allocation4 + $0x14b] sm:$0xff]
      %v10549 = vld [vmem:[#allocation4 + $0x153] sm:$0xff]
      %v10550 = vld [vmem:[#allocation4 + $0x15b] sm:$0xff]
      %v10551 = vld [vmem:[#allocation4 + $0x163] sm:$0xff]
      %v10552 = vld [vmem:[#allocation4 + $0x16b] sm:$0xff]
      %v10553 = vld [vmem:[#allocation4 + $0x173] sm:$0xff]
      %v10554 = vld [vmem:[#allocation4 + $0x17b] sm:$0xff]
      %v10555 = vld [vmem:[#allocation4 + $0x183] sm:$0xff]
      %v10556 = vld [vmem:[#allocation4 + $0x18b] sm:$0xff]
      %s10557 = scalar_lea.vmem %s7, 736
      %v10558 = vld [vmem:[%s10557] sm:$0xff]
      %v10559 = vld [vmem:[%s10557 + $0x8] sm:$0xff]
      %v10560 = vld [vmem:[%s10557 + $0x10] sm:$0xff]
      %v10561 = vld [vmem:[%s10557 + $0x18] sm:$0xff]
      %v10563 = vsel %vm409, %v10517, 0
      %v10566 = vsel %vm409, %v10518, 0
      %v10569 = vsel %vm409, %v10519, 0
      %v10572 = vsel %vm409, %v10520, 0
      %v10575 = vsel %vm409, %v10521, 0
      %v10578 = vsel %vm409, %v10522, 0
      %v10581 = vsel %vm409, %v10523, 0
      %v10584 = vsel %vm409, %v10524, 0
      %v10587 = vsel %vm409, %v10525, 0
      %v10590 = vsel %vm409, %v10526, 0
      %v10593 = vsel %vm409, %v10527, 0
      %v10596 = vsel %vm409, %v10528, 0
      %v10599 = vsel %vm409, %v10529, 0
      %v10602 = vsel %vm409, %v10530, 0
      %v10605 = vsel %vm409, %v10531, 0
      %v10608 = vsel %vm409, %v10532, 0
      %v10611 = vsel %vm409, %v10533, 0
      %v10614 = vsel %vm409, %v10534, 0
      %v10617 = vsel %vm409, %v10535, 0
      %v10620 = vsel %vm409, %v10536, 0
      %v10623 = vsel %vm409, %v10537, 0
      %v10626 = vsel %vm409, %v10538, 0
      %v10629 = vsel %vm409, %v10539, 0
      %v10632 = vsel %vm409, %v10540, 0
      %v10635 = vsel %vm409, %v10541, 0
      %v10638 = vsel %vm409, %v10542, 0
      %v10641 = vsel %vm409, %v10543, 0
      %v10644 = vsel %vm409, %v10544, 0
      %v10647 = vsel %vm409, %v10545, 0
      %v10650 = vsel %vm409, %v10546, 0
      %v10653 = vsel %vm409, %v10547, 0
      %v10656 = vsel %vm409, %v10548, 0
      %v10659 = vsel %vm409, %v10549, 0
      %v10662 = vsel %vm409, %v10550, 0
      %v10665 = vsel %vm409, %v10551, 0
      %v10668 = vsel %vm409, %v10552, 0
      %v10671 = vsel %vm409, %v10553, 0
      %v10674 = vsel %vm409, %v10554, 0
      %v10677 = vsel %vm409, %v10555, 0
      %v10680 = vsel %vm409, %v10556, 0
      %10682 = vmatpush.msra.mxu0 0.0
      %10683 = vmatpush.msra.mxu0 0.0
      %10684 = vmatpush.msra.mxu0 0.0
      %10685 = vmatpush.msra.mxu0 0.0
      %10686 = vmatpush.msra.mxu0 0.0
      %10687 = vmatpush.msra.mxu0 0.0
      %10688 = vmatpush.msra.mxu0 0.0
      %10689 = vmatpush.msra.mxu0 0.0
      %10690 = vmatpush.msra.mxu0 0.0
      %10691 = vmatpush.msra.mxu0 0.0
      %10692 = vmatpush.msra.mxu0 0.0
      %10693 = vmatpush.msra.mxu0 0.0
      %10694 = vmatpush.msra.mxu0 %v10561
      %10695 = vmatpush.msra.mxu0 %v10560
      %10696 = vmatpush.msra.mxu0 %v10559
      %10697 = vmatpush.msra.mxu0 %v10558
      %10698 = vmatmul.f32.gmra.mxu0 %v10563
      %v10699 = vpop.f32.mrf.mxu0
      %v10700 = vadd.f32 0.0, %v10699
      %10701 = vmatmul.f32.gmra.mxu0 %v10566
      %v10702 = vpop.f32.mrf.mxu0
      %v10703 = vadd.f32 0.0, %v10702
      %10704 = vmatmul.f32.gmra.mxu0 %v10569
      %v10705 = vpop.f32.mrf.mxu0
      %v10706 = vadd.f32 0.0, %v10705
      %10707 = vmatmul.f32.gmra.mxu0 %v10572
      %v10708 = vpop.f32.mrf.mxu0
      %v10709 = vadd.f32 0.0, %v10708
      %10710 = vmatmul.f32.gmra.mxu0 %v10575
      %v10711 = vpop.f32.mrf.mxu0
      %v10712 = vadd.f32 0.0, %v10711
      %10713 = vmatmul.f32.gmra.mxu0 %v10578
      %v10714 = vpop.f32.mrf.mxu0
      %v10715 = vadd.f32 0.0, %v10714
      %10716 = vmatmul.f32.gmra.mxu0 %v10581
      %v10717 = vpop.f32.mrf.mxu0
      %v10718 = vadd.f32 0.0, %v10717
      %10719 = vmatmul.f32.gmra.mxu0 %v10584
      %v10720 = vpop.f32.mrf.mxu0
      %v10721 = vadd.f32 0.0, %v10720
      %10722 = vmatmul.f32.gmra.mxu0 %v10587
      %v10723 = vpop.f32.mrf.mxu0
      %v10724 = vadd.f32 0.0, %v10723
      %10725 = vmatmul.f32.gmra.mxu0 %v10590
      %v10726 = vpop.f32.mrf.mxu0
      %v10727 = vadd.f32 0.0, %v10726
      %10728 = vmatmul.f32.gmra.mxu0 %v10593
      %v10729 = vpop.f32.mrf.mxu0
      %v10730 = vadd.f32 0.0, %v10729
      %10731 = vmatmul.f32.gmra.mxu0 %v10596
      %v10732 = vpop.f32.mrf.mxu0
      %v10733 = vadd.f32 0.0, %v10732
      %10734 = vmatmul.f32.gmra.mxu0 %v10599
      %v10735 = vpop.f32.mrf.mxu0
      %v10736 = vadd.f32 0.0, %v10735
      %10737 = vmatmul.f32.gmra.mxu0 %v10602
      %v10738 = vpop.f32.mrf.mxu0
      %v10739 = vadd.f32 0.0, %v10738
      %10740 = vmatmul.f32.gmra.mxu0 %v10605
      %v10741 = vpop.f32.mrf.mxu0
      %v10742 = vadd.f32 0.0, %v10741
      %10743 = vmatmul.f32.gmra.mxu0 %v10608
      %v10744 = vpop.f32.mrf.mxu0
      %v10745 = vadd.f32 0.0, %v10744
      %10746 = vmatmul.f32.gmra.mxu0 %v10611
      %v10747 = vpop.f32.mrf.mxu0
      %v10748 = vadd.f32 0.0, %v10747
      %10749 = vmatmul.f32.gmra.mxu0 %v10614
      %v10750 = vpop.f32.mrf.mxu0
      %v10751 = vadd.f32 0.0, %v10750
      %10752 = vmatmul.f32.gmra.mxu0 %v10617
      %v10753 = vpop.f32.mrf.mxu0
      %v10754 = vadd.f32 0.0, %v10753
      %10755 = vmatmul.f32.gmra.mxu0 %v10620
      %v10756 = vpop.f32.mrf.mxu0
      %v10757 = vadd.f32 0.0, %v10756
      %10758 = vmatmul.f32.gmra.mxu0 %v10623
      %v10759 = vpop.f32.mrf.mxu0
      %v10760 = vadd.f32 0.0, %v10759
      %10761 = vmatmul.f32.gmra.mxu0 %v10626
      %v10762 = vpop.f32.mrf.mxu0
      %v10763 = vadd.f32 0.0, %v10762
      %10764 = vmatmul.f32.gmra.mxu0 %v10629
      %v10765 = vpop.f32.mrf.mxu0
      %v10766 = vadd.f32 0.0, %v10765
      %10767 = vmatmul.f32.gmra.mxu0 %v10632
      %v10768 = vpop.f32.mrf.mxu0
      %v10769 = vadd.f32 0.0, %v10768
      %10770 = vmatmul.f32.gmra.mxu0 %v10635
      %v10771 = vpop.f32.mrf.mxu0
      %v10772 = vadd.f32 0.0, %v10771
      %10773 = vmatmul.f32.gmra.mxu0 %v10638
      %v10774 = vpop.f32.mrf.mxu0
      %v10775 = vadd.f32 0.0, %v10774
      %10776 = vmatmul.f32.gmra.mxu0 %v10641
      %v10777 = vpop.f32.mrf.mxu0
      %v10778 = vadd.f32 0.0, %v10777
      %10779 = vmatmul.f32.gmra.mxu0 %v10644
      %v10780 = vpop.f32.mrf.mxu0
      %v10781 = vadd.f32 0.0, %v10780
      %10782 = vmatmul.f32.gmra.mxu0 %v10647
      %v10783 = vpop.f32.mrf.mxu0
      %v10784 = vadd.f32 0.0, %v10783
      %10785 = vmatmul.f32.gmra.mxu0 %v10650
      %v10786 = vpop.f32.mrf.mxu0
      %v10787 = vadd.f32 0.0, %v10786
      %10788 = vmatmul.f32.gmra.mxu0 %v10653
      %v10789 = vpop.f32.mrf.mxu0
      %v10790 = vadd.f32 0.0, %v10789
      %10791 = vmatmul.f32.gmra.mxu0 %v10656
      %v10792 = vpop.f32.mrf.mxu0
      %v10793 = vadd.f32 0.0, %v10792
      %10794 = vmatmul.f32.gmra.mxu0 %v10659
      %v10795 = vpop.f32.mrf.mxu0
      %v10796 = vadd.f32 0.0, %v10795
      %10797 = vmatmul.f32.gmra.mxu0 %v10662
      %v10798 = vpop.f32.mrf.mxu0
      %v10799 = vadd.f32 0.0, %v10798
      %10800 = vmatmul.f32.gmra.mxu0 %v10665
      %v10801 = vpop.f32.mrf.mxu0
      %v10802 = vadd.f32 0.0, %v10801
      %10803 = vmatmul.f32.gmra.mxu0 %v10668
      %v10804 = vpop.f32.mrf.mxu0
      %v10805 = vadd.f32 0.0, %v10804
      %10806 = vmatmul.f32.gmra.mxu0 %v10671
      %v10807 = vpop.f32.mrf.mxu0
      %v10808 = vadd.f32 0.0, %v10807
      %10809 = vmatmul.f32.gmra.mxu0 %v10674
      %v10810 = vpop.f32.mrf.mxu0
      %v10811 = vadd.f32 0.0, %v10810
      %10812 = vmatmul.f32.gmra.mxu0 %v10677
      %v10813 = vpop.f32.mrf.mxu0
      %v10814 = vadd.f32 0.0, %v10813
      %10815 = vmatmul.f32.gmra.mxu0 %v10680
      %v10816 = vpop.f32.mrf.mxu0
      %v10817 = vadd.f32 0.0, %v10816
      %10818 = vdwg.mxu0
      %v10819 = vadd.f32 %v10477, %v10700
      %v10820 = vadd.f32 %v10478, %v10703
      %v10821 = vadd.f32 %v10479, %v10706
      %v10822 = vadd.f32 %v10480, %v10709
      %v10823 = vadd.f32 %v10481, %v10712
      %v10824 = vadd.f32 %v10482, %v10715
      %v10825 = vadd.f32 %v10483, %v10718
      %v10826 = vadd.f32 %v10484, %v10721
      %v10827 = vadd.f32 %v10485, %v10724
      %v10828 = vadd.f32 %v10486, %v10727
      %v10829 = vadd.f32 %v10487, %v10730
      %v10830 = vadd.f32 %v10488, %v10733
      %v10831 = vadd.f32 %v10489, %v10736
      %v10832 = vadd.f32 %v10490, %v10739
      %v10833 = vadd.f32 %v10491, %v10742
      %v10834 = vadd.f32 %v10492, %v10745
      %v10835 = vadd.f32 %v10493, %v10748
      %v10836 = vadd.f32 %v10494, %v10751
      %v10837 = vadd.f32 %v10495, %v10754
      %v10838 = vadd.f32 %v10496, %v10757
      %v10839 = vadd.f32 %v10497, %v10760
      %v10840 = vadd.f32 %v10498, %v10763
      %v10841 = vadd.f32 %v10499, %v10766
      %v10842 = vadd.f32 %v10500, %v10769
      %v10843 = vadd.f32 %v10501, %v10772
      %v10844 = vadd.f32 %v10502, %v10775
      %v10845 = vadd.f32 %v10503, %v10778
      %v10846 = vadd.f32 %v10504, %v10781
      %v10847 = vadd.f32 %v10505, %v10784
      %v10848 = vadd.f32 %v10506, %v10787
      %v10849 = vadd.f32 %v10507, %v10790
      %v10850 = vadd.f32 %v10508, %v10793
      %v10851 = vadd.f32 %v10509, %v10796
      %v10852 = vadd.f32 %v10510, %v10799
      %v10853 = vadd.f32 %v10511, %v10802
      %v10854 = vadd.f32 %v10512, %v10805
      %v10855 = vadd.f32 %v10513, %v10808
      %v10856 = vadd.f32 %v10514, %v10811
      %v10857 = vadd.f32 %v10515, %v10814
      %v10858 = vadd.f32 %v10516, %v10817
      %v10859 = vld [vmem:[#allocation4 + $0x54] sm:$0xff]
      %v10860 = vld [vmem:[#allocation4 + $0x5c] sm:$0xff]
      %v10861 = vld [vmem:[#allocation4 + $0x64] sm:$0xff]
      %v10862 = vld [vmem:[#allocation4 + $0x6c] sm:$0xff]
      %v10863 = vld [vmem:[#allocation4 + $0x74] sm:$0xff]
      %v10864 = vld [vmem:[#allocation4 + $0x7c] sm:$0xff]
      %v10865 = vld [vmem:[#allocation4 + $0x84] sm:$0xff]
      %v10866 = vld [vmem:[#allocation4 + $0x8c] sm:$0xff]
      %v10867 = vld [vmem:[#allocation4 + $0x94] sm:$0xff]
      %v10868 = vld [vmem:[#allocation4 + $0x9c] sm:$0xff]
      %v10869 = vld [vmem:[#allocation4 + $0xa4] sm:$0xff]
      %v10870 = vld [vmem:[#allocation4 + $0xac] sm:$0xff]
      %v10871 = vld [vmem:[#allocation4 + $0xb4] sm:$0xff]
      %v10872 = vld [vmem:[#allocation4 + $0xbc] sm:$0xff]
      %v10873 = vld [vmem:[#allocation4 + $0xc4] sm:$0xff]
      %v10874 = vld [vmem:[#allocation4 + $0xcc] sm:$0xff]
      %v10875 = vld [vmem:[#allocation4 + $0xd4] sm:$0xff]
      %v10876 = vld [vmem:[#allocation4 + $0xdc] sm:$0xff]
      %v10877 = vld [vmem:[#allocation4 + $0xe4] sm:$0xff]
      %v10878 = vld [vmem:[#allocation4 + $0xec] sm:$0xff]
      %v10879 = vld [vmem:[#allocation4 + $0xf4] sm:$0xff]
      %v10880 = vld [vmem:[#allocation4 + $0xfc] sm:$0xff]
      %v10881 = vld [vmem:[#allocation4 + $0x104] sm:$0xff]
      %v10882 = vld [vmem:[#allocation4 + $0x10c] sm:$0xff]
      %v10883 = vld [vmem:[#allocation4 + $0x114] sm:$0xff]
      %v10884 = vld [vmem:[#allocation4 + $0x11c] sm:$0xff]
      %v10885 = vld [vmem:[#allocation4 + $0x124] sm:$0xff]
      %v10886 = vld [vmem:[#allocation4 + $0x12c] sm:$0xff]
      %v10887 = vld [vmem:[#allocation4 + $0x134] sm:$0xff]
      %v10888 = vld [vmem:[#allocation4 + $0x13c] sm:$0xff]
      %v10889 = vld [vmem:[#allocation4 + $0x144] sm:$0xff]
      %v10890 = vld [vmem:[#allocation4 + $0x14c] sm:$0xff]
      %v10891 = vld [vmem:[#allocation4 + $0x154] sm:$0xff]
      %v10892 = vld [vmem:[#allocation4 + $0x15c] sm:$0xff]
      %v10893 = vld [vmem:[#allocation4 + $0x164] sm:$0xff]
      %v10894 = vld [vmem:[#allocation4 + $0x16c] sm:$0xff]
      %v10895 = vld [vmem:[#allocation4 + $0x174] sm:$0xff]
      %v10896 = vld [vmem:[#allocation4 + $0x17c] sm:$0xff]
      %v10897 = vld [vmem:[#allocation4 + $0x184] sm:$0xff]
      %v10898 = vld [vmem:[#allocation4 + $0x18c] sm:$0xff]
      %s10899 = scalar_lea.vmem %s7, 768
      %v10900 = vld [vmem:[%s10899] sm:$0xff]
      %v10901 = vld [vmem:[%s10899 + $0x8] sm:$0xff]
      %v10902 = vld [vmem:[%s10899 + $0x10] sm:$0xff]
      %v10903 = vld [vmem:[%s10899 + $0x18] sm:$0xff]
      %v10905 = vsel %vm409, %v10859, 0
      %v10908 = vsel %vm409, %v10860, 0
      %v10911 = vsel %vm409, %v10861, 0
      %v10914 = vsel %vm409, %v10862, 0
      %v10917 = vsel %vm409, %v10863, 0
      %v10920 = vsel %vm409, %v10864, 0
      %v10923 = vsel %vm409, %v10865, 0
      %v10926 = vsel %vm409, %v10866, 0
      %v10929 = vsel %vm409, %v10867, 0
      %v10932 = vsel %vm409, %v10868, 0
      %v10935 = vsel %vm409, %v10869, 0
      %v10938 = vsel %vm409, %v10870, 0
      %v10941 = vsel %vm409, %v10871, 0
      %v10944 = vsel %vm409, %v10872, 0
      %v10947 = vsel %vm409, %v10873, 0
      %v10950 = vsel %vm409, %v10874, 0
      %v10953 = vsel %vm409, %v10875, 0
      %v10956 = vsel %vm409, %v10876, 0
      %v10959 = vsel %vm409, %v10877, 0
      %v10962 = vsel %vm409, %v10878, 0
      %v10965 = vsel %vm409, %v10879, 0
      %v10968 = vsel %vm409, %v10880, 0
      %v10971 = vsel %vm409, %v10881, 0
      %v10974 = vsel %vm409, %v10882, 0
      %v10977 = vsel %vm409, %v10883, 0
      %v10980 = vsel %vm409, %v10884, 0
      %v10983 = vsel %vm409, %v10885, 0
      %v10986 = vsel %vm409, %v10886, 0
      %v10989 = vsel %vm409, %v10887, 0
      %v10992 = vsel %vm409, %v10888, 0
      %v10995 = vsel %vm409, %v10889, 0
      %v10998 = vsel %vm409, %v10890, 0
      %v11001 = vsel %vm409, %v10891, 0
      %v11004 = vsel %vm409, %v10892, 0
      %v11007 = vsel %vm409, %v10893, 0
      %v11010 = vsel %vm409, %v10894, 0
      %v11013 = vsel %vm409, %v10895, 0
      %v11016 = vsel %vm409, %v10896, 0
      %v11019 = vsel %vm409, %v10897, 0
      %v11022 = vsel %vm409, %v10898, 0
      %11024 = vmatpush.msra.mxu0 0.0
      %11025 = vmatpush.msra.mxu0 0.0
      %11026 = vmatpush.msra.mxu0 0.0
      %11027 = vmatpush.msra.mxu0 0.0
      %11028 = vmatpush.msra.mxu0 0.0
      %11029 = vmatpush.msra.mxu0 0.0
      %11030 = vmatpush.msra.mxu0 0.0
      %11031 = vmatpush.msra.mxu0 0.0
      %11032 = vmatpush.msra.mxu0 0.0
      %11033 = vmatpush.msra.mxu0 0.0
      %11034 = vmatpush.msra.mxu0 0.0
      %11035 = vmatpush.msra.mxu0 0.0
      %11036 = vmatpush.msra.mxu0 %v10903
      %11037 = vmatpush.msra.mxu0 %v10902
      %11038 = vmatpush.msra.mxu0 %v10901
      %11039 = vmatpush.msra.mxu0 %v10900
      %11040 = vmatmul.f32.gmra.mxu0 %v10905
      %v11041 = vpop.f32.mrf.mxu0
      %v11042 = vadd.f32 0.0, %v11041
      %11043 = vmatmul.f32.gmra.mxu0 %v10908
      %v11044 = vpop.f32.mrf.mxu0
      %v11045 = vadd.f32 0.0, %v11044
      %11046 = vmatmul.f32.gmra.mxu0 %v10911
      %v11047 = vpop.f32.mrf.mxu0
      %v11048 = vadd.f32 0.0, %v11047
      %11049 = vmatmul.f32.gmra.mxu0 %v10914
      %v11050 = vpop.f32.mrf.mxu0
      %v11051 = vadd.f32 0.0, %v11050
      %11052 = vmatmul.f32.gmra.mxu0 %v10917
      %v11053 = vpop.f32.mrf.mxu0
      %v11054 = vadd.f32 0.0, %v11053
      %11055 = vmatmul.f32.gmra.mxu0 %v10920
      %v11056 = vpop.f32.mrf.mxu0
      %v11057 = vadd.f32 0.0, %v11056
      %11058 = vmatmul.f32.gmra.mxu0 %v10923
      %v11059 = vpop.f32.mrf.mxu0
      %v11060 = vadd.f32 0.0, %v11059
      %11061 = vmatmul.f32.gmra.mxu0 %v10926
      %v11062 = vpop.f32.mrf.mxu0
      %v11063 = vadd.f32 0.0, %v11062
      %11064 = vmatmul.f32.gmra.mxu0 %v10929
      %v11065 = vpop.f32.mrf.mxu0
      %v11066 = vadd.f32 0.0, %v11065
      %11067 = vmatmul.f32.gmra.mxu0 %v10932
      %v11068 = vpop.f32.mrf.mxu0
      %v11069 = vadd.f32 0.0, %v11068
      %11070 = vmatmul.f32.gmra.mxu0 %v10935
      %v11071 = vpop.f32.mrf.mxu0
      %v11072 = vadd.f32 0.0, %v11071
      %11073 = vmatmul.f32.gmra.mxu0 %v10938
      %v11074 = vpop.f32.mrf.mxu0
      %v11075 = vadd.f32 0.0, %v11074
      %11076 = vmatmul.f32.gmra.mxu0 %v10941
      %v11077 = vpop.f32.mrf.mxu0
      %v11078 = vadd.f32 0.0, %v11077
      %11079 = vmatmul.f32.gmra.mxu0 %v10944
      %v11080 = vpop.f32.mrf.mxu0
      %v11081 = vadd.f32 0.0, %v11080
      %11082 = vmatmul.f32.gmra.mxu0 %v10947
      %v11083 = vpop.f32.mrf.mxu0
      %v11084 = vadd.f32 0.0, %v11083
      %11085 = vmatmul.f32.gmra.mxu0 %v10950
      %v11086 = vpop.f32.mrf.mxu0
      %v11087 = vadd.f32 0.0, %v11086
      %11088 = vmatmul.f32.gmra.mxu0 %v10953
      %v11089 = vpop.f32.mrf.mxu0
      %v11090 = vadd.f32 0.0, %v11089
      %11091 = vmatmul.f32.gmra.mxu0 %v10956
      %v11092 = vpop.f32.mrf.mxu0
      %v11093 = vadd.f32 0.0, %v11092
      %11094 = vmatmul.f32.gmra.mxu0 %v10959
      %v11095 = vpop.f32.mrf.mxu0
      %v11096 = vadd.f32 0.0, %v11095
      %11097 = vmatmul.f32.gmra.mxu0 %v10962
      %v11098 = vpop.f32.mrf.mxu0
      %v11099 = vadd.f32 0.0, %v11098
      %11100 = vmatmul.f32.gmra.mxu0 %v10965
      %v11101 = vpop.f32.mrf.mxu0
      %v11102 = vadd.f32 0.0, %v11101
      %11103 = vmatmul.f32.gmra.mxu0 %v10968
      %v11104 = vpop.f32.mrf.mxu0
      %v11105 = vadd.f32 0.0, %v11104
      %11106 = vmatmul.f32.gmra.mxu0 %v10971
      %v11107 = vpop.f32.mrf.mxu0
      %v11108 = vadd.f32 0.0, %v11107
      %11109 = vmatmul.f32.gmra.mxu0 %v10974
      %v11110 = vpop.f32.mrf.mxu0
      %v11111 = vadd.f32 0.0, %v11110
      %11112 = vmatmul.f32.gmra.mxu0 %v10977
      %v11113 = vpop.f32.mrf.mxu0
      %v11114 = vadd.f32 0.0, %v11113
      %11115 = vmatmul.f32.gmra.mxu0 %v10980
      %v11116 = vpop.f32.mrf.mxu0
      %v11117 = vadd.f32 0.0, %v11116
      %11118 = vmatmul.f32.gmra.mxu0 %v10983
      %v11119 = vpop.f32.mrf.mxu0
      %v11120 = vadd.f32 0.0, %v11119
      %11121 = vmatmul.f32.gmra.mxu0 %v10986
      %v11122 = vpop.f32.mrf.mxu0
      %v11123 = vadd.f32 0.0, %v11122
      %11124 = vmatmul.f32.gmra.mxu0 %v10989
      %v11125 = vpop.f32.mrf.mxu0
      %v11126 = vadd.f32 0.0, %v11125
      %11127 = vmatmul.f32.gmra.mxu0 %v10992
      %v11128 = vpop.f32.mrf.mxu0
      %v11129 = vadd.f32 0.0, %v11128
      %11130 = vmatmul.f32.gmra.mxu0 %v10995
      %v11131 = vpop.f32.mrf.mxu0
      %v11132 = vadd.f32 0.0, %v11131
      %11133 = vmatmul.f32.gmra.mxu0 %v10998
      %v11134 = vpop.f32.mrf.mxu0
      %v11135 = vadd.f32 0.0, %v11134
      %11136 = vmatmul.f32.gmra.mxu0 %v11001
      %v11137 = vpop.f32.mrf.mxu0
      %v11138 = vadd.f32 0.0, %v11137
      %11139 = vmatmul.f32.gmra.mxu0 %v11004
      %v11140 = vpop.f32.mrf.mxu0
      %v11141 = vadd.f32 0.0, %v11140
      %11142 = vmatmul.f32.gmra.mxu0 %v11007
      %v11143 = vpop.f32.mrf.mxu0
      %v11144 = vadd.f32 0.0, %v11143
      %11145 = vmatmul.f32.gmra.mxu0 %v11010
      %v11146 = vpop.f32.mrf.mxu0
      %v11147 = vadd.f32 0.0, %v11146
      %11148 = vmatmul.f32.gmra.mxu0 %v11013
      %v11149 = vpop.f32.mrf.mxu0
      %v11150 = vadd.f32 0.0, %v11149
      %11151 = vmatmul.f32.gmra.mxu0 %v11016
      %v11152 = vpop.f32.mrf.mxu0
      %v11153 = vadd.f32 0.0, %v11152
      %11154 = vmatmul.f32.gmra.mxu0 %v11019
      %v11155 = vpop.f32.mrf.mxu0
      %v11156 = vadd.f32 0.0, %v11155
      %11157 = vmatmul.f32.gmra.mxu0 %v11022
      %v11158 = vpop.f32.mrf.mxu0
      %v11159 = vadd.f32 0.0, %v11158
      %11160 = vdwg.mxu0
      %v11161 = vadd.f32 %v10819, %v11042
      %v11162 = vadd.f32 %v10820, %v11045
      %v11163 = vadd.f32 %v10821, %v11048
      %v11164 = vadd.f32 %v10822, %v11051
      %v11165 = vadd.f32 %v10823, %v11054
      %v11166 = vadd.f32 %v10824, %v11057
      %v11167 = vadd.f32 %v10825, %v11060
      %v11168 = vadd.f32 %v10826, %v11063
      %v11169 = vadd.f32 %v10827, %v11066
      %v11170 = vadd.f32 %v10828, %v11069
      %v11171 = vadd.f32 %v10829, %v11072
      %v11172 = vadd.f32 %v10830, %v11075
      %v11173 = vadd.f32 %v10831, %v11078
      %v11174 = vadd.f32 %v10832, %v11081
      %v11175 = vadd.f32 %v10833, %v11084
      %v11176 = vadd.f32 %v10834, %v11087
      %v11177 = vadd.f32 %v10835, %v11090
      %v11178 = vadd.f32 %v10836, %v11093
      %v11179 = vadd.f32 %v10837, %v11096
      %v11180 = vadd.f32 %v10838, %v11099
      %v11181 = vadd.f32 %v10839, %v11102
      %v11182 = vadd.f32 %v10840, %v11105
      %v11183 = vadd.f32 %v10841, %v11108
      %v11184 = vadd.f32 %v10842, %v11111
      %v11185 = vadd.f32 %v10843, %v11114
      %v11186 = vadd.f32 %v10844, %v11117
      %v11187 = vadd.f32 %v10845, %v11120
      %v11188 = vadd.f32 %v10846, %v11123
      %v11189 = vadd.f32 %v10847, %v11126
      %v11190 = vadd.f32 %v10848, %v11129
      %v11191 = vadd.f32 %v10849, %v11132
      %v11192 = vadd.f32 %v10850, %v11135
      %v11193 = vadd.f32 %v10851, %v11138
      %v11194 = vadd.f32 %v10852, %v11141
      %v11195 = vadd.f32 %v10853, %v11144
      %v11196 = vadd.f32 %v10854, %v11147
      %v11197 = vadd.f32 %v10855, %v11150
      %v11198 = vadd.f32 %v10856, %v11153
      %v11199 = vadd.f32 %v10857, %v11156
      %v11200 = vadd.f32 %v10858, %v11159
      %v11201 = vld [vmem:[%s8] sm:$0x1]
      %v11203 = vperm.slane %v11201, 0
      %v11205 = vadd.f32 %v11161, %v11203
      %v11206 = vadd.f32 %v11162, %v11203
      %v11207 = vadd.f32 %v11163, %v11203
      %v11208 = vadd.f32 %v11164, %v11203
      %v11209 = vadd.f32 %v11165, %v11203
      %v11210 = vadd.f32 %v11166, %v11203
      %v11211 = vadd.f32 %v11167, %v11203
      %v11212 = vadd.f32 %v11168, %v11203
      %v11213 = vadd.f32 %v11169, %v11203
      %v11214 = vadd.f32 %v11170, %v11203
      %v11215 = vadd.f32 %v11171, %v11203
      %v11216 = vadd.f32 %v11172, %v11203
      %v11217 = vadd.f32 %v11173, %v11203
      %v11218 = vadd.f32 %v11174, %v11203
      %v11219 = vadd.f32 %v11175, %v11203
      %v11220 = vadd.f32 %v11176, %v11203
      %v11221 = vadd.f32 %v11177, %v11203
      %v11222 = vadd.f32 %v11178, %v11203
      %v11223 = vadd.f32 %v11179, %v11203
      %v11224 = vadd.f32 %v11180, %v11203
      %v11225 = vadd.f32 %v11181, %v11203
      %v11226 = vadd.f32 %v11182, %v11203
      %v11227 = vadd.f32 %v11183, %v11203
      %v11228 = vadd.f32 %v11184, %v11203
      %v11229 = vadd.f32 %v11185, %v11203
      %v11230 = vadd.f32 %v11186, %v11203
      %v11231 = vadd.f32 %v11187, %v11203
      %v11232 = vadd.f32 %v11188, %v11203
      %v11233 = vadd.f32 %v11189, %v11203
      %v11234 = vadd.f32 %v11190, %v11203
      %v11235 = vadd.f32 %v11191, %v11203
      %v11236 = vadd.f32 %v11192, %v11203
      %v11237 = vadd.f32 %v11193, %v11203
      %v11238 = vadd.f32 %v11194, %v11203
      %v11239 = vadd.f32 %v11195, %v11203
      %v11240 = vadd.f32 %v11196, %v11203
      %v11241 = vadd.f32 %v11197, %v11203
      %v11242 = vadd.f32 %v11198, %v11203
      %v11243 = vadd.f32 %v11199, %v11203
      %v11244 = vadd.f32 %v11200, %v11203
      %11245 = vst [vmem:[%s332] sm:$0xff] %v11205
      %11246 = vst [vmem:[%s332 + $0x8] sm:$0xff] %v11206
      %s11247 = scalar_lea.vmem %s332, 16
      %11248 = vst [vmem:[%s11247 - $0x4] sm:$0xf0] %v11207
      %11249 = vst [vmem:[%s11247 + $0x4] sm:$0xff] %v11208
      %11250 = vst [vmem:[%s11247 + $0xc] sm:$0xf] %v11209
      %s11251 = scalar_lea.vmem %s332, 32
      %11252 = vst [vmem:[%s11251] sm:$0xff] %v11210
      %11253 = vst [vmem:[%s11251 + $0x8] sm:$0xff] %v11211
      %s11254 = scalar_lea.vmem %s332, 48
      %11255 = vst [vmem:[%s11254 - $0x4] sm:$0xf0] %v11212
      %11256 = vst [vmem:[%s11254 + $0x4] sm:$0xff] %v11213
      %11257 = vst [vmem:[%s11254 + $0xc] sm:$0xf] %v11214
      %s11258 = scalar_lea.vmem %s332, 64
      %11259 = vst [vmem:[%s11258] sm:$0xff] %v11215
      %11260 = vst [vmem:[%s11258 + $0x8] sm:$0xff] %v11216
      %s11261 = scalar_lea.vmem %s332, 80
      %11262 = vst [vmem:[%s11261 - $0x4] sm:$0xf0] %v11217
      %11263 = vst [vmem:[%s11261 + $0x4] sm:$0xff] %v11218
      %11264 = vst [vmem:[%s11261 + $0xc] sm:$0xf] %v11219
      %s11265 = scalar_lea.vmem %s332, 96
      %11266 = vst [vmem:[%s11265] sm:$0xff] %v11220
      %11267 = vst [vmem:[%s11265 + $0x8] sm:$0xff] %v11221
      %s11268 = scalar_lea.vmem %s332, 112
      %11269 = vst [vmem:[%s11268 - $0x4] sm:$0xf0] %v11222
      %11270 = vst [vmem:[%s11268 + $0x4] sm:$0xff] %v11223
      %11271 = vst [vmem:[%s11268 + $0xc] sm:$0xf] %v11224
      %s11272 = scalar_lea.vmem %s332, 128
      %11273 = vst [vmem:[%s11272] sm:$0xff] %v11225
      %11274 = vst [vmem:[%s11272 + $0x8] sm:$0xff] %v11226
      %s11275 = scalar_lea.vmem %s332, 144
      %11276 = vst [vmem:[%s11275 - $0x4] sm:$0xf0] %v11227
      %11277 = vst [vmem:[%s11275 + $0x4] sm:$0xff] %v11228
      %11278 = vst [vmem:[%s11275 + $0xc] sm:$0xf] %v11229
      %s11279 = scalar_lea.vmem %s332, 160
      %11280 = vst [vmem:[%s11279] sm:$0xff] %v11230
      %11281 = vst [vmem:[%s11279 + $0x8] sm:$0xff] %v11231
      %s11282 = scalar_lea.vmem %s332, 176
      %11283 = vst [vmem:[%s11282 - $0x4] sm:$0xf0] %v11232
      %11284 = vst [vmem:[%s11282 + $0x4] sm:$0xff] %v11233
      %11285 = vst [vmem:[%s11282 + $0xc] sm:$0xf] %v11234
      %s11286 = scalar_lea.vmem %s332, 192
      %11287 = vst [vmem:[%s11286] sm:$0xff] %v11235
      %11288 = vst [vmem:[%s11286 + $0x8] sm:$0xff] %v11236
      %s11289 = scalar_lea.vmem %s332, 208
      %11290 = vst [vmem:[%s11289 - $0x4] sm:$0xf0] %v11237
      %11291 = vst [vmem:[%s11289 + $0x4] sm:$0xff] %v11238
      %11292 = vst [vmem:[%s11289 + $0xc] sm:$0xf] %v11239
      %s11293 = scalar_lea.vmem %s332, 224
      %11294 = vst [vmem:[%s11293] sm:$0xff] %v11240
      %11295 = vst [vmem:[%s11293 + $0x8] sm:$0xff] %v11241
      %s11296 = scalar_lea.vmem %s332, 240
      %11297 = vst [vmem:[%s11296 - $0x4] sm:$0xf0] %v11242
      %11298 = vst [vmem:[%s11296 + $0x4] sm:$0xff] %v11243
      %11299 = vst [vmem:[%s11296 + $0xc] sm:$0xf] %v11244
      %p11300 = scmp.lt.s32.totalorder %s20, 1
      %s11301 = scalar_select %p11300, %s20, 1
      %s11302 = smul.addr %s11301, 32
      %s11303 = smul.addr %s11302, 8
      %s11304 = scalar_lea.vmem %s9, %s11303
      // Predicated region
      $region57: #{srcnn2_pallas.1} parent=55 // pred_check
        %p11305 = pneg %p232
      $region58: #{srcnn2_pallas.1} parent=55 // pred_check_branch
        %11307 = sbr.rel (%p11305) target = $region60
      $region59: #{srcnn2_pallas.1} parent=55 // pred_region
        _
      $region60: #{srcnn2_pallas.1} parent=55 // pred_fallthru
        _
    $region56: #{srcnn2_pallas.1} parent=5 // pred_fallthru
      _
    %p11308 = scmp.le.s32.totalorder 2, %s15
    // Predicated region
    $region61: #{srcnn2_pallas.1} parent=5 // pred_check
      %p11309 = pneg %p11308
    $region62: #{srcnn2_pallas.1} parent=5 // pred_check_branch
      %11311 = sbr.rel (%p11309) target = $region64
    $region63: #{srcnn2_pallas.1} parent=5 // pred_region
      %s11312 = ssub.s32 %s15, 2
      // Predicated region
      $region65: #{srcnn2_pallas.1} parent=63 // pred_check
        %p11313 = pneg %p238
      $region66: #{srcnn2_pallas.1} parent=63 // pred_check_branch
        %11315 = sbr.rel (%p11313) target = $region68
      $region67: #{srcnn2_pallas.1} parent=63 // pred_region
        %p11316 = scmp.lt.s32.totalorder %s21, 1
        %s11317 = scalar_select %p11316, %s21, 1
        %s11318 = smul.addr %s11317, 32
        %s11319 = smul.addr %s11318, 8
        %s11320 = scalar_lea.vmem %s9, %s11319
      $region68: #{srcnn2_pallas.1} parent=63 // pred_fallthru
        _
    $region64: #{srcnn2_pallas.1} parent=5 // pred_fallthru
      _
  $region6: #{srcnn2_pallas.1} parent=0 // loop_footer
    %s19 = sadd.s32 1, %s15
  $region7: #{srcnn2_pallas.1} parent=0 // loop_footer_branch
    %14 = sbr.rel target = $region3
  $region8: #{srcnn2_pallas.1} parent=0 // loop_exit
    _

</llo_original>
